<compile_context>
chip_gen: v6e
topology: v6e:2x2x1
jax: 0.10.0
libtpu: 0.0.40
codegen_flags: <defaults>
</compile_context>

<pallas_src>
import numpy as np
import jax
import jax.numpy as jnp
from jax.experimental import pallas as pl
from jax.experimental.pallas import tpu as pltpu


_NEG = float("-inf")
TILE_DST = 32      # destination rows per grid step (raise to 64/128 to amortize
                   # the ~0.35us per-step overhead on very large graphs)
SRC_CHUNK = 128    # source columns per grid step (one full lane group)


def _round_up(x, m):
    return (x + m - 1) // m * m


def _graph_backprop_kernel(upd_ref, mask_ref, fsrc_ref, fdst_ref, out_ref, acc_ref):
    """grid = (dst_tiles, src_chunks); the src axis is the "arbitrary" reduction.

    upd_ref  : (TILE_DST, 1)         f32, 1.0 iff this destination row is updated.
    mask_ref : (TILE_DST, SRC_CHUNK) f32, mask[v, u] = 1.0 iff edge u -> v.
    fsrc_ref : (SRC_CHUNK, F_pad)    f32, original features of this source chunk.
    fdst_ref : (TILE_DST, F_pad)     f32, original features of this dst tile.
    out_ref  : (TILE_DST, F_pad)     f32, result tile.
    acc_ref  : (TILE_DST, F_pad)     f32, VMEM running-max accumulator.
    """
    c = pl.program_id(1)

    @pl.when(c == 0)
    def _init():
        acc_ref[...] = jnp.full(acc_ref.shape, _NEG, acc_ref.dtype)

    mask_chunk = mask_ref[...]                       # (TILE_DST, SRC_CHUNK)
    acc = acc_ref[...]                               # vreg-resident across the unroll
    # Fixed 128-long static unroll: the lane index j into mask_chunk stays
    # static (cheap lane extract), the source row is a small (1, F_pad) VMEM
    # load; trace size is constant regardless of graph size.
    for j in range(SRC_CHUNK):
        src_row = fsrc_ref[j:j + 1, :]               # (1, F_pad)
        m_col = mask_chunk[:, j:j + 1] != 0.0        # (TILE_DST, 1) bool
        acc = jnp.maximum(acc, jnp.where(m_col, src_row, _NEG))
    acc_ref[...] = acc

    @pl.when(c == pl.num_programs(1) - 1)
    def _finalize():
        upd = upd_ref[...] != 0.0                    # (TILE_DST, 1) bool
        out_ref[...] = jnp.where(upd, acc, fdst_ref[...])


def graph_backprop(adj_np, levels_np, feat_np):
    """Max back-prop over a DAG whose `levels` are reverse-topological.

    adj_np[u, v] > 0 iff edge u -> v.  Requires levels[u] > levels[v] for every
    edge, which DGL's reverse topological_nodes_generator guarantees.
    """
    adj = np.asarray(adj_np, np.float32)
    levels = np.asarray(levels_np)
    feat = np.asarray(feat_np, np.float32)
    n, f = feat.shape

    num_levels = int(levels.max()) + 1 if n > 0 else 1
    if n == 0 or num_levels <= 1:            # nothing to propagate
        return jnp.asarray(feat)

    # Precondition for the single-pass formulation (always true for DGL
    # reverse-topological levels): predecessors sit on strictly higher levels.
    src_idx, dst_idx = np.nonzero(adj > 0)
    if not np.all(levels[src_idx] > levels[dst_idx]):
        raise ValueError("levels are not reverse-topological for this graph")

    n_pad = _round_up(max(n, SRC_CHUNK), SRC_CHUNK)   # multiple of 128 (and TILE_DST)
    f_pad = _round_up(max(f, 128), 128)               # lane-dense feature dim

    # (dst, src) edge mask as {0,1} f32 -> select-based masking in the kernel.
    # TODO(synk): int8 mask storage would cut mask HBM traffic 4x for huge graphs.
    mask = np.zeros((n_pad, n_pad), np.float32)
    mask[:n, :n] = (adj.T > 0).astype(np.float32)

    indeg = adj.sum(axis=0) > 0
    upd = np.zeros((n_pad, 1), np.float32)
    upd[:n, 0] = ((levels >= 1) & indeg).astype(np.float32)

    feat_p = np.zeros((n_pad, f_pad), np.float32)
    feat_p[:n, :f] = feat

    grid = (n_pad // TILE_DST, n_pad // SRC_CHUNK)

    # Per-step VMEM footprint (double-buffered blocks + scratch) is O(F_pad),
    # independent of N.  Only raise the scoped limit if it is ever needed, and
    # cap it generation-aware (v7x has only 64 MiB of physical VMEM).
    blk = 4 * (TILE_DST * 128             # upd (lane-padded)
               + TILE_DST * SRC_CHUNK     # mask block
               + SRC_CHUNK * f_pad        # feat (source chunk)
               + TILE_DST * f_pad         # feat (dst rows)
               + TILE_DST * f_pad)        # out block
    vmem_needed = 2 * blk + 4 * TILE_DST * f_pad      # + acc scratch
    cp_kwargs = {}
    if vmem_needed > 14 * 1024 * 1024:                # below v5e's 16 MiB default
        try:
            cap = int(getattr(pltpu.get_tpu_info(), "vmem_capacity_bytes",
                              64 * 1024 * 1024))
        except Exception:
            cap = 64 * 1024 * 1024
        cp_kwargs["vmem_limit_bytes"] = int(min(cap - 8 * 1024 * 1024,
                                                2 * vmem_needed))
    compiler_params = pltpu.CompilerParams(
        dimension_semantics=("parallel", "arbitrary"), **cp_kwargs)

    out = pl.pallas_call(
        _graph_backprop_kernel,
        out_shape=jax.ShapeDtypeStruct((n_pad, f_pad), jnp.float32),
        grid=grid,
        in_specs=[
            pl.BlockSpec((TILE_DST, 1), lambda i, c: (i, 0)),           # upd flags
            pl.BlockSpec((TILE_DST, SRC_CHUNK), lambda i, c: (i, c)),   # edge mask
            pl.BlockSpec((SRC_CHUNK, f_pad), lambda i, c: (c, 0)),      # feat (sources)
            pl.BlockSpec((TILE_DST, f_pad), lambda i, c: (i, 0)),       # feat (dst rows)
        ],
        out_specs=pl.BlockSpec((TILE_DST, f_pad), lambda i, c: (i, 0)),
        scratch_shapes=[pltpu.VMEM((TILE_DST, f_pad), jnp.float32)],
        compiler_params=compiler_params,
    )(jnp.asarray(upd), jnp.asarray(mask), jnp.asarray(feat_p), jnp.asarray(feat_p))

    return out[:n, :f]


def _reference(adj, levels, feat):
    """Pure-NumPy reference: literal DGL pull/max semantics, level by level."""
    out = feat.astype(np.float32).copy()
    n = adj.shape[0]
    indeg = adj.sum(axis=0) > 0
    for l in range(1, int(levels.max()) + 1):
        cur = out.copy()
        for v in range(n):
            if levels[v] == l and indeg[v]:
                preds = np.where(adj[:, v] > 0)[0]
                out[v] = np.max(cur[preds], axis=0)
    return out


def _build_dag(key, n_nodes, edge_prob=0.35):
    """Deterministic random DAG (edges only from lower to higher node index)."""
    probs = jax.random.uniform(key, (n_nodes, n_nodes))
    adj = np.array(np.triu(np.asarray(probs) < edge_prob, k=1), dtype=np.float32)
    # reverse-topological level: 0 for sinks, else 1 + max over successors
    levels = np.zeros((n_nodes,), dtype=np.int32)
    for v in range(n_nodes - 1, -1, -1):
        succ = np.where(adj[v] > 0)[0]
        levels[v] = 0 if succ.size == 0 else 1 + int(levels[succ].max())
    return adj, levels


if __name__ == "__main__":
    N, F = 16, 32
    key = jax.random.PRNGKey(0)
    k_graph, k_feat = jax.random.split(key)

    adj_np, levels_np = _build_dag(k_graph, N)
    feat_np = np.asarray(jax.random.normal(k_feat, (N, F), dtype=jnp.float32))

    out = graph_backprop(adj_np, levels_np, feat_np)
    out = jax.block_until_ready(out)

    ref = _reference(adj_np, levels_np, feat_np)
    np.testing.assert_allclose(np.asarray(out), ref, rtol=1e-6, atol=1e-6)
    print("KERNEL_OK")
</pallas_src>

<mosaic_0001>
module attributes {stable_mosaic.version = 11 : i64} {
  func.func @_graph_backprop_kernel(%arg0: i32, %arg1: i32, %arg2: memref<32x1xf32, #tpu.memory_space<vmem>>, %arg3: memref<32x128xf32, #tpu.memory_space<vmem>>, %arg4: memref<128x128xf32, #tpu.memory_space<vmem>>, %arg5: memref<32x128xf32, #tpu.memory_space<vmem>>, %arg6: memref<32x128xf32, #tpu.memory_space<vmem>>, %arg7: memref<32x128xf32, #tpu.memory_space<vmem>>) attributes {dimension_semantics = [#tpu.dimension_semantics<parallel>, #tpu.dimension_semantics<arbitrary>], iteration_bounds = array<i64: 4, 1>, scalar_prefetch = 0 : i64, scratch_operands = 1 : i64, tpu.core_type = #tpu.core_type<tc>, window_params = [{transform_indices = @transform_0, window_bounds = array<i64: 32, 1>}, {transform_indices = @transform_1, window_bounds = array<i64: 32, 128>}, {transform_indices = @transform_2, window_bounds = array<i64: 128, 128>}, {transform_indices = @transform_3, window_bounds = array<i64: 32, 128>}, {transform_indices = @transform_4, window_bounds = array<i64: 32, 128>}]} {
    %c0_i32 = arith.constant 0 : i32
    %0 = arith.cmpi eq, %arg1, %c0_i32 : i32
    %1 = arith.extui %0 : i1 to i32
    %c0_i32_0 = arith.constant 0 : i32
    %2 = arith.cmpi ne, %1, %c0_i32_0 : i32
    scf.if %2 {
      %cst_392 = arith.constant 0xFF800000 : f32
      %1417 = vector.broadcast %cst_392 : f32 to vector<32x128xf32>
      %c0_393 = arith.constant 0 : index
      %c0_394 = arith.constant 0 : index
      %1418 = vector.load %arg7[%c0_393, %c0_394] : memref<32x128xf32, #tpu.memory_space<vmem>>, vector<32x128xf32>
      tpu.vector_store %arg7[%c0_393, %c0_394], %1417 {strides = array<i32>} : memref<32x128xf32, #tpu.memory_space<vmem>>, vector<32x128xf32>,
    } else {
    }
    %c0 = arith.constant 0 : index
    %c0_1 = arith.constant 0 : index
    %3 = vector.load %arg3[%c0, %c0_1] : memref<32x128xf32, #tpu.memory_space<vmem>>, vector<32x128xf32>
    %c0_2 = arith.constant 0 : index
    %c0_3 = arith.constant 0 : index
    %4 = vector.load %arg7[%c0_2, %c0_3] : memref<32x128xf32, #tpu.memory_space<vmem>>, vector<32x128xf32>
    %c0_4 = arith.constant 0 : index
    %c0_5 = arith.constant 0 : index
    %5 = vector.load %arg4[%c0_4, %c0_5] : memref<128x128xf32, #tpu.memory_space<vmem>>, vector<1x128xf32>
    %6 = vector.extract_strided_slice %3 {offsets = [0, 0], sizes = [32, 1], strides = [1, 1]} : vector<32x128xf32> to vector<32x1xf32>
    %cst = arith.constant 0.000000e+00 : f32
    %7 = vector.broadcast %cst : f32 to vector<32x1xf32>
    %8 = arith.cmpf one, %6, %7 : vector<32x1xf32>
    %cst_6 = arith.constant 0xFF800000 : f32
    %9 = vector.shape_cast %8 : vector<32x1xi1> to vector<32x1xi1>
    %10 = vector.broadcast %9 : vector<32x1xi1> to vector<32x128xi1>
    %11 = vector.shape_cast %5 : vector<1x128xf32> to vector<1x128xf32>
    %12 = vector.broadcast %11 : vector<1x128xf32> to vector<32x128xf32>
    %13 = vector.broadcast %cst_6 : f32 to vector<32x128xf32>
    %14 = arith.select %10, %12, %13 : vector<32x128xi1>, vector<32x128xf32>
    %15 = arith.maximumf %4, %14 : vector<32x128xf32>
    %c1 = arith.constant 1 : index
    %c0_7 = arith.constant 0 : index
    %16 = vector.load %arg4[%c1, %c0_7] : memref<128x128xf32, #tpu.memory_space<vmem>>, vector<1x128xf32>
    %17 = vector.extract_strided_slice %3 {offsets = [0, 1], sizes = [32, 1], strides = [1, 1]} : vector<32x128xf32> to vector<32x1xf32>
    %cst_8 = arith.constant 0.000000e+00 : f32
    %18 = vector.broadcast %cst_8 : f32 to vector<32x1xf32>
    %19 = arith.cmpf one, %17, %18 : vector<32x1xf32>
    %cst_9 = arith.constant 0xFF800000 : f32
    %20 = vector.shape_cast %19 : vector<32x1xi1> to vector<32x1xi1>
    %21 = vector.broadcast %20 : vector<32x1xi1> to vector<32x128xi1>
    %22 = vector.shape_cast %16 : vector<1x128xf32> to vector<1x128xf32>
    %23 = vector.broadcast %22 : vector<1x128xf32> to vector<32x128xf32>
    %24 = vector.broadcast %cst_9 : f32 to vector<32x128xf32>
    %25 = arith.select %21, %23, %24 : vector<32x128xi1>, vector<32x128xf32>
    %26 = arith.maximumf %15, %25 : vector<32x128xf32>
    %c2 = arith.constant 2 : index
    %c0_10 = arith.constant 0 : index
    %27 = vector.load %arg4[%c2, %c0_10] : memref<128x128xf32, #tpu.memory_space<vmem>>, vector<1x128xf32>
    %28 = vector.extract_strided_slice %3 {offsets = [0, 2], sizes = [32, 1], strides = [1, 1]} : vector<32x128xf32> to vector<32x1xf32>
    %cst_11 = arith.constant 0.000000e+00 : f32
    %29 = vector.broadcast %cst_11 : f32 to vector<32x1xf32>
    %30 = arith.cmpf one, %28, %29 : vector<32x1xf32>
    %cst_12 = arith.constant 0xFF800000 : f32
    %31 = vector.shape_cast %30 : vector<32x1xi1> to vector<32x1xi1>
    %32 = vector.broadcast %31 : vector<32x1xi1> to vector<32x128xi1>
    %33 = vector.shape_cast %27 : vector<1x128xf32> to vector<1x128xf32>
    %34 = vector.broadcast %33 : vector<1x128xf32> to vector<32x128xf32>
    %35 = vector.broadcast %cst_12 : f32 to vector<32x128xf32>
    %36 = arith.select %32, %34, %35 : vector<32x128xi1>, vector<32x128xf32>
    %37 = arith.maximumf %26, %36 : vector<32x128xf32>
    %c3 = arith.constant 3 : index
    %c0_13 = arith.constant 0 : index
    %38 = vector.load %arg4[%c3, %c0_13] : memref<128x128xf32, #tpu.memory_space<vmem>>, vector<1x128xf32>
    %39 = vector.extract_strided_slice %3 {offsets = [0, 3], sizes = [32, 1], strides = [1, 1]} : vector<32x128xf32> to vector<32x1xf32>
    %cst_14 = arith.constant 0.000000e+00 : f32
    %40 = vector.broadcast %cst_14 : f32 to vector<32x1xf32>
    %41 = arith.cmpf one, %39, %40 : vector<32x1xf32>
    %cst_15 = arith.constant 0xFF800000 : f32
    %42 = vector.shape_cast %41 : vector<32x1xi1> to vector<32x1xi1>
    %43 = vector.broadcast %42 : vector<32x1xi1> to vector<32x128xi1>
    %44 = vector.shape_cast %38 : vector<1x128xf32> to vector<1x128xf32>
    %45 = vector.broadcast %44 : vector<1x128xf32> to vector<32x128xf32>
    %46 = vector.broadcast %cst_15 : f32 to vector<32x128xf32>
    %47 = arith.select %43, %45, %46 : vector<32x128xi1>, vector<32x128xf32>
    %48 = arith.maximumf %37, %47 : vector<32x128xf32>
    %c4 = arith.constant 4 : index
    %c0_16 = arith.constant 0 : index
    %49 = vector.load %arg4[%c4, %c0_16] : memref<128x128xf32, #tpu.memory_space<vmem>>, vector<1x128xf32>
    %50 = vector.extract_strided_slice %3 {offsets = [0, 4], sizes = [32, 1], strides = [1, 1]} : vector<32x128xf32> to vector<32x1xf32>
    %cst_17 = arith.constant 0.000000e+00 : f32
    %51 = vector.broadcast %cst_17 : f32 to vector<32x1xf32>
    %52 = arith.cmpf one, %50, %51 : vector<32x1xf32>
    %cst_18 = arith.constant 0xFF800000 : f32
    %53 = vector.shape_cast %52 : vector<32x1xi1> to vector<32x1xi1>
    %54 = vector.broadcast %53 : vector<32x1xi1> to vector<32x128xi1>
    %55 = vector.shape_cast %49 : vector<1x128xf32> to vector<1x128xf32>
    %56 = vector.broadcast %55 : vector<1x128xf32> to vector<32x128xf32>
    %57 = vector.broadcast %cst_18 : f32 to vector<32x128xf32>
    %58 = arith.select %54, %56, %57 : vector<32x128xi1>, vector<32x128xf32>
    %59 = arith.maximumf %48, %58 : vector<32x128xf32>
    %c5 = arith.constant 5 : index
    %c0_19 = arith.constant 0 : index
    %60 = vector.load %arg4[%c5, %c0_19] : memref<128x128xf32, #tpu.memory_space<vmem>>, vector<1x128xf32>
    %61 = vector.extract_strided_slice %3 {offsets = [0, 5], sizes = [32, 1], strides = [1, 1]} : vector<32x128xf32> to vector<32x1xf32>
    %cst_20 = arith.constant 0.000000e+00 : f32
    %62 = vector.broadcast %cst_20 : f32 to vector<32x1xf32>
    %63 = arith.cmpf one, %61, %62 : vector<32x1xf32>
    %cst_21 = arith.constant 0xFF800000 : f32
    %64 = vector.shape_cast %63 : vector<32x1xi1> to vector<32x1xi1>
    %65 = vector.broadcast %64 : vector<32x1xi1> to vector<32x128xi1>
    %66 = vector.shape_cast %60 : vector<1x128xf32> to vector<1x128xf32>
    %67 = vector.broadcast %66 : vector<1x128xf32> to vector<32x128xf32>
    %68 = vector.broadcast %cst_21 : f32 to vector<32x128xf32>
    %69 = arith.select %65, %67, %68 : vector<32x128xi1>, vector<32x128xf32>
    %70 = arith.maximumf %59, %69 : vector<32x128xf32>
    %c6 = arith.constant 6 : index
    %c0_22 = arith.constant 0 : index
    %71 = vector.load %arg4[%c6, %c0_22] : memref<128x128xf32, #tpu.memory_space<vmem>>, vector<1x128xf32>
    %72 = vector.extract_strided_slice %3 {offsets = [0, 6], sizes = [32, 1], strides = [1, 1]} : vector<32x128xf32> to vector<32x1xf32>
    %cst_23 = arith.constant 0.000000e+00 : f32
    %73 = vector.broadcast %cst_23 : f32 to vector<32x1xf32>
    %74 = arith.cmpf one, %72, %73 : vector<32x1xf32>
    %cst_24 = arith.constant 0xFF800000 : f32
    %75 = vector.shape_cast %74 : vector<32x1xi1> to vector<32x1xi1>
    %76 = vector.broadcast %75 : vector<32x1xi1> to vector<32x128xi1>
    %77 = vector.shape_cast %71 : vector<1x128xf32> to vector<1x128xf32>
    %78 = vector.broadcast %77 : vector<1x128xf32> to vector<32x128xf32>
    %79 = vector.broadcast %cst_24 : f32 to vector<32x128xf32>
    %80 = arith.select %76, %78, %79 : vector<32x128xi1>, vector<32x128xf32>
    %81 = arith.maximumf %70, %80 : vector<32x128xf32>
    %c7 = arith.constant 7 : index
    %c0_25 = arith.constant 0 : index
    %82 = vector.load %arg4[%c7, %c0_25] : memref<128x128xf32, #tpu.memory_space<vmem>>, vector<1x128xf32>
    %83 = vector.extract_strided_slice %3 {offsets = [0, 7], sizes = [32, 1], strides = [1, 1]} : vector<32x128xf32> to vector<32x1xf32>
    %cst_26 = arith.constant 0.000000e+00 : f32
    %84 = vector.broadcast %cst_26 : f32 to vector<32x1xf32>
    %85 = arith.cmpf one, %83, %84 : vector<32x1xf32>
    %cst_27 = arith.constant 0xFF800000 : f32
    %86 = vector.shape_cast %85 : vector<32x1xi1> to vector<32x1xi1>
    %87 = vector.broadcast %86 : vector<32x1xi1> to vector<32x128xi1>
    %88 = vector.shape_cast %82 : vector<1x128xf32> to vector<1x128xf32>
    %89 = vector.broadcast %88 : vector<1x128xf32> to vector<32x128xf32>
    %90 = vector.broadcast %cst_27 : f32 to vector<32x128xf32>
    %91 = arith.select %87, %89, %90 : vector<32x128xi1>, vector<32x128xf32>
    %92 = arith.maximumf %81, %91 : vector<32x128xf32>
    %c8 = arith.constant 8 : index
    %c0_28 = arith.constant 0 : index
    %93 = vector.load %arg4[%c8, %c0_28] : memref<128x128xf32, #tpu.memory_space<vmem>>, vector<1x128xf32>
    %94 = vector.extract_strided_slice %3 {offsets = [0, 8], sizes = [32, 1], strides = [1, 1]} : vector<32x128xf32> to vector<32x1xf32>
    %cst_29 = arith.constant 0.000000e+00 : f32
    %95 = vector.broadcast %cst_29 : f32 to vector<32x1xf32>
    %96 = arith.cmpf one, %94, %95 : vector<32x1xf32>
    %cst_30 = arith.constant 0xFF800000 : f32
    %97 = vector.shape_cast %96 : vector<32x1xi1> to vector<32x1xi1>
    %98 = vector.broadcast %97 : vector<32x1xi1> to vector<32x128xi1>
    %99 = vector.shape_cast %93 : vector<1x128xf32> to vector<1x128xf32>
    %100 = vector.broadcast %99 : vector<1x128xf32> to vector<32x128xf32>
    %101 = vector.broadcast %cst_30 : f32 to vector<32x128xf32>
    %102 = arith.select %98, %100, %101 : vector<32x128xi1>, vector<32x128xf32>
    %103 = arith.maximumf %92, %102 : vector<32x128xf32>
    %c9 = arith.constant 9 : index
    %c0_31 = arith.constant 0 : index
    %104 = vector.load %arg4[%c9, %c0_31] : memref<128x128xf32, #tpu.memory_space<vmem>>, vector<1x128xf32>
    %105 = vector.extract_strided_slice %3 {offsets = [0, 9], sizes = [32, 1], strides = [1, 1]} : vector<32x128xf32> to vector<32x1xf32>
    %cst_32 = arith.constant 0.000000e+00 : f32
    %106 = vector.broadcast %cst_32 : f32 to vector<32x1xf32>
    %107 = arith.cmpf one, %105, %106 : vector<32x1xf32>
    %cst_33 = arith.constant 0xFF800000 : f32
    %108 = vector.shape_cast %107 : vector<32x1xi1> to vector<32x1xi1>
    %109 = vector.broadcast %108 : vector<32x1xi1> to vector<32x128xi1>
    %110 = vector.shape_cast %104 : vector<1x128xf32> to vector<1x128xf32>
    %111 = vector.broadcast %110 : vector<1x128xf32> to vector<32x128xf32>
    %112 = vector.broadcast %cst_33 : f32 to vector<32x128xf32>
    %113 = arith.select %109, %111, %112 : vector<32x128xi1>, vector<32x128xf32>
    %114 = arith.maximumf %103, %113 : vector<32x128xf32>
    %c10 = arith.constant 10 : index
    %c0_34 = arith.constant 0 : index
    %115 = vector.load %arg4[%c10, %c0_34] : memref<128x128xf32, #tpu.memory_space<vmem>>, vector<1x128xf32>
    %116 = vector.extract_strided_slice %3 {offsets = [0, 10], sizes = [32, 1], strides = [1, 1]} : vector<32x128xf32> to vector<32x1xf32>
    %cst_35 = arith.constant 0.000000e+00 : f32
    %117 = vector.broadcast %cst_35 : f32 to vector<32x1xf32>
    %118 = arith.cmpf one, %116, %117 : vector<32x1xf32>
    %cst_36 = arith.constant 0xFF800000 : f32
    %119 = vector.shape_cast %118 : vector<32x1xi1> to vector<32x1xi1>
    %120 = vector.broadcast %119 : vector<32x1xi1> to vector<32x128xi1>
    %121 = vector.shape_cast %115 : vector<1x128xf32> to vector<1x128xf32>
    %122 = vector.broadcast %121 : vector<1x128xf32> to vector<32x128xf32>
    %123 = vector.broadcast %cst_36 : f32 to vector<32x128xf32>
    %124 = arith.select %120, %122, %123 : vector<32x128xi1>, vector<32x128xf32>
    %125 = arith.maximumf %114, %124 : vector<32x128xf32>
    %c11 = arith.constant 11 : index
    %c0_37 = arith.constant 0 : index
    %126 = vector.load %arg4[%c11, %c0_37] : memref<128x128xf32, #tpu.memory_space<vmem>>, vector<1x128xf32>
    %127 = vector.extract_strided_slice %3 {offsets = [0, 11], sizes = [32, 1], strides = [1, 1]} : vector<32x128xf32> to vector<32x1xf32>
    %cst_38 = arith.constant 0.000000e+00 : f32
    %128 = vector.broadcast %cst_38 : f32 to vector<32x1xf32>
    %129 = arith.cmpf one, %127, %128 : vector<32x1xf32>
    %cst_39 = arith.constant 0xFF800000 : f32
    %130 = vector.shape_cast %129 : vector<32x1xi1> to vector<32x1xi1>
    %131 = vector.broadcast %130 : vector<32x1xi1> to vector<32x128xi1>
    %132 = vector.shape_cast %126 : vector<1x128xf32> to vector<1x128xf32>
    %133 = vector.broadcast %132 : vector<1x128xf32> to vector<32x128xf32>
    %134 = vector.broadcast %cst_39 : f32 to vector<32x128xf32>
    %135 = arith.select %131, %133, %134 : vector<32x128xi1>, vector<32x128xf32>
    %136 = arith.maximumf %125, %135 : vector<32x128xf32>
    %c12 = arith.constant 12 : index
    %c0_40 = arith.constant 0 : index
    %137 = vector.load %arg4[%c12, %c0_40] : memref<128x128xf32, #tpu.memory_space<vmem>>, vector<1x128xf32>
    %138 = vector.extract_strided_slice %3 {offsets = [0, 12], sizes = [32, 1], strides = [1, 1]} : vector<32x128xf32> to vector<32x1xf32>
    %cst_41 = arith.constant 0.000000e+00 : f32
    %139 = vector.broadcast %cst_41 : f32 to vector<32x1xf32>
    %140 = arith.cmpf one, %138, %139 : vector<32x1xf32>
    %cst_42 = arith.constant 0xFF800000 : f32
    %141 = vector.shape_cast %140 : vector<32x1xi1> to vector<32x1xi1>
    %142 = vector.broadcast %141 : vector<32x1xi1> to vector<32x128xi1>
    %143 = vector.shape_cast %137 : vector<1x128xf32> to vector<1x128xf32>
    %144 = vector.broadcast %143 : vector<1x128xf32> to vector<32x128xf32>
    %145 = vector.broadcast %cst_42 : f32 to vector<32x128xf32>
    %146 = arith.select %142, %144, %145 : vector<32x128xi1>, vector<32x128xf32>
    %147 = arith.maximumf %136, %146 : vector<32x128xf32>
    %c13 = arith.constant 13 : index
    %c0_43 = arith.constant 0 : index
    %148 = vector.load %arg4[%c13, %c0_43] : memref<128x128xf32, #tpu.memory_space<vmem>>, vector<1x128xf32>
    %149 = vector.extract_strided_slice %3 {offsets = [0, 13], sizes = [32, 1], strides = [1, 1]} : vector<32x128xf32> to vector<32x1xf32>
    %cst_44 = arith.constant 0.000000e+00 : f32
    %150 = vector.broadcast %cst_44 : f32 to vector<32x1xf32>
    %151 = arith.cmpf one, %149, %150 : vector<32x1xf32>
    %cst_45 = arith.constant 0xFF800000 : f32
    %152 = vector.shape_cast %151 : vector<32x1xi1> to vector<32x1xi1>
    %153 = vector.broadcast %152 : vector<32x1xi1> to vector<32x128xi1>
    %154 = vector.shape_cast %148 : vector<1x128xf32> to vector<1x128xf32>
    %155 = vector.broadcast %154 : vector<1x128xf32> to vector<32x128xf32>
    %156 = vector.broadcast %cst_45 : f32 to vector<32x128xf32>
    %157 = arith.select %153, %155, %156 : vector<32x128xi1>, vector<32x128xf32>
    %158 = arith.maximumf %147, %157 : vector<32x128xf32>
    %c14 = arith.constant 14 : index
    %c0_46 = arith.constant 0 : index
    %159 = vector.load %arg4[%c14, %c0_46] : memref<128x128xf32, #tpu.memory_space<vmem>>, vector<1x128xf32>
    %160 = vector.extract_strided_slice %3 {offsets = [0, 14], sizes = [32, 1], strides = [1, 1]} : vector<32x128xf32> to vector<32x1xf32>
    %cst_47 = arith.constant 0.000000e+00 : f32
    %161 = vector.broadcast %cst_47 : f32 to vector<32x1xf32>
    %162 = arith.cmpf one, %160, %161 : vector<32x1xf32>
    %cst_48 = arith.constant 0xFF800000 : f32
    %163 = vector.shape_cast %162 : vector<32x1xi1> to vector<32x1xi1>
    %164 = vector.broadcast %163 : vector<32x1xi1> to vector<32x128xi1>
    %165 = vector.shape_cast %159 : vector<1x128xf32> to vector<1x128xf32>
    %166 = vector.broadcast %165 : vector<1x128xf32> to vector<32x128xf32>
    %167 = vector.broadcast %cst_48 : f32 to vector<32x128xf32>
    %168 = arith.select %164, %166, %167 : vector<32x128xi1>, vector<32x128xf32>
    %169 = arith.maximumf %158, %168 : vector<32x128xf32>
    %c15 = arith.constant 15 : index
    %c0_49 = arith.constant 0 : index
    %170 = vector.load %arg4[%c15, %c0_49] : memref<128x128xf32, #tpu.memory_space<vmem>>, vector<1x128xf32>
    %171 = vector.extract_strided_slice %3 {offsets = [0, 15], sizes = [32, 1], strides = [1, 1]} : vector<32x128xf32> to vector<32x1xf32>
    %cst_50 = arith.constant 0.000000e+00 : f32
    %172 = vector.broadcast %cst_50 : f32 to vector<32x1xf32>
    %173 = arith.cmpf one, %171, %172 : vector<32x1xf32>
    %cst_51 = arith.constant 0xFF800000 : f32
    %174 = vector.shape_cast %173 : vector<32x1xi1> to vector<32x1xi1>
    %175 = vector.broadcast %174 : vector<32x1xi1> to vector<32x128xi1>
    %176 = vector.shape_cast %170 : vector<1x128xf32> to vector<1x128xf32>
    %177 = vector.broadcast %176 : vector<1x128xf32> to vector<32x128xf32>
    %178 = vector.broadcast %cst_51 : f32 to vector<32x128xf32>
    %179 = arith.select %175, %177, %178 : vector<32x128xi1>, vector<32x128xf32>
    %180 = arith.maximumf %169, %179 : vector<32x128xf32>
    %c16 = arith.constant 16 : index
    %c0_52 = arith.constant 0 : index
    %181 = vector.load %arg4[%c16, %c0_52] : memref<128x128xf32, #tpu.memory_space<vmem>>, vector<1x128xf32>
    %182 = vector.extract_strided_slice %3 {offsets = [0, 16], sizes = [32, 1], strides = [1, 1]} : vector<32x128xf32> to vector<32x1xf32>
    %cst_53 = arith.constant 0.000000e+00 : f32
    %183 = vector.broadcast %cst_53 : f32 to vector<32x1xf32>
    %184 = arith.cmpf one, %182, %183 : vector<32x1xf32>
    %cst_54 = arith.constant 0xFF800000 : f32
    %185 = vector.shape_cast %184 : vector<32x1xi1> to vector<32x1xi1>
    %186 = vector.broadcast %185 : vector<32x1xi1> to vector<32x128xi1>
    %187 = vector.shape_cast %181 : vector<1x128xf32> to vector<1x128xf32>
    %188 = vector.broadcast %187 : vector<1x128xf32> to vector<32x128xf32>
    %189 = vector.broadcast %cst_54 : f32 to vector<32x128xf32>
    %190 = arith.select %186, %188, %189 : vector<32x128xi1>, vector<32x128xf32>
    %191 = arith.maximumf %180, %190 : vector<32x128xf32>
    %c17 = arith.constant 17 : index
    %c0_55 = arith.constant 0 : index
    %192 = vector.load %arg4[%c17, %c0_55] : memref<128x128xf32, #tpu.memory_space<vmem>>, vector<1x128xf32>
    %193 = vector.extract_strided_slice %3 {offsets = [0, 17], sizes = [32, 1], strides = [1, 1]} : vector<32x128xf32> to vector<32x1xf32>
    %cst_56 = arith.constant 0.000000e+00 : f32
    %194 = vector.broadcast %cst_56 : f32 to vector<32x1xf32>
    %195 = arith.cmpf one, %193, %194 : vector<32x1xf32>
    %cst_57 = arith.constant 0xFF800000 : f32
    %196 = vector.shape_cast %195 : vector<32x1xi1> to vector<32x1xi1>
    %197 = vector.broadcast %196 : vector<32x1xi1> to vector<32x128xi1>
    %198 = vector.shape_cast %192 : vector<1x128xf32> to vector<1x128xf32>
    %199 = vector.broadcast %198 : vector<1x128xf32> to vector<32x128xf32>
    %200 = vector.broadcast %cst_57 : f32 to vector<32x128xf32>
    %201 = arith.select %197, %199, %200 : vector<32x128xi1>, vector<32x128xf32>
    %202 = arith.maximumf %191, %201 : vector<32x128xf32>
    %c18 = arith.constant 18 : index
    %c0_58 = arith.constant 0 : index
    %203 = vector.load %arg4[%c18, %c0_58] : memref<128x128xf32, #tpu.memory_space<vmem>>, vector<1x128xf32>
    %204 = vector.extract_strided_slice %3 {offsets = [0, 18], sizes = [32, 1], strides = [1, 1]} : vector<32x128xf32> to vector<32x1xf32>
    %cst_59 = arith.constant 0.000000e+00 : f32
    %205 = vector.broadcast %cst_59 : f32 to vector<32x1xf32>
    %206 = arith.cmpf one, %204, %205 : vector<32x1xf32>
    %cst_60 = arith.constant 0xFF800000 : f32
    %207 = vector.shape_cast %206 : vector<32x1xi1> to vector<32x1xi1>
    %208 = vector.broadcast %207 : vector<32x1xi1> to vector<32x128xi1>
    %209 = vector.shape_cast %203 : vector<1x128xf32> to vector<1x128xf32>
    %210 = vector.broadcast %209 : vector<1x128xf32> to vector<32x128xf32>
    %211 = vector.broadcast %cst_60 : f32 to vector<32x128xf32>
    %212 = arith.select %208, %210, %211 : vector<32x128xi1>, vector<32x128xf32>
    %213 = arith.maximumf %202, %212 : vector<32x128xf32>
    %c19 = arith.constant 19 : index
    %c0_61 = arith.constant 0 : index
    %214 = vector.load %arg4[%c19, %c0_61] : memref<128x128xf32, #tpu.memory_space<vmem>>, vector<1x128xf32>
    %215 = vector.extract_strided_slice %3 {offsets = [0, 19], sizes = [32, 1], strides = [1, 1]} : vector<32x128xf32> to vector<32x1xf32>
    %cst_62 = arith.constant 0.000000e+00 : f32
    %216 = vector.broadcast %cst_62 : f32 to vector<32x1xf32>
    %217 = arith.cmpf one, %215, %216 : vector<32x1xf32>
    %cst_63 = arith.constant 0xFF800000 : f32
    %218 = vector.shape_cast %217 : vector<32x1xi1> to vector<32x1xi1>
    %219 = vector.broadcast %218 : vector<32x1xi1> to vector<32x128xi1>
    %220 = vector.shape_cast %214 : vector<1x128xf32> to vector<1x128xf32>
    %221 = vector.broadcast %220 : vector<1x128xf32> to vector<32x128xf32>
    %222 = vector.broadcast %cst_63 : f32 to vector<32x128xf32>
    %223 = arith.select %219, %221, %222 : vector<32x128xi1>, vector<32x128xf32>
    %224 = arith.maximumf %213, %223 : vector<32x128xf32>
    %c20 = arith.constant 20 : index
    %c0_64 = arith.constant 0 : index
    %225 = vector.load %arg4[%c20, %c0_64] : memref<128x128xf32, #tpu.memory_space<vmem>>, vector<1x128xf32>
    %226 = vector.extract_strided_slice %3 {offsets = [0, 20], sizes = [32, 1], strides = [1, 1]} : vector<32x128xf32> to vector<32x1xf32>
    %cst_65 = arith.constant 0.000000e+00 : f32
    %227 = vector.broadcast %cst_65 : f32 to vector<32x1xf32>
    %228 = arith.cmpf one, %226, %227 : vector<32x1xf32>
    %cst_66 = arith.constant 0xFF800000 : f32
    %229 = vector.shape_cast %228 : vector<32x1xi1> to vector<32x1xi1>
    %230 = vector.broadcast %229 : vector<32x1xi1> to vector<32x128xi1>
    %231 = vector.shape_cast %225 : vector<1x128xf32> to vector<1x128xf32>
    %232 = vector.broadcast %231 : vector<1x128xf32> to vector<32x128xf32>
    %233 = vector.broadcast %cst_66 : f32 to vector<32x128xf32>
    %234 = arith.select %230, %232, %233 : vector<32x128xi1>, vector<32x128xf32>
    %235 = arith.maximumf %224, %234 : vector<32x128xf32>
    %c21 = arith.constant 21 : index
    %c0_67 = arith.constant 0 : index
    %236 = vector.load %arg4[%c21, %c0_67] : memref<128x128xf32, #tpu.memory_space<vmem>>, vector<1x128xf32>
    %237 = vector.extract_strided_slice %3 {offsets = [0, 21], sizes = [32, 1], strides = [1, 1]} : vector<32x128xf32> to vector<32x1xf32>
    %cst_68 = arith.constant 0.000000e+00 : f32
    %238 = vector.broadcast %cst_68 : f32 to vector<32x1xf32>
    %239 = arith.cmpf one, %237, %238 : vector<32x1xf32>
    %cst_69 = arith.constant 0xFF800000 : f32
    %240 = vector.shape_cast %239 : vector<32x1xi1> to vector<32x1xi1>
    %241 = vector.broadcast %240 : vector<32x1xi1> to vector<32x128xi1>
    %242 = vector.shape_cast %236 : vector<1x128xf32> to vector<1x128xf32>
    %243 = vector.broadcast %242 : vector<1x128xf32> to vector<32x128xf32>
    %244 = vector.broadcast %cst_69 : f32 to vector<32x128xf32>
    %245 = arith.select %241, %243, %244 : vector<32x128xi1>, vector<32x128xf32>
    %246 = arith.maximumf %235, %245 : vector<32x128xf32>
    %c22 = arith.constant 22 : index
    %c0_70 = arith.constant 0 : index
    %247 = vector.load %arg4[%c22, %c0_70] : memref<128x128xf32, #tpu.memory_space<vmem>>, vector<1x128xf32>
    %248 = vector.extract_strided_slice %3 {offsets = [0, 22], sizes = [32, 1], strides = [1, 1]} : vector<32x128xf32> to vector<32x1xf32>
    %cst_71 = arith.constant 0.000000e+00 : f32
    %249 = vector.broadcast %cst_71 : f32 to vector<32x1xf32>
    %250 = arith.cmpf one, %248, %249 : vector<32x1xf32>
    %cst_72 = arith.constant 0xFF800000 : f32
    %251 = vector.shape_cast %250 : vector<32x1xi1> to vector<32x1xi1>
    %252 = vector.broadcast %251 : vector<32x1xi1> to vector<32x128xi1>
    %253 = vector.shape_cast %247 : vector<1x128xf32> to vector<1x128xf32>
    %254 = vector.broadcast %253 : vector<1x128xf32> to vector<32x128xf32>
    %255 = vector.broadcast %cst_72 : f32 to vector<32x128xf32>
    %256 = arith.select %252, %254, %255 : vector<32x128xi1>, vector<32x128xf32>
    %257 = arith.maximumf %246, %256 : vector<32x128xf32>
    %c23 = arith.constant 23 : index
    %c0_73 = arith.constant 0 : index
    %258 = vector.load %arg4[%c23, %c0_73] : memref<128x128xf32, #tpu.memory_space<vmem>>, vector<1x128xf32>
    %259 = vector.extract_strided_slice %3 {offsets = [0, 23], sizes = [32, 1], strides = [1, 1]} : vector<32x128xf32> to vector<32x1xf32>
    %cst_74 = arith.constant 0.000000e+00 : f32
    %260 = vector.broadcast %cst_74 : f32 to vector<32x1xf32>
    %261 = arith.cmpf one, %259, %260 : vector<32x1xf32>
    %cst_75 = arith.constant 0xFF800000 : f32
    %262 = vector.shape_cast %261 : vector<32x1xi1> to vector<32x1xi1>
    %263 = vector.broadcast %262 : vector<32x1xi1> to vector<32x128xi1>
    %264 = vector.shape_cast %258 : vector<1x128xf32> to vector<1x128xf32>
    %265 = vector.broadcast %264 : vector<1x128xf32> to vector<32x128xf32>
    %266 = vector.broadcast %cst_75 : f32 to vector<32x128xf32>
    %267 = arith.select %263, %265, %266 : vector<32x128xi1>, vector<32x128xf32>
    %268 = arith.maximumf %257, %267 : vector<32x128xf32>
    %c24 = arith.constant 24 : index
    %c0_76 = arith.constant 0 : index
    %269 = vector.load %arg4[%c24, %c0_76] : memref<128x128xf32, #tpu.memory_space<vmem>>, vector<1x128xf32>
    %270 = vector.extract_strided_slice %3 {offsets = [0, 24], sizes = [32, 1], strides = [1, 1]} : vector<32x128xf32> to vector<32x1xf32>
    %cst_77 = arith.constant 0.000000e+00 : f32
    %271 = vector.broadcast %cst_77 : f32 to vector<32x1xf32>
    %272 = arith.cmpf one, %270, %271 : vector<32x1xf32>
    %cst_78 = arith.constant 0xFF800000 : f32
    %273 = vector.shape_cast %272 : vector<32x1xi1> to vector<32x1xi1>
    %274 = vector.broadcast %273 : vector<32x1xi1> to vector<32x128xi1>
    %275 = vector.shape_cast %269 : vector<1x128xf32> to vector<1x128xf32>
    %276 = vector.broadcast %275 : vector<1x128xf32> to vector<32x128xf32>
    %277 = vector.broadcast %cst_78 : f32 to vector<32x128xf32>
    %278 = arith.select %274, %276, %277 : vector<32x128xi1>, vector<32x128xf32>
    %279 = arith.maximumf %268, %278 : vector<32x128xf32>
    %c25 = arith.constant 25 : index
    %c0_79 = arith.constant 0 : index
    %280 = vector.load %arg4[%c25, %c0_79] : memref<128x128xf32, #tpu.memory_space<vmem>>, vector<1x128xf32>
    %281 = vector.extract_strided_slice %3 {offsets = [0, 25], sizes = [32, 1], strides = [1, 1]} : vector<32x128xf32> to vector<32x1xf32>
    %cst_80 = arith.constant 0.000000e+00 : f32
    %282 = vector.broadcast %cst_80 : f32 to vector<32x1xf32>
    %283 = arith.cmpf one, %281, %282 : vector<32x1xf32>
    %cst_81 = arith.constant 0xFF800000 : f32
    %284 = vector.shape_cast %283 : vector<32x1xi1> to vector<32x1xi1>
    %285 = vector.broadcast %284 : vector<32x1xi1> to vector<32x128xi1>
    %286 = vector.shape_cast %280 : vector<1x128xf32> to vector<1x128xf32>
    %287 = vector.broadcast %286 : vector<1x128xf32> to vector<32x128xf32>
    %288 = vector.broadcast %cst_81 : f32 to vector<32x128xf32>
    %289 = arith.select %285, %287, %288 : vector<32x128xi1>, vector<32x128xf32>
    %290 = arith.maximumf %279, %289 : vector<32x128xf32>
    %c26 = arith.constant 26 : index
    %c0_82 = arith.constant 0 : index
    %291 = vector.load %arg4[%c26, %c0_82] : memref<128x128xf32, #tpu.memory_space<vmem>>, vector<1x128xf32>
    %292 = vector.extract_strided_slice %3 {offsets = [0, 26], sizes = [32, 1], strides = [1, 1]} : vector<32x128xf32> to vector<32x1xf32>
    %cst_83 = arith.constant 0.000000e+00 : f32
    %293 = vector.broadcast %cst_83 : f32 to vector<32x1xf32>
    %294 = arith.cmpf one, %292, %293 : vector<32x1xf32>
    %cst_84 = arith.constant 0xFF800000 : f32
    %295 = vector.shape_cast %294 : vector<32x1xi1> to vector<32x1xi1>
    %296 = vector.broadcast %295 : vector<32x1xi1> to vector<32x128xi1>
    %297 = vector.shape_cast %291 : vector<1x128xf32> to vector<1x128xf32>
    %298 = vector.broadcast %297 : vector<1x128xf32> to vector<32x128xf32>
    %299 = vector.broadcast %cst_84 : f32 to vector<32x128xf32>
    %300 = arith.select %296, %298, %299 : vector<32x128xi1>, vector<32x128xf32>
    %301 = arith.maximumf %290, %300 : vector<32x128xf32>
    %c27 = arith.constant 27 : index
    %c0_85 = arith.constant 0 : index
    %302 = vector.load %arg4[%c27, %c0_85] : memref<128x128xf32, #tpu.memory_space<vmem>>, vector<1x128xf32>
    %303 = vector.extract_strided_slice %3 {offsets = [0, 27], sizes = [32, 1], strides = [1, 1]} : vector<32x128xf32> to vector<32x1xf32>
    %cst_86 = arith.constant 0.000000e+00 : f32
    %304 = vector.broadcast %cst_86 : f32 to vector<32x1xf32>
    %305 = arith.cmpf one, %303, %304 : vector<32x1xf32>
    %cst_87 = arith.constant 0xFF800000 : f32
    %306 = vector.shape_cast %305 : vector<32x1xi1> to vector<32x1xi1>
    %307 = vector.broadcast %306 : vector<32x1xi1> to vector<32x128xi1>
    %308 = vector.shape_cast %302 : vector<1x128xf32> to vector<1x128xf32>
    %309 = vector.broadcast %308 : vector<1x128xf32> to vector<32x128xf32>
    %310 = vector.broadcast %cst_87 : f32 to vector<32x128xf32>
    %311 = arith.select %307, %309, %310 : vector<32x128xi1>, vector<32x128xf32>
    %312 = arith.maximumf %301, %311 : vector<32x128xf32>
    %c28 = arith.constant 28 : index
    %c0_88 = arith.constant 0 : index
    %313 = vector.load %arg4[%c28, %c0_88] : memref<128x128xf32, #tpu.memory_space<vmem>>, vector<1x128xf32>
    %314 = vector.extract_strided_slice %3 {offsets = [0, 28], sizes = [32, 1], strides = [1, 1]} : vector<32x128xf32> to vector<32x1xf32>
    %cst_89 = arith.constant 0.000000e+00 : f32
    %315 = vector.broadcast %cst_89 : f32 to vector<32x1xf32>
    %316 = arith.cmpf one, %314, %315 : vector<32x1xf32>
    %cst_90 = arith.constant 0xFF800000 : f32
    %317 = vector.shape_cast %316 : vector<32x1xi1> to vector<32x1xi1>
    %318 = vector.broadcast %317 : vector<32x1xi1> to vector<32x128xi1>
    %319 = vector.shape_cast %313 : vector<1x128xf32> to vector<1x128xf32>
    %320 = vector.broadcast %319 : vector<1x128xf32> to vector<32x128xf32>
    %321 = vector.broadcast %cst_90 : f32 to vector<32x128xf32>
    %322 = arith.select %318, %320, %321 : vector<32x128xi1>, vector<32x128xf32>
    %323 = arith.maximumf %312, %322 : vector<32x128xf32>
    %c29 = arith.constant 29 : index
    %c0_91 = arith.constant 0 : index
    %324 = vector.load %arg4[%c29, %c0_91] : memref<128x128xf32, #tpu.memory_space<vmem>>, vector<1x128xf32>
    %325 = vector.extract_strided_slice %3 {offsets = [0, 29], sizes = [32, 1], strides = [1, 1]} : vector<32x128xf32> to vector<32x1xf32>
    %cst_92 = arith.constant 0.000000e+00 : f32
    %326 = vector.broadcast %cst_92 : f32 to vector<32x1xf32>
    %327 = arith.cmpf one, %325, %326 : vector<32x1xf32>
    %cst_93 = arith.constant 0xFF800000 : f32
    %328 = vector.shape_cast %327 : vector<32x1xi1> to vector<32x1xi1>
    %329 = vector.broadcast %328 : vector<32x1xi1> to vector<32x128xi1>
    %330 = vector.shape_cast %324 : vector<1x128xf32> to vector<1x128xf32>
    %331 = vector.broadcast %330 : vector<1x128xf32> to vector<32x128xf32>
    %332 = vector.broadcast %cst_93 : f32 to vector<32x128xf32>
    %333 = arith.select %329, %331, %332 : vector<32x128xi1>, vector<32x128xf32>
    %334 = arith.maximumf %323, %333 : vector<32x128xf32>
    %c30 = arith.constant 30 : index
    %c0_94 = arith.constant 0 : index
    %335 = vector.load %arg4[%c30, %c0_94] : memref<128x128xf32, #tpu.memory_space<vmem>>, vector<1x128xf32>
    %336 = vector.extract_strided_slice %3 {offsets = [0, 30], sizes = [32, 1], strides = [1, 1]} : vector<32x128xf32> to vector<32x1xf32>
    %cst_95 = arith.constant 0.000000e+00 : f32
    %337 = vector.broadcast %cst_95 : f32 to vector<32x1xf32>
    %338 = arith.cmpf one, %336, %337 : vector<32x1xf32>
    %cst_96 = arith.constant 0xFF800000 : f32
    %339 = vector.shape_cast %338 : vector<32x1xi1> to vector<32x1xi1>
    %340 = vector.broadcast %339 : vector<32x1xi1> to vector<32x128xi1>
    %341 = vector.shape_cast %335 : vector<1x128xf32> to vector<1x128xf32>
    %342 = vector.broadcast %341 : vector<1x128xf32> to vector<32x128xf32>
    %343 = vector.broadcast %cst_96 : f32 to vector<32x128xf32>
    %344 = arith.select %340, %342, %343 : vector<32x128xi1>, vector<32x128xf32>
    %345 = arith.maximumf %334, %344 : vector<32x128xf32>
    %c31 = arith.constant 31 : index
    %c0_97 = arith.constant 0 : index
    %346 = vector.load %arg4[%c31, %c0_97] : memref<128x128xf32, #tpu.memory_space<vmem>>, vector<1x128xf32>
    %347 = vector.extract_strided_slice %3 {offsets = [0, 31], sizes = [32, 1], strides = [1, 1]} : vector<32x128xf32> to vector<32x1xf32>
    %cst_98 = arith.constant 0.000000e+00 : f32
    %348 = vector.broadcast %cst_98 : f32 to vector<32x1xf32>
    %349 = arith.cmpf one, %347, %348 : vector<32x1xf32>
    %cst_99 = arith.constant 0xFF800000 : f32
    %350 = vector.shape_cast %349 : vector<32x1xi1> to vector<32x1xi1>
    %351 = vector.broadcast %350 : vector<32x1xi1> to vector<32x128xi1>
    %352 = vector.shape_cast %346 : vector<1x128xf32> to vector<1x128xf32>
    %353 = vector.broadcast %352 : vector<1x128xf32> to vector<32x128xf32>
    %354 = vector.broadcast %cst_99 : f32 to vector<32x128xf32>
    %355 = arith.select %351, %353, %354 : vector<32x128xi1>, vector<32x128xf32>
    %356 = arith.maximumf %345, %355 : vector<32x128xf32>
    %c32 = arith.constant 32 : index
    %c0_100 = arith.constant 0 : index
    %357 = vector.load %arg4[%c32, %c0_100] : memref<128x128xf32, #tpu.memory_space<vmem>>, vector<1x128xf32>
    %358 = vector.extract_strided_slice %3 {offsets = [0, 32], sizes = [32, 1], strides = [1, 1]} : vector<32x128xf32> to vector<32x1xf32>
    %cst_101 = arith.constant 0.000000e+00 : f32
    %359 = vector.broadcast %cst_101 : f32 to vector<32x1xf32>
    %360 = arith.cmpf one, %358, %359 : vector<32x1xf32>
    %cst_102 = arith.constant 0xFF800000 : f32
    %361 = vector.shape_cast %360 : vector<32x1xi1> to vector<32x1xi1>
    %362 = vector.broadcast %361 : vector<32x1xi1> to vector<32x128xi1>
    %363 = vector.shape_cast %357 : vector<1x128xf32> to vector<1x128xf32>
    %364 = vector.broadcast %363 : vector<1x128xf32> to vector<32x128xf32>
    %365 = vector.broadcast %cst_102 : f32 to vector<32x128xf32>
    %366 = arith.select %362, %364, %365 : vector<32x128xi1>, vector<32x128xf32>
    %367 = arith.maximumf %356, %366 : vector<32x128xf32>
    %c33 = arith.constant 33 : index
    %c0_103 = arith.constant 0 : index
    %368 = vector.load %arg4[%c33, %c0_103] : memref<128x128xf32, #tpu.memory_space<vmem>>, vector<1x128xf32>
    %369 = vector.extract_strided_slice %3 {offsets = [0, 33], sizes = [32, 1], strides = [1, 1]} : vector<32x128xf32> to vector<32x1xf32>
    %cst_104 = arith.constant 0.000000e+00 : f32
    %370 = vector.broadcast %cst_104 : f32 to vector<32x1xf32>
    %371 = arith.cmpf one, %369, %370 : vector<32x1xf32>
    %cst_105 = arith.constant 0xFF800000 : f32
    %372 = vector.shape_cast %371 : vector<32x1xi1> to vector<32x1xi1>
    %373 = vector.broadcast %372 : vector<32x1xi1> to vector<32x128xi1>
    %374 = vector.shape_cast %368 : vector<1x128xf32> to vector<1x128xf32>
    %375 = vector.broadcast %374 : vector<1x128xf32> to vector<32x128xf32>
    %376 = vector.broadcast %cst_105 : f32 to vector<32x128xf32>
    %377 = arith.select %373, %375, %376 : vector<32x128xi1>, vector<32x128xf32>
    %378 = arith.maximumf %367, %377 : vector<32x128xf32>
    %c34 = arith.constant 34 : index
    %c0_106 = arith.constant 0 : index
    %379 = vector.load %arg4[%c34, %c0_106] : memref<128x128xf32, #tpu.memory_space<vmem>>, vector<1x128xf32>
    %380 = vector.extract_strided_slice %3 {offsets = [0, 34], sizes = [32, 1], strides = [1, 1]} : vector<32x128xf32> to vector<32x1xf32>
    %cst_107 = arith.constant 0.000000e+00 : f32
    %381 = vector.broadcast %cst_107 : f32 to vector<32x1xf32>
    %382 = arith.cmpf one, %380, %381 : vector<32x1xf32>
    %cst_108 = arith.constant 0xFF800000 : f32
    %383 = vector.shape_cast %382 : vector<32x1xi1> to vector<32x1xi1>
    %384 = vector.broadcast %383 : vector<32x1xi1> to vector<32x128xi1>
    %385 = vector.shape_cast %379 : vector<1x128xf32> to vector<1x128xf32>
    %386 = vector.broadcast %385 : vector<1x128xf32> to vector<32x128xf32>
    %387 = vector.broadcast %cst_108 : f32 to vector<32x128xf32>
    %388 = arith.select %384, %386, %387 : vector<32x128xi1>, vector<32x128xf32>
    %389 = arith.maximumf %378, %388 : vector<32x128xf32>
    %c35 = arith.constant 35 : index
    %c0_109 = arith.constant 0 : index
    %390 = vector.load %arg4[%c35, %c0_109] : memref<128x128xf32, #tpu.memory_space<vmem>>, vector<1x128xf32>
    %391 = vector.extract_strided_slice %3 {offsets = [0, 35], sizes = [32, 1], strides = [1, 1]} : vector<32x128xf32> to vector<32x1xf32>
    %cst_110 = arith.constant 0.000000e+00 : f32
    %392 = vector.broadcast %cst_110 : f32 to vector<32x1xf32>
    %393 = arith.cmpf one, %391, %392 : vector<32x1xf32>
    %cst_111 = arith.constant 0xFF800000 : f32
    %394 = vector.shape_cast %393 : vector<32x1xi1> to vector<32x1xi1>
    %395 = vector.broadcast %394 : vector<32x1xi1> to vector<32x128xi1>
    %396 = vector.shape_cast %390 : vector<1x128xf32> to vector<1x128xf32>
    %397 = vector.broadcast %396 : vector<1x128xf32> to vector<32x128xf32>
    %398 = vector.broadcast %cst_111 : f32 to vector<32x128xf32>
    %399 = arith.select %395, %397, %398 : vector<32x128xi1>, vector<32x128xf32>
    %400 = arith.maximumf %389, %399 : vector<32x128xf32>
    %c36 = arith.constant 36 : index
    %c0_112 = arith.constant 0 : index
    %401 = vector.load %arg4[%c36, %c0_112] : memref<128x128xf32, #tpu.memory_space<vmem>>, vector<1x128xf32>
    %402 = vector.extract_strided_slice %3 {offsets = [0, 36], sizes = [32, 1], strides = [1, 1]} : vector<32x128xf32> to vector<32x1xf32>
    %cst_113 = arith.constant 0.000000e+00 : f32
    %403 = vector.broadcast %cst_113 : f32 to vector<32x1xf32>
    %404 = arith.cmpf one, %402, %403 : vector<32x1xf32>
    %cst_114 = arith.constant 0xFF800000 : f32
    %405 = vector.shape_cast %404 : vector<32x1xi1> to vector<32x1xi1>
    %406 = vector.broadcast %405 : vector<32x1xi1> to vector<32x128xi1>
    %407 = vector.shape_cast %401 : vector<1x128xf32> to vector<1x128xf32>
    %408 = vector.broadcast %407 : vector<1x128xf32> to vector<32x128xf32>
    %409 = vector.broadcast %cst_114 : f32 to vector<32x128xf32>
    %410 = arith.select %406, %408, %409 : vector<32x128xi1>, vector<32x128xf32>
    %411 = arith.maximumf %400, %410 : vector<32x128xf32>
    %c37 = arith.constant 37 : index
    %c0_115 = arith.constant 0 : index
    %412 = vector.load %arg4[%c37, %c0_115] : memref<128x128xf32, #tpu.memory_space<vmem>>, vector<1x128xf32>
    %413 = vector.extract_strided_slice %3 {offsets = [0, 37], sizes = [32, 1], strides = [1, 1]} : vector<32x128xf32> to vector<32x1xf32>
    %cst_116 = arith.constant 0.000000e+00 : f32
    %414 = vector.broadcast %cst_116 : f32 to vector<32x1xf32>
    %415 = arith.cmpf one, %413, %414 : vector<32x1xf32>
    %cst_117 = arith.constant 0xFF800000 : f32
    %416 = vector.shape_cast %415 : vector<32x1xi1> to vector<32x1xi1>
    %417 = vector.broadcast %416 : vector<32x1xi1> to vector<32x128xi1>
    %418 = vector.shape_cast %412 : vector<1x128xf32> to vector<1x128xf32>
    %419 = vector.broadcast %418 : vector<1x128xf32> to vector<32x128xf32>
    %420 = vector.broadcast %cst_117 : f32 to vector<32x128xf32>
    %421 = arith.select %417, %419, %420 : vector<32x128xi1>, vector<32x128xf32>
    %422 = arith.maximumf %411, %421 : vector<32x128xf32>
    %c38 = arith.constant 38 : index
    %c0_118 = arith.constant 0 : index
    %423 = vector.load %arg4[%c38, %c0_118] : memref<128x128xf32, #tpu.memory_space<vmem>>, vector<1x128xf32>
    %424 = vector.extract_strided_slice %3 {offsets = [0, 38], sizes = [32, 1], strides = [1, 1]} : vector<32x128xf32> to vector<32x1xf32>
    %cst_119 = arith.constant 0.000000e+00 : f32
    %425 = vector.broadcast %cst_119 : f32 to vector<32x1xf32>
    %426 = arith.cmpf one, %424, %425 : vector<32x1xf32>
    %cst_120 = arith.constant 0xFF800000 : f32
    %427 = vector.shape_cast %426 : vector<32x1xi1> to vector<32x1xi1>
    %428 = vector.broadcast %427 : vector<32x1xi1> to vector<32x128xi1>
    %429 = vector.shape_cast %423 : vector<1x128xf32> to vector<1x128xf32>
    %430 = vector.broadcast %429 : vector<1x128xf32> to vector<32x128xf32>
    %431 = vector.broadcast %cst_120 : f32 to vector<32x128xf32>
    %432 = arith.select %428, %430, %431 : vector<32x128xi1>, vector<32x128xf32>
    %433 = arith.maximumf %422, %432 : vector<32x128xf32>
    %c39 = arith.constant 39 : index
    %c0_121 = arith.constant 0 : index
    %434 = vector.load %arg4[%c39, %c0_121] : memref<128x128xf32, #tpu.memory_space<vmem>>, vector<1x128xf32>
    %435 = vector.extract_strided_slice %3 {offsets = [0, 39], sizes = [32, 1], strides = [1, 1]} : vector<32x128xf32> to vector<32x1xf32>
    %cst_122 = arith.constant 0.000000e+00 : f32
    %436 = vector.broadcast %cst_122 : f32 to vector<32x1xf32>
    %437 = arith.cmpf one, %435, %436 : vector<32x1xf32>
    %cst_123 = arith.constant 0xFF800000 : f32
    %438 = vector.shape_cast %437 : vector<32x1xi1> to vector<32x1xi1>
    %439 = vector.broadcast %438 : vector<32x1xi1> to vector<32x128xi1>
    %440 = vector.shape_cast %434 : vector<1x128xf32> to vector<1x128xf32>
    %441 = vector.broadcast %440 : vector<1x128xf32> to vector<32x128xf32>
    %442 = vector.broadcast %cst_123 : f32 to vector<32x128xf32>
    %443 = arith.select %439, %441, %442 : vector<32x128xi1>, vector<32x128xf32>
    %444 = arith.maximumf %433, %443 : vector<32x128xf32>
    %c40 = arith.constant 40 : index
    %c0_124 = arith.constant 0 : index
    %445 = vector.load %arg4[%c40, %c0_124] : memref<128x128xf32, #tpu.memory_space<vmem>>, vector<1x128xf32>
    %446 = vector.extract_strided_slice %3 {offsets = [0, 40], sizes = [32, 1], strides = [1, 1]} : vector<32x128xf32> to vector<32x1xf32>
    %cst_125 = arith.constant 0.000000e+00 : f32
    %447 = vector.broadcast %cst_125 : f32 to vector<32x1xf32>
    %448 = arith.cmpf one, %446, %447 : vector<32x1xf32>
    %cst_126 = arith.constant 0xFF800000 : f32
    %449 = vector.shape_cast %448 : vector<32x1xi1> to vector<32x1xi1>
    %450 = vector.broadcast %449 : vector<32x1xi1> to vector<32x128xi1>
    %451 = vector.shape_cast %445 : vector<1x128xf32> to vector<1x128xf32>
    %452 = vector.broadcast %451 : vector<1x128xf32> to vector<32x128xf32>
    %453 = vector.broadcast %cst_126 : f32 to vector<32x128xf32>
    %454 = arith.select %450, %452, %453 : vector<32x128xi1>, vector<32x128xf32>
    %455 = arith.maximumf %444, %454 : vector<32x128xf32>
    %c41 = arith.constant 41 : index
    %c0_127 = arith.constant 0 : index
    %456 = vector.load %arg4[%c41, %c0_127] : memref<128x128xf32, #tpu.memory_space<vmem>>, vector<1x128xf32>
    %457 = vector.extract_strided_slice %3 {offsets = [0, 41], sizes = [32, 1], strides = [1, 1]} : vector<32x128xf32> to vector<32x1xf32>
    %cst_128 = arith.constant 0.000000e+00 : f32
    %458 = vector.broadcast %cst_128 : f32 to vector<32x1xf32>
    %459 = arith.cmpf one, %457, %458 : vector<32x1xf32>
    %cst_129 = arith.constant 0xFF800000 : f32
    %460 = vector.shape_cast %459 : vector<32x1xi1> to vector<32x1xi1>
    %461 = vector.broadcast %460 : vector<32x1xi1> to vector<32x128xi1>
    %462 = vector.shape_cast %456 : vector<1x128xf32> to vector<1x128xf32>
    %463 = vector.broadcast %462 : vector<1x128xf32> to vector<32x128xf32>
    %464 = vector.broadcast %cst_129 : f32 to vector<32x128xf32>
    %465 = arith.select %461, %463, %464 : vector<32x128xi1>, vector<32x128xf32>
    %466 = arith.maximumf %455, %465 : vector<32x128xf32>
    %c42 = arith.constant 42 : index
    %c0_130 = arith.constant 0 : index
    %467 = vector.load %arg4[%c42, %c0_130] : memref<128x128xf32, #tpu.memory_space<vmem>>, vector<1x128xf32>
    %468 = vector.extract_strided_slice %3 {offsets = [0, 42], sizes = [32, 1], strides = [1, 1]} : vector<32x128xf32> to vector<32x1xf32>
    %cst_131 = arith.constant 0.000000e+00 : f32
    %469 = vector.broadcast %cst_131 : f32 to vector<32x1xf32>
    %470 = arith.cmpf one, %468, %469 : vector<32x1xf32>
    %cst_132 = arith.constant 0xFF800000 : f32
    %471 = vector.shape_cast %470 : vector<32x1xi1> to vector<32x1xi1>
    %472 = vector.broadcast %471 : vector<32x1xi1> to vector<32x128xi1>
    %473 = vector.shape_cast %467 : vector<1x128xf32> to vector<1x128xf32>
    %474 = vector.broadcast %473 : vector<1x128xf32> to vector<32x128xf32>
    %475 = vector.broadcast %cst_132 : f32 to vector<32x128xf32>
    %476 = arith.select %472, %474, %475 : vector<32x128xi1>, vector<32x128xf32>
    %477 = arith.maximumf %466, %476 : vector<32x128xf32>
    %c43 = arith.constant 43 : index
    %c0_133 = arith.constant 0 : index
    %478 = vector.load %arg4[%c43, %c0_133] : memref<128x128xf32, #tpu.memory_space<vmem>>, vector<1x128xf32>
    %479 = vector.extract_strided_slice %3 {offsets = [0, 43], sizes = [32, 1], strides = [1, 1]} : vector<32x128xf32> to vector<32x1xf32>
    %cst_134 = arith.constant 0.000000e+00 : f32
    %480 = vector.broadcast %cst_134 : f32 to vector<32x1xf32>
    %481 = arith.cmpf one, %479, %480 : vector<32x1xf32>
    %cst_135 = arith.constant 0xFF800000 : f32
    %482 = vector.shape_cast %481 : vector<32x1xi1> to vector<32x1xi1>
    %483 = vector.broadcast %482 : vector<32x1xi1> to vector<32x128xi1>
    %484 = vector.shape_cast %478 : vector<1x128xf32> to vector<1x128xf32>
    %485 = vector.broadcast %484 : vector<1x128xf32> to vector<32x128xf32>
    %486 = vector.broadcast %cst_135 : f32 to vector<32x128xf32>
    %487 = arith.select %483, %485, %486 : vector<32x128xi1>, vector<32x128xf32>
    %488 = arith.maximumf %477, %487 : vector<32x128xf32>
    %c44 = arith.constant 44 : index
    %c0_136 = arith.constant 0 : index
    %489 = vector.load %arg4[%c44, %c0_136] : memref<128x128xf32, #tpu.memory_space<vmem>>, vector<1x128xf32>
    %490 = vector.extract_strided_slice %3 {offsets = [0, 44], sizes = [32, 1], strides = [1, 1]} : vector<32x128xf32> to vector<32x1xf32>
    %cst_137 = arith.constant 0.000000e+00 : f32
    %491 = vector.broadcast %cst_137 : f32 to vector<32x1xf32>
    %492 = arith.cmpf one, %490, %491 : vector<32x1xf32>
    %cst_138 = arith.constant 0xFF800000 : f32
    %493 = vector.shape_cast %492 : vector<32x1xi1> to vector<32x1xi1>
    %494 = vector.broadcast %493 : vector<32x1xi1> to vector<32x128xi1>
    %495 = vector.shape_cast %489 : vector<1x128xf32> to vector<1x128xf32>
    %496 = vector.broadcast %495 : vector<1x128xf32> to vector<32x128xf32>
    %497 = vector.broadcast %cst_138 : f32 to vector<32x128xf32>
    %498 = arith.select %494, %496, %497 : vector<32x128xi1>, vector<32x128xf32>
    %499 = arith.maximumf %488, %498 : vector<32x128xf32>
    %c45 = arith.constant 45 : index
    %c0_139 = arith.constant 0 : index
    %500 = vector.load %arg4[%c45, %c0_139] : memref<128x128xf32, #tpu.memory_space<vmem>>, vector<1x128xf32>
    %501 = vector.extract_strided_slice %3 {offsets = [0, 45], sizes = [32, 1], strides = [1, 1]} : vector<32x128xf32> to vector<32x1xf32>
    %cst_140 = arith.constant 0.000000e+00 : f32
    %502 = vector.broadcast %cst_140 : f32 to vector<32x1xf32>
    %503 = arith.cmpf one, %501, %502 : vector<32x1xf32>
    %cst_141 = arith.constant 0xFF800000 : f32
    %504 = vector.shape_cast %503 : vector<32x1xi1> to vector<32x1xi1>
    %505 = vector.broadcast %504 : vector<32x1xi1> to vector<32x128xi1>
    %506 = vector.shape_cast %500 : vector<1x128xf32> to vector<1x128xf32>
    %507 = vector.broadcast %506 : vector<1x128xf32> to vector<32x128xf32>
    %508 = vector.broadcast %cst_141 : f32 to vector<32x128xf32>
    %509 = arith.select %505, %507, %508 : vector<32x128xi1>, vector<32x128xf32>
    %510 = arith.maximumf %499, %509 : vector<32x128xf32>
    %c46 = arith.constant 46 : index
    %c0_142 = arith.constant 0 : index
    %511 = vector.load %arg4[%c46, %c0_142] : memref<128x128xf32, #tpu.memory_space<vmem>>, vector<1x128xf32>
    %512 = vector.extract_strided_slice %3 {offsets = [0, 46], sizes = [32, 1], strides = [1, 1]} : vector<32x128xf32> to vector<32x1xf32>
    %cst_143 = arith.constant 0.000000e+00 : f32
    %513 = vector.broadcast %cst_143 : f32 to vector<32x1xf32>
    %514 = arith.cmpf one, %512, %513 : vector<32x1xf32>
    %cst_144 = arith.constant 0xFF800000 : f32
    %515 = vector.shape_cast %514 : vector<32x1xi1> to vector<32x1xi1>
    %516 = vector.broadcast %515 : vector<32x1xi1> to vector<32x128xi1>
    %517 = vector.shape_cast %511 : vector<1x128xf32> to vector<1x128xf32>
    %518 = vector.broadcast %517 : vector<1x128xf32> to vector<32x128xf32>
    %519 = vector.broadcast %cst_144 : f32 to vector<32x128xf32>
    %520 = arith.select %516, %518, %519 : vector<32x128xi1>, vector<32x128xf32>
    %521 = arith.maximumf %510, %520 : vector<32x128xf32>
    %c47 = arith.constant 47 : index
    %c0_145 = arith.constant 0 : index
    %522 = vector.load %arg4[%c47, %c0_145] : memref<128x128xf32, #tpu.memory_space<vmem>>, vector<1x128xf32>
    %523 = vector.extract_strided_slice %3 {offsets = [0, 47], sizes = [32, 1], strides = [1, 1]} : vector<32x128xf32> to vector<32x1xf32>
    %cst_146 = arith.constant 0.000000e+00 : f32
    %524 = vector.broadcast %cst_146 : f32 to vector<32x1xf32>
    %525 = arith.cmpf one, %523, %524 : vector<32x1xf32>
    %cst_147 = arith.constant 0xFF800000 : f32
    %526 = vector.shape_cast %525 : vector<32x1xi1> to vector<32x1xi1>
    %527 = vector.broadcast %526 : vector<32x1xi1> to vector<32x128xi1>
    %528 = vector.shape_cast %522 : vector<1x128xf32> to vector<1x128xf32>
    %529 = vector.broadcast %528 : vector<1x128xf32> to vector<32x128xf32>
    %530 = vector.broadcast %cst_147 : f32 to vector<32x128xf32>
    %531 = arith.select %527, %529, %530 : vector<32x128xi1>, vector<32x128xf32>
    %532 = arith.maximumf %521, %531 : vector<32x128xf32>
    %c48 = arith.constant 48 : index
    %c0_148 = arith.constant 0 : index
    %533 = vector.load %arg4[%c48, %c0_148] : memref<128x128xf32, #tpu.memory_space<vmem>>, vector<1x128xf32>
    %534 = vector.extract_strided_slice %3 {offsets = [0, 48], sizes = [32, 1], strides = [1, 1]} : vector<32x128xf32> to vector<32x1xf32>
    %cst_149 = arith.constant 0.000000e+00 : f32
    %535 = vector.broadcast %cst_149 : f32 to vector<32x1xf32>
    %536 = arith.cmpf one, %534, %535 : vector<32x1xf32>
    %cst_150 = arith.constant 0xFF800000 : f32
    %537 = vector.shape_cast %536 : vector<32x1xi1> to vector<32x1xi1>
    %538 = vector.broadcast %537 : vector<32x1xi1> to vector<32x128xi1>
    %539 = vector.shape_cast %533 : vector<1x128xf32> to vector<1x128xf32>
    %540 = vector.broadcast %539 : vector<1x128xf32> to vector<32x128xf32>
    %541 = vector.broadcast %cst_150 : f32 to vector<32x128xf32>
    %542 = arith.select %538, %540, %541 : vector<32x128xi1>, vector<32x128xf32>
    %543 = arith.maximumf %532, %542 : vector<32x128xf32>
    %c49 = arith.constant 49 : index
    %c0_151 = arith.constant 0 : index
    %544 = vector.load %arg4[%c49, %c0_151] : memref<128x128xf32, #tpu.memory_space<vmem>>, vector<1x128xf32>
    %545 = vector.extract_strided_slice %3 {offsets = [0, 49], sizes = [32, 1], strides = [1, 1]} : vector<32x128xf32> to vector<32x1xf32>
    %cst_152 = arith.constant 0.000000e+00 : f32
    %546 = vector.broadcast %cst_152 : f32 to vector<32x1xf32>
    %547 = arith.cmpf one, %545, %546 : vector<32x1xf32>
    %cst_153 = arith.constant 0xFF800000 : f32
    %548 = vector.shape_cast %547 : vector<32x1xi1> to vector<32x1xi1>
    %549 = vector.broadcast %548 : vector<32x1xi1> to vector<32x128xi1>
    %550 = vector.shape_cast %544 : vector<1x128xf32> to vector<1x128xf32>
    %551 = vector.broadcast %550 : vector<1x128xf32> to vector<32x128xf32>
    %552 = vector.broadcast %cst_153 : f32 to vector<32x128xf32>
    %553 = arith.select %549, %551, %552 : vector<32x128xi1>, vector<32x128xf32>
    %554 = arith.maximumf %543, %553 : vector<32x128xf32>
    %c50 = arith.constant 50 : index
    %c0_154 = arith.constant 0 : index
    %555 = vector.load %arg4[%c50, %c0_154] : memref<128x128xf32, #tpu.memory_space<vmem>>, vector<1x128xf32>
    %556 = vector.extract_strided_slice %3 {offsets = [0, 50], sizes = [32, 1], strides = [1, 1]} : vector<32x128xf32> to vector<32x1xf32>
    %cst_155 = arith.constant 0.000000e+00 : f32
    %557 = vector.broadcast %cst_155 : f32 to vector<32x1xf32>
    %558 = arith.cmpf one, %556, %557 : vector<32x1xf32>
    %cst_156 = arith.constant 0xFF800000 : f32
    %559 = vector.shape_cast %558 : vector<32x1xi1> to vector<32x1xi1>
    %560 = vector.broadcast %559 : vector<32x1xi1> to vector<32x128xi1>
    %561 = vector.shape_cast %555 : vector<1x128xf32> to vector<1x128xf32>
    %562 = vector.broadcast %561 : vector<1x128xf32> to vector<32x128xf32>
    %563 = vector.broadcast %cst_156 : f32 to vector<32x128xf32>
    %564 = arith.select %560, %562, %563 : vector<32x128xi1>, vector<32x128xf32>
    %565 = arith.maximumf %554, %564 : vector<32x128xf32>
    %c51 = arith.constant 51 : index
    %c0_157 = arith.constant 0 : index
    %566 = vector.load %arg4[%c51, %c0_157] : memref<128x128xf32, #tpu.memory_space<vmem>>, vector<1x128xf32>
    %567 = vector.extract_strided_slice %3 {offsets = [0, 51], sizes = [32, 1], strides = [1, 1]} : vector<32x128xf32> to vector<32x1xf32>
    %cst_158 = arith.constant 0.000000e+00 : f32
    %568 = vector.broadcast %cst_158 : f32 to vector<32x1xf32>
    %569 = arith.cmpf one, %567, %568 : vector<32x1xf32>
    %cst_159 = arith.constant 0xFF800000 : f32
    %570 = vector.shape_cast %569 : vector<32x1xi1> to vector<32x1xi1>
    %571 = vector.broadcast %570 : vector<32x1xi1> to vector<32x128xi1>
    %572 = vector.shape_cast %566 : vector<1x128xf32> to vector<1x128xf32>
    %573 = vector.broadcast %572 : vector<1x128xf32> to vector<32x128xf32>
    %574 = vector.broadcast %cst_159 : f32 to vector<32x128xf32>
    %575 = arith.select %571, %573, %574 : vector<32x128xi1>, vector<32x128xf32>
    %576 = arith.maximumf %565, %575 : vector<32x128xf32>
    %c52 = arith.constant 52 : index
    %c0_160 = arith.constant 0 : index
    %577 = vector.load %arg4[%c52, %c0_160] : memref<128x128xf32, #tpu.memory_space<vmem>>, vector<1x128xf32>
    %578 = vector.extract_strided_slice %3 {offsets = [0, 52], sizes = [32, 1], strides = [1, 1]} : vector<32x128xf32> to vector<32x1xf32>
    %cst_161 = arith.constant 0.000000e+00 : f32
    %579 = vector.broadcast %cst_161 : f32 to vector<32x1xf32>
    %580 = arith.cmpf one, %578, %579 : vector<32x1xf32>
    %cst_162 = arith.constant 0xFF800000 : f32
    %581 = vector.shape_cast %580 : vector<32x1xi1> to vector<32x1xi1>
    %582 = vector.broadcast %581 : vector<32x1xi1> to vector<32x128xi1>
    %583 = vector.shape_cast %577 : vector<1x128xf32> to vector<1x128xf32>
    %584 = vector.broadcast %583 : vector<1x128xf32> to vector<32x128xf32>
    %585 = vector.broadcast %cst_162 : f32 to vector<32x128xf32>
    %586 = arith.select %582, %584, %585 : vector<32x128xi1>, vector<32x128xf32>
    %587 = arith.maximumf %576, %586 : vector<32x128xf32>
    %c53 = arith.constant 53 : index
    %c0_163 = arith.constant 0 : index
    %588 = vector.load %arg4[%c53, %c0_163] : memref<128x128xf32, #tpu.memory_space<vmem>>, vector<1x128xf32>
    %589 = vector.extract_strided_slice %3 {offsets = [0, 53], sizes = [32, 1], strides = [1, 1]} : vector<32x128xf32> to vector<32x1xf32>
    %cst_164 = arith.constant 0.000000e+00 : f32
    %590 = vector.broadcast %cst_164 : f32 to vector<32x1xf32>
    %591 = arith.cmpf one, %589, %590 : vector<32x1xf32>
    %cst_165 = arith.constant 0xFF800000 : f32
    %592 = vector.shape_cast %591 : vector<32x1xi1> to vector<32x1xi1>
    %593 = vector.broadcast %592 : vector<32x1xi1> to vector<32x128xi1>
    %594 = vector.shape_cast %588 : vector<1x128xf32> to vector<1x128xf32>
    %595 = vector.broadcast %594 : vector<1x128xf32> to vector<32x128xf32>
    %596 = vector.broadcast %cst_165 : f32 to vector<32x128xf32>
    %597 = arith.select %593, %595, %596 : vector<32x128xi1>, vector<32x128xf32>
    %598 = arith.maximumf %587, %597 : vector<32x128xf32>
    %c54 = arith.constant 54 : index
    %c0_166 = arith.constant 0 : index
    %599 = vector.load %arg4[%c54, %c0_166] : memref<128x128xf32, #tpu.memory_space<vmem>>, vector<1x128xf32>
    %600 = vector.extract_strided_slice %3 {offsets = [0, 54], sizes = [32, 1], strides = [1, 1]} : vector<32x128xf32> to vector<32x1xf32>
    %cst_167 = arith.constant 0.000000e+00 : f32
    %601 = vector.broadcast %cst_167 : f32 to vector<32x1xf32>
    %602 = arith.cmpf one, %600, %601 : vector<32x1xf32>
    %cst_168 = arith.constant 0xFF800000 : f32
    %603 = vector.shape_cast %602 : vector<32x1xi1> to vector<32x1xi1>
    %604 = vector.broadcast %603 : vector<32x1xi1> to vector<32x128xi1>
    %605 = vector.shape_cast %599 : vector<1x128xf32> to vector<1x128xf32>
    %606 = vector.broadcast %605 : vector<1x128xf32> to vector<32x128xf32>
    %607 = vector.broadcast %cst_168 : f32 to vector<32x128xf32>
    %608 = arith.select %604, %606, %607 : vector<32x128xi1>, vector<32x128xf32>
    %609 = arith.maximumf %598, %608 : vector<32x128xf32>
    %c55 = arith.constant 55 : index
    %c0_169 = arith.constant 0 : index
    %610 = vector.load %arg4[%c55, %c0_169] : memref<128x128xf32, #tpu.memory_space<vmem>>, vector<1x128xf32>
    %611 = vector.extract_strided_slice %3 {offsets = [0, 55], sizes = [32, 1], strides = [1, 1]} : vector<32x128xf32> to vector<32x1xf32>
    %cst_170 = arith.constant 0.000000e+00 : f32
    %612 = vector.broadcast %cst_170 : f32 to vector<32x1xf32>
    %613 = arith.cmpf one, %611, %612 : vector<32x1xf32>
    %cst_171 = arith.constant 0xFF800000 : f32
    %614 = vector.shape_cast %613 : vector<32x1xi1> to vector<32x1xi1>
    %615 = vector.broadcast %614 : vector<32x1xi1> to vector<32x128xi1>
    %616 = vector.shape_cast %610 : vector<1x128xf32> to vector<1x128xf32>
    %617 = vector.broadcast %616 : vector<1x128xf32> to vector<32x128xf32>
    %618 = vector.broadcast %cst_171 : f32 to vector<32x128xf32>
    %619 = arith.select %615, %617, %618 : vector<32x128xi1>, vector<32x128xf32>
    %620 = arith.maximumf %609, %619 : vector<32x128xf32>
    %c56 = arith.constant 56 : index
    %c0_172 = arith.constant 0 : index
    %621 = vector.load %arg4[%c56, %c0_172] : memref<128x128xf32, #tpu.memory_space<vmem>>, vector<1x128xf32>
    %622 = vector.extract_strided_slice %3 {offsets = [0, 56], sizes = [32, 1], strides = [1, 1]} : vector<32x128xf32> to vector<32x1xf32>
    %cst_173 = arith.constant 0.000000e+00 : f32
    %623 = vector.broadcast %cst_173 : f32 to vector<32x1xf32>
    %624 = arith.cmpf one, %622, %623 : vector<32x1xf32>
    %cst_174 = arith.constant 0xFF800000 : f32
    %625 = vector.shape_cast %624 : vector<32x1xi1> to vector<32x1xi1>
    %626 = vector.broadcast %625 : vector<32x1xi1> to vector<32x128xi1>
    %627 = vector.shape_cast %621 : vector<1x128xf32> to vector<1x128xf32>
    %628 = vector.broadcast %627 : vector<1x128xf32> to vector<32x128xf32>
    %629 = vector.broadcast %cst_174 : f32 to vector<32x128xf32>
    %630 = arith.select %626, %628, %629 : vector<32x128xi1>, vector<32x128xf32>
    %631 = arith.maximumf %620, %630 : vector<32x128xf32>
    %c57 = arith.constant 57 : index
    %c0_175 = arith.constant 0 : index
    %632 = vector.load %arg4[%c57, %c0_175] : memref<128x128xf32, #tpu.memory_space<vmem>>, vector<1x128xf32>
    %633 = vector.extract_strided_slice %3 {offsets = [0, 57], sizes = [32, 1], strides = [1, 1]} : vector<32x128xf32> to vector<32x1xf32>
    %cst_176 = arith.constant 0.000000e+00 : f32
    %634 = vector.broadcast %cst_176 : f32 to vector<32x1xf32>
    %635 = arith.cmpf one, %633, %634 : vector<32x1xf32>
    %cst_177 = arith.constant 0xFF800000 : f32
    %636 = vector.shape_cast %635 : vector<32x1xi1> to vector<32x1xi1>
    %637 = vector.broadcast %636 : vector<32x1xi1> to vector<32x128xi1>
    %638 = vector.shape_cast %632 : vector<1x128xf32> to vector<1x128xf32>
    %639 = vector.broadcast %638 : vector<1x128xf32> to vector<32x128xf32>
    %640 = vector.broadcast %cst_177 : f32 to vector<32x128xf32>
    %641 = arith.select %637, %639, %640 : vector<32x128xi1>, vector<32x128xf32>
    %642 = arith.maximumf %631, %641 : vector<32x128xf32>
    %c58 = arith.constant 58 : index
    %c0_178 = arith.constant 0 : index
    %643 = vector.load %arg4[%c58, %c0_178] : memref<128x128xf32, #tpu.memory_space<vmem>>, vector<1x128xf32>
    %644 = vector.extract_strided_slice %3 {offsets = [0, 58], sizes = [32, 1], strides = [1, 1]} : vector<32x128xf32> to vector<32x1xf32>
    %cst_179 = arith.constant 0.000000e+00 : f32
    %645 = vector.broadcast %cst_179 : f32 to vector<32x1xf32>
    %646 = arith.cmpf one, %644, %645 : vector<32x1xf32>
    %cst_180 = arith.constant 0xFF800000 : f32
    %647 = vector.shape_cast %646 : vector<32x1xi1> to vector<32x1xi1>
    %648 = vector.broadcast %647 : vector<32x1xi1> to vector<32x128xi1>
    %649 = vector.shape_cast %643 : vector<1x128xf32> to vector<1x128xf32>
    %650 = vector.broadcast %649 : vector<1x128xf32> to vector<32x128xf32>
    %651 = vector.broadcast %cst_180 : f32 to vector<32x128xf32>
    %652 = arith.select %648, %650, %651 : vector<32x128xi1>, vector<32x128xf32>
    %653 = arith.maximumf %642, %652 : vector<32x128xf32>
    %c59 = arith.constant 59 : index
    %c0_181 = arith.constant 0 : index
    %654 = vector.load %arg4[%c59, %c0_181] : memref<128x128xf32, #tpu.memory_space<vmem>>, vector<1x128xf32>
    %655 = vector.extract_strided_slice %3 {offsets = [0, 59], sizes = [32, 1], strides = [1, 1]} : vector<32x128xf32> to vector<32x1xf32>
    %cst_182 = arith.constant 0.000000e+00 : f32
    %656 = vector.broadcast %cst_182 : f32 to vector<32x1xf32>
    %657 = arith.cmpf one, %655, %656 : vector<32x1xf32>
    %cst_183 = arith.constant 0xFF800000 : f32
    %658 = vector.shape_cast %657 : vector<32x1xi1> to vector<32x1xi1>
    %659 = vector.broadcast %658 : vector<32x1xi1> to vector<32x128xi1>
    %660 = vector.shape_cast %654 : vector<1x128xf32> to vector<1x128xf32>
    %661 = vector.broadcast %660 : vector<1x128xf32> to vector<32x128xf32>
    %662 = vector.broadcast %cst_183 : f32 to vector<32x128xf32>
    %663 = arith.select %659, %661, %662 : vector<32x128xi1>, vector<32x128xf32>
    %664 = arith.maximumf %653, %663 : vector<32x128xf32>
    %c60 = arith.constant 60 : index
    %c0_184 = arith.constant 0 : index
    %665 = vector.load %arg4[%c60, %c0_184] : memref<128x128xf32, #tpu.memory_space<vmem>>, vector<1x128xf32>
    %666 = vector.extract_strided_slice %3 {offsets = [0, 60], sizes = [32, 1], strides = [1, 1]} : vector<32x128xf32> to vector<32x1xf32>
    %cst_185 = arith.constant 0.000000e+00 : f32
    %667 = vector.broadcast %cst_185 : f32 to vector<32x1xf32>
    %668 = arith.cmpf one, %666, %667 : vector<32x1xf32>
    %cst_186 = arith.constant 0xFF800000 : f32
    %669 = vector.shape_cast %668 : vector<32x1xi1> to vector<32x1xi1>
    %670 = vector.broadcast %669 : vector<32x1xi1> to vector<32x128xi1>
    %671 = vector.shape_cast %665 : vector<1x128xf32> to vector<1x128xf32>
    %672 = vector.broadcast %671 : vector<1x128xf32> to vector<32x128xf32>
    %673 = vector.broadcast %cst_186 : f32 to vector<32x128xf32>
    %674 = arith.select %670, %672, %673 : vector<32x128xi1>, vector<32x128xf32>
    %675 = arith.maximumf %664, %674 : vector<32x128xf32>
    %c61 = arith.constant 61 : index
    %c0_187 = arith.constant 0 : index
    %676 = vector.load %arg4[%c61, %c0_187] : memref<128x128xf32, #tpu.memory_space<vmem>>, vector<1x128xf32>
    %677 = vector.extract_strided_slice %3 {offsets = [0, 61], sizes = [32, 1], strides = [1, 1]} : vector<32x128xf32> to vector<32x1xf32>
    %cst_188 = arith.constant 0.000000e+00 : f32
    %678 = vector.broadcast %cst_188 : f32 to vector<32x1xf32>
    %679 = arith.cmpf one, %677, %678 : vector<32x1xf32>
    %cst_189 = arith.constant 0xFF800000 : f32
    %680 = vector.shape_cast %679 : vector<32x1xi1> to vector<32x1xi1>
    %681 = vector.broadcast %680 : vector<32x1xi1> to vector<32x128xi1>
    %682 = vector.shape_cast %676 : vector<1x128xf32> to vector<1x128xf32>
    %683 = vector.broadcast %682 : vector<1x128xf32> to vector<32x128xf32>
    %684 = vector.broadcast %cst_189 : f32 to vector<32x128xf32>
    %685 = arith.select %681, %683, %684 : vector<32x128xi1>, vector<32x128xf32>
    %686 = arith.maximumf %675, %685 : vector<32x128xf32>
    %c62 = arith.constant 62 : index
    %c0_190 = arith.constant 0 : index
    %687 = vector.load %arg4[%c62, %c0_190] : memref<128x128xf32, #tpu.memory_space<vmem>>, vector<1x128xf32>
    %688 = vector.extract_strided_slice %3 {offsets = [0, 62], sizes = [32, 1], strides = [1, 1]} : vector<32x128xf32> to vector<32x1xf32>
    %cst_191 = arith.constant 0.000000e+00 : f32
    %689 = vector.broadcast %cst_191 : f32 to vector<32x1xf32>
    %690 = arith.cmpf one, %688, %689 : vector<32x1xf32>
    %cst_192 = arith.constant 0xFF800000 : f32
    %691 = vector.shape_cast %690 : vector<32x1xi1> to vector<32x1xi1>
    %692 = vector.broadcast %691 : vector<32x1xi1> to vector<32x128xi1>
    %693 = vector.shape_cast %687 : vector<1x128xf32> to vector<1x128xf32>
    %694 = vector.broadcast %693 : vector<1x128xf32> to vector<32x128xf32>
    %695 = vector.broadcast %cst_192 : f32 to vector<32x128xf32>
    %696 = arith.select %692, %694, %695 : vector<32x128xi1>, vector<32x128xf32>
    %697 = arith.maximumf %686, %696 : vector<32x128xf32>
    %c63 = arith.constant 63 : index
    %c0_193 = arith.constant 0 : index
    %698 = vector.load %arg4[%c63, %c0_193] : memref<128x128xf32, #tpu.memory_space<vmem>>, vector<1x128xf32>
    %699 = vector.extract_strided_slice %3 {offsets = [0, 63], sizes = [32, 1], strides = [1, 1]} : vector<32x128xf32> to vector<32x1xf32>
    %cst_194 = arith.constant 0.000000e+00 : f32
    %700 = vector.broadcast %cst_194 : f32 to vector<32x1xf32>
    %701 = arith.cmpf one, %699, %700 : vector<32x1xf32>
    %cst_195 = arith.constant 0xFF800000 : f32
    %702 = vector.shape_cast %701 : vector<32x1xi1> to vector<32x1xi1>
    %703 = vector.broadcast %702 : vector<32x1xi1> to vector<32x128xi1>
    %704 = vector.shape_cast %698 : vector<1x128xf32> to vector<1x128xf32>
    %705 = vector.broadcast %704 : vector<1x128xf32> to vector<32x128xf32>
    %706 = vector.broadcast %cst_195 : f32 to vector<32x128xf32>
    %707 = arith.select %703, %705, %706 : vector<32x128xi1>, vector<32x128xf32>
    %708 = arith.maximumf %697, %707 : vector<32x128xf32>
    %c64 = arith.constant 64 : index
    %c0_196 = arith.constant 0 : index
    %709 = vector.load %arg4[%c64, %c0_196] : memref<128x128xf32, #tpu.memory_space<vmem>>, vector<1x128xf32>
    %710 = vector.extract_strided_slice %3 {offsets = [0, 64], sizes = [32, 1], strides = [1, 1]} : vector<32x128xf32> to vector<32x1xf32>
    %cst_197 = arith.constant 0.000000e+00 : f32
    %711 = vector.broadcast %cst_197 : f32 to vector<32x1xf32>
    %712 = arith.cmpf one, %710, %711 : vector<32x1xf32>
    %cst_198 = arith.constant 0xFF800000 : f32
    %713 = vector.shape_cast %712 : vector<32x1xi1> to vector<32x1xi1>
    %714 = vector.broadcast %713 : vector<32x1xi1> to vector<32x128xi1>
    %715 = vector.shape_cast %709 : vector<1x128xf32> to vector<1x128xf32>
    %716 = vector.broadcast %715 : vector<1x128xf32> to vector<32x128xf32>
    %717 = vector.broadcast %cst_198 : f32 to vector<32x128xf32>
    %718 = arith.select %714, %716, %717 : vector<32x128xi1>, vector<32x128xf32>
    %719 = arith.maximumf %708, %718 : vector<32x128xf32>
    %c65 = arith.constant 65 : index
    %c0_199 = arith.constant 0 : index
    %720 = vector.load %arg4[%c65, %c0_199] : memref<128x128xf32, #tpu.memory_space<vmem>>, vector<1x128xf32>
    %721 = vector.extract_strided_slice %3 {offsets = [0, 65], sizes = [32, 1], strides = [1, 1]} : vector<32x128xf32> to vector<32x1xf32>
    %cst_200 = arith.constant 0.000000e+00 : f32
    %722 = vector.broadcast %cst_200 : f32 to vector<32x1xf32>
    %723 = arith.cmpf one, %721, %722 : vector<32x1xf32>
    %cst_201 = arith.constant 0xFF800000 : f32
    %724 = vector.shape_cast %723 : vector<32x1xi1> to vector<32x1xi1>
    %725 = vector.broadcast %724 : vector<32x1xi1> to vector<32x128xi1>
    %726 = vector.shape_cast %720 : vector<1x128xf32> to vector<1x128xf32>
    %727 = vector.broadcast %726 : vector<1x128xf32> to vector<32x128xf32>
    %728 = vector.broadcast %cst_201 : f32 to vector<32x128xf32>
    %729 = arith.select %725, %727, %728 : vector<32x128xi1>, vector<32x128xf32>
    %730 = arith.maximumf %719, %729 : vector<32x128xf32>
    %c66 = arith.constant 66 : index
    %c0_202 = arith.constant 0 : index
    %731 = vector.load %arg4[%c66, %c0_202] : memref<128x128xf32, #tpu.memory_space<vmem>>, vector<1x128xf32>
    %732 = vector.extract_strided_slice %3 {offsets = [0, 66], sizes = [32, 1], strides = [1, 1]} : vector<32x128xf32> to vector<32x1xf32>
    %cst_203 = arith.constant 0.000000e+00 : f32
    %733 = vector.broadcast %cst_203 : f32 to vector<32x1xf32>
    %734 = arith.cmpf one, %732, %733 : vector<32x1xf32>
    %cst_204 = arith.constant 0xFF800000 : f32
    %735 = vector.shape_cast %734 : vector<32x1xi1> to vector<32x1xi1>
    %736 = vector.broadcast %735 : vector<32x1xi1> to vector<32x128xi1>
    %737 = vector.shape_cast %731 : vector<1x128xf32> to vector<1x128xf32>
    %738 = vector.broadcast %737 : vector<1x128xf32> to vector<32x128xf32>
    %739 = vector.broadcast %cst_204 : f32 to vector<32x128xf32>
    %740 = arith.select %736, %738, %739 : vector<32x128xi1>, vector<32x128xf32>
    %741 = arith.maximumf %730, %740 : vector<32x128xf32>
    %c67 = arith.constant 67 : index
    %c0_205 = arith.constant 0 : index
    %742 = vector.load %arg4[%c67, %c0_205] : memref<128x128xf32, #tpu.memory_space<vmem>>, vector<1x128xf32>
    %743 = vector.extract_strided_slice %3 {offsets = [0, 67], sizes = [32, 1], strides = [1, 1]} : vector<32x128xf32> to vector<32x1xf32>
    %cst_206 = arith.constant 0.000000e+00 : f32
    %744 = vector.broadcast %cst_206 : f32 to vector<32x1xf32>
    %745 = arith.cmpf one, %743, %744 : vector<32x1xf32>
    %cst_207 = arith.constant 0xFF800000 : f32
    %746 = vector.shape_cast %745 : vector<32x1xi1> to vector<32x1xi1>
    %747 = vector.broadcast %746 : vector<32x1xi1> to vector<32x128xi1>
    %748 = vector.shape_cast %742 : vector<1x128xf32> to vector<1x128xf32>
    %749 = vector.broadcast %748 : vector<1x128xf32> to vector<32x128xf32>
    %750 = vector.broadcast %cst_207 : f32 to vector<32x128xf32>
    %751 = arith.select %747, %749, %750 : vector<32x128xi1>, vector<32x128xf32>
    %752 = arith.maximumf %741, %751 : vector<32x128xf32>
    %c68 = arith.constant 68 : index
    %c0_208 = arith.constant 0 : index
    %753 = vector.load %arg4[%c68, %c0_208] : memref<128x128xf32, #tpu.memory_space<vmem>>, vector<1x128xf32>
    %754 = vector.extract_strided_slice %3 {offsets = [0, 68], sizes = [32, 1], strides = [1, 1]} : vector<32x128xf32> to vector<32x1xf32>
    %cst_209 = arith.constant 0.000000e+00 : f32
    %755 = vector.broadcast %cst_209 : f32 to vector<32x1xf32>
    %756 = arith.cmpf one, %754, %755 : vector<32x1xf32>
    %cst_210 = arith.constant 0xFF800000 : f32
    %757 = vector.shape_cast %756 : vector<32x1xi1> to vector<32x1xi1>
    %758 = vector.broadcast %757 : vector<32x1xi1> to vector<32x128xi1>
    %759 = vector.shape_cast %753 : vector<1x128xf32> to vector<1x128xf32>
    %760 = vector.broadcast %759 : vector<1x128xf32> to vector<32x128xf32>
    %761 = vector.broadcast %cst_210 : f32 to vector<32x128xf32>
    %762 = arith.select %758, %760, %761 : vector<32x128xi1>, vector<32x128xf32>
    %763 = arith.maximumf %752, %762 : vector<32x128xf32>
    %c69 = arith.constant 69 : index
    %c0_211 = arith.constant 0 : index
    %764 = vector.load %arg4[%c69, %c0_211] : memref<128x128xf32, #tpu.memory_space<vmem>>, vector<1x128xf32>
    %765 = vector.extract_strided_slice %3 {offsets = [0, 69], sizes = [32, 1], strides = [1, 1]} : vector<32x128xf32> to vector<32x1xf32>
    %cst_212 = arith.constant 0.000000e+00 : f32
    %766 = vector.broadcast %cst_212 : f32 to vector<32x1xf32>
    %767 = arith.cmpf one, %765, %766 : vector<32x1xf32>
    %cst_213 = arith.constant 0xFF800000 : f32
    %768 = vector.shape_cast %767 : vector<32x1xi1> to vector<32x1xi1>
    %769 = vector.broadcast %768 : vector<32x1xi1> to vector<32x128xi1>
    %770 = vector.shape_cast %764 : vector<1x128xf32> to vector<1x128xf32>
    %771 = vector.broadcast %770 : vector<1x128xf32> to vector<32x128xf32>
    %772 = vector.broadcast %cst_213 : f32 to vector<32x128xf32>
    %773 = arith.select %769, %771, %772 : vector<32x128xi1>, vector<32x128xf32>
    %774 = arith.maximumf %763, %773 : vector<32x128xf32>
    %c70 = arith.constant 70 : index
    %c0_214 = arith.constant 0 : index
    %775 = vector.load %arg4[%c70, %c0_214] : memref<128x128xf32, #tpu.memory_space<vmem>>, vector<1x128xf32>
    %776 = vector.extract_strided_slice %3 {offsets = [0, 70], sizes = [32, 1], strides = [1, 1]} : vector<32x128xf32> to vector<32x1xf32>
    %cst_215 = arith.constant 0.000000e+00 : f32
    %777 = vector.broadcast %cst_215 : f32 to vector<32x1xf32>
    %778 = arith.cmpf one, %776, %777 : vector<32x1xf32>
    %cst_216 = arith.constant 0xFF800000 : f32
    %779 = vector.shape_cast %778 : vector<32x1xi1> to vector<32x1xi1>
    %780 = vector.broadcast %779 : vector<32x1xi1> to vector<32x128xi1>
    %781 = vector.shape_cast %775 : vector<1x128xf32> to vector<1x128xf32>
    %782 = vector.broadcast %781 : vector<1x128xf32> to vector<32x128xf32>
    %783 = vector.broadcast %cst_216 : f32 to vector<32x128xf32>
    %784 = arith.select %780, %782, %783 : vector<32x128xi1>, vector<32x128xf32>
    %785 = arith.maximumf %774, %784 : vector<32x128xf32>
    %c71 = arith.constant 71 : index
    %c0_217 = arith.constant 0 : index
    %786 = vector.load %arg4[%c71, %c0_217] : memref<128x128xf32, #tpu.memory_space<vmem>>, vector<1x128xf32>
    %787 = vector.extract_strided_slice %3 {offsets = [0, 71], sizes = [32, 1], strides = [1, 1]} : vector<32x128xf32> to vector<32x1xf32>
    %cst_218 = arith.constant 0.000000e+00 : f32
    %788 = vector.broadcast %cst_218 : f32 to vector<32x1xf32>
    %789 = arith.cmpf one, %787, %788 : vector<32x1xf32>
    %cst_219 = arith.constant 0xFF800000 : f32
    %790 = vector.shape_cast %789 : vector<32x1xi1> to vector<32x1xi1>
    %791 = vector.broadcast %790 : vector<32x1xi1> to vector<32x128xi1>
    %792 = vector.shape_cast %786 : vector<1x128xf32> to vector<1x128xf32>
    %793 = vector.broadcast %792 : vector<1x128xf32> to vector<32x128xf32>
    %794 = vector.broadcast %cst_219 : f32 to vector<32x128xf32>
    %795 = arith.select %791, %793, %794 : vector<32x128xi1>, vector<32x128xf32>
    %796 = arith.maximumf %785, %795 : vector<32x128xf32>
    %c72 = arith.constant 72 : index
    %c0_220 = arith.constant 0 : index
    %797 = vector.load %arg4[%c72, %c0_220] : memref<128x128xf32, #tpu.memory_space<vmem>>, vector<1x128xf32>
    %798 = vector.extract_strided_slice %3 {offsets = [0, 72], sizes = [32, 1], strides = [1, 1]} : vector<32x128xf32> to vector<32x1xf32>
    %cst_221 = arith.constant 0.000000e+00 : f32
    %799 = vector.broadcast %cst_221 : f32 to vector<32x1xf32>
    %800 = arith.cmpf one, %798, %799 : vector<32x1xf32>
    %cst_222 = arith.constant 0xFF800000 : f32
    %801 = vector.shape_cast %800 : vector<32x1xi1> to vector<32x1xi1>
    %802 = vector.broadcast %801 : vector<32x1xi1> to vector<32x128xi1>
    %803 = vector.shape_cast %797 : vector<1x128xf32> to vector<1x128xf32>
    %804 = vector.broadcast %803 : vector<1x128xf32> to vector<32x128xf32>
    %805 = vector.broadcast %cst_222 : f32 to vector<32x128xf32>
    %806 = arith.select %802, %804, %805 : vector<32x128xi1>, vector<32x128xf32>
    %807 = arith.maximumf %796, %806 : vector<32x128xf32>
    %c73 = arith.constant 73 : index
    %c0_223 = arith.constant 0 : index
    %808 = vector.load %arg4[%c73, %c0_223] : memref<128x128xf32, #tpu.memory_space<vmem>>, vector<1x128xf32>
    %809 = vector.extract_strided_slice %3 {offsets = [0, 73], sizes = [32, 1], strides = [1, 1]} : vector<32x128xf32> to vector<32x1xf32>
    %cst_224 = arith.constant 0.000000e+00 : f32
    %810 = vector.broadcast %cst_224 : f32 to vector<32x1xf32>
    %811 = arith.cmpf one, %809, %810 : vector<32x1xf32>
    %cst_225 = arith.constant 0xFF800000 : f32
    %812 = vector.shape_cast %811 : vector<32x1xi1> to vector<32x1xi1>
    %813 = vector.broadcast %812 : vector<32x1xi1> to vector<32x128xi1>
    %814 = vector.shape_cast %808 : vector<1x128xf32> to vector<1x128xf32>
    %815 = vector.broadcast %814 : vector<1x128xf32> to vector<32x128xf32>
    %816 = vector.broadcast %cst_225 : f32 to vector<32x128xf32>
    %817 = arith.select %813, %815, %816 : vector<32x128xi1>, vector<32x128xf32>
    %818 = arith.maximumf %807, %817 : vector<32x128xf32>
    %c74 = arith.constant 74 : index
    %c0_226 = arith.constant 0 : index
    %819 = vector.load %arg4[%c74, %c0_226] : memref<128x128xf32, #tpu.memory_space<vmem>>, vector<1x128xf32>
    %820 = vector.extract_strided_slice %3 {offsets = [0, 74], sizes = [32, 1], strides = [1, 1]} : vector<32x128xf32> to vector<32x1xf32>
    %cst_227 = arith.constant 0.000000e+00 : f32
    %821 = vector.broadcast %cst_227 : f32 to vector<32x1xf32>
    %822 = arith.cmpf one, %820, %821 : vector<32x1xf32>
    %cst_228 = arith.constant 0xFF800000 : f32
    %823 = vector.shape_cast %822 : vector<32x1xi1> to vector<32x1xi1>
    %824 = vector.broadcast %823 : vector<32x1xi1> to vector<32x128xi1>
    %825 = vector.shape_cast %819 : vector<1x128xf32> to vector<1x128xf32>
    %826 = vector.broadcast %825 : vector<1x128xf32> to vector<32x128xf32>
    %827 = vector.broadcast %cst_228 : f32 to vector<32x128xf32>
    %828 = arith.select %824, %826, %827 : vector<32x128xi1>, vector<32x128xf32>
    %829 = arith.maximumf %818, %828 : vector<32x128xf32>
    %c75 = arith.constant 75 : index
    %c0_229 = arith.constant 0 : index
    %830 = vector.load %arg4[%c75, %c0_229] : memref<128x128xf32, #tpu.memory_space<vmem>>, vector<1x128xf32>
    %831 = vector.extract_strided_slice %3 {offsets = [0, 75], sizes = [32, 1], strides = [1, 1]} : vector<32x128xf32> to vector<32x1xf32>
    %cst_230 = arith.constant 0.000000e+00 : f32
    %832 = vector.broadcast %cst_230 : f32 to vector<32x1xf32>
    %833 = arith.cmpf one, %831, %832 : vector<32x1xf32>
    %cst_231 = arith.constant 0xFF800000 : f32
    %834 = vector.shape_cast %833 : vector<32x1xi1> to vector<32x1xi1>
    %835 = vector.broadcast %834 : vector<32x1xi1> to vector<32x128xi1>
    %836 = vector.shape_cast %830 : vector<1x128xf32> to vector<1x128xf32>
    %837 = vector.broadcast %836 : vector<1x128xf32> to vector<32x128xf32>
    %838 = vector.broadcast %cst_231 : f32 to vector<32x128xf32>
    %839 = arith.select %835, %837, %838 : vector<32x128xi1>, vector<32x128xf32>
    %840 = arith.maximumf %829, %839 : vector<32x128xf32>
    %c76 = arith.constant 76 : index
    %c0_232 = arith.constant 0 : index
    %841 = vector.load %arg4[%c76, %c0_232] : memref<128x128xf32, #tpu.memory_space<vmem>>, vector<1x128xf32>
    %842 = vector.extract_strided_slice %3 {offsets = [0, 76], sizes = [32, 1], strides = [1, 1]} : vector<32x128xf32> to vector<32x1xf32>
    %cst_233 = arith.constant 0.000000e+00 : f32
    %843 = vector.broadcast %cst_233 : f32 to vector<32x1xf32>
    %844 = arith.cmpf one, %842, %843 : vector<32x1xf32>
    %cst_234 = arith.constant 0xFF800000 : f32
    %845 = vector.shape_cast %844 : vector<32x1xi1> to vector<32x1xi1>
    %846 = vector.broadcast %845 : vector<32x1xi1> to vector<32x128xi1>
    %847 = vector.shape_cast %841 : vector<1x128xf32> to vector<1x128xf32>
    %848 = vector.broadcast %847 : vector<1x128xf32> to vector<32x128xf32>
    %849 = vector.broadcast %cst_234 : f32 to vector<32x128xf32>
    %850 = arith.select %846, %848, %849 : vector<32x128xi1>, vector<32x128xf32>
    %851 = arith.maximumf %840, %850 : vector<32x128xf32>
    %c77 = arith.constant 77 : index
    %c0_235 = arith.constant 0 : index
    %852 = vector.load %arg4[%c77, %c0_235] : memref<128x128xf32, #tpu.memory_space<vmem>>, vector<1x128xf32>
    %853 = vector.extract_strided_slice %3 {offsets = [0, 77], sizes = [32, 1], strides = [1, 1]} : vector<32x128xf32> to vector<32x1xf32>
    %cst_236 = arith.constant 0.000000e+00 : f32
    %854 = vector.broadcast %cst_236 : f32 to vector<32x1xf32>
    %855 = arith.cmpf one, %853, %854 : vector<32x1xf32>
    %cst_237 = arith.constant 0xFF800000 : f32
    %856 = vector.shape_cast %855 : vector<32x1xi1> to vector<32x1xi1>
    %857 = vector.broadcast %856 : vector<32x1xi1> to vector<32x128xi1>
    %858 = vector.shape_cast %852 : vector<1x128xf32> to vector<1x128xf32>
    %859 = vector.broadcast %858 : vector<1x128xf32> to vector<32x128xf32>
    %860 = vector.broadcast %cst_237 : f32 to vector<32x128xf32>
    %861 = arith.select %857, %859, %860 : vector<32x128xi1>, vector<32x128xf32>
    %862 = arith.maximumf %851, %861 : vector<32x128xf32>
    %c78 = arith.constant 78 : index
    %c0_238 = arith.constant 0 : index
    %863 = vector.load %arg4[%c78, %c0_238] : memref<128x128xf32, #tpu.memory_space<vmem>>, vector<1x128xf32>
    %864 = vector.extract_strided_slice %3 {offsets = [0, 78], sizes = [32, 1], strides = [1, 1]} : vector<32x128xf32> to vector<32x1xf32>
    %cst_239 = arith.constant 0.000000e+00 : f32
    %865 = vector.broadcast %cst_239 : f32 to vector<32x1xf32>
    %866 = arith.cmpf one, %864, %865 : vector<32x1xf32>
    %cst_240 = arith.constant 0xFF800000 : f32
    %867 = vector.shape_cast %866 : vector<32x1xi1> to vector<32x1xi1>
    %868 = vector.broadcast %867 : vector<32x1xi1> to vector<32x128xi1>
    %869 = vector.shape_cast %863 : vector<1x128xf32> to vector<1x128xf32>
    %870 = vector.broadcast %869 : vector<1x128xf32> to vector<32x128xf32>
    %871 = vector.broadcast %cst_240 : f32 to vector<32x128xf32>
    %872 = arith.select %868, %870, %871 : vector<32x128xi1>, vector<32x128xf32>
    %873 = arith.maximumf %862, %872 : vector<32x128xf32>
    %c79 = arith.constant 79 : index
    %c0_241 = arith.constant 0 : index
    %874 = vector.load %arg4[%c79, %c0_241] : memref<128x128xf32, #tpu.memory_space<vmem>>, vector<1x128xf32>
    %875 = vector.extract_strided_slice %3 {offsets = [0, 79], sizes = [32, 1], strides = [1, 1]} : vector<32x128xf32> to vector<32x1xf32>
    %cst_242 = arith.constant 0.000000e+00 : f32
    %876 = vector.broadcast %cst_242 : f32 to vector<32x1xf32>
    %877 = arith.cmpf one, %875, %876 : vector<32x1xf32>
    %cst_243 = arith.constant 0xFF800000 : f32
    %878 = vector.shape_cast %877 : vector<32x1xi1> to vector<32x1xi1>
    %879 = vector.broadcast %878 : vector<32x1xi1> to vector<32x128xi1>
    %880 = vector.shape_cast %874 : vector<1x128xf32> to vector<1x128xf32>
    %881 = vector.broadcast %880 : vector<1x128xf32> to vector<32x128xf32>
    %882 = vector.broadcast %cst_243 : f32 to vector<32x128xf32>
    %883 = arith.select %879, %881, %882 : vector<32x128xi1>, vector<32x128xf32>
    %884 = arith.maximumf %873, %883 : vector<32x128xf32>
    %c80 = arith.constant 80 : index
    %c0_244 = arith.constant 0 : index
    %885 = vector.load %arg4[%c80, %c0_244] : memref<128x128xf32, #tpu.memory_space<vmem>>, vector<1x128xf32>
    %886 = vector.extract_strided_slice %3 {offsets = [0, 80], sizes = [32, 1], strides = [1, 1]} : vector<32x128xf32> to vector<32x1xf32>
    %cst_245 = arith.constant 0.000000e+00 : f32
    %887 = vector.broadcast %cst_245 : f32 to vector<32x1xf32>
    %888 = arith.cmpf one, %886, %887 : vector<32x1xf32>
    %cst_246 = arith.constant 0xFF800000 : f32
    %889 = vector.shape_cast %888 : vector<32x1xi1> to vector<32x1xi1>
    %890 = vector.broadcast %889 : vector<32x1xi1> to vector<32x128xi1>
    %891 = vector.shape_cast %885 : vector<1x128xf32> to vector<1x128xf32>
    %892 = vector.broadcast %891 : vector<1x128xf32> to vector<32x128xf32>
    %893 = vector.broadcast %cst_246 : f32 to vector<32x128xf32>
    %894 = arith.select %890, %892, %893 : vector<32x128xi1>, vector<32x128xf32>
    %895 = arith.maximumf %884, %894 : vector<32x128xf32>
    %c81 = arith.constant 81 : index
    %c0_247 = arith.constant 0 : index
    %896 = vector.load %arg4[%c81, %c0_247] : memref<128x128xf32, #tpu.memory_space<vmem>>, vector<1x128xf32>
    %897 = vector.extract_strided_slice %3 {offsets = [0, 81], sizes = [32, 1], strides = [1, 1]} : vector<32x128xf32> to vector<32x1xf32>
    %cst_248 = arith.constant 0.000000e+00 : f32
    %898 = vector.broadcast %cst_248 : f32 to vector<32x1xf32>
    %899 = arith.cmpf one, %897, %898 : vector<32x1xf32>
    %cst_249 = arith.constant 0xFF800000 : f32
    %900 = vector.shape_cast %899 : vector<32x1xi1> to vector<32x1xi1>
    %901 = vector.broadcast %900 : vector<32x1xi1> to vector<32x128xi1>
    %902 = vector.shape_cast %896 : vector<1x128xf32> to vector<1x128xf32>
    %903 = vector.broadcast %902 : vector<1x128xf32> to vector<32x128xf32>
    %904 = vector.broadcast %cst_249 : f32 to vector<32x128xf32>
    %905 = arith.select %901, %903, %904 : vector<32x128xi1>, vector<32x128xf32>
    %906 = arith.maximumf %895, %905 : vector<32x128xf32>
    %c82 = arith.constant 82 : index
    %c0_250 = arith.constant 0 : index
    %907 = vector.load %arg4[%c82, %c0_250] : memref<128x128xf32, #tpu.memory_space<vmem>>, vector<1x128xf32>
    %908 = vector.extract_strided_slice %3 {offsets = [0, 82], sizes = [32, 1], strides = [1, 1]} : vector<32x128xf32> to vector<32x1xf32>
    %cst_251 = arith.constant 0.000000e+00 : f32
    %909 = vector.broadcast %cst_251 : f32 to vector<32x1xf32>
    %910 = arith.cmpf one, %908, %909 : vector<32x1xf32>
    %cst_252 = arith.constant 0xFF800000 : f32
    %911 = vector.shape_cast %910 : vector<32x1xi1> to vector<32x1xi1>
    %912 = vector.broadcast %911 : vector<32x1xi1> to vector<32x128xi1>
    %913 = vector.shape_cast %907 : vector<1x128xf32> to vector<1x128xf32>
    %914 = vector.broadcast %913 : vector<1x128xf32> to vector<32x128xf32>
    %915 = vector.broadcast %cst_252 : f32 to vector<32x128xf32>
    %916 = arith.select %912, %914, %915 : vector<32x128xi1>, vector<32x128xf32>
    %917 = arith.maximumf %906, %916 : vector<32x128xf32>
    %c83 = arith.constant 83 : index
    %c0_253 = arith.constant 0 : index
    %918 = vector.load %arg4[%c83, %c0_253] : memref<128x128xf32, #tpu.memory_space<vmem>>, vector<1x128xf32>
    %919 = vector.extract_strided_slice %3 {offsets = [0, 83], sizes = [32, 1], strides = [1, 1]} : vector<32x128xf32> to vector<32x1xf32>
    %cst_254 = arith.constant 0.000000e+00 : f32
    %920 = vector.broadcast %cst_254 : f32 to vector<32x1xf32>
    %921 = arith.cmpf one, %919, %920 : vector<32x1xf32>
    %cst_255 = arith.constant 0xFF800000 : f32
    %922 = vector.shape_cast %921 : vector<32x1xi1> to vector<32x1xi1>
    %923 = vector.broadcast %922 : vector<32x1xi1> to vector<32x128xi1>
    %924 = vector.shape_cast %918 : vector<1x128xf32> to vector<1x128xf32>
    %925 = vector.broadcast %924 : vector<1x128xf32> to vector<32x128xf32>
    %926 = vector.broadcast %cst_255 : f32 to vector<32x128xf32>
    %927 = arith.select %923, %925, %926 : vector<32x128xi1>, vector<32x128xf32>
    %928 = arith.maximumf %917, %927 : vector<32x128xf32>
    %c84 = arith.constant 84 : index
    %c0_256 = arith.constant 0 : index
    %929 = vector.load %arg4[%c84, %c0_256] : memref<128x128xf32, #tpu.memory_space<vmem>>, vector<1x128xf32>
    %930 = vector.extract_strided_slice %3 {offsets = [0, 84], sizes = [32, 1], strides = [1, 1]} : vector<32x128xf32> to vector<32x1xf32>
    %cst_257 = arith.constant 0.000000e+00 : f32
    %931 = vector.broadcast %cst_257 : f32 to vector<32x1xf32>
    %932 = arith.cmpf one, %930, %931 : vector<32x1xf32>
    %cst_258 = arith.constant 0xFF800000 : f32
    %933 = vector.shape_cast %932 : vector<32x1xi1> to vector<32x1xi1>
    %934 = vector.broadcast %933 : vector<32x1xi1> to vector<32x128xi1>
    %935 = vector.shape_cast %929 : vector<1x128xf32> to vector<1x128xf32>
    %936 = vector.broadcast %935 : vector<1x128xf32> to vector<32x128xf32>
    %937 = vector.broadcast %cst_258 : f32 to vector<32x128xf32>
    %938 = arith.select %934, %936, %937 : vector<32x128xi1>, vector<32x128xf32>
    %939 = arith.maximumf %928, %938 : vector<32x128xf32>
    %c85 = arith.constant 85 : index
    %c0_259 = arith.constant 0 : index
    %940 = vector.load %arg4[%c85, %c0_259] : memref<128x128xf32, #tpu.memory_space<vmem>>, vector<1x128xf32>
    %941 = vector.extract_strided_slice %3 {offsets = [0, 85], sizes = [32, 1], strides = [1, 1]} : vector<32x128xf32> to vector<32x1xf32>
    %cst_260 = arith.constant 0.000000e+00 : f32
    %942 = vector.broadcast %cst_260 : f32 to vector<32x1xf32>
    %943 = arith.cmpf one, %941, %942 : vector<32x1xf32>
    %cst_261 = arith.constant 0xFF800000 : f32
    %944 = vector.shape_cast %943 : vector<32x1xi1> to vector<32x1xi1>
    %945 = vector.broadcast %944 : vector<32x1xi1> to vector<32x128xi1>
    %946 = vector.shape_cast %940 : vector<1x128xf32> to vector<1x128xf32>
    %947 = vector.broadcast %946 : vector<1x128xf32> to vector<32x128xf32>
    %948 = vector.broadcast %cst_261 : f32 to vector<32x128xf32>
    %949 = arith.select %945, %947, %948 : vector<32x128xi1>, vector<32x128xf32>
    %950 = arith.maximumf %939, %949 : vector<32x128xf32>
    %c86 = arith.constant 86 : index
    %c0_262 = arith.constant 0 : index
    %951 = vector.load %arg4[%c86, %c0_262] : memref<128x128xf32, #tpu.memory_space<vmem>>, vector<1x128xf32>
    %952 = vector.extract_strided_slice %3 {offsets = [0, 86], sizes = [32, 1], strides = [1, 1]} : vector<32x128xf32> to vector<32x1xf32>
    %cst_263 = arith.constant 0.000000e+00 : f32
    %953 = vector.broadcast %cst_263 : f32 to vector<32x1xf32>
    %954 = arith.cmpf one, %952, %953 : vector<32x1xf32>
    %cst_264 = arith.constant 0xFF800000 : f32
    %955 = vector.shape_cast %954 : vector<32x1xi1> to vector<32x1xi1>
    %956 = vector.broadcast %955 : vector<32x1xi1> to vector<32x128xi1>
    %957 = vector.shape_cast %951 : vector<1x128xf32> to vector<1x128xf32>
    %958 = vector.broadcast %957 : vector<1x128xf32> to vector<32x128xf32>
    %959 = vector.broadcast %cst_264 : f32 to vector<32x128xf32>
    %960 = arith.select %956, %958, %959 : vector<32x128xi1>, vector<32x128xf32>
    %961 = arith.maximumf %950, %960 : vector<32x128xf32>
    %c87 = arith.constant 87 : index
    %c0_265 = arith.constant 0 : index
    %962 = vector.load %arg4[%c87, %c0_265] : memref<128x128xf32, #tpu.memory_space<vmem>>, vector<1x128xf32>
    %963 = vector.extract_strided_slice %3 {offsets = [0, 87], sizes = [32, 1], strides = [1, 1]} : vector<32x128xf32> to vector<32x1xf32>
    %cst_266 = arith.constant 0.000000e+00 : f32
    %964 = vector.broadcast %cst_266 : f32 to vector<32x1xf32>
    %965 = arith.cmpf one, %963, %964 : vector<32x1xf32>
    %cst_267 = arith.constant 0xFF800000 : f32
    %966 = vector.shape_cast %965 : vector<32x1xi1> to vector<32x1xi1>
    %967 = vector.broadcast %966 : vector<32x1xi1> to vector<32x128xi1>
    %968 = vector.shape_cast %962 : vector<1x128xf32> to vector<1x128xf32>
    %969 = vector.broadcast %968 : vector<1x128xf32> to vector<32x128xf32>
    %970 = vector.broadcast %cst_267 : f32 to vector<32x128xf32>
    %971 = arith.select %967, %969, %970 : vector<32x128xi1>, vector<32x128xf32>
    %972 = arith.maximumf %961, %971 : vector<32x128xf32>
    %c88 = arith.constant 88 : index
    %c0_268 = arith.constant 0 : index
    %973 = vector.load %arg4[%c88, %c0_268] : memref<128x128xf32, #tpu.memory_space<vmem>>, vector<1x128xf32>
    %974 = vector.extract_strided_slice %3 {offsets = [0, 88], sizes = [32, 1], strides = [1, 1]} : vector<32x128xf32> to vector<32x1xf32>
    %cst_269 = arith.constant 0.000000e+00 : f32
    %975 = vector.broadcast %cst_269 : f32 to vector<32x1xf32>
    %976 = arith.cmpf one, %974, %975 : vector<32x1xf32>
    %cst_270 = arith.constant 0xFF800000 : f32
    %977 = vector.shape_cast %976 : vector<32x1xi1> to vector<32x1xi1>
    %978 = vector.broadcast %977 : vector<32x1xi1> to vector<32x128xi1>
    %979 = vector.shape_cast %973 : vector<1x128xf32> to vector<1x128xf32>
    %980 = vector.broadcast %979 : vector<1x128xf32> to vector<32x128xf32>
    %981 = vector.broadcast %cst_270 : f32 to vector<32x128xf32>
    %982 = arith.select %978, %980, %981 : vector<32x128xi1>, vector<32x128xf32>
    %983 = arith.maximumf %972, %982 : vector<32x128xf32>
    %c89 = arith.constant 89 : index
    %c0_271 = arith.constant 0 : index
    %984 = vector.load %arg4[%c89, %c0_271] : memref<128x128xf32, #tpu.memory_space<vmem>>, vector<1x128xf32>
    %985 = vector.extract_strided_slice %3 {offsets = [0, 89], sizes = [32, 1], strides = [1, 1]} : vector<32x128xf32> to vector<32x1xf32>
    %cst_272 = arith.constant 0.000000e+00 : f32
    %986 = vector.broadcast %cst_272 : f32 to vector<32x1xf32>
    %987 = arith.cmpf one, %985, %986 : vector<32x1xf32>
    %cst_273 = arith.constant 0xFF800000 : f32
    %988 = vector.shape_cast %987 : vector<32x1xi1> to vector<32x1xi1>
    %989 = vector.broadcast %988 : vector<32x1xi1> to vector<32x128xi1>
    %990 = vector.shape_cast %984 : vector<1x128xf32> to vector<1x128xf32>
    %991 = vector.broadcast %990 : vector<1x128xf32> to vector<32x128xf32>
    %992 = vector.broadcast %cst_273 : f32 to vector<32x128xf32>
    %993 = arith.select %989, %991, %992 : vector<32x128xi1>, vector<32x128xf32>
    %994 = arith.maximumf %983, %993 : vector<32x128xf32>
    %c90 = arith.constant 90 : index
    %c0_274 = arith.constant 0 : index
    %995 = vector.load %arg4[%c90, %c0_274] : memref<128x128xf32, #tpu.memory_space<vmem>>, vector<1x128xf32>
    %996 = vector.extract_strided_slice %3 {offsets = [0, 90], sizes = [32, 1], strides = [1, 1]} : vector<32x128xf32> to vector<32x1xf32>
    %cst_275 = arith.constant 0.000000e+00 : f32
    %997 = vector.broadcast %cst_275 : f32 to vector<32x1xf32>
    %998 = arith.cmpf one, %996, %997 : vector<32x1xf32>
    %cst_276 = arith.constant 0xFF800000 : f32
    %999 = vector.shape_cast %998 : vector<32x1xi1> to vector<32x1xi1>
    %1000 = vector.broadcast %999 : vector<32x1xi1> to vector<32x128xi1>
    %1001 = vector.shape_cast %995 : vector<1x128xf32> to vector<1x128xf32>
    %1002 = vector.broadcast %1001 : vector<1x128xf32> to vector<32x128xf32>
    %1003 = vector.broadcast %cst_276 : f32 to vector<32x128xf32>
    %1004 = arith.select %1000, %1002, %1003 : vector<32x128xi1>, vector<32x128xf32>
    %1005 = arith.maximumf %994, %1004 : vector<32x128xf32>
    %c91 = arith.constant 91 : index
    %c0_277 = arith.constant 0 : index
    %1006 = vector.load %arg4[%c91, %c0_277] : memref<128x128xf32, #tpu.memory_space<vmem>>, vector<1x128xf32>
    %1007 = vector.extract_strided_slice %3 {offsets = [0, 91], sizes = [32, 1], strides = [1, 1]} : vector<32x128xf32> to vector<32x1xf32>
    %cst_278 = arith.constant 0.000000e+00 : f32
    %1008 = vector.broadcast %cst_278 : f32 to vector<32x1xf32>
    %1009 = arith.cmpf one, %1007, %1008 : vector<32x1xf32>
    %cst_279 = arith.constant 0xFF800000 : f32
    %1010 = vector.shape_cast %1009 : vector<32x1xi1> to vector<32x1xi1>
    %1011 = vector.broadcast %1010 : vector<32x1xi1> to vector<32x128xi1>
    %1012 = vector.shape_cast %1006 : vector<1x128xf32> to vector<1x128xf32>
    %1013 = vector.broadcast %1012 : vector<1x128xf32> to vector<32x128xf32>
    %1014 = vector.broadcast %cst_279 : f32 to vector<32x128xf32>
    %1015 = arith.select %1011, %1013, %1014 : vector<32x128xi1>, vector<32x128xf32>
    %1016 = arith.maximumf %1005, %1015 : vector<32x128xf32>
    %c92 = arith.constant 92 : index
    %c0_280 = arith.constant 0 : index
    %1017 = vector.load %arg4[%c92, %c0_280] : memref<128x128xf32, #tpu.memory_space<vmem>>, vector<1x128xf32>
    %1018 = vector.extract_strided_slice %3 {offsets = [0, 92], sizes = [32, 1], strides = [1, 1]} : vector<32x128xf32> to vector<32x1xf32>
    %cst_281 = arith.constant 0.000000e+00 : f32
    %1019 = vector.broadcast %cst_281 : f32 to vector<32x1xf32>
    %1020 = arith.cmpf one, %1018, %1019 : vector<32x1xf32>
    %cst_282 = arith.constant 0xFF800000 : f32
    %1021 = vector.shape_cast %1020 : vector<32x1xi1> to vector<32x1xi1>
    %1022 = vector.broadcast %1021 : vector<32x1xi1> to vector<32x128xi1>
    %1023 = vector.shape_cast %1017 : vector<1x128xf32> to vector<1x128xf32>
    %1024 = vector.broadcast %1023 : vector<1x128xf32> to vector<32x128xf32>
    %1025 = vector.broadcast %cst_282 : f32 to vector<32x128xf32>
    %1026 = arith.select %1022, %1024, %1025 : vector<32x128xi1>, vector<32x128xf32>
    %1027 = arith.maximumf %1016, %1026 : vector<32x128xf32>
    %c93 = arith.constant 93 : index
    %c0_283 = arith.constant 0 : index
    %1028 = vector.load %arg4[%c93, %c0_283] : memref<128x128xf32, #tpu.memory_space<vmem>>, vector<1x128xf32>
    %1029 = vector.extract_strided_slice %3 {offsets = [0, 93], sizes = [32, 1], strides = [1, 1]} : vector<32x128xf32> to vector<32x1xf32>
    %cst_284 = arith.constant 0.000000e+00 : f32
    %1030 = vector.broadcast %cst_284 : f32 to vector<32x1xf32>
    %1031 = arith.cmpf one, %1029, %1030 : vector<32x1xf32>
    %cst_285 = arith.constant 0xFF800000 : f32
    %1032 = vector.shape_cast %1031 : vector<32x1xi1> to vector<32x1xi1>
    %1033 = vector.broadcast %1032 : vector<32x1xi1> to vector<32x128xi1>
    %1034 = vector.shape_cast %1028 : vector<1x128xf32> to vector<1x128xf32>
    %1035 = vector.broadcast %1034 : vector<1x128xf32> to vector<32x128xf32>
    %1036 = vector.broadcast %cst_285 : f32 to vector<32x128xf32>
    %1037 = arith.select %1033, %1035, %1036 : vector<32x128xi1>, vector<32x128xf32>
    %1038 = arith.maximumf %1027, %1037 : vector<32x128xf32>
    %c94 = arith.constant 94 : index
    %c0_286 = arith.constant 0 : index
    %1039 = vector.load %arg4[%c94, %c0_286] : memref<128x128xf32, #tpu.memory_space<vmem>>, vector<1x128xf32>
    %1040 = vector.extract_strided_slice %3 {offsets = [0, 94], sizes = [32, 1], strides = [1, 1]} : vector<32x128xf32> to vector<32x1xf32>
    %cst_287 = arith.constant 0.000000e+00 : f32
    %1041 = vector.broadcast %cst_287 : f32 to vector<32x1xf32>
    %1042 = arith.cmpf one, %1040, %1041 : vector<32x1xf32>
    %cst_288 = arith.constant 0xFF800000 : f32
    %1043 = vector.shape_cast %1042 : vector<32x1xi1> to vector<32x1xi1>
    %1044 = vector.broadcast %1043 : vector<32x1xi1> to vector<32x128xi1>
    %1045 = vector.shape_cast %1039 : vector<1x128xf32> to vector<1x128xf32>
    %1046 = vector.broadcast %1045 : vector<1x128xf32> to vector<32x128xf32>
    %1047 = vector.broadcast %cst_288 : f32 to vector<32x128xf32>
    %1048 = arith.select %1044, %1046, %1047 : vector<32x128xi1>, vector<32x128xf32>
    %1049 = arith.maximumf %1038, %1048 : vector<32x128xf32>
    %c95 = arith.constant 95 : index
    %c0_289 = arith.constant 0 : index
    %1050 = vector.load %arg4[%c95, %c0_289] : memref<128x128xf32, #tpu.memory_space<vmem>>, vector<1x128xf32>
    %1051 = vector.extract_strided_slice %3 {offsets = [0, 95], sizes = [32, 1], strides = [1, 1]} : vector<32x128xf32> to vector<32x1xf32>
    %cst_290 = arith.constant 0.000000e+00 : f32
    %1052 = vector.broadcast %cst_290 : f32 to vector<32x1xf32>
    %1053 = arith.cmpf one, %1051, %1052 : vector<32x1xf32>
    %cst_291 = arith.constant 0xFF800000 : f32
    %1054 = vector.shape_cast %1053 : vector<32x1xi1> to vector<32x1xi1>
    %1055 = vector.broadcast %1054 : vector<32x1xi1> to vector<32x128xi1>
    %1056 = vector.shape_cast %1050 : vector<1x128xf32> to vector<1x128xf32>
    %1057 = vector.broadcast %1056 : vector<1x128xf32> to vector<32x128xf32>
    %1058 = vector.broadcast %cst_291 : f32 to vector<32x128xf32>
    %1059 = arith.select %1055, %1057, %1058 : vector<32x128xi1>, vector<32x128xf32>
    %1060 = arith.maximumf %1049, %1059 : vector<32x128xf32>
    %c96 = arith.constant 96 : index
    %c0_292 = arith.constant 0 : index
    %1061 = vector.load %arg4[%c96, %c0_292] : memref<128x128xf32, #tpu.memory_space<vmem>>, vector<1x128xf32>
    %1062 = vector.extract_strided_slice %3 {offsets = [0, 96], sizes = [32, 1], strides = [1, 1]} : vector<32x128xf32> to vector<32x1xf32>
    %cst_293 = arith.constant 0.000000e+00 : f32
    %1063 = vector.broadcast %cst_293 : f32 to vector<32x1xf32>
    %1064 = arith.cmpf one, %1062, %1063 : vector<32x1xf32>
    %cst_294 = arith.constant 0xFF800000 : f32
    %1065 = vector.shape_cast %1064 : vector<32x1xi1> to vector<32x1xi1>
    %1066 = vector.broadcast %1065 : vector<32x1xi1> to vector<32x128xi1>
    %1067 = vector.shape_cast %1061 : vector<1x128xf32> to vector<1x128xf32>
    %1068 = vector.broadcast %1067 : vector<1x128xf32> to vector<32x128xf32>
    %1069 = vector.broadcast %cst_294 : f32 to vector<32x128xf32>
    %1070 = arith.select %1066, %1068, %1069 : vector<32x128xi1>, vector<32x128xf32>
    %1071 = arith.maximumf %1060, %1070 : vector<32x128xf32>
    %c97 = arith.constant 97 : index
    %c0_295 = arith.constant 0 : index
    %1072 = vector.load %arg4[%c97, %c0_295] : memref<128x128xf32, #tpu.memory_space<vmem>>, vector<1x128xf32>
    %1073 = vector.extract_strided_slice %3 {offsets = [0, 97], sizes = [32, 1], strides = [1, 1]} : vector<32x128xf32> to vector<32x1xf32>
    %cst_296 = arith.constant 0.000000e+00 : f32
    %1074 = vector.broadcast %cst_296 : f32 to vector<32x1xf32>
    %1075 = arith.cmpf one, %1073, %1074 : vector<32x1xf32>
    %cst_297 = arith.constant 0xFF800000 : f32
    %1076 = vector.shape_cast %1075 : vector<32x1xi1> to vector<32x1xi1>
    %1077 = vector.broadcast %1076 : vector<32x1xi1> to vector<32x128xi1>
    %1078 = vector.shape_cast %1072 : vector<1x128xf32> to vector<1x128xf32>
    %1079 = vector.broadcast %1078 : vector<1x128xf32> to vector<32x128xf32>
    %1080 = vector.broadcast %cst_297 : f32 to vector<32x128xf32>
    %1081 = arith.select %1077, %1079, %1080 : vector<32x128xi1>, vector<32x128xf32>
    %1082 = arith.maximumf %1071, %1081 : vector<32x128xf32>
    %c98 = arith.constant 98 : index
    %c0_298 = arith.constant 0 : index
    %1083 = vector.load %arg4[%c98, %c0_298] : memref<128x128xf32, #tpu.memory_space<vmem>>, vector<1x128xf32>
    %1084 = vector.extract_strided_slice %3 {offsets = [0, 98], sizes = [32, 1], strides = [1, 1]} : vector<32x128xf32> to vector<32x1xf32>
    %cst_299 = arith.constant 0.000000e+00 : f32
    %1085 = vector.broadcast %cst_299 : f32 to vector<32x1xf32>
    %1086 = arith.cmpf one, %1084, %1085 : vector<32x1xf32>
    %cst_300 = arith.constant 0xFF800000 : f32
    %1087 = vector.shape_cast %1086 : vector<32x1xi1> to vector<32x1xi1>
    %1088 = vector.broadcast %1087 : vector<32x1xi1> to vector<32x128xi1>
    %1089 = vector.shape_cast %1083 : vector<1x128xf32> to vector<1x128xf32>
    %1090 = vector.broadcast %1089 : vector<1x128xf32> to vector<32x128xf32>
    %1091 = vector.broadcast %cst_300 : f32 to vector<32x128xf32>
    %1092 = arith.select %1088, %1090, %1091 : vector<32x128xi1>, vector<32x128xf32>
    %1093 = arith.maximumf %1082, %1092 : vector<32x128xf32>
    %c99 = arith.constant 99 : index
    %c0_301 = arith.constant 0 : index
    %1094 = vector.load %arg4[%c99, %c0_301] : memref<128x128xf32, #tpu.memory_space<vmem>>, vector<1x128xf32>
    %1095 = vector.extract_strided_slice %3 {offsets = [0, 99], sizes = [32, 1], strides = [1, 1]} : vector<32x128xf32> to vector<32x1xf32>
    %cst_302 = arith.constant 0.000000e+00 : f32
    %1096 = vector.broadcast %cst_302 : f32 to vector<32x1xf32>
    %1097 = arith.cmpf one, %1095, %1096 : vector<32x1xf32>
    %cst_303 = arith.constant 0xFF800000 : f32
    %1098 = vector.shape_cast %1097 : vector<32x1xi1> to vector<32x1xi1>
    %1099 = vector.broadcast %1098 : vector<32x1xi1> to vector<32x128xi1>
    %1100 = vector.shape_cast %1094 : vector<1x128xf32> to vector<1x128xf32>
    %1101 = vector.broadcast %1100 : vector<1x128xf32> to vector<32x128xf32>
    %1102 = vector.broadcast %cst_303 : f32 to vector<32x128xf32>
    %1103 = arith.select %1099, %1101, %1102 : vector<32x128xi1>, vector<32x128xf32>
    %1104 = arith.maximumf %1093, %1103 : vector<32x128xf32>
    %c100 = arith.constant 100 : index
    %c0_304 = arith.constant 0 : index
    %1105 = vector.load %arg4[%c100, %c0_304] : memref<128x128xf32, #tpu.memory_space<vmem>>, vector<1x128xf32>
    %1106 = vector.extract_strided_slice %3 {offsets = [0, 100], sizes = [32, 1], strides = [1, 1]} : vector<32x128xf32> to vector<32x1xf32>
    %cst_305 = arith.constant 0.000000e+00 : f32
    %1107 = vector.broadcast %cst_305 : f32 to vector<32x1xf32>
    %1108 = arith.cmpf one, %1106, %1107 : vector<32x1xf32>
    %cst_306 = arith.constant 0xFF800000 : f32
    %1109 = vector.shape_cast %1108 : vector<32x1xi1> to vector<32x1xi1>
    %1110 = vector.broadcast %1109 : vector<32x1xi1> to vector<32x128xi1>
    %1111 = vector.shape_cast %1105 : vector<1x128xf32> to vector<1x128xf32>
    %1112 = vector.broadcast %1111 : vector<1x128xf32> to vector<32x128xf32>
    %1113 = vector.broadcast %cst_306 : f32 to vector<32x128xf32>
    %1114 = arith.select %1110, %1112, %1113 : vector<32x128xi1>, vector<32x128xf32>
    %1115 = arith.maximumf %1104, %1114 : vector<32x128xf32>
    %c101 = arith.constant 101 : index
    %c0_307 = arith.constant 0 : index
    %1116 = vector.load %arg4[%c101, %c0_307] : memref<128x128xf32, #tpu.memory_space<vmem>>, vector<1x128xf32>
    %1117 = vector.extract_strided_slice %3 {offsets = [0, 101], sizes = [32, 1], strides = [1, 1]} : vector<32x128xf32> to vector<32x1xf32>
    %cst_308 = arith.constant 0.000000e+00 : f32
    %1118 = vector.broadcast %cst_308 : f32 to vector<32x1xf32>
    %1119 = arith.cmpf one, %1117, %1118 : vector<32x1xf32>
    %cst_309 = arith.constant 0xFF800000 : f32
    %1120 = vector.shape_cast %1119 : vector<32x1xi1> to vector<32x1xi1>
    %1121 = vector.broadcast %1120 : vector<32x1xi1> to vector<32x128xi1>
    %1122 = vector.shape_cast %1116 : vector<1x128xf32> to vector<1x128xf32>
    %1123 = vector.broadcast %1122 : vector<1x128xf32> to vector<32x128xf32>
    %1124 = vector.broadcast %cst_309 : f32 to vector<32x128xf32>
    %1125 = arith.select %1121, %1123, %1124 : vector<32x128xi1>, vector<32x128xf32>
    %1126 = arith.maximumf %1115, %1125 : vector<32x128xf32>
    %c102 = arith.constant 102 : index
    %c0_310 = arith.constant 0 : index
    %1127 = vector.load %arg4[%c102, %c0_310] : memref<128x128xf32, #tpu.memory_space<vmem>>, vector<1x128xf32>
    %1128 = vector.extract_strided_slice %3 {offsets = [0, 102], sizes = [32, 1], strides = [1, 1]} : vector<32x128xf32> to vector<32x1xf32>
    %cst_311 = arith.constant 0.000000e+00 : f32
    %1129 = vector.broadcast %cst_311 : f32 to vector<32x1xf32>
    %1130 = arith.cmpf one, %1128, %1129 : vector<32x1xf32>
    %cst_312 = arith.constant 0xFF800000 : f32
    %1131 = vector.shape_cast %1130 : vector<32x1xi1> to vector<32x1xi1>
    %1132 = vector.broadcast %1131 : vector<32x1xi1> to vector<32x128xi1>
    %1133 = vector.shape_cast %1127 : vector<1x128xf32> to vector<1x128xf32>
    %1134 = vector.broadcast %1133 : vector<1x128xf32> to vector<32x128xf32>
    %1135 = vector.broadcast %cst_312 : f32 to vector<32x128xf32>
    %1136 = arith.select %1132, %1134, %1135 : vector<32x128xi1>, vector<32x128xf32>
    %1137 = arith.maximumf %1126, %1136 : vector<32x128xf32>
    %c103 = arith.constant 103 : index
    %c0_313 = arith.constant 0 : index
    %1138 = vector.load %arg4[%c103, %c0_313] : memref<128x128xf32, #tpu.memory_space<vmem>>, vector<1x128xf32>
    %1139 = vector.extract_strided_slice %3 {offsets = [0, 103], sizes = [32, 1], strides = [1, 1]} : vector<32x128xf32> to vector<32x1xf32>
    %cst_314 = arith.constant 0.000000e+00 : f32
    %1140 = vector.broadcast %cst_314 : f32 to vector<32x1xf32>
    %1141 = arith.cmpf one, %1139, %1140 : vector<32x1xf32>
    %cst_315 = arith.constant 0xFF800000 : f32
    %1142 = vector.shape_cast %1141 : vector<32x1xi1> to vector<32x1xi1>
    %1143 = vector.broadcast %1142 : vector<32x1xi1> to vector<32x128xi1>
    %1144 = vector.shape_cast %1138 : vector<1x128xf32> to vector<1x128xf32>
    %1145 = vector.broadcast %1144 : vector<1x128xf32> to vector<32x128xf32>
    %1146 = vector.broadcast %cst_315 : f32 to vector<32x128xf32>
    %1147 = arith.select %1143, %1145, %1146 : vector<32x128xi1>, vector<32x128xf32>
    %1148 = arith.maximumf %1137, %1147 : vector<32x128xf32>
    %c104 = arith.constant 104 : index
    %c0_316 = arith.constant 0 : index
    %1149 = vector.load %arg4[%c104, %c0_316] : memref<128x128xf32, #tpu.memory_space<vmem>>, vector<1x128xf32>
    %1150 = vector.extract_strided_slice %3 {offsets = [0, 104], sizes = [32, 1], strides = [1, 1]} : vector<32x128xf32> to vector<32x1xf32>
    %cst_317 = arith.constant 0.000000e+00 : f32
    %1151 = vector.broadcast %cst_317 : f32 to vector<32x1xf32>
    %1152 = arith.cmpf one, %1150, %1151 : vector<32x1xf32>
    %cst_318 = arith.constant 0xFF800000 : f32
    %1153 = vector.shape_cast %1152 : vector<32x1xi1> to vector<32x1xi1>
    %1154 = vector.broadcast %1153 : vector<32x1xi1> to vector<32x128xi1>
    %1155 = vector.shape_cast %1149 : vector<1x128xf32> to vector<1x128xf32>
    %1156 = vector.broadcast %1155 : vector<1x128xf32> to vector<32x128xf32>
    %1157 = vector.broadcast %cst_318 : f32 to vector<32x128xf32>
    %1158 = arith.select %1154, %1156, %1157 : vector<32x128xi1>, vector<32x128xf32>
    %1159 = arith.maximumf %1148, %1158 : vector<32x128xf32>
    %c105 = arith.constant 105 : index
    %c0_319 = arith.constant 0 : index
    %1160 = vector.load %arg4[%c105, %c0_319] : memref<128x128xf32, #tpu.memory_space<vmem>>, vector<1x128xf32>
    %1161 = vector.extract_strided_slice %3 {offsets = [0, 105], sizes = [32, 1], strides = [1, 1]} : vector<32x128xf32> to vector<32x1xf32>
    %cst_320 = arith.constant 0.000000e+00 : f32
    %1162 = vector.broadcast %cst_320 : f32 to vector<32x1xf32>
    %1163 = arith.cmpf one, %1161, %1162 : vector<32x1xf32>
    %cst_321 = arith.constant 0xFF800000 : f32
    %1164 = vector.shape_cast %1163 : vector<32x1xi1> to vector<32x1xi1>
    %1165 = vector.broadcast %1164 : vector<32x1xi1> to vector<32x128xi1>
    %1166 = vector.shape_cast %1160 : vector<1x128xf32> to vector<1x128xf32>
    %1167 = vector.broadcast %1166 : vector<1x128xf32> to vector<32x128xf32>
    %1168 = vector.broadcast %cst_321 : f32 to vector<32x128xf32>
    %1169 = arith.select %1165, %1167, %1168 : vector<32x128xi1>, vector<32x128xf32>
    %1170 = arith.maximumf %1159, %1169 : vector<32x128xf32>
    %c106 = arith.constant 106 : index
    %c0_322 = arith.constant 0 : index
    %1171 = vector.load %arg4[%c106, %c0_322] : memref<128x128xf32, #tpu.memory_space<vmem>>, vector<1x128xf32>
    %1172 = vector.extract_strided_slice %3 {offsets = [0, 106], sizes = [32, 1], strides = [1, 1]} : vector<32x128xf32> to vector<32x1xf32>
    %cst_323 = arith.constant 0.000000e+00 : f32
    %1173 = vector.broadcast %cst_323 : f32 to vector<32x1xf32>
    %1174 = arith.cmpf one, %1172, %1173 : vector<32x1xf32>
    %cst_324 = arith.constant 0xFF800000 : f32
    %1175 = vector.shape_cast %1174 : vector<32x1xi1> to vector<32x1xi1>
    %1176 = vector.broadcast %1175 : vector<32x1xi1> to vector<32x128xi1>
    %1177 = vector.shape_cast %1171 : vector<1x128xf32> to vector<1x128xf32>
    %1178 = vector.broadcast %1177 : vector<1x128xf32> to vector<32x128xf32>
    %1179 = vector.broadcast %cst_324 : f32 to vector<32x128xf32>
    %1180 = arith.select %1176, %1178, %1179 : vector<32x128xi1>, vector<32x128xf32>
    %1181 = arith.maximumf %1170, %1180 : vector<32x128xf32>
    %c107 = arith.constant 107 : index
    %c0_325 = arith.constant 0 : index
    %1182 = vector.load %arg4[%c107, %c0_325] : memref<128x128xf32, #tpu.memory_space<vmem>>, vector<1x128xf32>
    %1183 = vector.extract_strided_slice %3 {offsets = [0, 107], sizes = [32, 1], strides = [1, 1]} : vector<32x128xf32> to vector<32x1xf32>
    %cst_326 = arith.constant 0.000000e+00 : f32
    %1184 = vector.broadcast %cst_326 : f32 to vector<32x1xf32>
    %1185 = arith.cmpf one, %1183, %1184 : vector<32x1xf32>
    %cst_327 = arith.constant 0xFF800000 : f32
    %1186 = vector.shape_cast %1185 : vector<32x1xi1> to vector<32x1xi1>
    %1187 = vector.broadcast %1186 : vector<32x1xi1> to vector<32x128xi1>
    %1188 = vector.shape_cast %1182 : vector<1x128xf32> to vector<1x128xf32>
    %1189 = vector.broadcast %1188 : vector<1x128xf32> to vector<32x128xf32>
    %1190 = vector.broadcast %cst_327 : f32 to vector<32x128xf32>
    %1191 = arith.select %1187, %1189, %1190 : vector<32x128xi1>, vector<32x128xf32>
    %1192 = arith.maximumf %1181, %1191 : vector<32x128xf32>
    %c108 = arith.constant 108 : index
    %c0_328 = arith.constant 0 : index
    %1193 = vector.load %arg4[%c108, %c0_328] : memref<128x128xf32, #tpu.memory_space<vmem>>, vector<1x128xf32>
    %1194 = vector.extract_strided_slice %3 {offsets = [0, 108], sizes = [32, 1], strides = [1, 1]} : vector<32x128xf32> to vector<32x1xf32>
    %cst_329 = arith.constant 0.000000e+00 : f32
    %1195 = vector.broadcast %cst_329 : f32 to vector<32x1xf32>
    %1196 = arith.cmpf one, %1194, %1195 : vector<32x1xf32>
    %cst_330 = arith.constant 0xFF800000 : f32
    %1197 = vector.shape_cast %1196 : vector<32x1xi1> to vector<32x1xi1>
    %1198 = vector.broadcast %1197 : vector<32x1xi1> to vector<32x128xi1>
    %1199 = vector.shape_cast %1193 : vector<1x128xf32> to vector<1x128xf32>
    %1200 = vector.broadcast %1199 : vector<1x128xf32> to vector<32x128xf32>
    %1201 = vector.broadcast %cst_330 : f32 to vector<32x128xf32>
    %1202 = arith.select %1198, %1200, %1201 : vector<32x128xi1>, vector<32x128xf32>
    %1203 = arith.maximumf %1192, %1202 : vector<32x128xf32>
    %c109 = arith.constant 109 : index
    %c0_331 = arith.constant 0 : index
    %1204 = vector.load %arg4[%c109, %c0_331] : memref<128x128xf32, #tpu.memory_space<vmem>>, vector<1x128xf32>
    %1205 = vector.extract_strided_slice %3 {offsets = [0, 109], sizes = [32, 1], strides = [1, 1]} : vector<32x128xf32> to vector<32x1xf32>
    %cst_332 = arith.constant 0.000000e+00 : f32
    %1206 = vector.broadcast %cst_332 : f32 to vector<32x1xf32>
    %1207 = arith.cmpf one, %1205, %1206 : vector<32x1xf32>
    %cst_333 = arith.constant 0xFF800000 : f32
    %1208 = vector.shape_cast %1207 : vector<32x1xi1> to vector<32x1xi1>
    %1209 = vector.broadcast %1208 : vector<32x1xi1> to vector<32x128xi1>
    %1210 = vector.shape_cast %1204 : vector<1x128xf32> to vector<1x128xf32>
    %1211 = vector.broadcast %1210 : vector<1x128xf32> to vector<32x128xf32>
    %1212 = vector.broadcast %cst_333 : f32 to vector<32x128xf32>
    %1213 = arith.select %1209, %1211, %1212 : vector<32x128xi1>, vector<32x128xf32>
    %1214 = arith.maximumf %1203, %1213 : vector<32x128xf32>
    %c110 = arith.constant 110 : index
    %c0_334 = arith.constant 0 : index
    %1215 = vector.load %arg4[%c110, %c0_334] : memref<128x128xf32, #tpu.memory_space<vmem>>, vector<1x128xf32>
    %1216 = vector.extract_strided_slice %3 {offsets = [0, 110], sizes = [32, 1], strides = [1, 1]} : vector<32x128xf32> to vector<32x1xf32>
    %cst_335 = arith.constant 0.000000e+00 : f32
    %1217 = vector.broadcast %cst_335 : f32 to vector<32x1xf32>
    %1218 = arith.cmpf one, %1216, %1217 : vector<32x1xf32>
    %cst_336 = arith.constant 0xFF800000 : f32
    %1219 = vector.shape_cast %1218 : vector<32x1xi1> to vector<32x1xi1>
    %1220 = vector.broadcast %1219 : vector<32x1xi1> to vector<32x128xi1>
    %1221 = vector.shape_cast %1215 : vector<1x128xf32> to vector<1x128xf32>
    %1222 = vector.broadcast %1221 : vector<1x128xf32> to vector<32x128xf32>
    %1223 = vector.broadcast %cst_336 : f32 to vector<32x128xf32>
    %1224 = arith.select %1220, %1222, %1223 : vector<32x128xi1>, vector<32x128xf32>
    %1225 = arith.maximumf %1214, %1224 : vector<32x128xf32>
    %c111 = arith.constant 111 : index
    %c0_337 = arith.constant 0 : index
    %1226 = vector.load %arg4[%c111, %c0_337] : memref<128x128xf32, #tpu.memory_space<vmem>>, vector<1x128xf32>
    %1227 = vector.extract_strided_slice %3 {offsets = [0, 111], sizes = [32, 1], strides = [1, 1]} : vector<32x128xf32> to vector<32x1xf32>
    %cst_338 = arith.constant 0.000000e+00 : f32
    %1228 = vector.broadcast %cst_338 : f32 to vector<32x1xf32>
    %1229 = arith.cmpf one, %1227, %1228 : vector<32x1xf32>
    %cst_339 = arith.constant 0xFF800000 : f32
    %1230 = vector.shape_cast %1229 : vector<32x1xi1> to vector<32x1xi1>
    %1231 = vector.broadcast %1230 : vector<32x1xi1> to vector<32x128xi1>
    %1232 = vector.shape_cast %1226 : vector<1x128xf32> to vector<1x128xf32>
    %1233 = vector.broadcast %1232 : vector<1x128xf32> to vector<32x128xf32>
    %1234 = vector.broadcast %cst_339 : f32 to vector<32x128xf32>
    %1235 = arith.select %1231, %1233, %1234 : vector<32x128xi1>, vector<32x128xf32>
    %1236 = arith.maximumf %1225, %1235 : vector<32x128xf32>
    %c112 = arith.constant 112 : index
    %c0_340 = arith.constant 0 : index
    %1237 = vector.load %arg4[%c112, %c0_340] : memref<128x128xf32, #tpu.memory_space<vmem>>, vector<1x128xf32>
    %1238 = vector.extract_strided_slice %3 {offsets = [0, 112], sizes = [32, 1], strides = [1, 1]} : vector<32x128xf32> to vector<32x1xf32>
    %cst_341 = arith.constant 0.000000e+00 : f32
    %1239 = vector.broadcast %cst_341 : f32 to vector<32x1xf32>
    %1240 = arith.cmpf one, %1238, %1239 : vector<32x1xf32>
    %cst_342 = arith.constant 0xFF800000 : f32
    %1241 = vector.shape_cast %1240 : vector<32x1xi1> to vector<32x1xi1>
    %1242 = vector.broadcast %1241 : vector<32x1xi1> to vector<32x128xi1>
    %1243 = vector.shape_cast %1237 : vector<1x128xf32> to vector<1x128xf32>
    %1244 = vector.broadcast %1243 : vector<1x128xf32> to vector<32x128xf32>
    %1245 = vector.broadcast %cst_342 : f32 to vector<32x128xf32>
    %1246 = arith.select %1242, %1244, %1245 : vector<32x128xi1>, vector<32x128xf32>
    %1247 = arith.maximumf %1236, %1246 : vector<32x128xf32>
    %c113 = arith.constant 113 : index
    %c0_343 = arith.constant 0 : index
    %1248 = vector.load %arg4[%c113, %c0_343] : memref<128x128xf32, #tpu.memory_space<vmem>>, vector<1x128xf32>
    %1249 = vector.extract_strided_slice %3 {offsets = [0, 113], sizes = [32, 1], strides = [1, 1]} : vector<32x128xf32> to vector<32x1xf32>
    %cst_344 = arith.constant 0.000000e+00 : f32
    %1250 = vector.broadcast %cst_344 : f32 to vector<32x1xf32>
    %1251 = arith.cmpf one, %1249, %1250 : vector<32x1xf32>
    %cst_345 = arith.constant 0xFF800000 : f32
    %1252 = vector.shape_cast %1251 : vector<32x1xi1> to vector<32x1xi1>
    %1253 = vector.broadcast %1252 : vector<32x1xi1> to vector<32x128xi1>
    %1254 = vector.shape_cast %1248 : vector<1x128xf32> to vector<1x128xf32>
    %1255 = vector.broadcast %1254 : vector<1x128xf32> to vector<32x128xf32>
    %1256 = vector.broadcast %cst_345 : f32 to vector<32x128xf32>
    %1257 = arith.select %1253, %1255, %1256 : vector<32x128xi1>, vector<32x128xf32>
    %1258 = arith.maximumf %1247, %1257 : vector<32x128xf32>
    %c114 = arith.constant 114 : index
    %c0_346 = arith.constant 0 : index
    %1259 = vector.load %arg4[%c114, %c0_346] : memref<128x128xf32, #tpu.memory_space<vmem>>, vector<1x128xf32>
    %1260 = vector.extract_strided_slice %3 {offsets = [0, 114], sizes = [32, 1], strides = [1, 1]} : vector<32x128xf32> to vector<32x1xf32>
    %cst_347 = arith.constant 0.000000e+00 : f32
    %1261 = vector.broadcast %cst_347 : f32 to vector<32x1xf32>
    %1262 = arith.cmpf one, %1260, %1261 : vector<32x1xf32>
    %cst_348 = arith.constant 0xFF800000 : f32
    %1263 = vector.shape_cast %1262 : vector<32x1xi1> to vector<32x1xi1>
    %1264 = vector.broadcast %1263 : vector<32x1xi1> to vector<32x128xi1>
    %1265 = vector.shape_cast %1259 : vector<1x128xf32> to vector<1x128xf32>
    %1266 = vector.broadcast %1265 : vector<1x128xf32> to vector<32x128xf32>
    %1267 = vector.broadcast %cst_348 : f32 to vector<32x128xf32>
    %1268 = arith.select %1264, %1266, %1267 : vector<32x128xi1>, vector<32x128xf32>
    %1269 = arith.maximumf %1258, %1268 : vector<32x128xf32>
    %c115 = arith.constant 115 : index
    %c0_349 = arith.constant 0 : index
    %1270 = vector.load %arg4[%c115, %c0_349] : memref<128x128xf32, #tpu.memory_space<vmem>>, vector<1x128xf32>
    %1271 = vector.extract_strided_slice %3 {offsets = [0, 115], sizes = [32, 1], strides = [1, 1]} : vector<32x128xf32> to vector<32x1xf32>
    %cst_350 = arith.constant 0.000000e+00 : f32
    %1272 = vector.broadcast %cst_350 : f32 to vector<32x1xf32>
    %1273 = arith.cmpf one, %1271, %1272 : vector<32x1xf32>
    %cst_351 = arith.constant 0xFF800000 : f32
    %1274 = vector.shape_cast %1273 : vector<32x1xi1> to vector<32x1xi1>
    %1275 = vector.broadcast %1274 : vector<32x1xi1> to vector<32x128xi1>
    %1276 = vector.shape_cast %1270 : vector<1x128xf32> to vector<1x128xf32>
    %1277 = vector.broadcast %1276 : vector<1x128xf32> to vector<32x128xf32>
    %1278 = vector.broadcast %cst_351 : f32 to vector<32x128xf32>
    %1279 = arith.select %1275, %1277, %1278 : vector<32x128xi1>, vector<32x128xf32>
    %1280 = arith.maximumf %1269, %1279 : vector<32x128xf32>
    %c116 = arith.constant 116 : index
    %c0_352 = arith.constant 0 : index
    %1281 = vector.load %arg4[%c116, %c0_352] : memref<128x128xf32, #tpu.memory_space<vmem>>, vector<1x128xf32>
    %1282 = vector.extract_strided_slice %3 {offsets = [0, 116], sizes = [32, 1], strides = [1, 1]} : vector<32x128xf32> to vector<32x1xf32>
    %cst_353 = arith.constant 0.000000e+00 : f32
    %1283 = vector.broadcast %cst_353 : f32 to vector<32x1xf32>
    %1284 = arith.cmpf one, %1282, %1283 : vector<32x1xf32>
    %cst_354 = arith.constant 0xFF800000 : f32
    %1285 = vector.shape_cast %1284 : vector<32x1xi1> to vector<32x1xi1>
    %1286 = vector.broadcast %1285 : vector<32x1xi1> to vector<32x128xi1>
    %1287 = vector.shape_cast %1281 : vector<1x128xf32> to vector<1x128xf32>
    %1288 = vector.broadcast %1287 : vector<1x128xf32> to vector<32x128xf32>
    %1289 = vector.broadcast %cst_354 : f32 to vector<32x128xf32>
    %1290 = arith.select %1286, %1288, %1289 : vector<32x128xi1>, vector<32x128xf32>
    %1291 = arith.maximumf %1280, %1290 : vector<32x128xf32>
    %c117 = arith.constant 117 : index
    %c0_355 = arith.constant 0 : index
    %1292 = vector.load %arg4[%c117, %c0_355] : memref<128x128xf32, #tpu.memory_space<vmem>>, vector<1x128xf32>
    %1293 = vector.extract_strided_slice %3 {offsets = [0, 117], sizes = [32, 1], strides = [1, 1]} : vector<32x128xf32> to vector<32x1xf32>
    %cst_356 = arith.constant 0.000000e+00 : f32
    %1294 = vector.broadcast %cst_356 : f32 to vector<32x1xf32>
    %1295 = arith.cmpf one, %1293, %1294 : vector<32x1xf32>
    %cst_357 = arith.constant 0xFF800000 : f32
    %1296 = vector.shape_cast %1295 : vector<32x1xi1> to vector<32x1xi1>
    %1297 = vector.broadcast %1296 : vector<32x1xi1> to vector<32x128xi1>
    %1298 = vector.shape_cast %1292 : vector<1x128xf32> to vector<1x128xf32>
    %1299 = vector.broadcast %1298 : vector<1x128xf32> to vector<32x128xf32>
    %1300 = vector.broadcast %cst_357 : f32 to vector<32x128xf32>
    %1301 = arith.select %1297, %1299, %1300 : vector<32x128xi1>, vector<32x128xf32>
    %1302 = arith.maximumf %1291, %1301 : vector<32x128xf32>
    %c118 = arith.constant 118 : index
    %c0_358 = arith.constant 0 : index
    %1303 = vector.load %arg4[%c118, %c0_358] : memref<128x128xf32, #tpu.memory_space<vmem>>, vector<1x128xf32>
    %1304 = vector.extract_strided_slice %3 {offsets = [0, 118], sizes = [32, 1], strides = [1, 1]} : vector<32x128xf32> to vector<32x1xf32>
    %cst_359 = arith.constant 0.000000e+00 : f32
    %1305 = vector.broadcast %cst_359 : f32 to vector<32x1xf32>
    %1306 = arith.cmpf one, %1304, %1305 : vector<32x1xf32>
    %cst_360 = arith.constant 0xFF800000 : f32
    %1307 = vector.shape_cast %1306 : vector<32x1xi1> to vector<32x1xi1>
    %1308 = vector.broadcast %1307 : vector<32x1xi1> to vector<32x128xi1>
    %1309 = vector.shape_cast %1303 : vector<1x128xf32> to vector<1x128xf32>
    %1310 = vector.broadcast %1309 : vector<1x128xf32> to vector<32x128xf32>
    %1311 = vector.broadcast %cst_360 : f32 to vector<32x128xf32>
    %1312 = arith.select %1308, %1310, %1311 : vector<32x128xi1>, vector<32x128xf32>
    %1313 = arith.maximumf %1302, %1312 : vector<32x128xf32>
    %c119 = arith.constant 119 : index
    %c0_361 = arith.constant 0 : index
    %1314 = vector.load %arg4[%c119, %c0_361] : memref<128x128xf32, #tpu.memory_space<vmem>>, vector<1x128xf32>
    %1315 = vector.extract_strided_slice %3 {offsets = [0, 119], sizes = [32, 1], strides = [1, 1]} : vector<32x128xf32> to vector<32x1xf32>
    %cst_362 = arith.constant 0.000000e+00 : f32
    %1316 = vector.broadcast %cst_362 : f32 to vector<32x1xf32>
    %1317 = arith.cmpf one, %1315, %1316 : vector<32x1xf32>
    %cst_363 = arith.constant 0xFF800000 : f32
    %1318 = vector.shape_cast %1317 : vector<32x1xi1> to vector<32x1xi1>
    %1319 = vector.broadcast %1318 : vector<32x1xi1> to vector<32x128xi1>
    %1320 = vector.shape_cast %1314 : vector<1x128xf32> to vector<1x128xf32>
    %1321 = vector.broadcast %1320 : vector<1x128xf32> to vector<32x128xf32>
    %1322 = vector.broadcast %cst_363 : f32 to vector<32x128xf32>
    %1323 = arith.select %1319, %1321, %1322 : vector<32x128xi1>, vector<32x128xf32>
    %1324 = arith.maximumf %1313, %1323 : vector<32x128xf32>
    %c120 = arith.constant 120 : index
    %c0_364 = arith.constant 0 : index
    %1325 = vector.load %arg4[%c120, %c0_364] : memref<128x128xf32, #tpu.memory_space<vmem>>, vector<1x128xf32>
    %1326 = vector.extract_strided_slice %3 {offsets = [0, 120], sizes = [32, 1], strides = [1, 1]} : vector<32x128xf32> to vector<32x1xf32>
    %cst_365 = arith.constant 0.000000e+00 : f32
    %1327 = vector.broadcast %cst_365 : f32 to vector<32x1xf32>
    %1328 = arith.cmpf one, %1326, %1327 : vector<32x1xf32>
    %cst_366 = arith.constant 0xFF800000 : f32
    %1329 = vector.shape_cast %1328 : vector<32x1xi1> to vector<32x1xi1>
    %1330 = vector.broadcast %1329 : vector<32x1xi1> to vector<32x128xi1>
    %1331 = vector.shape_cast %1325 : vector<1x128xf32> to vector<1x128xf32>
    %1332 = vector.broadcast %1331 : vector<1x128xf32> to vector<32x128xf32>
    %1333 = vector.broadcast %cst_366 : f32 to vector<32x128xf32>
    %1334 = arith.select %1330, %1332, %1333 : vector<32x128xi1>, vector<32x128xf32>
    %1335 = arith.maximumf %1324, %1334 : vector<32x128xf32>
    %c121 = arith.constant 121 : index
    %c0_367 = arith.constant 0 : index
    %1336 = vector.load %arg4[%c121, %c0_367] : memref<128x128xf32, #tpu.memory_space<vmem>>, vector<1x128xf32>
    %1337 = vector.extract_strided_slice %3 {offsets = [0, 121], sizes = [32, 1], strides = [1, 1]} : vector<32x128xf32> to vector<32x1xf32>
    %cst_368 = arith.constant 0.000000e+00 : f32
    %1338 = vector.broadcast %cst_368 : f32 to vector<32x1xf32>
    %1339 = arith.cmpf one, %1337, %1338 : vector<32x1xf32>
    %cst_369 = arith.constant 0xFF800000 : f32
    %1340 = vector.shape_cast %1339 : vector<32x1xi1> to vector<32x1xi1>
    %1341 = vector.broadcast %1340 : vector<32x1xi1> to vector<32x128xi1>
    %1342 = vector.shape_cast %1336 : vector<1x128xf32> to vector<1x128xf32>
    %1343 = vector.broadcast %1342 : vector<1x128xf32> to vector<32x128xf32>
    %1344 = vector.broadcast %cst_369 : f32 to vector<32x128xf32>
    %1345 = arith.select %1341, %1343, %1344 : vector<32x128xi1>, vector<32x128xf32>
    %1346 = arith.maximumf %1335, %1345 : vector<32x128xf32>
    %c122 = arith.constant 122 : index
    %c0_370 = arith.constant 0 : index
    %1347 = vector.load %arg4[%c122, %c0_370] : memref<128x128xf32, #tpu.memory_space<vmem>>, vector<1x128xf32>
    %1348 = vector.extract_strided_slice %3 {offsets = [0, 122], sizes = [32, 1], strides = [1, 1]} : vector<32x128xf32> to vector<32x1xf32>
    %cst_371 = arith.constant 0.000000e+00 : f32
    %1349 = vector.broadcast %cst_371 : f32 to vector<32x1xf32>
    %1350 = arith.cmpf one, %1348, %1349 : vector<32x1xf32>
    %cst_372 = arith.constant 0xFF800000 : f32
    %1351 = vector.shape_cast %1350 : vector<32x1xi1> to vector<32x1xi1>
    %1352 = vector.broadcast %1351 : vector<32x1xi1> to vector<32x128xi1>
    %1353 = vector.shape_cast %1347 : vector<1x128xf32> to vector<1x128xf32>
    %1354 = vector.broadcast %1353 : vector<1x128xf32> to vector<32x128xf32>
    %1355 = vector.broadcast %cst_372 : f32 to vector<32x128xf32>
    %1356 = arith.select %1352, %1354, %1355 : vector<32x128xi1>, vector<32x128xf32>
    %1357 = arith.maximumf %1346, %1356 : vector<32x128xf32>
    %c123 = arith.constant 123 : index
    %c0_373 = arith.constant 0 : index
    %1358 = vector.load %arg4[%c123, %c0_373] : memref<128x128xf32, #tpu.memory_space<vmem>>, vector<1x128xf32>
    %1359 = vector.extract_strided_slice %3 {offsets = [0, 123], sizes = [32, 1], strides = [1, 1]} : vector<32x128xf32> to vector<32x1xf32>
    %cst_374 = arith.constant 0.000000e+00 : f32
    %1360 = vector.broadcast %cst_374 : f32 to vector<32x1xf32>
    %1361 = arith.cmpf one, %1359, %1360 : vector<32x1xf32>
    %cst_375 = arith.constant 0xFF800000 : f32
    %1362 = vector.shape_cast %1361 : vector<32x1xi1> to vector<32x1xi1>
    %1363 = vector.broadcast %1362 : vector<32x1xi1> to vector<32x128xi1>
    %1364 = vector.shape_cast %1358 : vector<1x128xf32> to vector<1x128xf32>
    %1365 = vector.broadcast %1364 : vector<1x128xf32> to vector<32x128xf32>
    %1366 = vector.broadcast %cst_375 : f32 to vector<32x128xf32>
    %1367 = arith.select %1363, %1365, %1366 : vector<32x128xi1>, vector<32x128xf32>
    %1368 = arith.maximumf %1357, %1367 : vector<32x128xf32>
    %c124 = arith.constant 124 : index
    %c0_376 = arith.constant 0 : index
    %1369 = vector.load %arg4[%c124, %c0_376] : memref<128x128xf32, #tpu.memory_space<vmem>>, vector<1x128xf32>
    %1370 = vector.extract_strided_slice %3 {offsets = [0, 124], sizes = [32, 1], strides = [1, 1]} : vector<32x128xf32> to vector<32x1xf32>
    %cst_377 = arith.constant 0.000000e+00 : f32
    %1371 = vector.broadcast %cst_377 : f32 to vector<32x1xf32>
    %1372 = arith.cmpf one, %1370, %1371 : vector<32x1xf32>
    %cst_378 = arith.constant 0xFF800000 : f32
    %1373 = vector.shape_cast %1372 : vector<32x1xi1> to vector<32x1xi1>
    %1374 = vector.broadcast %1373 : vector<32x1xi1> to vector<32x128xi1>
    %1375 = vector.shape_cast %1369 : vector<1x128xf32> to vector<1x128xf32>
    %1376 = vector.broadcast %1375 : vector<1x128xf32> to vector<32x128xf32>
    %1377 = vector.broadcast %cst_378 : f32 to vector<32x128xf32>
    %1378 = arith.select %1374, %1376, %1377 : vector<32x128xi1>, vector<32x128xf32>
    %1379 = arith.maximumf %1368, %1378 : vector<32x128xf32>
    %c125 = arith.constant 125 : index
    %c0_379 = arith.constant 0 : index
    %1380 = vector.load %arg4[%c125, %c0_379] : memref<128x128xf32, #tpu.memory_space<vmem>>, vector<1x128xf32>
    %1381 = vector.extract_strided_slice %3 {offsets = [0, 125], sizes = [32, 1], strides = [1, 1]} : vector<32x128xf32> to vector<32x1xf32>
    %cst_380 = arith.constant 0.000000e+00 : f32
    %1382 = vector.broadcast %cst_380 : f32 to vector<32x1xf32>
    %1383 = arith.cmpf one, %1381, %1382 : vector<32x1xf32>
    %cst_381 = arith.constant 0xFF800000 : f32
    %1384 = vector.shape_cast %1383 : vector<32x1xi1> to vector<32x1xi1>
    %1385 = vector.broadcast %1384 : vector<32x1xi1> to vector<32x128xi1>
    %1386 = vector.shape_cast %1380 : vector<1x128xf32> to vector<1x128xf32>
    %1387 = vector.broadcast %1386 : vector<1x128xf32> to vector<32x128xf32>
    %1388 = vector.broadcast %cst_381 : f32 to vector<32x128xf32>
    %1389 = arith.select %1385, %1387, %1388 : vector<32x128xi1>, vector<32x128xf32>
    %1390 = arith.maximumf %1379, %1389 : vector<32x128xf32>
    %c126 = arith.constant 126 : index
    %c0_382 = arith.constant 0 : index
    %1391 = vector.load %arg4[%c126, %c0_382] : memref<128x128xf32, #tpu.memory_space<vmem>>, vector<1x128xf32>
    %1392 = vector.extract_strided_slice %3 {offsets = [0, 126], sizes = [32, 1], strides = [1, 1]} : vector<32x128xf32> to vector<32x1xf32>
    %cst_383 = arith.constant 0.000000e+00 : f32
    %1393 = vector.broadcast %cst_383 : f32 to vector<32x1xf32>
    %1394 = arith.cmpf one, %1392, %1393 : vector<32x1xf32>
    %cst_384 = arith.constant 0xFF800000 : f32
    %1395 = vector.shape_cast %1394 : vector<32x1xi1> to vector<32x1xi1>
    %1396 = vector.broadcast %1395 : vector<32x1xi1> to vector<32x128xi1>
    %1397 = vector.shape_cast %1391 : vector<1x128xf32> to vector<1x128xf32>
    %1398 = vector.broadcast %1397 : vector<1x128xf32> to vector<32x128xf32>
    %1399 = vector.broadcast %cst_384 : f32 to vector<32x128xf32>
    %1400 = arith.select %1396, %1398, %1399 : vector<32x128xi1>, vector<32x128xf32>
    %1401 = arith.maximumf %1390, %1400 : vector<32x128xf32>
    %c127 = arith.constant 127 : index
    %c0_385 = arith.constant 0 : index
    %1402 = vector.load %arg4[%c127, %c0_385] : memref<128x128xf32, #tpu.memory_space<vmem>>, vector<1x128xf32>
    %1403 = vector.extract_strided_slice %3 {offsets = [0, 127], sizes = [32, 1], strides = [1, 1]} : vector<32x128xf32> to vector<32x1xf32>
    %cst_386 = arith.constant 0.000000e+00 : f32
    %1404 = vector.broadcast %cst_386 : f32 to vector<32x1xf32>
    %1405 = arith.cmpf one, %1403, %1404 : vector<32x1xf32>
    %cst_387 = arith.constant 0xFF800000 : f32
    %1406 = vector.shape_cast %1405 : vector<32x1xi1> to vector<32x1xi1>
    %1407 = vector.broadcast %1406 : vector<32x1xi1> to vector<32x128xi1>
    %1408 = vector.shape_cast %1402 : vector<1x128xf32> to vector<1x128xf32>
    %1409 = vector.broadcast %1408 : vector<1x128xf32> to vector<32x128xf32>
    %1410 = vector.broadcast %cst_387 : f32 to vector<32x128xf32>
    %1411 = arith.select %1407, %1409, %1410 : vector<32x128xi1>, vector<32x128xf32>
    %1412 = arith.maximumf %1401, %1411 : vector<32x128xf32>
    %c0_388 = arith.constant 0 : index
    %c0_389 = arith.constant 0 : index
    %1413 = vector.load %arg7[%c0_388, %c0_389] : memref<32x128xf32, #tpu.memory_space<vmem>>, vector<32x128xf32>
    tpu.vector_store %arg7[%c0_388, %c0_389], %1412 {strides = array<i32>} : memref<32x128xf32, #tpu.memory_space<vmem>>, vector<32x128xf32>,
    %c0_i32_390 = arith.constant 0 : i32
    %1414 = arith.cmpi eq, %arg1, %c0_i32_390 : i32
    %1415 = arith.extui %1414 : i1 to i32
    %c0_i32_391 = arith.constant 0 : i32
    %1416 = arith.cmpi ne, %1415, %c0_i32_391 : i32
    scf.if %1416 {
      %c0_392 = arith.constant 0 : index
      %c0_393 = arith.constant 0 : index
      %1417 = vector.load %arg2[%c0_392, %c0_393] : memref<32x1xf32, #tpu.memory_space<vmem>>, vector<32x1xf32>
      %cst_394 = arith.constant 0.000000e+00 : f32
      %1418 = vector.broadcast %cst_394 : f32 to vector<32x1xf32>
      %1419 = arith.cmpf one, %1417, %1418 : vector<32x1xf32>
      %c0_395 = arith.constant 0 : index
      %c0_396 = arith.constant 0 : index
      %1420 = vector.load %arg5[%c0_395, %c0_396] : memref<32x128xf32, #tpu.memory_space<vmem>>, vector<32x128xf32>
      %1421 = vector.shape_cast %1419 : vector<32x1xi1> to vector<32x1xi1>
      %1422 = vector.broadcast %1421 : vector<32x1xi1> to vector<32x128xi1>
      %1423 = arith.select %1422, %1412, %1420 : vector<32x128xi1>, vector<32x128xf32>
      %c0_397 = arith.constant 0 : index
      %c0_398 = arith.constant 0 : index
      %1424 = vector.load %arg6[%c0_397, %c0_398] : memref<32x128xf32, #tpu.memory_space<vmem>>, vector<32x128xf32>
      tpu.vector_store %arg6[%c0_397, %c0_398], %1423 {strides = array<i32>} : memref<32x128xf32, #tpu.memory_space<vmem>>, vector<32x128xf32>,
    } else {
    }
    return
  }
  func.func @transform_0(%arg0: i32, %arg1: i32) -> (i32, i32) {
    %c0_i32 = arith.constant 0 : i32
    %c0_i32_0 = arith.constant 0 : i32
    return %arg0, %c0_i32 : i32, i32
  }
  func.func @transform_1(%arg0: i32, %arg1: i32) -> (i32, i32) {
    %c0_i32 = arith.constant 0 : i32
    return %arg0, %arg1 : i32, i32
  }
  func.func @transform_2(%arg0: i32, %arg1: i32) -> (i32, i32) {
    %c0_i32 = arith.constant 0 : i32
    %c0_i32_0 = arith.constant 0 : i32
    return %arg1, %c0_i32 : i32, i32
  }
  func.func @transform_3(%arg0: i32, %arg1: i32) -> (i32, i32) {
    %c0_i32 = arith.constant 0 : i32
    %c0_i32_0 = arith.constant 0 : i32
    return %arg0, %c0_i32 : i32, i32
  }
  func.func @transform_4(%arg0: i32, %arg1: i32) -> (i32, i32) {
    %c0_i32 = arith.constant 0 : i32
    %c0_i32_0 = arith.constant 0 : i32
    return %arg0, %c0_i32 : i32, i32
  }
}

</mosaic_0001>

<llo_original>
// kernel: tpu_custom_call.1
$region0: #{tpu_custom_call.1}
  #allocation0 [shape = 'u32[]', space=smem, size = 0x4, offset = 0x4, fixed_abs, tag = 'smem constant byte address 0x4 - core index']
  #allocation1 [shape = 'u32[144,128]{1,0:T(1,128)}', space=vmem, size = 0x12000, scoped, tag = 'internal scratch']
  #allocation2 [shape = 'f32[32,128]{1,0:T(8,128)}', space=vmem, size = 0x4000, scoped, tag = 'scratch operand']
  %s0 = inlined_call_operand.vmem [shape: f32[128,1], index: 0, kind: input, shape index: {}]
  %s1 = inlined_call_operand.vmem [shape: f32[128,128], index: 1, kind: input, shape index: {}]
  %s2 = inlined_call_operand.hbm [shape: f32[128,128], index: 2, kind: input, shape index: {}]
  %s3 = inlined_call_operand.hbm [shape: f32[128,128], index: 3, kind: input, shape index: {}]
  %s4 = inlined_call_operand.hbm [shape: f32[128,128], index: 4, kind: output, shape index: {}]
  %s5 = sld [smem:[#allocation0]]
  $region65: #{tpu_custom_call.1} parent=0
    _
  %s7 = ssub.s32 1, %s5
  %s8 = scalar_select 0, %s7, %s5
  $region1: #{tpu_custom_call.1} parent=0
    #allocation3 [shape = 'u8[65536]{0}', space=vmem, size = 0x10000, scoped, tag = 'input window, operand 2, single buffered']
    #allocation4 [shape = 's32[2]{0}', space=sflag, size = 0x8, scoped, tag = 'scoped memory for tpu_custom_call.1']
    #allocation5 [shape = 's32[2]{0}', space=sflag, size = 0x8, scoped, tag = 'scoped memory for tpu_custom_call.1']
    #allocation6 [shape = 'u8[32768]{0}', space=vmem, size = 0x8000, scoped, tag = 'input window, operand 3']
    #allocation7 [shape = 's32[2]{0}', space=sflag, size = 0x8, scoped, tag = 'scoped memory for tpu_custom_call.1']
    #allocation8 [shape = 'u8[32768]{0}', space=vmem, size = 0x8000, scoped, tag = 'output window, operand 0']
    %9 = vsyncpa [#allocation4], 0
    %10 = vsyncpa [#allocation7], 0
    %s11 = scalar_lea.sflag [#allocation7], 1
    %12 = vsyncpa %s11, 0
    %13 = vsyncpa [#allocation5], 0
    %s14 = scalar_lea.sflag [#allocation5], 1
    %15 = vsyncpa %s14, 0
    loop: start=0, step=1, limit=6
    $region2: #{tpu_custom_call.1} parent=1 // loop_pre_header
      _
    $region3: #{tpu_custom_call.1} parent=1 // loop_header
      %s17 = sphi 0, %s21
      %p18 = scmp.ge.s32.totalorder %s17, 6
      %s24 = sphi 0, %s36
      %s25 = sphi 0, %s32
      %s26 = sphi 0, %s24
      %s27 = sphi 0, %s25
      %s28 = sphi 0, %s26
      %s29 = sphi 0, %s27
      %s39 = sphi 0, %s41
      %s42 = sphi 0, %s39
      %s43 = sphi 0, %s42
      %s59 = sphi 0, %s43
      %s67 = sphi 0, %s69
      %s70 = sphi 0, %s67
      %s71 = sphi 0, %s70
      %s87 = sphi 0, %s71
      %s93 = sphi 0, %s95
      %s96 = sphi 0, %s93
      %s97 = sphi 0, %s96
      %s113 = sphi 0, %s97
      %s119 = sphi 0, %s121
      %s122 = sphi 0, %s119
      %s123 = sphi 0, %s122
      %s139 = sphi 0, %s123
      %s145 = sphi 0, %s147
      %s148 = sphi 0, %s145
      %s149 = sphi 0, %s148
      %s165 = sphi 0, %s149
    $region4: #{tpu_custom_call.1} parent=1 // loop_header_branch
      %20 = sbr.rel (%p18) target = $region8
    $region5: #{tpu_custom_call.1} parent=1 // loop_body
      %s22 = ssub.s32 %s17, 1
      %s23 = ssub.s32 %s17, 2
      %s30 = sadd.s32 1, %s25
      %p31 = scmp.ge.s32.totalorder %s30, 1
      %s32 = scalar_select %p31, 0, %s30
      %s33 = sadd.s32 1, %s24
      %s34 = scalar_select %p31, %s33, %s24
      %p35 = scmp.ge.s32.totalorder %s34, 4
      %s36 = scalar_select %p35, 0, %s34
      %s37 = ssub.s32 %s24, %s36
      %p38 = scmp.eq.s32.totalorder %s37, 0
      %s40 = sadd.s32 %s39, 1
      %s41 = scalar_select %p38, %s39, %s40
      %p44 = pneg %p38
      %p45 = scmp.eq.s32.totalorder %s17, 3
      %p46 = por %p44, %p45
      %p47 = scmp.ne.s32.totalorder %s39, %s42
      %p48 = scmp.eq.s32.totalorder %s17, 0
      %p49 = por %p47, %p48
      %p50 = scmp.ne.s32.totalorder %s39, %s42
      %p51 = scmp.eq.s32.totalorder %s22, 3
      %p52 = por %p50, %p51
      %p53 = scmp.ne.s32.totalorder %s42, %s43
      %p54 = scmp.eq.s32.totalorder %s22, 0
      %p55 = por %p53, %p54
      %p56 = scmp.ne.s32.totalorder %s42, %s43
      %p57 = scmp.eq.s32.totalorder %s23, 3
      %p58 = por %p56, %p57
      %p60 = scmp.ne.s32.totalorder %s43, %s59
      %p61 = scmp.eq.s32.totalorder %s23, 0
      %p62 = por %p60, %p61
      %s63 = ssub.s32 %s24, %s36
      %s64 = ssub.s32 %s25, %s32
      %s65 = sor.u32 %s63, %s64
      %p66 = scmp.eq.s32.totalorder %s65, 0
      %s68 = sadd.s32 %s67, 1
      %s69 = scalar_select %p66, %s67, %s68
      %p72 = pneg %p66
      %p73 = scmp.eq.s32.totalorder %s17, 3
      %p74 = por %p72, %p73
      %p75 = scmp.ne.s32.totalorder %s67, %s70
      %p76 = scmp.eq.s32.totalorder %s17, 0
      %p77 = por %p75, %p76
      %p78 = scmp.ne.s32.totalorder %s67, %s70
      %p79 = scmp.eq.s32.totalorder %s22, 3
      %p80 = por %p78, %p79
      %p81 = scmp.ne.s32.totalorder %s70, %s71
      %p82 = scmp.eq.s32.totalorder %s22, 0
      %p83 = por %p81, %p82
      %p84 = scmp.ne.s32.totalorder %s70, %s71
      %p85 = scmp.eq.s32.totalorder %s23, 3
      %p86 = por %p84, %p85
      %p88 = scmp.ne.s32.totalorder %s71, %s87
      %p89 = scmp.eq.s32.totalorder %s23, 0
      %p90 = por %p88, %p89
      %s91 = ssub.s32 %s25, %s32
      %p92 = scmp.eq.s32.totalorder %s91, 0
      %s94 = sadd.s32 %s93, 1
      %s95 = scalar_select %p92, %s93, %s94
      %p98 = pneg %p92
      %p99 = scmp.eq.s32.totalorder %s17, 3
      %p100 = por %p98, %p99
      %p101 = scmp.ne.s32.totalorder %s93, %s96
      %p102 = scmp.eq.s32.totalorder %s17, 0
      %p103 = por %p101, %p102
      %p104 = scmp.ne.s32.totalorder %s93, %s96
      %p105 = scmp.eq.s32.totalorder %s22, 3
      %p106 = por %p104, %p105
      %p107 = scmp.ne.s32.totalorder %s96, %s97
      %p108 = scmp.eq.s32.totalorder %s22, 0
      %p109 = por %p107, %p108
      %p110 = scmp.ne.s32.totalorder %s96, %s97
      %p111 = scmp.eq.s32.totalorder %s23, 3
      %p112 = por %p110, %p111
      %p114 = scmp.ne.s32.totalorder %s97, %s113
      %p115 = scmp.eq.s32.totalorder %s23, 0
      %p116 = por %p114, %p115
      %s117 = ssub.s32 %s24, %s36
      %p118 = scmp.eq.s32.totalorder %s117, 0
      %s120 = sadd.s32 %s119, 1
      %s121 = scalar_select %p118, %s119, %s120
      %p124 = pneg %p118
      %p125 = scmp.eq.s32.totalorder %s17, 3
      %p126 = por %p124, %p125
      %p127 = scmp.ne.s32.totalorder %s119, %s122
      %p128 = scmp.eq.s32.totalorder %s17, 0
      %p129 = por %p127, %p128
      %p130 = scmp.ne.s32.totalorder %s119, %s122
      %p131 = scmp.eq.s32.totalorder %s22, 3
      %p132 = por %p130, %p131
      %p133 = scmp.ne.s32.totalorder %s122, %s123
      %p134 = scmp.eq.s32.totalorder %s22, 0
      %p135 = por %p133, %p134
      %p136 = scmp.ne.s32.totalorder %s122, %s123
      %p137 = scmp.eq.s32.totalorder %s23, 3
      %p138 = por %p136, %p137
      %p140 = scmp.ne.s32.totalorder %s123, %s139
      %p141 = scmp.eq.s32.totalorder %s23, 0
      %p142 = por %p140, %p141
      %s143 = ssub.s32 %s24, %s36
      %p144 = scmp.eq.s32.totalorder %s143, 0
      %s146 = sadd.s32 %s145, 1
      %s147 = scalar_select %p144, %s145, %s146
      %p150 = pneg %p144
      %p151 = scmp.eq.s32.totalorder %s17, 3
      %p152 = por %p150, %p151
      %p153 = scmp.ne.s32.totalorder %s145, %s148
      %p154 = scmp.eq.s32.totalorder %s17, 0
      %p155 = por %p153, %p154
      %p156 = scmp.ne.s32.totalorder %s145, %s148
      %p157 = scmp.eq.s32.totalorder %s22, 3
      %p158 = por %p156, %p157
      %p159 = scmp.ne.s32.totalorder %s148, %s149
      %p160 = scmp.eq.s32.totalorder %s22, 0
      %p161 = por %p159, %p160
      %p162 = scmp.ne.s32.totalorder %s148, %s149
      %p163 = scmp.eq.s32.totalorder %s23, 3
      %p164 = por %p162, %p163
      %p166 = scmp.ne.s32.totalorder %s149, %s165
      %p167 = scmp.eq.s32.totalorder %s23, 0
      %p168 = por %p166, %p167
      %p169 = scmp.le.s32.totalorder 1, %s17
      %p170 = scmp.lt.s32.totalorder %s17, 5
      %p171 = pnand %p169, %p170
      %p172 = pneg %p171
      // Predicated region
      $region9: #{tpu_custom_call.1} parent=5 // pred_check
        _
      $region10: #{tpu_custom_call.1} parent=5 // pred_check_branch
        %174 = sbr.rel (%p171) target = $region12
      $region11: #{tpu_custom_call.1} parent=5 // pred_region
        %s175 = ssub.s32 %s17, 1
        // Predicated region
        $region13: #{tpu_custom_call.1} parent=11 // pred_check
          %p176 = pneg %p109
        $region14: #{tpu_custom_call.1} parent=11 // pred_check_branch
          %178 = sbr.rel (%p176) target = $region16
        $region15: #{tpu_custom_call.1} parent=11 // pred_region
          %s179 = smul.u32 16, %s27
          %s181 = ssub.s32 2048, 2048
          %182 = vsyncadd [#allocation4], %s181
          %s183 = smul.addr %s179, 128
          %s184 = scalar_lea.hbm %s2, %s183
          %s185 = sshll.u32 [#allocation3], 4
          %s186 = int_to_ptr.vmem [resolvable:$true] %s185
          %191 = dma.hbm_to_vmem [thread:$0]  %s184, 2048, %s186, [#allocation4], 128, 128, 8
        $region16: #{tpu_custom_call.1} parent=11 // pred_fallthru
          _
      $region12: #{tpu_custom_call.1} parent=5 // pred_fallthru
        _
      %p192 = scmp.lt.s32.totalorder %s17, 4
      // Predicated region
      $region17: #{tpu_custom_call.1} parent=5 // pred_check
        %p193 = pneg %p192
      $region18: #{tpu_custom_call.1} parent=5 // pred_check_branch
        %195 = sbr.rel (%p193) target = $region20
      $region19: #{tpu_custom_call.1} parent=5 // pred_region
        // Predicated region
        $region21: #{tpu_custom_call.1} parent=19 // pred_check
          %p196 = pneg %p49
        $region22: #{tpu_custom_call.1} parent=19 // pred_check_branch
          %198 = sbr.rel (%p196) target = $region24
        $region23: #{tpu_custom_call.1} parent=19 // pred_region
          %s199 = smul.u32 4, %s24
          %p200 = scmp.lt.s32.totalorder %s199, 15
          %s201 = scalar_select %p200, %s199, 15
          %s202 = smul.addr %s201, 8
          %s203 = scalar_lea.vmem %s0, %s202
          %s204 = smul.u32 4, %s24
        $region24: #{tpu_custom_call.1} parent=19 // pred_fallthru
          _
        // Predicated region
        $region25: #{tpu_custom_call.1} parent=19 // pred_check
          %p205 = pneg %p77
        $region26: #{tpu_custom_call.1} parent=19 // pred_check_branch
          %207 = sbr.rel (%p205) target = $region28
        $region27: #{tpu_custom_call.1} parent=19 // pred_region
          %s208 = smul.u32 4, %s24
          %p209 = scmp.lt.s32.totalorder %s208, 15
          %s210 = scalar_select %p209, %s208, 15
          %p211 = scmp.lt.s32.totalorder %s25, 0
          %s212 = scalar_select %p211, %s25, 0
          %s213 = sadd.s32 %s212, %s210
          %s214 = smul.addr %s213, 8
          %s215 = scalar_lea.vmem %s1, %s214
          %s216 = smul.u32 4, %s24
        $region28: #{tpu_custom_call.1} parent=19 // pred_fallthru
          _
        // Predicated region
        $region29: #{tpu_custom_call.1} parent=19 // pred_check
          %p217 = pneg %p129
        $region30: #{tpu_custom_call.1} parent=19 // pred_check_branch
          %219 = sbr.rel (%p217) target = $region32
        $region31: #{tpu_custom_call.1} parent=19 // pred_region
          %s220 = sand.u32 %s119, 1
          %s221 = scalar_lea.sflag [#allocation7], %s220
          %s222 = sand.u32 %s119, 1
          %s223 = smul.addr %s222, 32
          %s224 = scalar_lea.vmem [#allocation6], %s223
          %s225 = smul.u32 4, %s24
          %s227 = ssub.s32 512, 512
          %228 = vsyncadd %s221, %s227
          %s229 = smul.addr %s225, 128
          %s230 = scalar_lea.hbm %s3, %s229
          %s231 = sshll.u32 %s224, 4
          %s232 = int_to_ptr.vmem [resolvable:$true] %s231
          %237 = dma.hbm_to_vmem [thread:$0]  %s230, 512, %s232, %s221, 128, 128, 8
        $region32: #{tpu_custom_call.1} parent=19 // pred_fallthru
          _
      $region20: #{tpu_custom_call.1} parent=5 // pred_fallthru
        _
      %p238 = scmp.le.s32.totalorder 1, %s17
      %p239 = scmp.lt.s32.totalorder %s17, 5
      %p240 = pnand %p238, %p239
      %p241 = pneg %p240
      // Predicated region
      $region33: #{tpu_custom_call.1} parent=5 // pred_check
        _
      $region34: #{tpu_custom_call.1} parent=5 // pred_check_branch
        %243 = sbr.rel (%p240) target = $region36
      $region35: #{tpu_custom_call.1} parent=5 // pred_region
        %s244 = ssub.s32 %s17, 1
        // Predicated region
        $region37: #{tpu_custom_call.1} parent=35 // pred_check
          %p245 = pneg %p109
        $region38: #{tpu_custom_call.1} parent=35 // pred_check_branch
          %247 = sbr.rel (%p245) target = $region40
        $region39: #{tpu_custom_call.1} parent=35 // pred_region
          %248 = dma.done [#allocation4], 2048
        $region40: #{tpu_custom_call.1} parent=35 // pred_fallthru
          _
        %s249 = sand.u32 %s122, 1
        %s250 = scalar_lea.sflag [#allocation7], %s249
        %s251 = sand.u32 %s122, 1
        %s252 = smul.addr %s251, 32
        %s253 = scalar_lea.vmem [#allocation6], %s252
        // Predicated region
        $region41: #{tpu_custom_call.1} parent=35 // pred_check
          %p254 = pneg %p135
        $region42: #{tpu_custom_call.1} parent=35 // pred_check_branch
          %256 = sbr.rel (%p254) target = $region44
        $region43: #{tpu_custom_call.1} parent=35 // pred_region
          %257 = dma.done %s250, 512
        $region44: #{tpu_custom_call.1} parent=35 // pred_fallthru
          _
        %s258 = smul.u32 4, %s26
        %p259 = scmp.lt.s32.totalorder %s258, 15
        %s260 = scalar_select %p259, %s258, 15
        %s261 = smul.addr %s260, 8
        %s262 = scalar_lea.vmem %s0, %s261
        %p263 = pneg %p55
        %p264 = pneg %p52
        %s265 = smul.u32 4, %s26
        %p266 = scmp.lt.s32.totalorder %s265, 15
        %s267 = scalar_select %p266, %s265, 15
        %p268 = scmp.lt.s32.totalorder %s27, 0
        %s269 = scalar_select %p268, %s27, 0
        %s270 = sadd.s32 %s269, %s267
        %s271 = smul.addr %s270, 8
        %s272 = scalar_lea.vmem %s1, %s271
        %p273 = pneg %p83
        %p274 = pneg %p80
        %p275 = pneg %p109
        %p276 = pneg %p106
        %s277 = sand.u32 %s122, 1
        %s278 = scalar_lea.sflag [#allocation7], %s277
        %s279 = sand.u32 %s122, 1
        %s280 = smul.addr %s279, 32
        %s281 = scalar_lea.vmem [#allocation6], %s280
        %p282 = pneg %p135
        %p283 = pneg %p132
        %p284 = pneg %p161
        %p285 = pneg %p158
        %s286 = sand.u32 %s148, 1
        %s287 = scalar_lea.sflag [#allocation5], %s286
        %s288 = sand.u32 %s148, 1
        %s289 = smul.addr %s288, 32
        %s290 = scalar_lea.vmem [#allocation8], %s289
        %s291 = smul.u32 4, %s26
        %p292 = scmp.lt.s32.totalorder %s291, 15
        %s293 = scalar_select %p292, %s291, 15
        %s294 = smul.addr %s293, 8
        %s295 = scalar_lea.vmem %s0, %s294
        %s296 = smul.u32 4, %s26
        %s297 = smul.u32 4, %s26
        %p298 = scmp.lt.s32.totalorder %s297, 15
        %s299 = scalar_select %p298, %s297, 15
        %p300 = scmp.lt.s32.totalorder %s27, 0
        %s301 = scalar_select %p300, %s27, 0
        %s302 = sadd.s32 %s301, %s299
        %s303 = smul.addr %s302, 8
        %s304 = scalar_lea.vmem %s1, %s303
        %s305 = smul.u32 4, %s26
        %s306 = smul.u32 16, %s27
        %s307 = smul.u32 4, %s26
        %s308 = smul.u32 4, %s26
        %p309 = scmp.eq.s32.totalorder %s27, 0
        // Predicated region
        $region45: #{tpu_custom_call.1} parent=35 // pred_check
          %p310 = pneg %p309
        $region46: #{tpu_custom_call.1} parent=35 // pred_check_branch
          %312 = sbr.rel (%p310) target = $region48
        $region47: #{tpu_custom_call.1} parent=35 // pred_region
          %313 = vst [vmem:[#allocation2] sm:$0xff] -inf
          %314 = vst [vmem:[#allocation2 + $0x8] sm:$0xff] -inf
          %315 = vst [vmem:[#allocation2 + $0x10] sm:$0xff] -inf
          %316 = vst [vmem:[#allocation2 + $0x18] sm:$0xff] -inf
        $region48: #{tpu_custom_call.1} parent=35 // pred_fallthru
          _
        %v317 = vld [vmem:[%s304] sm:$0xff]
        %v318 = vld [vmem:[%s304 + $0x8] sm:$0xff]
        %v319 = vld [vmem:[%s304 + $0x10] sm:$0xff]
        %v320 = vld [vmem:[%s304 + $0x18] sm:$0xff]
        %v321 = vld [vmem:[#allocation2] sm:$0xff]
        %v322 = vld [vmem:[#allocation2 + $0x8] sm:$0xff]
        %v323 = vld [vmem:[#allocation2 + $0x10] sm:$0xff]
        %v324 = vld [vmem:[#allocation2 + $0x18] sm:$0xff]
        %v325 = vld [vmem:[#allocation3] sm:$0x1]
        %vm326 = vcmp.ne.f32.partialorder %v317, 0.0
        %vm327 = vcmp.ne.f32.partialorder %v318, 0.0
        %vm328 = vcmp.ne.f32.partialorder %v319, 0.0
        %vm329 = vcmp.ne.f32.partialorder %v320, 0.0
        %v330 = vsel %vm326, 1, 0
        %v331 = vsel %vm327, 1, 0
        %v332 = vsel %vm328, 1, 0
        %v333 = vsel %vm329, 1, 0
        %334 = vset.pattern.permute.xlu0 0
        %335 = vperm.xlu0 %334, %v330
        %v336 = vpop.permute.xlu0 %335
        %337 = vset.pattern.permute.xlu0 0
        %338 = vperm.xlu0 %337, %v331
        %v339 = vpop.permute.xlu0 %338
        %340 = vset.pattern.permute.xlu0 0
        %341 = vperm.xlu0 %340, %v332
        %v342 = vpop.permute.xlu0 %341
        %343 = vset.pattern.permute.xlu0 0
        %344 = vperm.xlu0 %343, %v333
        %v345 = vpop.permute.xlu0 %344
        %vm346 = vcmp.eq.s32.totalorder %v336, 1
        %vm347 = vcmp.eq.s32.totalorder %v339, 1
        %vm348 = vcmp.eq.s32.totalorder %v342, 1
        %vm349 = vcmp.eq.s32.totalorder %v345, 1
        %v350 = vlaneseq
        %v351 = vshrl.u32 %v350, 7
        %v352 = vsub.s32 0, %v351
        %v353 = vrot.slane %v325, %v352
        %v354 = vsel %vm346, %v353, -inf
        %v355 = vsel %vm347, %v353, -inf
        %v356 = vsel %vm348, %v353, -inf
        %v357 = vsel %vm349, %v353, -inf
        %v358 = vmax.f32 %v321, %v354
        %v359 = vmax.f32 %v322, %v355
        %v360 = vmax.f32 %v323, %v356
        %v361 = vmax.f32 %v324, %v357
        %v362 = vld [vmem:[#allocation3 + $0x1] sm:$0x1]
        %363 = vset.pattern.permute.xlu0 1
        %364 = vperm.xlu0 %363, %v330
        %v365 = vpop.permute.xlu0 %364
        %366 = vset.pattern.permute.xlu0 1
        %367 = vperm.xlu0 %366, %v331
        %v368 = vpop.permute.xlu0 %367
        %369 = vset.pattern.permute.xlu0 1
        %370 = vperm.xlu0 %369, %v332
        %v371 = vpop.permute.xlu0 %370
        %372 = vset.pattern.permute.xlu0 1
        %373 = vperm.xlu0 %372, %v333
        %v374 = vpop.permute.xlu0 %373
        %vm375 = vcmp.eq.s32.totalorder %v365, 1
        %vm376 = vcmp.eq.s32.totalorder %v368, 1
        %vm377 = vcmp.eq.s32.totalorder %v371, 1
        %vm378 = vcmp.eq.s32.totalorder %v374, 1
        %v379 = vlaneseq
        %v380 = vshrl.u32 %v379, 7
        %v381 = vsub.s32 0, %v380
        %v382 = vrot.slane %v362, %v381
        %v383 = vsel %vm375, %v382, -inf
        %v384 = vsel %vm376, %v382, -inf
        %v385 = vsel %vm377, %v382, -inf
        %v386 = vsel %vm378, %v382, -inf
        %v387 = vmax.f32 %v358, %v383
        %v388 = vmax.f32 %v359, %v384
        %v389 = vmax.f32 %v360, %v385
        %v390 = vmax.f32 %v361, %v386
        %v391 = vld [vmem:[#allocation3 + $0x2] sm:$0x1]
        %392 = vset.pattern.permute.xlu0 2
        %393 = vperm.xlu0 %392, %v330
        %v394 = vpop.permute.xlu0 %393
        %395 = vset.pattern.permute.xlu0 2
        %396 = vperm.xlu0 %395, %v331
        %v397 = vpop.permute.xlu0 %396
        %398 = vset.pattern.permute.xlu0 2
        %399 = vperm.xlu0 %398, %v332
        %v400 = vpop.permute.xlu0 %399
        %401 = vset.pattern.permute.xlu0 2
        %402 = vperm.xlu0 %401, %v333
        %v403 = vpop.permute.xlu0 %402
        %vm404 = vcmp.eq.s32.totalorder %v394, 1
        %vm405 = vcmp.eq.s32.totalorder %v397, 1
        %vm406 = vcmp.eq.s32.totalorder %v400, 1
        %vm407 = vcmp.eq.s32.totalorder %v403, 1
        %v408 = vlaneseq
        %v409 = vshrl.u32 %v408, 7
        %v410 = vsub.s32 0, %v409
        %v411 = vrot.slane %v391, %v410
        %v412 = vsel %vm404, %v411, -inf
        %v413 = vsel %vm405, %v411, -inf
        %v414 = vsel %vm406, %v411, -inf
        %v415 = vsel %vm407, %v411, -inf
        %v416 = vmax.f32 %v387, %v412
        %v417 = vmax.f32 %v388, %v413
        %v418 = vmax.f32 %v389, %v414
        %v419 = vmax.f32 %v390, %v415
        %v420 = vld [vmem:[#allocation3 + $0x3] sm:$0x1]
        %421 = vset.pattern.permute.xlu0 3
        %422 = vperm.xlu0 %421, %v330
        %v423 = vpop.permute.xlu0 %422
        %424 = vset.pattern.permute.xlu0 3
        %425 = vperm.xlu0 %424, %v331
        %v426 = vpop.permute.xlu0 %425
        %427 = vset.pattern.permute.xlu0 3
        %428 = vperm.xlu0 %427, %v332
        %v429 = vpop.permute.xlu0 %428
        %430 = vset.pattern.permute.xlu0 3
        %431 = vperm.xlu0 %430, %v333
        %v432 = vpop.permute.xlu0 %431
        %vm433 = vcmp.eq.s32.totalorder %v423, 1
        %vm434 = vcmp.eq.s32.totalorder %v426, 1
        %vm435 = vcmp.eq.s32.totalorder %v429, 1
        %vm436 = vcmp.eq.s32.totalorder %v432, 1
        %v437 = vlaneseq
        %v438 = vshrl.u32 %v437, 7
        %v439 = vsub.s32 0, %v438
        %v440 = vrot.slane %v420, %v439
        %v441 = vsel %vm433, %v440, -inf
        %v442 = vsel %vm434, %v440, -inf
        %v443 = vsel %vm435, %v440, -inf
        %v444 = vsel %vm436, %v440, -inf
        %v445 = vmax.f32 %v416, %v441
        %v446 = vmax.f32 %v417, %v442
        %v447 = vmax.f32 %v418, %v443
        %v448 = vmax.f32 %v419, %v444
        %v449 = vld [vmem:[#allocation3 + $0x4] sm:$0x1]
        %450 = vset.pattern.permute.xlu0 4
        %451 = vperm.xlu0 %450, %v330
        %v452 = vpop.permute.xlu0 %451
        %453 = vset.pattern.permute.xlu0 4
        %454 = vperm.xlu0 %453, %v331
        %v455 = vpop.permute.xlu0 %454
        %456 = vset.pattern.permute.xlu0 4
        %457 = vperm.xlu0 %456, %v332
        %v458 = vpop.permute.xlu0 %457
        %459 = vset.pattern.permute.xlu0 4
        %460 = vperm.xlu0 %459, %v333
        %v461 = vpop.permute.xlu0 %460
        %vm462 = vcmp.eq.s32.totalorder %v452, 1
        %vm463 = vcmp.eq.s32.totalorder %v455, 1
        %vm464 = vcmp.eq.s32.totalorder %v458, 1
        %vm465 = vcmp.eq.s32.totalorder %v461, 1
        %v466 = vlaneseq
        %v467 = vshrl.u32 %v466, 7
        %v468 = vsub.s32 0, %v467
        %v469 = vrot.slane %v449, %v468
        %v470 = vsel %vm462, %v469, -inf
        %v471 = vsel %vm463, %v469, -inf
        %v472 = vsel %vm464, %v469, -inf
        %v473 = vsel %vm465, %v469, -inf
        %v474 = vmax.f32 %v445, %v470
        %v475 = vmax.f32 %v446, %v471
        %v476 = vmax.f32 %v447, %v472
        %v477 = vmax.f32 %v448, %v473
        %v478 = vld [vmem:[#allocation3 + $0x5] sm:$0x1]
        %479 = vset.pattern.permute.xlu0 5
        %480 = vperm.xlu0 %479, %v330
        %v481 = vpop.permute.xlu0 %480
        %482 = vset.pattern.permute.xlu0 5
        %483 = vperm.xlu0 %482, %v331
        %v484 = vpop.permute.xlu0 %483
        %485 = vset.pattern.permute.xlu0 5
        %486 = vperm.xlu0 %485, %v332
        %v487 = vpop.permute.xlu0 %486
        %488 = vset.pattern.permute.xlu0 5
        %489 = vperm.xlu0 %488, %v333
        %v490 = vpop.permute.xlu0 %489
        %vm491 = vcmp.eq.s32.totalorder %v481, 1
        %vm492 = vcmp.eq.s32.totalorder %v484, 1
        %vm493 = vcmp.eq.s32.totalorder %v487, 1
        %vm494 = vcmp.eq.s32.totalorder %v490, 1
        %v495 = vlaneseq
        %v496 = vshrl.u32 %v495, 7
        %v497 = vsub.s32 0, %v496
        %v498 = vrot.slane %v478, %v497
        %v499 = vsel %vm491, %v498, -inf
        %v500 = vsel %vm492, %v498, -inf
        %v501 = vsel %vm493, %v498, -inf
        %v502 = vsel %vm494, %v498, -inf
        %v503 = vmax.f32 %v474, %v499
        %v504 = vmax.f32 %v475, %v500
        %v505 = vmax.f32 %v476, %v501
        %v506 = vmax.f32 %v477, %v502
        %v507 = vld [vmem:[#allocation3 + $0x6] sm:$0x1]
        %508 = vset.pattern.permute.xlu0 6
        %509 = vperm.xlu0 %508, %v330
        %v510 = vpop.permute.xlu0 %509
        %511 = vset.pattern.permute.xlu0 6
        %512 = vperm.xlu0 %511, %v331
        %v513 = vpop.permute.xlu0 %512
        %514 = vset.pattern.permute.xlu0 6
        %515 = vperm.xlu0 %514, %v332
        %v516 = vpop.permute.xlu0 %515
        %517 = vset.pattern.permute.xlu0 6
        %518 = vperm.xlu0 %517, %v333
        %v519 = vpop.permute.xlu0 %518
        %vm520 = vcmp.eq.s32.totalorder %v510, 1
        %vm521 = vcmp.eq.s32.totalorder %v513, 1
        %vm522 = vcmp.eq.s32.totalorder %v516, 1
        %vm523 = vcmp.eq.s32.totalorder %v519, 1
        %v524 = vlaneseq
        %v525 = vshrl.u32 %v524, 7
        %v526 = vsub.s32 0, %v525
        %v527 = vrot.slane %v507, %v526
        %v528 = vsel %vm520, %v527, -inf
        %v529 = vsel %vm521, %v527, -inf
        %v530 = vsel %vm522, %v527, -inf
        %v531 = vsel %vm523, %v527, -inf
        %v532 = vmax.f32 %v503, %v528
        %v533 = vmax.f32 %v504, %v529
        %v534 = vmax.f32 %v505, %v530
        %v535 = vmax.f32 %v506, %v531
        %v536 = vld [vmem:[#allocation3 + $0x7] sm:$0x1]
        %537 = vset.pattern.permute.xlu0 7
        %538 = vperm.xlu0 %537, %v330
        %v539 = vpop.permute.xlu0 %538
        %540 = vset.pattern.permute.xlu0 7
        %541 = vperm.xlu0 %540, %v331
        %v542 = vpop.permute.xlu0 %541
        %543 = vset.pattern.permute.xlu0 7
        %544 = vperm.xlu0 %543, %v332
        %v545 = vpop.permute.xlu0 %544
        %546 = vset.pattern.permute.xlu0 7
        %547 = vperm.xlu0 %546, %v333
        %v548 = vpop.permute.xlu0 %547
        %vm549 = vcmp.eq.s32.totalorder %v539, 1
        %vm550 = vcmp.eq.s32.totalorder %v542, 1
        %vm551 = vcmp.eq.s32.totalorder %v545, 1
        %vm552 = vcmp.eq.s32.totalorder %v548, 1
        %v553 = vlaneseq
        %v554 = vshrl.u32 %v553, 7
        %v555 = vsub.s32 0, %v554
        %v556 = vrot.slane %v536, %v555
        %v557 = vsel %vm549, %v556, -inf
        %v558 = vsel %vm550, %v556, -inf
        %v559 = vsel %vm551, %v556, -inf
        %v560 = vsel %vm552, %v556, -inf
        %v561 = vmax.f32 %v532, %v557
        %v562 = vmax.f32 %v533, %v558
        %v563 = vmax.f32 %v534, %v559
        %v564 = vmax.f32 %v535, %v560
        %v565 = vld [vmem:[#allocation3 + $0x8] sm:$0x1]
        %566 = vset.pattern.permute.xlu0 8
        %567 = vperm.xlu0 %566, %v330
        %v568 = vpop.permute.xlu0 %567
        %569 = vset.pattern.permute.xlu0 8
        %570 = vperm.xlu0 %569, %v331
        %v571 = vpop.permute.xlu0 %570
        %572 = vset.pattern.permute.xlu0 8
        %573 = vperm.xlu0 %572, %v332
        %v574 = vpop.permute.xlu0 %573
        %575 = vset.pattern.permute.xlu0 8
        %576 = vperm.xlu0 %575, %v333
        %v577 = vpop.permute.xlu0 %576
        %vm578 = vcmp.eq.s32.totalorder %v568, 1
        %vm579 = vcmp.eq.s32.totalorder %v571, 1
        %vm580 = vcmp.eq.s32.totalorder %v574, 1
        %vm581 = vcmp.eq.s32.totalorder %v577, 1
        %v582 = vlaneseq
        %v583 = vshrl.u32 %v582, 7
        %v584 = vsub.s32 0, %v583
        %v585 = vrot.slane %v565, %v584
        %v586 = vsel %vm578, %v585, -inf
        %v587 = vsel %vm579, %v585, -inf
        %v588 = vsel %vm580, %v585, -inf
        %v589 = vsel %vm581, %v585, -inf
        %v590 = vmax.f32 %v561, %v586
        %v591 = vmax.f32 %v562, %v587
        %v592 = vmax.f32 %v563, %v588
        %v593 = vmax.f32 %v564, %v589
        %v594 = vld [vmem:[#allocation3 + $0x9] sm:$0x1]
        %595 = vset.pattern.permute.xlu0 9
        %596 = vperm.xlu0 %595, %v330
        %v597 = vpop.permute.xlu0 %596
        %598 = vset.pattern.permute.xlu0 9
        %599 = vperm.xlu0 %598, %v331
        %v600 = vpop.permute.xlu0 %599
        %601 = vset.pattern.permute.xlu0 9
        %602 = vperm.xlu0 %601, %v332
        %v603 = vpop.permute.xlu0 %602
        %604 = vset.pattern.permute.xlu0 9
        %605 = vperm.xlu0 %604, %v333
        %v606 = vpop.permute.xlu0 %605
        %vm607 = vcmp.eq.s32.totalorder %v597, 1
        %vm608 = vcmp.eq.s32.totalorder %v600, 1
        %vm609 = vcmp.eq.s32.totalorder %v603, 1
        %vm610 = vcmp.eq.s32.totalorder %v606, 1
        %v611 = vlaneseq
        %v612 = vshrl.u32 %v611, 7
        %v613 = vsub.s32 0, %v612
        %v614 = vrot.slane %v594, %v613
        %v615 = vsel %vm607, %v614, -inf
        %v616 = vsel %vm608, %v614, -inf
        %v617 = vsel %vm609, %v614, -inf
        %v618 = vsel %vm610, %v614, -inf
        %v619 = vmax.f32 %v590, %v615
        %v620 = vmax.f32 %v591, %v616
        %v621 = vmax.f32 %v592, %v617
        %v622 = vmax.f32 %v593, %v618
        %v623 = vld [vmem:[#allocation3 + $0xa] sm:$0x1]
        %624 = vset.pattern.permute.xlu0 10
        %625 = vperm.xlu0 %624, %v330
        %v626 = vpop.permute.xlu0 %625
        %627 = vset.pattern.permute.xlu0 10
        %628 = vperm.xlu0 %627, %v331
        %v629 = vpop.permute.xlu0 %628
        %630 = vset.pattern.permute.xlu0 10
        %631 = vperm.xlu0 %630, %v332
        %v632 = vpop.permute.xlu0 %631
        %633 = vset.pattern.permute.xlu0 10
        %634 = vperm.xlu0 %633, %v333
        %v635 = vpop.permute.xlu0 %634
        %vm636 = vcmp.eq.s32.totalorder %v626, 1
        %vm637 = vcmp.eq.s32.totalorder %v629, 1
        %vm638 = vcmp.eq.s32.totalorder %v632, 1
        %vm639 = vcmp.eq.s32.totalorder %v635, 1
        %v640 = vlaneseq
        %v641 = vshrl.u32 %v640, 7
        %v642 = vsub.s32 0, %v641
        %v643 = vrot.slane %v623, %v642
        %v644 = vsel %vm636, %v643, -inf
        %v645 = vsel %vm637, %v643, -inf
        %v646 = vsel %vm638, %v643, -inf
        %v647 = vsel %vm639, %v643, -inf
        %v648 = vmax.f32 %v619, %v644
        %v649 = vmax.f32 %v620, %v645
        %v650 = vmax.f32 %v621, %v646
        %v651 = vmax.f32 %v622, %v647
        %v652 = vld [vmem:[#allocation3 + $0xb] sm:$0x1]
        %653 = vset.pattern.permute.xlu0 11
        %654 = vperm.xlu0 %653, %v330
        %v655 = vpop.permute.xlu0 %654
        %656 = vset.pattern.permute.xlu0 11
        %657 = vperm.xlu0 %656, %v331
        %v658 = vpop.permute.xlu0 %657
        %659 = vset.pattern.permute.xlu0 11
        %660 = vperm.xlu0 %659, %v332
        %v661 = vpop.permute.xlu0 %660
        %662 = vset.pattern.permute.xlu0 11
        %663 = vperm.xlu0 %662, %v333
        %v664 = vpop.permute.xlu0 %663
        %vm665 = vcmp.eq.s32.totalorder %v655, 1
        %vm666 = vcmp.eq.s32.totalorder %v658, 1
        %vm667 = vcmp.eq.s32.totalorder %v661, 1
        %vm668 = vcmp.eq.s32.totalorder %v664, 1
        %v669 = vlaneseq
        %v670 = vshrl.u32 %v669, 7
        %v671 = vsub.s32 0, %v670
        %v672 = vrot.slane %v652, %v671
        %v673 = vsel %vm665, %v672, -inf
        %v674 = vsel %vm666, %v672, -inf
        %v675 = vsel %vm667, %v672, -inf
        %v676 = vsel %vm668, %v672, -inf
        %v677 = vmax.f32 %v648, %v673
        %v678 = vmax.f32 %v649, %v674
        %v679 = vmax.f32 %v650, %v675
        %v680 = vmax.f32 %v651, %v676
        %v681 = vld [vmem:[#allocation3 + $0xc] sm:$0x1]
        %682 = vset.pattern.permute.xlu0 12
        %683 = vperm.xlu0 %682, %v330
        %v684 = vpop.permute.xlu0 %683
        %685 = vset.pattern.permute.xlu0 12
        %686 = vperm.xlu0 %685, %v331
        %v687 = vpop.permute.xlu0 %686
        %688 = vset.pattern.permute.xlu0 12
        %689 = vperm.xlu0 %688, %v332
        %v690 = vpop.permute.xlu0 %689
        %691 = vset.pattern.permute.xlu0 12
        %692 = vperm.xlu0 %691, %v333
        %v693 = vpop.permute.xlu0 %692
        %vm694 = vcmp.eq.s32.totalorder %v684, 1
        %vm695 = vcmp.eq.s32.totalorder %v687, 1
        %vm696 = vcmp.eq.s32.totalorder %v690, 1
        %vm697 = vcmp.eq.s32.totalorder %v693, 1
        %v698 = vlaneseq
        %v699 = vshrl.u32 %v698, 7
        %v700 = vsub.s32 0, %v699
        %v701 = vrot.slane %v681, %v700
        %v702 = vsel %vm694, %v701, -inf
        %v703 = vsel %vm695, %v701, -inf
        %v704 = vsel %vm696, %v701, -inf
        %v705 = vsel %vm697, %v701, -inf
        %v706 = vmax.f32 %v677, %v702
        %v707 = vmax.f32 %v678, %v703
        %v708 = vmax.f32 %v679, %v704
        %v709 = vmax.f32 %v680, %v705
        %v710 = vld [vmem:[#allocation3 + $0xd] sm:$0x1]
        %711 = vset.pattern.permute.xlu0 13
        %712 = vperm.xlu0 %711, %v330
        %v713 = vpop.permute.xlu0 %712
        %714 = vset.pattern.permute.xlu0 13
        %715 = vperm.xlu0 %714, %v331
        %v716 = vpop.permute.xlu0 %715
        %717 = vset.pattern.permute.xlu0 13
        %718 = vperm.xlu0 %717, %v332
        %v719 = vpop.permute.xlu0 %718
        %720 = vset.pattern.permute.xlu0 13
        %721 = vperm.xlu0 %720, %v333
        %v722 = vpop.permute.xlu0 %721
        %vm723 = vcmp.eq.s32.totalorder %v713, 1
        %vm724 = vcmp.eq.s32.totalorder %v716, 1
        %vm725 = vcmp.eq.s32.totalorder %v719, 1
        %vm726 = vcmp.eq.s32.totalorder %v722, 1
        %v727 = vlaneseq
        %v728 = vshrl.u32 %v727, 7
        %v729 = vsub.s32 0, %v728
        %v730 = vrot.slane %v710, %v729
        %v731 = vsel %vm723, %v730, -inf
        %v732 = vsel %vm724, %v730, -inf
        %v733 = vsel %vm725, %v730, -inf
        %v734 = vsel %vm726, %v730, -inf
        %v735 = vmax.f32 %v706, %v731
        %v736 = vmax.f32 %v707, %v732
        %v737 = vmax.f32 %v708, %v733
        %v738 = vmax.f32 %v709, %v734
        %v739 = vld [vmem:[#allocation3 + $0xe] sm:$0x1]
        %740 = vset.pattern.permute.xlu0 14
        %741 = vperm.xlu0 %740, %v330
        %v742 = vpop.permute.xlu0 %741
        %743 = vset.pattern.permute.xlu0 14
        %744 = vperm.xlu0 %743, %v331
        %v745 = vpop.permute.xlu0 %744
        %746 = vset.pattern.permute.xlu0 14
        %747 = vperm.xlu0 %746, %v332
        %v748 = vpop.permute.xlu0 %747
        %749 = vset.pattern.permute.xlu0 14
        %750 = vperm.xlu0 %749, %v333
        %v751 = vpop.permute.xlu0 %750
        %vm752 = vcmp.eq.s32.totalorder %v742, 1
        %vm753 = vcmp.eq.s32.totalorder %v745, 1
        %vm754 = vcmp.eq.s32.totalorder %v748, 1
        %vm755 = vcmp.eq.s32.totalorder %v751, 1
        %v756 = vlaneseq
        %v757 = vshrl.u32 %v756, 7
        %v758 = vsub.s32 0, %v757
        %v759 = vrot.slane %v739, %v758
        %v760 = vsel %vm752, %v759, -inf
        %v761 = vsel %vm753, %v759, -inf
        %v762 = vsel %vm754, %v759, -inf
        %v763 = vsel %vm755, %v759, -inf
        %v764 = vmax.f32 %v735, %v760
        %v765 = vmax.f32 %v736, %v761
        %v766 = vmax.f32 %v737, %v762
        %v767 = vmax.f32 %v738, %v763
        %v768 = vld [vmem:[#allocation3 + $0xf] sm:$0x1]
        %769 = vset.pattern.permute.xlu0 15
        %770 = vperm.xlu0 %769, %v330
        %v771 = vpop.permute.xlu0 %770
        %772 = vset.pattern.permute.xlu0 15
        %773 = vperm.xlu0 %772, %v331
        %v774 = vpop.permute.xlu0 %773
        %775 = vset.pattern.permute.xlu0 15
        %776 = vperm.xlu0 %775, %v332
        %v777 = vpop.permute.xlu0 %776
        %778 = vset.pattern.permute.xlu0 15
        %779 = vperm.xlu0 %778, %v333
        %v780 = vpop.permute.xlu0 %779
        %vm781 = vcmp.eq.s32.totalorder %v771, 1
        %vm782 = vcmp.eq.s32.totalorder %v774, 1
        %vm783 = vcmp.eq.s32.totalorder %v777, 1
        %vm784 = vcmp.eq.s32.totalorder %v780, 1
        %v785 = vlaneseq
        %v786 = vshrl.u32 %v785, 7
        %v787 = vsub.s32 0, %v786
        %v788 = vrot.slane %v768, %v787
        %v789 = vsel %vm781, %v788, -inf
        %v790 = vsel %vm782, %v788, -inf
        %v791 = vsel %vm783, %v788, -inf
        %v792 = vsel %vm784, %v788, -inf
        %v793 = vmax.f32 %v764, %v789
        %v794 = vmax.f32 %v765, %v790
        %v795 = vmax.f32 %v766, %v791
        %v796 = vmax.f32 %v767, %v792
        %v797 = vld [vmem:[#allocation3 + $0x10] sm:$0x1]
        %798 = vset.pattern.permute.xlu0 16
        %799 = vperm.xlu0 %798, %v330
        %v800 = vpop.permute.xlu0 %799
        %801 = vset.pattern.permute.xlu0 16
        %802 = vperm.xlu0 %801, %v331
        %v803 = vpop.permute.xlu0 %802
        %804 = vset.pattern.permute.xlu0 16
        %805 = vperm.xlu0 %804, %v332
        %v806 = vpop.permute.xlu0 %805
        %807 = vset.pattern.permute.xlu0 16
        %808 = vperm.xlu0 %807, %v333
        %v809 = vpop.permute.xlu0 %808
        %vm810 = vcmp.eq.s32.totalorder %v800, 1
        %vm811 = vcmp.eq.s32.totalorder %v803, 1
        %vm812 = vcmp.eq.s32.totalorder %v806, 1
        %vm813 = vcmp.eq.s32.totalorder %v809, 1
        %v814 = vlaneseq
        %v815 = vshrl.u32 %v814, 7
        %v816 = vsub.s32 0, %v815
        %v817 = vrot.slane %v797, %v816
        %v818 = vsel %vm810, %v817, -inf
        %v819 = vsel %vm811, %v817, -inf
        %v820 = vsel %vm812, %v817, -inf
        %v821 = vsel %vm813, %v817, -inf
        %v822 = vmax.f32 %v793, %v818
        %v823 = vmax.f32 %v794, %v819
        %v824 = vmax.f32 %v795, %v820
        %v825 = vmax.f32 %v796, %v821
        %v826 = vld [vmem:[#allocation3 + $0x11] sm:$0x1]
        %827 = vset.pattern.permute.xlu0 17
        %828 = vperm.xlu0 %827, %v330
        %v829 = vpop.permute.xlu0 %828
        %830 = vset.pattern.permute.xlu0 17
        %831 = vperm.xlu0 %830, %v331
        %v832 = vpop.permute.xlu0 %831
        %833 = vset.pattern.permute.xlu0 17
        %834 = vperm.xlu0 %833, %v332
        %v835 = vpop.permute.xlu0 %834
        %836 = vset.pattern.permute.xlu0 17
        %837 = vperm.xlu0 %836, %v333
        %v838 = vpop.permute.xlu0 %837
        %vm839 = vcmp.eq.s32.totalorder %v829, 1
        %vm840 = vcmp.eq.s32.totalorder %v832, 1
        %vm841 = vcmp.eq.s32.totalorder %v835, 1
        %vm842 = vcmp.eq.s32.totalorder %v838, 1
        %v843 = vlaneseq
        %v844 = vshrl.u32 %v843, 7
        %v845 = vsub.s32 0, %v844
        %v846 = vrot.slane %v826, %v845
        %v847 = vsel %vm839, %v846, -inf
        %v848 = vsel %vm840, %v846, -inf
        %v849 = vsel %vm841, %v846, -inf
        %v850 = vsel %vm842, %v846, -inf
        %v851 = vmax.f32 %v822, %v847
        %v852 = vmax.f32 %v823, %v848
        %v853 = vmax.f32 %v824, %v849
        %v854 = vmax.f32 %v825, %v850
        %v855 = vld [vmem:[#allocation3 + $0x12] sm:$0x1]
        %856 = vset.pattern.permute.xlu0 18
        %857 = vperm.xlu0 %856, %v330
        %v858 = vpop.permute.xlu0 %857
        %859 = vset.pattern.permute.xlu0 18
        %860 = vperm.xlu0 %859, %v331
        %v861 = vpop.permute.xlu0 %860
        %862 = vset.pattern.permute.xlu0 18
        %863 = vperm.xlu0 %862, %v332
        %v864 = vpop.permute.xlu0 %863
        %865 = vset.pattern.permute.xlu0 18
        %866 = vperm.xlu0 %865, %v333
        %v867 = vpop.permute.xlu0 %866
        %vm868 = vcmp.eq.s32.totalorder %v858, 1
        %vm869 = vcmp.eq.s32.totalorder %v861, 1
        %vm870 = vcmp.eq.s32.totalorder %v864, 1
        %vm871 = vcmp.eq.s32.totalorder %v867, 1
        %v872 = vlaneseq
        %v873 = vshrl.u32 %v872, 7
        %v874 = vsub.s32 0, %v873
        %v875 = vrot.slane %v855, %v874
        %v876 = vsel %vm868, %v875, -inf
        %v877 = vsel %vm869, %v875, -inf
        %v878 = vsel %vm870, %v875, -inf
        %v879 = vsel %vm871, %v875, -inf
        %v880 = vmax.f32 %v851, %v876
        %v881 = vmax.f32 %v852, %v877
        %v882 = vmax.f32 %v853, %v878
        %v883 = vmax.f32 %v854, %v879
        %v884 = vld [vmem:[#allocation3 + $0x13] sm:$0x1]
        %885 = vset.pattern.permute.xlu0 19
        %886 = vperm.xlu0 %885, %v330
        %v887 = vpop.permute.xlu0 %886
        %888 = vset.pattern.permute.xlu0 19
        %889 = vperm.xlu0 %888, %v331
        %v890 = vpop.permute.xlu0 %889
        %891 = vset.pattern.permute.xlu0 19
        %892 = vperm.xlu0 %891, %v332
        %v893 = vpop.permute.xlu0 %892
        %894 = vset.pattern.permute.xlu0 19
        %895 = vperm.xlu0 %894, %v333
        %v896 = vpop.permute.xlu0 %895
        %vm897 = vcmp.eq.s32.totalorder %v887, 1
        %vm898 = vcmp.eq.s32.totalorder %v890, 1
        %vm899 = vcmp.eq.s32.totalorder %v893, 1
        %vm900 = vcmp.eq.s32.totalorder %v896, 1
        %v901 = vlaneseq
        %v902 = vshrl.u32 %v901, 7
        %v903 = vsub.s32 0, %v902
        %v904 = vrot.slane %v884, %v903
        %v905 = vsel %vm897, %v904, -inf
        %v906 = vsel %vm898, %v904, -inf
        %v907 = vsel %vm899, %v904, -inf
        %v908 = vsel %vm900, %v904, -inf
        %v909 = vmax.f32 %v880, %v905
        %v910 = vmax.f32 %v881, %v906
        %v911 = vmax.f32 %v882, %v907
        %v912 = vmax.f32 %v883, %v908
        %v913 = vld [vmem:[#allocation3 + $0x14] sm:$0x1]
        %914 = vset.pattern.permute.xlu0 20
        %915 = vperm.xlu0 %914, %v330
        %v916 = vpop.permute.xlu0 %915
        %917 = vset.pattern.permute.xlu0 20
        %918 = vperm.xlu0 %917, %v331
        %v919 = vpop.permute.xlu0 %918
        %920 = vset.pattern.permute.xlu0 20
        %921 = vperm.xlu0 %920, %v332
        %v922 = vpop.permute.xlu0 %921
        %923 = vset.pattern.permute.xlu0 20
        %924 = vperm.xlu0 %923, %v333
        %v925 = vpop.permute.xlu0 %924
        %vm926 = vcmp.eq.s32.totalorder %v916, 1
        %vm927 = vcmp.eq.s32.totalorder %v919, 1
        %vm928 = vcmp.eq.s32.totalorder %v922, 1
        %vm929 = vcmp.eq.s32.totalorder %v925, 1
        %v930 = vlaneseq
        %v931 = vshrl.u32 %v930, 7
        %v932 = vsub.s32 0, %v931
        %v933 = vrot.slane %v913, %v932
        %v934 = vsel %vm926, %v933, -inf
        %v935 = vsel %vm927, %v933, -inf
        %v936 = vsel %vm928, %v933, -inf
        %v937 = vsel %vm929, %v933, -inf
        %v938 = vmax.f32 %v909, %v934
        %v939 = vmax.f32 %v910, %v935
        %v940 = vmax.f32 %v911, %v936
        %v941 = vmax.f32 %v912, %v937
        %v942 = vld [vmem:[#allocation3 + $0x15] sm:$0x1]
        %943 = vset.pattern.permute.xlu0 21
        %944 = vperm.xlu0 %943, %v330
        %v945 = vpop.permute.xlu0 %944
        %946 = vset.pattern.permute.xlu0 21
        %947 = vperm.xlu0 %946, %v331
        %v948 = vpop.permute.xlu0 %947
        %949 = vset.pattern.permute.xlu0 21
        %950 = vperm.xlu0 %949, %v332
        %v951 = vpop.permute.xlu0 %950
        %952 = vset.pattern.permute.xlu0 21
        %953 = vperm.xlu0 %952, %v333
        %v954 = vpop.permute.xlu0 %953
        %vm955 = vcmp.eq.s32.totalorder %v945, 1
        %vm956 = vcmp.eq.s32.totalorder %v948, 1
        %vm957 = vcmp.eq.s32.totalorder %v951, 1
        %vm958 = vcmp.eq.s32.totalorder %v954, 1
        %v959 = vlaneseq
        %v960 = vshrl.u32 %v959, 7
        %v961 = vsub.s32 0, %v960
        %v962 = vrot.slane %v942, %v961
        %v963 = vsel %vm955, %v962, -inf
        %v964 = vsel %vm956, %v962, -inf
        %v965 = vsel %vm957, %v962, -inf
        %v966 = vsel %vm958, %v962, -inf
        %v967 = vmax.f32 %v938, %v963
        %v968 = vmax.f32 %v939, %v964
        %v969 = vmax.f32 %v940, %v965
        %v970 = vmax.f32 %v941, %v966
        %v971 = vld [vmem:[#allocation3 + $0x16] sm:$0x1]
        %972 = vset.pattern.permute.xlu0 22
        %973 = vperm.xlu0 %972, %v330
        %v974 = vpop.permute.xlu0 %973
        %975 = vset.pattern.permute.xlu0 22
        %976 = vperm.xlu0 %975, %v331
        %v977 = vpop.permute.xlu0 %976
        %978 = vset.pattern.permute.xlu0 22
        %979 = vperm.xlu0 %978, %v332
        %v980 = vpop.permute.xlu0 %979
        %981 = vset.pattern.permute.xlu0 22
        %982 = vperm.xlu0 %981, %v333
        %v983 = vpop.permute.xlu0 %982
        %vm984 = vcmp.eq.s32.totalorder %v974, 1
        %vm985 = vcmp.eq.s32.totalorder %v977, 1
        %vm986 = vcmp.eq.s32.totalorder %v980, 1
        %vm987 = vcmp.eq.s32.totalorder %v983, 1
        %v988 = vlaneseq
        %v989 = vshrl.u32 %v988, 7
        %v990 = vsub.s32 0, %v989
        %v991 = vrot.slane %v971, %v990
        %v992 = vsel %vm984, %v991, -inf
        %v993 = vsel %vm985, %v991, -inf
        %v994 = vsel %vm986, %v991, -inf
        %v995 = vsel %vm987, %v991, -inf
        %v996 = vmax.f32 %v967, %v992
        %v997 = vmax.f32 %v968, %v993
        %v998 = vmax.f32 %v969, %v994
        %v999 = vmax.f32 %v970, %v995
        %v1000 = vld [vmem:[#allocation3 + $0x17] sm:$0x1]
        %1001 = vset.pattern.permute.xlu0 23
        %1002 = vperm.xlu0 %1001, %v330
        %v1003 = vpop.permute.xlu0 %1002
        %1004 = vset.pattern.permute.xlu0 23
        %1005 = vperm.xlu0 %1004, %v331
        %v1006 = vpop.permute.xlu0 %1005
        %1007 = vset.pattern.permute.xlu0 23
        %1008 = vperm.xlu0 %1007, %v332
        %v1009 = vpop.permute.xlu0 %1008
        %1010 = vset.pattern.permute.xlu0 23
        %1011 = vperm.xlu0 %1010, %v333
        %v1012 = vpop.permute.xlu0 %1011
        %vm1013 = vcmp.eq.s32.totalorder %v1003, 1
        %vm1014 = vcmp.eq.s32.totalorder %v1006, 1
        %vm1015 = vcmp.eq.s32.totalorder %v1009, 1
        %vm1016 = vcmp.eq.s32.totalorder %v1012, 1
        %v1017 = vlaneseq
        %v1018 = vshrl.u32 %v1017, 7
        %v1019 = vsub.s32 0, %v1018
        %v1020 = vrot.slane %v1000, %v1019
        %v1021 = vsel %vm1013, %v1020, -inf
        %v1022 = vsel %vm1014, %v1020, -inf
        %v1023 = vsel %vm1015, %v1020, -inf
        %v1024 = vsel %vm1016, %v1020, -inf
        %v1025 = vmax.f32 %v996, %v1021
        %v1026 = vmax.f32 %v997, %v1022
        %v1027 = vmax.f32 %v998, %v1023
        %v1028 = vmax.f32 %v999, %v1024
        %v1029 = vld [vmem:[#allocation3 + $0x18] sm:$0x1]
        %1030 = vset.pattern.permute.xlu0 24
        %1031 = vperm.xlu0 %1030, %v330
        %v1032 = vpop.permute.xlu0 %1031
        %1033 = vset.pattern.permute.xlu0 24
        %1034 = vperm.xlu0 %1033, %v331
        %v1035 = vpop.permute.xlu0 %1034
        %1036 = vset.pattern.permute.xlu0 24
        %1037 = vperm.xlu0 %1036, %v332
        %v1038 = vpop.permute.xlu0 %1037
        %1039 = vset.pattern.permute.xlu0 24
        %1040 = vperm.xlu0 %1039, %v333
        %v1041 = vpop.permute.xlu0 %1040
        %vm1042 = vcmp.eq.s32.totalorder %v1032, 1
        %vm1043 = vcmp.eq.s32.totalorder %v1035, 1
        %vm1044 = vcmp.eq.s32.totalorder %v1038, 1
        %vm1045 = vcmp.eq.s32.totalorder %v1041, 1
        %v1046 = vlaneseq
        %v1047 = vshrl.u32 %v1046, 7
        %v1048 = vsub.s32 0, %v1047
        %v1049 = vrot.slane %v1029, %v1048
        %v1050 = vsel %vm1042, %v1049, -inf
        %v1051 = vsel %vm1043, %v1049, -inf
        %v1052 = vsel %vm1044, %v1049, -inf
        %v1053 = vsel %vm1045, %v1049, -inf
        %v1054 = vmax.f32 %v1025, %v1050
        %v1055 = vmax.f32 %v1026, %v1051
        %v1056 = vmax.f32 %v1027, %v1052
        %v1057 = vmax.f32 %v1028, %v1053
        %v1058 = vld [vmem:[#allocation3 + $0x19] sm:$0x1]
        %1059 = vset.pattern.permute.xlu0 25
        %1060 = vperm.xlu0 %1059, %v330
        %v1061 = vpop.permute.xlu0 %1060
        %1062 = vset.pattern.permute.xlu0 25
        %1063 = vperm.xlu0 %1062, %v331
        %v1064 = vpop.permute.xlu0 %1063
        %1065 = vset.pattern.permute.xlu0 25
        %1066 = vperm.xlu0 %1065, %v332
        %v1067 = vpop.permute.xlu0 %1066
        %1068 = vset.pattern.permute.xlu0 25
        %1069 = vperm.xlu0 %1068, %v333
        %v1070 = vpop.permute.xlu0 %1069
        %vm1071 = vcmp.eq.s32.totalorder %v1061, 1
        %vm1072 = vcmp.eq.s32.totalorder %v1064, 1
        %vm1073 = vcmp.eq.s32.totalorder %v1067, 1
        %vm1074 = vcmp.eq.s32.totalorder %v1070, 1
        %v1075 = vlaneseq
        %v1076 = vshrl.u32 %v1075, 7
        %v1077 = vsub.s32 0, %v1076
        %v1078 = vrot.slane %v1058, %v1077
        %v1079 = vsel %vm1071, %v1078, -inf
        %v1080 = vsel %vm1072, %v1078, -inf
        %v1081 = vsel %vm1073, %v1078, -inf
        %v1082 = vsel %vm1074, %v1078, -inf
        %v1083 = vmax.f32 %v1054, %v1079
        %v1084 = vmax.f32 %v1055, %v1080
        %v1085 = vmax.f32 %v1056, %v1081
        %v1086 = vmax.f32 %v1057, %v1082
        %v1087 = vld [vmem:[#allocation3 + $0x1a] sm:$0x1]
        %1088 = vset.pattern.permute.xlu0 26
        %1089 = vperm.xlu0 %1088, %v330
        %v1090 = vpop.permute.xlu0 %1089
        %1091 = vset.pattern.permute.xlu0 26
        %1092 = vperm.xlu0 %1091, %v331
        %v1093 = vpop.permute.xlu0 %1092
        %1094 = vset.pattern.permute.xlu0 26
        %1095 = vperm.xlu0 %1094, %v332
        %v1096 = vpop.permute.xlu0 %1095
        %1097 = vset.pattern.permute.xlu0 26
        %1098 = vperm.xlu0 %1097, %v333
        %v1099 = vpop.permute.xlu0 %1098
        %vm1100 = vcmp.eq.s32.totalorder %v1090, 1
        %vm1101 = vcmp.eq.s32.totalorder %v1093, 1
        %vm1102 = vcmp.eq.s32.totalorder %v1096, 1
        %vm1103 = vcmp.eq.s32.totalorder %v1099, 1
        %v1104 = vlaneseq
        %v1105 = vshrl.u32 %v1104, 7
        %v1106 = vsub.s32 0, %v1105
        %v1107 = vrot.slane %v1087, %v1106
        %v1108 = vsel %vm1100, %v1107, -inf
        %v1109 = vsel %vm1101, %v1107, -inf
        %v1110 = vsel %vm1102, %v1107, -inf
        %v1111 = vsel %vm1103, %v1107, -inf
        %v1112 = vmax.f32 %v1083, %v1108
        %v1113 = vmax.f32 %v1084, %v1109
        %v1114 = vmax.f32 %v1085, %v1110
        %v1115 = vmax.f32 %v1086, %v1111
        %v1116 = vld [vmem:[#allocation3 + $0x1b] sm:$0x1]
        %1117 = vset.pattern.permute.xlu0 27
        %1118 = vperm.xlu0 %1117, %v330
        %v1119 = vpop.permute.xlu0 %1118
        %1120 = vset.pattern.permute.xlu0 27
        %1121 = vperm.xlu0 %1120, %v331
        %v1122 = vpop.permute.xlu0 %1121
        %1123 = vset.pattern.permute.xlu0 27
        %1124 = vperm.xlu0 %1123, %v332
        %v1125 = vpop.permute.xlu0 %1124
        %1126 = vset.pattern.permute.xlu0 27
        %1127 = vperm.xlu0 %1126, %v333
        %v1128 = vpop.permute.xlu0 %1127
        %vm1129 = vcmp.eq.s32.totalorder %v1119, 1
        %vm1130 = vcmp.eq.s32.totalorder %v1122, 1
        %vm1131 = vcmp.eq.s32.totalorder %v1125, 1
        %vm1132 = vcmp.eq.s32.totalorder %v1128, 1
        %v1133 = vlaneseq
        %v1134 = vshrl.u32 %v1133, 7
        %v1135 = vsub.s32 0, %v1134
        %v1136 = vrot.slane %v1116, %v1135
        %v1137 = vsel %vm1129, %v1136, -inf
        %v1138 = vsel %vm1130, %v1136, -inf
        %v1139 = vsel %vm1131, %v1136, -inf
        %v1140 = vsel %vm1132, %v1136, -inf
        %v1141 = vmax.f32 %v1112, %v1137
        %v1142 = vmax.f32 %v1113, %v1138
        %v1143 = vmax.f32 %v1114, %v1139
        %v1144 = vmax.f32 %v1115, %v1140
        %v1145 = vld [vmem:[#allocation3 + $0x1c] sm:$0x1]
        %1146 = vset.pattern.permute.xlu0 28
        %1147 = vperm.xlu0 %1146, %v330
        %v1148 = vpop.permute.xlu0 %1147
        %1149 = vset.pattern.permute.xlu0 28
        %1150 = vperm.xlu0 %1149, %v331
        %v1151 = vpop.permute.xlu0 %1150
        %1152 = vset.pattern.permute.xlu0 28
        %1153 = vperm.xlu0 %1152, %v332
        %v1154 = vpop.permute.xlu0 %1153
        %1155 = vset.pattern.permute.xlu0 28
        %1156 = vperm.xlu0 %1155, %v333
        %v1157 = vpop.permute.xlu0 %1156
        %vm1158 = vcmp.eq.s32.totalorder %v1148, 1
        %vm1159 = vcmp.eq.s32.totalorder %v1151, 1
        %vm1160 = vcmp.eq.s32.totalorder %v1154, 1
        %vm1161 = vcmp.eq.s32.totalorder %v1157, 1
        %v1162 = vlaneseq
        %v1163 = vshrl.u32 %v1162, 7
        %v1164 = vsub.s32 0, %v1163
        %v1165 = vrot.slane %v1145, %v1164
        %v1166 = vsel %vm1158, %v1165, -inf
        %v1167 = vsel %vm1159, %v1165, -inf
        %v1168 = vsel %vm1160, %v1165, -inf
        %v1169 = vsel %vm1161, %v1165, -inf
        %v1170 = vmax.f32 %v1141, %v1166
        %v1171 = vmax.f32 %v1142, %v1167
        %v1172 = vmax.f32 %v1143, %v1168
        %v1173 = vmax.f32 %v1144, %v1169
        %v1174 = vld [vmem:[#allocation3 + $0x1d] sm:$0x1]
        %1175 = vset.pattern.permute.xlu0 29
        %1176 = vperm.xlu0 %1175, %v330
        %v1177 = vpop.permute.xlu0 %1176
        %1178 = vset.pattern.permute.xlu0 29
        %1179 = vperm.xlu0 %1178, %v331
        %v1180 = vpop.permute.xlu0 %1179
        %1181 = vset.pattern.permute.xlu0 29
        %1182 = vperm.xlu0 %1181, %v332
        %v1183 = vpop.permute.xlu0 %1182
        %1184 = vset.pattern.permute.xlu0 29
        %1185 = vperm.xlu0 %1184, %v333
        %v1186 = vpop.permute.xlu0 %1185
        %vm1187 = vcmp.eq.s32.totalorder %v1177, 1
        %vm1188 = vcmp.eq.s32.totalorder %v1180, 1
        %vm1189 = vcmp.eq.s32.totalorder %v1183, 1
        %vm1190 = vcmp.eq.s32.totalorder %v1186, 1
        %v1191 = vlaneseq
        %v1192 = vshrl.u32 %v1191, 7
        %v1193 = vsub.s32 0, %v1192
        %v1194 = vrot.slane %v1174, %v1193
        %v1195 = vsel %vm1187, %v1194, -inf
        %v1196 = vsel %vm1188, %v1194, -inf
        %v1197 = vsel %vm1189, %v1194, -inf
        %v1198 = vsel %vm1190, %v1194, -inf
        %v1199 = vmax.f32 %v1170, %v1195
        %v1200 = vmax.f32 %v1171, %v1196
        %v1201 = vmax.f32 %v1172, %v1197
        %v1202 = vmax.f32 %v1173, %v1198
        %v1203 = vld [vmem:[#allocation3 + $0x1e] sm:$0x1]
        %1204 = vset.pattern.permute.xlu0 30
        %1205 = vperm.xlu0 %1204, %v330
        %v1206 = vpop.permute.xlu0 %1205
        %1207 = vset.pattern.permute.xlu0 30
        %1208 = vperm.xlu0 %1207, %v331
        %v1209 = vpop.permute.xlu0 %1208
        %1210 = vset.pattern.permute.xlu0 30
        %1211 = vperm.xlu0 %1210, %v332
        %v1212 = vpop.permute.xlu0 %1211
        %1213 = vset.pattern.permute.xlu0 30
        %1214 = vperm.xlu0 %1213, %v333
        %v1215 = vpop.permute.xlu0 %1214
        %vm1216 = vcmp.eq.s32.totalorder %v1206, 1
        %vm1217 = vcmp.eq.s32.totalorder %v1209, 1
        %vm1218 = vcmp.eq.s32.totalorder %v1212, 1
        %vm1219 = vcmp.eq.s32.totalorder %v1215, 1
        %v1220 = vlaneseq
        %v1221 = vshrl.u32 %v1220, 7
        %v1222 = vsub.s32 0, %v1221
        %v1223 = vrot.slane %v1203, %v1222
        %v1224 = vsel %vm1216, %v1223, -inf
        %v1225 = vsel %vm1217, %v1223, -inf
        %v1226 = vsel %vm1218, %v1223, -inf
        %v1227 = vsel %vm1219, %v1223, -inf
        %v1228 = vmax.f32 %v1199, %v1224
        %v1229 = vmax.f32 %v1200, %v1225
        %v1230 = vmax.f32 %v1201, %v1226
        %v1231 = vmax.f32 %v1202, %v1227
        %v1232 = vld [vmem:[#allocation3 + $0x1f] sm:$0x1]
        %1233 = vset.pattern.permute.xlu0 31
        %1234 = vperm.xlu0 %1233, %v330
        %v1235 = vpop.permute.xlu0 %1234
        %1236 = vset.pattern.permute.xlu0 31
        %1237 = vperm.xlu0 %1236, %v331
        %v1238 = vpop.permute.xlu0 %1237
        %1239 = vset.pattern.permute.xlu0 31
        %1240 = vperm.xlu0 %1239, %v332
        %v1241 = vpop.permute.xlu0 %1240
        %1242 = vset.pattern.permute.xlu0 31
        %1243 = vperm.xlu0 %1242, %v333
        %v1244 = vpop.permute.xlu0 %1243
        %vm1245 = vcmp.eq.s32.totalorder %v1235, 1
        %vm1246 = vcmp.eq.s32.totalorder %v1238, 1
        %vm1247 = vcmp.eq.s32.totalorder %v1241, 1
        %vm1248 = vcmp.eq.s32.totalorder %v1244, 1
        %v1249 = vlaneseq
        %v1250 = vshrl.u32 %v1249, 7
        %v1251 = vsub.s32 0, %v1250
        %v1252 = vrot.slane %v1232, %v1251
        %v1253 = vsel %vm1245, %v1252, -inf
        %v1254 = vsel %vm1246, %v1252, -inf
        %v1255 = vsel %vm1247, %v1252, -inf
        %v1256 = vsel %vm1248, %v1252, -inf
        %v1257 = vmax.f32 %v1228, %v1253
        %v1258 = vmax.f32 %v1229, %v1254
        %v1259 = vmax.f32 %v1230, %v1255
        %v1260 = vmax.f32 %v1231, %v1256
        %v1261 = vld [vmem:[#allocation3 + $0x20] sm:$0x1]
        %1262 = vset.pattern.permute.xlu0 32
        %1263 = vperm.xlu0 %1262, %v330
        %v1264 = vpop.permute.xlu0 %1263
        %1265 = vset.pattern.permute.xlu0 32
        %1266 = vperm.xlu0 %1265, %v331
        %v1267 = vpop.permute.xlu0 %1266
        %1268 = vset.pattern.permute.xlu0 32
        %1269 = vperm.xlu0 %1268, %v332
        %v1270 = vpop.permute.xlu0 %1269
        %1271 = vset.pattern.permute.xlu0 32
        %1272 = vperm.xlu0 %1271, %v333
        %v1273 = vpop.permute.xlu0 %1272
        %vm1274 = vcmp.eq.s32.totalorder %v1264, 1
        %vm1275 = vcmp.eq.s32.totalorder %v1267, 1
        %vm1276 = vcmp.eq.s32.totalorder %v1270, 1
        %vm1277 = vcmp.eq.s32.totalorder %v1273, 1
        %v1278 = vlaneseq
        %v1279 = vshrl.u32 %v1278, 7
        %v1280 = vsub.s32 0, %v1279
        %v1281 = vrot.slane %v1261, %v1280
        %v1282 = vsel %vm1274, %v1281, -inf
        %v1283 = vsel %vm1275, %v1281, -inf
        %v1284 = vsel %vm1276, %v1281, -inf
        %v1285 = vsel %vm1277, %v1281, -inf
        %v1286 = vmax.f32 %v1257, %v1282
        %v1287 = vmax.f32 %v1258, %v1283
        %v1288 = vmax.f32 %v1259, %v1284
        %v1289 = vmax.f32 %v1260, %v1285
        %v1290 = vld [vmem:[#allocation3 + $0x21] sm:$0x1]
        %1291 = vset.pattern.permute.xlu0 33
        %1292 = vperm.xlu0 %1291, %v330
        %v1293 = vpop.permute.xlu0 %1292
        %1294 = vset.pattern.permute.xlu0 33
        %1295 = vperm.xlu0 %1294, %v331
        %v1296 = vpop.permute.xlu0 %1295
        %1297 = vset.pattern.permute.xlu0 33
        %1298 = vperm.xlu0 %1297, %v332
        %v1299 = vpop.permute.xlu0 %1298
        %1300 = vset.pattern.permute.xlu0 33
        %1301 = vperm.xlu0 %1300, %v333
        %v1302 = vpop.permute.xlu0 %1301
        %vm1303 = vcmp.eq.s32.totalorder %v1293, 1
        %vm1304 = vcmp.eq.s32.totalorder %v1296, 1
        %vm1305 = vcmp.eq.s32.totalorder %v1299, 1
        %vm1306 = vcmp.eq.s32.totalorder %v1302, 1
        %v1307 = vlaneseq
        %v1308 = vshrl.u32 %v1307, 7
        %v1309 = vsub.s32 0, %v1308
        %v1310 = vrot.slane %v1290, %v1309
        %v1311 = vsel %vm1303, %v1310, -inf
        %v1312 = vsel %vm1304, %v1310, -inf
        %v1313 = vsel %vm1305, %v1310, -inf
        %v1314 = vsel %vm1306, %v1310, -inf
        %v1315 = vmax.f32 %v1286, %v1311
        %v1316 = vmax.f32 %v1287, %v1312
        %v1317 = vmax.f32 %v1288, %v1313
        %v1318 = vmax.f32 %v1289, %v1314
        %v1319 = vld [vmem:[#allocation3 + $0x22] sm:$0x1]
        %1320 = vset.pattern.permute.xlu0 34
        %1321 = vperm.xlu0 %1320, %v330
        %v1322 = vpop.permute.xlu0 %1321
        %1323 = vset.pattern.permute.xlu0 34
        %1324 = vperm.xlu0 %1323, %v331
        %v1325 = vpop.permute.xlu0 %1324
        %1326 = vset.pattern.permute.xlu0 34
        %1327 = vperm.xlu0 %1326, %v332
        %v1328 = vpop.permute.xlu0 %1327
        %1329 = vset.pattern.permute.xlu0 34
        %1330 = vperm.xlu0 %1329, %v333
        %v1331 = vpop.permute.xlu0 %1330
        %vm1332 = vcmp.eq.s32.totalorder %v1322, 1
        %vm1333 = vcmp.eq.s32.totalorder %v1325, 1
        %vm1334 = vcmp.eq.s32.totalorder %v1328, 1
        %vm1335 = vcmp.eq.s32.totalorder %v1331, 1
        %v1336 = vlaneseq
        %v1337 = vshrl.u32 %v1336, 7
        %v1338 = vsub.s32 0, %v1337
        %v1339 = vrot.slane %v1319, %v1338
        %v1340 = vsel %vm1332, %v1339, -inf
        %v1341 = vsel %vm1333, %v1339, -inf
        %v1342 = vsel %vm1334, %v1339, -inf
        %v1343 = vsel %vm1335, %v1339, -inf
        %v1344 = vmax.f32 %v1315, %v1340
        %v1345 = vmax.f32 %v1316, %v1341
        %v1346 = vmax.f32 %v1317, %v1342
        %v1347 = vmax.f32 %v1318, %v1343
        %v1348 = vld [vmem:[#allocation3 + $0x23] sm:$0x1]
        %1349 = vset.pattern.permute.xlu0 35
        %1350 = vperm.xlu0 %1349, %v330
        %v1351 = vpop.permute.xlu0 %1350
        %1352 = vset.pattern.permute.xlu0 35
        %1353 = vperm.xlu0 %1352, %v331
        %v1354 = vpop.permute.xlu0 %1353
        %1355 = vset.pattern.permute.xlu0 35
        %1356 = vperm.xlu0 %1355, %v332
        %v1357 = vpop.permute.xlu0 %1356
        %1358 = vset.pattern.permute.xlu0 35
        %1359 = vperm.xlu0 %1358, %v333
        %v1360 = vpop.permute.xlu0 %1359
        %vm1361 = vcmp.eq.s32.totalorder %v1351, 1
        %vm1362 = vcmp.eq.s32.totalorder %v1354, 1
        %vm1363 = vcmp.eq.s32.totalorder %v1357, 1
        %vm1364 = vcmp.eq.s32.totalorder %v1360, 1
        %v1365 = vlaneseq
        %v1366 = vshrl.u32 %v1365, 7
        %v1367 = vsub.s32 0, %v1366
        %v1368 = vrot.slane %v1348, %v1367
        %v1369 = vsel %vm1361, %v1368, -inf
        %v1370 = vsel %vm1362, %v1368, -inf
        %v1371 = vsel %vm1363, %v1368, -inf
        %v1372 = vsel %vm1364, %v1368, -inf
        %v1373 = vmax.f32 %v1344, %v1369
        %v1374 = vmax.f32 %v1345, %v1370
        %v1375 = vmax.f32 %v1346, %v1371
        %v1376 = vmax.f32 %v1347, %v1372
        %v1377 = vld [vmem:[#allocation3 + $0x24] sm:$0x1]
        %1378 = vset.pattern.permute.xlu0 36
        %1379 = vperm.xlu0 %1378, %v330
        %v1380 = vpop.permute.xlu0 %1379
        %1381 = vset.pattern.permute.xlu0 36
        %1382 = vperm.xlu0 %1381, %v331
        %v1383 = vpop.permute.xlu0 %1382
        %1384 = vset.pattern.permute.xlu0 36
        %1385 = vperm.xlu0 %1384, %v332
        %v1386 = vpop.permute.xlu0 %1385
        %1387 = vset.pattern.permute.xlu0 36
        %1388 = vperm.xlu0 %1387, %v333
        %v1389 = vpop.permute.xlu0 %1388
        %vm1390 = vcmp.eq.s32.totalorder %v1380, 1
        %vm1391 = vcmp.eq.s32.totalorder %v1383, 1
        %vm1392 = vcmp.eq.s32.totalorder %v1386, 1
        %vm1393 = vcmp.eq.s32.totalorder %v1389, 1
        %v1394 = vlaneseq
        %v1395 = vshrl.u32 %v1394, 7
        %v1396 = vsub.s32 0, %v1395
        %v1397 = vrot.slane %v1377, %v1396
        %v1398 = vsel %vm1390, %v1397, -inf
        %v1399 = vsel %vm1391, %v1397, -inf
        %v1400 = vsel %vm1392, %v1397, -inf
        %v1401 = vsel %vm1393, %v1397, -inf
        %v1402 = vmax.f32 %v1373, %v1398
        %v1403 = vmax.f32 %v1374, %v1399
        %v1404 = vmax.f32 %v1375, %v1400
        %v1405 = vmax.f32 %v1376, %v1401
        %v1406 = vld [vmem:[#allocation3 + $0x25] sm:$0x1]
        %1407 = vset.pattern.permute.xlu0 37
        %1408 = vperm.xlu0 %1407, %v330
        %v1409 = vpop.permute.xlu0 %1408
        %1410 = vset.pattern.permute.xlu0 37
        %1411 = vperm.xlu0 %1410, %v331
        %v1412 = vpop.permute.xlu0 %1411
        %1413 = vset.pattern.permute.xlu0 37
        %1414 = vperm.xlu0 %1413, %v332
        %v1415 = vpop.permute.xlu0 %1414
        %1416 = vset.pattern.permute.xlu0 37
        %1417 = vperm.xlu0 %1416, %v333
        %v1418 = vpop.permute.xlu0 %1417
        %vm1419 = vcmp.eq.s32.totalorder %v1409, 1
        %vm1420 = vcmp.eq.s32.totalorder %v1412, 1
        %vm1421 = vcmp.eq.s32.totalorder %v1415, 1
        %vm1422 = vcmp.eq.s32.totalorder %v1418, 1
        %v1423 = vlaneseq
        %v1424 = vshrl.u32 %v1423, 7
        %v1425 = vsub.s32 0, %v1424
        %v1426 = vrot.slane %v1406, %v1425
        %v1427 = vsel %vm1419, %v1426, -inf
        %v1428 = vsel %vm1420, %v1426, -inf
        %v1429 = vsel %vm1421, %v1426, -inf
        %v1430 = vsel %vm1422, %v1426, -inf
        %v1431 = vmax.f32 %v1402, %v1427
        %v1432 = vmax.f32 %v1403, %v1428
        %v1433 = vmax.f32 %v1404, %v1429
        %v1434 = vmax.f32 %v1405, %v1430
        %v1435 = vld [vmem:[#allocation3 + $0x26] sm:$0x1]
        %1436 = vset.pattern.permute.xlu0 38
        %1437 = vperm.xlu0 %1436, %v330
        %v1438 = vpop.permute.xlu0 %1437
        %1439 = vset.pattern.permute.xlu0 38
        %1440 = vperm.xlu0 %1439, %v331
        %v1441 = vpop.permute.xlu0 %1440
        %1442 = vset.pattern.permute.xlu0 38
        %1443 = vperm.xlu0 %1442, %v332
        %v1444 = vpop.permute.xlu0 %1443
        %1445 = vset.pattern.permute.xlu0 38
        %1446 = vperm.xlu0 %1445, %v333
        %v1447 = vpop.permute.xlu0 %1446
        %vm1448 = vcmp.eq.s32.totalorder %v1438, 1
        %vm1449 = vcmp.eq.s32.totalorder %v1441, 1
        %vm1450 = vcmp.eq.s32.totalorder %v1444, 1
        %vm1451 = vcmp.eq.s32.totalorder %v1447, 1
        %v1452 = vlaneseq
        %v1453 = vshrl.u32 %v1452, 7
        %v1454 = vsub.s32 0, %v1453
        %v1455 = vrot.slane %v1435, %v1454
        %v1456 = vsel %vm1448, %v1455, -inf
        %v1457 = vsel %vm1449, %v1455, -inf
        %v1458 = vsel %vm1450, %v1455, -inf
        %v1459 = vsel %vm1451, %v1455, -inf
        %v1460 = vmax.f32 %v1431, %v1456
        %v1461 = vmax.f32 %v1432, %v1457
        %v1462 = vmax.f32 %v1433, %v1458
        %v1463 = vmax.f32 %v1434, %v1459
        %v1464 = vld [vmem:[#allocation3 + $0x27] sm:$0x1]
        %1465 = vset.pattern.permute.xlu0 39
        %1466 = vperm.xlu0 %1465, %v330
        %v1467 = vpop.permute.xlu0 %1466
        %1468 = vset.pattern.permute.xlu0 39
        %1469 = vperm.xlu0 %1468, %v331
        %v1470 = vpop.permute.xlu0 %1469
        %1471 = vset.pattern.permute.xlu0 39
        %1472 = vperm.xlu0 %1471, %v332
        %v1473 = vpop.permute.xlu0 %1472
        %1474 = vset.pattern.permute.xlu0 39
        %1475 = vperm.xlu0 %1474, %v333
        %v1476 = vpop.permute.xlu0 %1475
        %vm1477 = vcmp.eq.s32.totalorder %v1467, 1
        %vm1478 = vcmp.eq.s32.totalorder %v1470, 1
        %vm1479 = vcmp.eq.s32.totalorder %v1473, 1
        %vm1480 = vcmp.eq.s32.totalorder %v1476, 1
        %v1481 = vlaneseq
        %v1482 = vshrl.u32 %v1481, 7
        %v1483 = vsub.s32 0, %v1482
        %v1484 = vrot.slane %v1464, %v1483
        %v1485 = vsel %vm1477, %v1484, -inf
        %v1486 = vsel %vm1478, %v1484, -inf
        %v1487 = vsel %vm1479, %v1484, -inf
        %v1488 = vsel %vm1480, %v1484, -inf
        %v1489 = vmax.f32 %v1460, %v1485
        %v1490 = vmax.f32 %v1461, %v1486
        %v1491 = vmax.f32 %v1462, %v1487
        %v1492 = vmax.f32 %v1463, %v1488
        %v1493 = vld [vmem:[#allocation3 + $0x28] sm:$0x1]
        %1494 = vset.pattern.permute.xlu0 40
        %1495 = vperm.xlu0 %1494, %v330
        %v1496 = vpop.permute.xlu0 %1495
        %1497 = vset.pattern.permute.xlu0 40
        %1498 = vperm.xlu0 %1497, %v331
        %v1499 = vpop.permute.xlu0 %1498
        %1500 = vset.pattern.permute.xlu0 40
        %1501 = vperm.xlu0 %1500, %v332
        %v1502 = vpop.permute.xlu0 %1501
        %1503 = vset.pattern.permute.xlu0 40
        %1504 = vperm.xlu0 %1503, %v333
        %v1505 = vpop.permute.xlu0 %1504
        %vm1506 = vcmp.eq.s32.totalorder %v1496, 1
        %vm1507 = vcmp.eq.s32.totalorder %v1499, 1
        %vm1508 = vcmp.eq.s32.totalorder %v1502, 1
        %vm1509 = vcmp.eq.s32.totalorder %v1505, 1
        %v1510 = vlaneseq
        %v1511 = vshrl.u32 %v1510, 7
        %v1512 = vsub.s32 0, %v1511
        %v1513 = vrot.slane %v1493, %v1512
        %v1514 = vsel %vm1506, %v1513, -inf
        %v1515 = vsel %vm1507, %v1513, -inf
        %v1516 = vsel %vm1508, %v1513, -inf
        %v1517 = vsel %vm1509, %v1513, -inf
        %v1518 = vmax.f32 %v1489, %v1514
        %v1519 = vmax.f32 %v1490, %v1515
        %v1520 = vmax.f32 %v1491, %v1516
        %v1521 = vmax.f32 %v1492, %v1517
        %v1522 = vld [vmem:[#allocation3 + $0x29] sm:$0x1]
        %1523 = vset.pattern.permute.xlu0 41
        %1524 = vperm.xlu0 %1523, %v330
        %v1525 = vpop.permute.xlu0 %1524
        %1526 = vset.pattern.permute.xlu0 41
        %1527 = vperm.xlu0 %1526, %v331
        %v1528 = vpop.permute.xlu0 %1527
        %1529 = vset.pattern.permute.xlu0 41
        %1530 = vperm.xlu0 %1529, %v332
        %v1531 = vpop.permute.xlu0 %1530
        %1532 = vset.pattern.permute.xlu0 41
        %1533 = vperm.xlu0 %1532, %v333
        %v1534 = vpop.permute.xlu0 %1533
        %vm1535 = vcmp.eq.s32.totalorder %v1525, 1
        %vm1536 = vcmp.eq.s32.totalorder %v1528, 1
        %vm1537 = vcmp.eq.s32.totalorder %v1531, 1
        %vm1538 = vcmp.eq.s32.totalorder %v1534, 1
        %v1539 = vlaneseq
        %v1540 = vshrl.u32 %v1539, 7
        %v1541 = vsub.s32 0, %v1540
        %v1542 = vrot.slane %v1522, %v1541
        %v1543 = vsel %vm1535, %v1542, -inf
        %v1544 = vsel %vm1536, %v1542, -inf
        %v1545 = vsel %vm1537, %v1542, -inf
        %v1546 = vsel %vm1538, %v1542, -inf
        %v1547 = vmax.f32 %v1518, %v1543
        %v1548 = vmax.f32 %v1519, %v1544
        %v1549 = vmax.f32 %v1520, %v1545
        %v1550 = vmax.f32 %v1521, %v1546
        %v1551 = vld [vmem:[#allocation3 + $0x2a] sm:$0x1]
        %1552 = vset.pattern.permute.xlu0 42
        %1553 = vperm.xlu0 %1552, %v330
        %v1554 = vpop.permute.xlu0 %1553
        %1555 = vset.pattern.permute.xlu0 42
        %1556 = vperm.xlu0 %1555, %v331
        %v1557 = vpop.permute.xlu0 %1556
        %1558 = vset.pattern.permute.xlu0 42
        %1559 = vperm.xlu0 %1558, %v332
        %v1560 = vpop.permute.xlu0 %1559
        %1561 = vset.pattern.permute.xlu0 42
        %1562 = vperm.xlu0 %1561, %v333
        %v1563 = vpop.permute.xlu0 %1562
        %vm1564 = vcmp.eq.s32.totalorder %v1554, 1
        %vm1565 = vcmp.eq.s32.totalorder %v1557, 1
        %vm1566 = vcmp.eq.s32.totalorder %v1560, 1
        %vm1567 = vcmp.eq.s32.totalorder %v1563, 1
        %v1568 = vlaneseq
        %v1569 = vshrl.u32 %v1568, 7
        %v1570 = vsub.s32 0, %v1569
        %v1571 = vrot.slane %v1551, %v1570
        %v1572 = vsel %vm1564, %v1571, -inf
        %v1573 = vsel %vm1565, %v1571, -inf
        %v1574 = vsel %vm1566, %v1571, -inf
        %v1575 = vsel %vm1567, %v1571, -inf
        %v1576 = vmax.f32 %v1547, %v1572
        %v1577 = vmax.f32 %v1548, %v1573
        %v1578 = vmax.f32 %v1549, %v1574
        %v1579 = vmax.f32 %v1550, %v1575
        %v1580 = vld [vmem:[#allocation3 + $0x2b] sm:$0x1]
        %1581 = vset.pattern.permute.xlu0 43
        %1582 = vperm.xlu0 %1581, %v330
        %v1583 = vpop.permute.xlu0 %1582
        %1584 = vset.pattern.permute.xlu0 43
        %1585 = vperm.xlu0 %1584, %v331
        %v1586 = vpop.permute.xlu0 %1585
        %1587 = vset.pattern.permute.xlu0 43
        %1588 = vperm.xlu0 %1587, %v332
        %v1589 = vpop.permute.xlu0 %1588
        %1590 = vset.pattern.permute.xlu0 43
        %1591 = vperm.xlu0 %1590, %v333
        %v1592 = vpop.permute.xlu0 %1591
        %vm1593 = vcmp.eq.s32.totalorder %v1583, 1
        %vm1594 = vcmp.eq.s32.totalorder %v1586, 1
        %vm1595 = vcmp.eq.s32.totalorder %v1589, 1
        %vm1596 = vcmp.eq.s32.totalorder %v1592, 1
        %v1597 = vlaneseq
        %v1598 = vshrl.u32 %v1597, 7
        %v1599 = vsub.s32 0, %v1598
        %v1600 = vrot.slane %v1580, %v1599
        %v1601 = vsel %vm1593, %v1600, -inf
        %v1602 = vsel %vm1594, %v1600, -inf
        %v1603 = vsel %vm1595, %v1600, -inf
        %v1604 = vsel %vm1596, %v1600, -inf
        %v1605 = vmax.f32 %v1576, %v1601
        %v1606 = vmax.f32 %v1577, %v1602
        %v1607 = vmax.f32 %v1578, %v1603
        %v1608 = vmax.f32 %v1579, %v1604
        %v1609 = vld [vmem:[#allocation3 + $0x2c] sm:$0x1]
        %1610 = vset.pattern.permute.xlu0 44
        %1611 = vperm.xlu0 %1610, %v330
        %v1612 = vpop.permute.xlu0 %1611
        %1613 = vset.pattern.permute.xlu0 44
        %1614 = vperm.xlu0 %1613, %v331
        %v1615 = vpop.permute.xlu0 %1614
        %1616 = vset.pattern.permute.xlu0 44
        %1617 = vperm.xlu0 %1616, %v332
        %v1618 = vpop.permute.xlu0 %1617
        %1619 = vset.pattern.permute.xlu0 44
        %1620 = vperm.xlu0 %1619, %v333
        %v1621 = vpop.permute.xlu0 %1620
        %vm1622 = vcmp.eq.s32.totalorder %v1612, 1
        %vm1623 = vcmp.eq.s32.totalorder %v1615, 1
        %vm1624 = vcmp.eq.s32.totalorder %v1618, 1
        %vm1625 = vcmp.eq.s32.totalorder %v1621, 1
        %v1626 = vlaneseq
        %v1627 = vshrl.u32 %v1626, 7
        %v1628 = vsub.s32 0, %v1627
        %v1629 = vrot.slane %v1609, %v1628
        %v1630 = vsel %vm1622, %v1629, -inf
        %v1631 = vsel %vm1623, %v1629, -inf
        %v1632 = vsel %vm1624, %v1629, -inf
        %v1633 = vsel %vm1625, %v1629, -inf
        %v1634 = vmax.f32 %v1605, %v1630
        %v1635 = vmax.f32 %v1606, %v1631
        %v1636 = vmax.f32 %v1607, %v1632
        %v1637 = vmax.f32 %v1608, %v1633
        %v1638 = vld [vmem:[#allocation3 + $0x2d] sm:$0x1]
        %1639 = vset.pattern.permute.xlu0 45
        %1640 = vperm.xlu0 %1639, %v330
        %v1641 = vpop.permute.xlu0 %1640
        %1642 = vset.pattern.permute.xlu0 45
        %1643 = vperm.xlu0 %1642, %v331
        %v1644 = vpop.permute.xlu0 %1643
        %1645 = vset.pattern.permute.xlu0 45
        %1646 = vperm.xlu0 %1645, %v332
        %v1647 = vpop.permute.xlu0 %1646
        %1648 = vset.pattern.permute.xlu0 45
        %1649 = vperm.xlu0 %1648, %v333
        %v1650 = vpop.permute.xlu0 %1649
        %vm1651 = vcmp.eq.s32.totalorder %v1641, 1
        %vm1652 = vcmp.eq.s32.totalorder %v1644, 1
        %vm1653 = vcmp.eq.s32.totalorder %v1647, 1
        %vm1654 = vcmp.eq.s32.totalorder %v1650, 1
        %v1655 = vlaneseq
        %v1656 = vshrl.u32 %v1655, 7
        %v1657 = vsub.s32 0, %v1656
        %v1658 = vrot.slane %v1638, %v1657
        %v1659 = vsel %vm1651, %v1658, -inf
        %v1660 = vsel %vm1652, %v1658, -inf
        %v1661 = vsel %vm1653, %v1658, -inf
        %v1662 = vsel %vm1654, %v1658, -inf
        %v1663 = vmax.f32 %v1634, %v1659
        %v1664 = vmax.f32 %v1635, %v1660
        %v1665 = vmax.f32 %v1636, %v1661
        %v1666 = vmax.f32 %v1637, %v1662
        %v1667 = vld [vmem:[#allocation3 + $0x2e] sm:$0x1]
        %1668 = vset.pattern.permute.xlu0 46
        %1669 = vperm.xlu0 %1668, %v330
        %v1670 = vpop.permute.xlu0 %1669
        %1671 = vset.pattern.permute.xlu0 46
        %1672 = vperm.xlu0 %1671, %v331
        %v1673 = vpop.permute.xlu0 %1672
        %1674 = vset.pattern.permute.xlu0 46
        %1675 = vperm.xlu0 %1674, %v332
        %v1676 = vpop.permute.xlu0 %1675
        %1677 = vset.pattern.permute.xlu0 46
        %1678 = vperm.xlu0 %1677, %v333
        %v1679 = vpop.permute.xlu0 %1678
        %vm1680 = vcmp.eq.s32.totalorder %v1670, 1
        %vm1681 = vcmp.eq.s32.totalorder %v1673, 1
        %vm1682 = vcmp.eq.s32.totalorder %v1676, 1
        %vm1683 = vcmp.eq.s32.totalorder %v1679, 1
        %v1684 = vlaneseq
        %v1685 = vshrl.u32 %v1684, 7
        %v1686 = vsub.s32 0, %v1685
        %v1687 = vrot.slane %v1667, %v1686
        %v1688 = vsel %vm1680, %v1687, -inf
        %v1689 = vsel %vm1681, %v1687, -inf
        %v1690 = vsel %vm1682, %v1687, -inf
        %v1691 = vsel %vm1683, %v1687, -inf
        %v1692 = vmax.f32 %v1663, %v1688
        %v1693 = vmax.f32 %v1664, %v1689
        %v1694 = vmax.f32 %v1665, %v1690
        %v1695 = vmax.f32 %v1666, %v1691
        %v1696 = vld [vmem:[#allocation3 + $0x2f] sm:$0x1]
        %1697 = vset.pattern.permute.xlu0 47
        %1698 = vperm.xlu0 %1697, %v330
        %v1699 = vpop.permute.xlu0 %1698
        %1700 = vset.pattern.permute.xlu0 47
        %1701 = vperm.xlu0 %1700, %v331
        %v1702 = vpop.permute.xlu0 %1701
        %1703 = vset.pattern.permute.xlu0 47
        %1704 = vperm.xlu0 %1703, %v332
        %v1705 = vpop.permute.xlu0 %1704
        %1706 = vset.pattern.permute.xlu0 47
        %1707 = vperm.xlu0 %1706, %v333
        %v1708 = vpop.permute.xlu0 %1707
        %vm1709 = vcmp.eq.s32.totalorder %v1699, 1
        %vm1710 = vcmp.eq.s32.totalorder %v1702, 1
        %vm1711 = vcmp.eq.s32.totalorder %v1705, 1
        %vm1712 = vcmp.eq.s32.totalorder %v1708, 1
        %v1713 = vlaneseq
        %v1714 = vshrl.u32 %v1713, 7
        %v1715 = vsub.s32 0, %v1714
        %v1716 = vrot.slane %v1696, %v1715
        %v1717 = vsel %vm1709, %v1716, -inf
        %v1718 = vsel %vm1710, %v1716, -inf
        %v1719 = vsel %vm1711, %v1716, -inf
        %v1720 = vsel %vm1712, %v1716, -inf
        %v1721 = vmax.f32 %v1692, %v1717
        %v1722 = vmax.f32 %v1693, %v1718
        %v1723 = vmax.f32 %v1694, %v1719
        %v1724 = vmax.f32 %v1695, %v1720
        %v1725 = vld [vmem:[#allocation3 + $0x30] sm:$0x1]
        %1726 = vset.pattern.permute.xlu0 48
        %1727 = vperm.xlu0 %1726, %v330
        %v1728 = vpop.permute.xlu0 %1727
        %1729 = vset.pattern.permute.xlu0 48
        %1730 = vperm.xlu0 %1729, %v331
        %v1731 = vpop.permute.xlu0 %1730
        %1732 = vset.pattern.permute.xlu0 48
        %1733 = vperm.xlu0 %1732, %v332
        %v1734 = vpop.permute.xlu0 %1733
        %1735 = vset.pattern.permute.xlu0 48
        %1736 = vperm.xlu0 %1735, %v333
        %v1737 = vpop.permute.xlu0 %1736
        %vm1738 = vcmp.eq.s32.totalorder %v1728, 1
        %vm1739 = vcmp.eq.s32.totalorder %v1731, 1
        %vm1740 = vcmp.eq.s32.totalorder %v1734, 1
        %vm1741 = vcmp.eq.s32.totalorder %v1737, 1
        %v1742 = vlaneseq
        %v1743 = vshrl.u32 %v1742, 7
        %v1744 = vsub.s32 0, %v1743
        %v1745 = vrot.slane %v1725, %v1744
        %v1746 = vsel %vm1738, %v1745, -inf
        %v1747 = vsel %vm1739, %v1745, -inf
        %v1748 = vsel %vm1740, %v1745, -inf
        %v1749 = vsel %vm1741, %v1745, -inf
        %v1750 = vmax.f32 %v1721, %v1746
        %v1751 = vmax.f32 %v1722, %v1747
        %v1752 = vmax.f32 %v1723, %v1748
        %v1753 = vmax.f32 %v1724, %v1749
        %v1754 = vld [vmem:[#allocation3 + $0x31] sm:$0x1]
        %1755 = vset.pattern.permute.xlu0 49
        %1756 = vperm.xlu0 %1755, %v330
        %v1757 = vpop.permute.xlu0 %1756
        %1758 = vset.pattern.permute.xlu0 49
        %1759 = vperm.xlu0 %1758, %v331
        %v1760 = vpop.permute.xlu0 %1759
        %1761 = vset.pattern.permute.xlu0 49
        %1762 = vperm.xlu0 %1761, %v332
        %v1763 = vpop.permute.xlu0 %1762
        %1764 = vset.pattern.permute.xlu0 49
        %1765 = vperm.xlu0 %1764, %v333
        %v1766 = vpop.permute.xlu0 %1765
        %vm1767 = vcmp.eq.s32.totalorder %v1757, 1
        %vm1768 = vcmp.eq.s32.totalorder %v1760, 1
        %vm1769 = vcmp.eq.s32.totalorder %v1763, 1
        %vm1770 = vcmp.eq.s32.totalorder %v1766, 1
        %v1771 = vlaneseq
        %v1772 = vshrl.u32 %v1771, 7
        %v1773 = vsub.s32 0, %v1772
        %v1774 = vrot.slane %v1754, %v1773
        %v1775 = vsel %vm1767, %v1774, -inf
        %v1776 = vsel %vm1768, %v1774, -inf
        %v1777 = vsel %vm1769, %v1774, -inf
        %v1778 = vsel %vm1770, %v1774, -inf
        %v1779 = vmax.f32 %v1750, %v1775
        %v1780 = vmax.f32 %v1751, %v1776
        %v1781 = vmax.f32 %v1752, %v1777
        %v1782 = vmax.f32 %v1753, %v1778
        %v1783 = vld [vmem:[#allocation3 + $0x32] sm:$0x1]
        %1784 = vset.pattern.permute.xlu0 50
        %1785 = vperm.xlu0 %1784, %v330
        %v1786 = vpop.permute.xlu0 %1785
        %1787 = vset.pattern.permute.xlu0 50
        %1788 = vperm.xlu0 %1787, %v331
        %v1789 = vpop.permute.xlu0 %1788
        %1790 = vset.pattern.permute.xlu0 50
        %1791 = vperm.xlu0 %1790, %v332
        %v1792 = vpop.permute.xlu0 %1791
        %1793 = vset.pattern.permute.xlu0 50
        %1794 = vperm.xlu0 %1793, %v333
        %v1795 = vpop.permute.xlu0 %1794
        %vm1796 = vcmp.eq.s32.totalorder %v1786, 1
        %vm1797 = vcmp.eq.s32.totalorder %v1789, 1
        %vm1798 = vcmp.eq.s32.totalorder %v1792, 1
        %vm1799 = vcmp.eq.s32.totalorder %v1795, 1
        %v1800 = vlaneseq
        %v1801 = vshrl.u32 %v1800, 7
        %v1802 = vsub.s32 0, %v1801
        %v1803 = vrot.slane %v1783, %v1802
        %v1804 = vsel %vm1796, %v1803, -inf
        %v1805 = vsel %vm1797, %v1803, -inf
        %v1806 = vsel %vm1798, %v1803, -inf
        %v1807 = vsel %vm1799, %v1803, -inf
        %v1808 = vmax.f32 %v1779, %v1804
        %v1809 = vmax.f32 %v1780, %v1805
        %v1810 = vmax.f32 %v1781, %v1806
        %v1811 = vmax.f32 %v1782, %v1807
        %v1812 = vld [vmem:[#allocation3 + $0x33] sm:$0x1]
        %1813 = vset.pattern.permute.xlu0 51
        %1814 = vperm.xlu0 %1813, %v330
        %v1815 = vpop.permute.xlu0 %1814
        %1816 = vset.pattern.permute.xlu0 51
        %1817 = vperm.xlu0 %1816, %v331
        %v1818 = vpop.permute.xlu0 %1817
        %1819 = vset.pattern.permute.xlu0 51
        %1820 = vperm.xlu0 %1819, %v332
        %v1821 = vpop.permute.xlu0 %1820
        %1822 = vset.pattern.permute.xlu0 51
        %1823 = vperm.xlu0 %1822, %v333
        %v1824 = vpop.permute.xlu0 %1823
        %vm1825 = vcmp.eq.s32.totalorder %v1815, 1
        %vm1826 = vcmp.eq.s32.totalorder %v1818, 1
        %vm1827 = vcmp.eq.s32.totalorder %v1821, 1
        %vm1828 = vcmp.eq.s32.totalorder %v1824, 1
        %v1829 = vlaneseq
        %v1830 = vshrl.u32 %v1829, 7
        %v1831 = vsub.s32 0, %v1830
        %v1832 = vrot.slane %v1812, %v1831
        %v1833 = vsel %vm1825, %v1832, -inf
        %v1834 = vsel %vm1826, %v1832, -inf
        %v1835 = vsel %vm1827, %v1832, -inf
        %v1836 = vsel %vm1828, %v1832, -inf
        %v1837 = vmax.f32 %v1808, %v1833
        %v1838 = vmax.f32 %v1809, %v1834
        %v1839 = vmax.f32 %v1810, %v1835
        %v1840 = vmax.f32 %v1811, %v1836
        %v1841 = vld [vmem:[#allocation3 + $0x34] sm:$0x1]
        %1842 = vset.pattern.permute.xlu0 52
        %1843 = vperm.xlu0 %1842, %v330
        %v1844 = vpop.permute.xlu0 %1843
        %1845 = vset.pattern.permute.xlu0 52
        %1846 = vperm.xlu0 %1845, %v331
        %v1847 = vpop.permute.xlu0 %1846
        %1848 = vset.pattern.permute.xlu0 52
        %1849 = vperm.xlu0 %1848, %v332
        %v1850 = vpop.permute.xlu0 %1849
        %1851 = vset.pattern.permute.xlu0 52
        %1852 = vperm.xlu0 %1851, %v333
        %v1853 = vpop.permute.xlu0 %1852
        %vm1854 = vcmp.eq.s32.totalorder %v1844, 1
        %vm1855 = vcmp.eq.s32.totalorder %v1847, 1
        %vm1856 = vcmp.eq.s32.totalorder %v1850, 1
        %vm1857 = vcmp.eq.s32.totalorder %v1853, 1
        %v1858 = vlaneseq
        %v1859 = vshrl.u32 %v1858, 7
        %v1860 = vsub.s32 0, %v1859
        %v1861 = vrot.slane %v1841, %v1860
        %v1862 = vsel %vm1854, %v1861, -inf
        %v1863 = vsel %vm1855, %v1861, -inf
        %v1864 = vsel %vm1856, %v1861, -inf
        %v1865 = vsel %vm1857, %v1861, -inf
        %v1866 = vmax.f32 %v1837, %v1862
        %v1867 = vmax.f32 %v1838, %v1863
        %v1868 = vmax.f32 %v1839, %v1864
        %v1869 = vmax.f32 %v1840, %v1865
        %v1870 = vld [vmem:[#allocation3 + $0x35] sm:$0x1]
        %1871 = vset.pattern.permute.xlu0 53
        %1872 = vperm.xlu0 %1871, %v330
        %v1873 = vpop.permute.xlu0 %1872
        %1874 = vset.pattern.permute.xlu0 53
        %1875 = vperm.xlu0 %1874, %v331
        %v1876 = vpop.permute.xlu0 %1875
        %1877 = vset.pattern.permute.xlu0 53
        %1878 = vperm.xlu0 %1877, %v332
        %v1879 = vpop.permute.xlu0 %1878
        %1880 = vset.pattern.permute.xlu0 53
        %1881 = vperm.xlu0 %1880, %v333
        %v1882 = vpop.permute.xlu0 %1881
        %vm1883 = vcmp.eq.s32.totalorder %v1873, 1
        %vm1884 = vcmp.eq.s32.totalorder %v1876, 1
        %vm1885 = vcmp.eq.s32.totalorder %v1879, 1
        %vm1886 = vcmp.eq.s32.totalorder %v1882, 1
        %v1887 = vlaneseq
        %v1888 = vshrl.u32 %v1887, 7
        %v1889 = vsub.s32 0, %v1888
        %v1890 = vrot.slane %v1870, %v1889
        %v1891 = vsel %vm1883, %v1890, -inf
        %v1892 = vsel %vm1884, %v1890, -inf
        %v1893 = vsel %vm1885, %v1890, -inf
        %v1894 = vsel %vm1886, %v1890, -inf
        %v1895 = vmax.f32 %v1866, %v1891
        %v1896 = vmax.f32 %v1867, %v1892
        %v1897 = vmax.f32 %v1868, %v1893
        %v1898 = vmax.f32 %v1869, %v1894
        %v1899 = vld [vmem:[#allocation3 + $0x36] sm:$0x1]
        %1900 = vset.pattern.permute.xlu0 54
        %1901 = vperm.xlu0 %1900, %v330
        %v1902 = vpop.permute.xlu0 %1901
        %1903 = vset.pattern.permute.xlu0 54
        %1904 = vperm.xlu0 %1903, %v331
        %v1905 = vpop.permute.xlu0 %1904
        %1906 = vset.pattern.permute.xlu0 54
        %1907 = vperm.xlu0 %1906, %v332
        %v1908 = vpop.permute.xlu0 %1907
        %1909 = vset.pattern.permute.xlu0 54
        %1910 = vperm.xlu0 %1909, %v333
        %v1911 = vpop.permute.xlu0 %1910
        %vm1912 = vcmp.eq.s32.totalorder %v1902, 1
        %vm1913 = vcmp.eq.s32.totalorder %v1905, 1
        %vm1914 = vcmp.eq.s32.totalorder %v1908, 1
        %vm1915 = vcmp.eq.s32.totalorder %v1911, 1
        %v1916 = vlaneseq
        %v1917 = vshrl.u32 %v1916, 7
        %v1918 = vsub.s32 0, %v1917
        %v1919 = vrot.slane %v1899, %v1918
        %v1920 = vsel %vm1912, %v1919, -inf
        %v1921 = vsel %vm1913, %v1919, -inf
        %v1922 = vsel %vm1914, %v1919, -inf
        %v1923 = vsel %vm1915, %v1919, -inf
        %v1924 = vmax.f32 %v1895, %v1920
        %v1925 = vmax.f32 %v1896, %v1921
        %v1926 = vmax.f32 %v1897, %v1922
        %v1927 = vmax.f32 %v1898, %v1923
        %v1928 = vld [vmem:[#allocation3 + $0x37] sm:$0x1]
        %1929 = vset.pattern.permute.xlu0 55
        %1930 = vperm.xlu0 %1929, %v330
        %v1931 = vpop.permute.xlu0 %1930
        %1932 = vset.pattern.permute.xlu0 55
        %1933 = vperm.xlu0 %1932, %v331
        %v1934 = vpop.permute.xlu0 %1933
        %1935 = vset.pattern.permute.xlu0 55
        %1936 = vperm.xlu0 %1935, %v332
        %v1937 = vpop.permute.xlu0 %1936
        %1938 = vset.pattern.permute.xlu0 55
        %1939 = vperm.xlu0 %1938, %v333
        %v1940 = vpop.permute.xlu0 %1939
        %vm1941 = vcmp.eq.s32.totalorder %v1931, 1
        %vm1942 = vcmp.eq.s32.totalorder %v1934, 1
        %vm1943 = vcmp.eq.s32.totalorder %v1937, 1
        %vm1944 = vcmp.eq.s32.totalorder %v1940, 1
        %v1945 = vlaneseq
        %v1946 = vshrl.u32 %v1945, 7
        %v1947 = vsub.s32 0, %v1946
        %v1948 = vrot.slane %v1928, %v1947
        %v1949 = vsel %vm1941, %v1948, -inf
        %v1950 = vsel %vm1942, %v1948, -inf
        %v1951 = vsel %vm1943, %v1948, -inf
        %v1952 = vsel %vm1944, %v1948, -inf
        %v1953 = vmax.f32 %v1924, %v1949
        %v1954 = vmax.f32 %v1925, %v1950
        %v1955 = vmax.f32 %v1926, %v1951
        %v1956 = vmax.f32 %v1927, %v1952
        %v1957 = vld [vmem:[#allocation3 + $0x38] sm:$0x1]
        %1958 = vset.pattern.permute.xlu0 56
        %1959 = vperm.xlu0 %1958, %v330
        %v1960 = vpop.permute.xlu0 %1959
        %1961 = vset.pattern.permute.xlu0 56
        %1962 = vperm.xlu0 %1961, %v331
        %v1963 = vpop.permute.xlu0 %1962
        %1964 = vset.pattern.permute.xlu0 56
        %1965 = vperm.xlu0 %1964, %v332
        %v1966 = vpop.permute.xlu0 %1965
        %1967 = vset.pattern.permute.xlu0 56
        %1968 = vperm.xlu0 %1967, %v333
        %v1969 = vpop.permute.xlu0 %1968
        %vm1970 = vcmp.eq.s32.totalorder %v1960, 1
        %vm1971 = vcmp.eq.s32.totalorder %v1963, 1
        %vm1972 = vcmp.eq.s32.totalorder %v1966, 1
        %vm1973 = vcmp.eq.s32.totalorder %v1969, 1
        %v1974 = vlaneseq
        %v1975 = vshrl.u32 %v1974, 7
        %v1976 = vsub.s32 0, %v1975
        %v1977 = vrot.slane %v1957, %v1976
        %v1978 = vsel %vm1970, %v1977, -inf
        %v1979 = vsel %vm1971, %v1977, -inf
        %v1980 = vsel %vm1972, %v1977, -inf
        %v1981 = vsel %vm1973, %v1977, -inf
        %v1982 = vmax.f32 %v1953, %v1978
        %v1983 = vmax.f32 %v1954, %v1979
        %v1984 = vmax.f32 %v1955, %v1980
        %v1985 = vmax.f32 %v1956, %v1981
        %v1986 = vld [vmem:[#allocation3 + $0x39] sm:$0x1]
        %1987 = vset.pattern.permute.xlu0 57
        %1988 = vperm.xlu0 %1987, %v330
        %v1989 = vpop.permute.xlu0 %1988
        %1990 = vset.pattern.permute.xlu0 57
        %1991 = vperm.xlu0 %1990, %v331
        %v1992 = vpop.permute.xlu0 %1991
        %1993 = vset.pattern.permute.xlu0 57
        %1994 = vperm.xlu0 %1993, %v332
        %v1995 = vpop.permute.xlu0 %1994
        %1996 = vset.pattern.permute.xlu0 57
        %1997 = vperm.xlu0 %1996, %v333
        %v1998 = vpop.permute.xlu0 %1997
        %vm1999 = vcmp.eq.s32.totalorder %v1989, 1
        %vm2000 = vcmp.eq.s32.totalorder %v1992, 1
        %vm2001 = vcmp.eq.s32.totalorder %v1995, 1
        %vm2002 = vcmp.eq.s32.totalorder %v1998, 1
        %v2003 = vlaneseq
        %v2004 = vshrl.u32 %v2003, 7
        %v2005 = vsub.s32 0, %v2004
        %v2006 = vrot.slane %v1986, %v2005
        %v2007 = vsel %vm1999, %v2006, -inf
        %v2008 = vsel %vm2000, %v2006, -inf
        %v2009 = vsel %vm2001, %v2006, -inf
        %v2010 = vsel %vm2002, %v2006, -inf
        %v2011 = vmax.f32 %v1982, %v2007
        %v2012 = vmax.f32 %v1983, %v2008
        %v2013 = vmax.f32 %v1984, %v2009
        %v2014 = vmax.f32 %v1985, %v2010
        %v2015 = vld [vmem:[#allocation3 + $0x3a] sm:$0x1]
        %2016 = vset.pattern.permute.xlu0 58
        %2017 = vperm.xlu0 %2016, %v330
        %v2018 = vpop.permute.xlu0 %2017
        %2019 = vset.pattern.permute.xlu0 58
        %2020 = vperm.xlu0 %2019, %v331
        %v2021 = vpop.permute.xlu0 %2020
        %2022 = vset.pattern.permute.xlu0 58
        %2023 = vperm.xlu0 %2022, %v332
        %v2024 = vpop.permute.xlu0 %2023
        %2025 = vset.pattern.permute.xlu0 58
        %2026 = vperm.xlu0 %2025, %v333
        %v2027 = vpop.permute.xlu0 %2026
        %vm2028 = vcmp.eq.s32.totalorder %v2018, 1
        %vm2029 = vcmp.eq.s32.totalorder %v2021, 1
        %vm2030 = vcmp.eq.s32.totalorder %v2024, 1
        %vm2031 = vcmp.eq.s32.totalorder %v2027, 1
        %v2032 = vlaneseq
        %v2033 = vshrl.u32 %v2032, 7
        %v2034 = vsub.s32 0, %v2033
        %v2035 = vrot.slane %v2015, %v2034
        %v2036 = vsel %vm2028, %v2035, -inf
        %v2037 = vsel %vm2029, %v2035, -inf
        %v2038 = vsel %vm2030, %v2035, -inf
        %v2039 = vsel %vm2031, %v2035, -inf
        %v2040 = vmax.f32 %v2011, %v2036
        %v2041 = vmax.f32 %v2012, %v2037
        %v2042 = vmax.f32 %v2013, %v2038
        %v2043 = vmax.f32 %v2014, %v2039
        %v2044 = vld [vmem:[#allocation3 + $0x3b] sm:$0x1]
        %2045 = vset.pattern.permute.xlu0 59
        %2046 = vperm.xlu0 %2045, %v330
        %v2047 = vpop.permute.xlu0 %2046
        %2048 = vset.pattern.permute.xlu0 59
        %2049 = vperm.xlu0 %2048, %v331
        %v2050 = vpop.permute.xlu0 %2049
        %2051 = vset.pattern.permute.xlu0 59
        %2052 = vperm.xlu0 %2051, %v332
        %v2053 = vpop.permute.xlu0 %2052
        %2054 = vset.pattern.permute.xlu0 59
        %2055 = vperm.xlu0 %2054, %v333
        %v2056 = vpop.permute.xlu0 %2055
        %vm2057 = vcmp.eq.s32.totalorder %v2047, 1
        %vm2058 = vcmp.eq.s32.totalorder %v2050, 1
        %vm2059 = vcmp.eq.s32.totalorder %v2053, 1
        %vm2060 = vcmp.eq.s32.totalorder %v2056, 1
        %v2061 = vlaneseq
        %v2062 = vshrl.u32 %v2061, 7
        %v2063 = vsub.s32 0, %v2062
        %v2064 = vrot.slane %v2044, %v2063
        %v2065 = vsel %vm2057, %v2064, -inf
        %v2066 = vsel %vm2058, %v2064, -inf
        %v2067 = vsel %vm2059, %v2064, -inf
        %v2068 = vsel %vm2060, %v2064, -inf
        %v2069 = vmax.f32 %v2040, %v2065
        %v2070 = vmax.f32 %v2041, %v2066
        %v2071 = vmax.f32 %v2042, %v2067
        %v2072 = vmax.f32 %v2043, %v2068
        %v2073 = vld [vmem:[#allocation3 + $0x3c] sm:$0x1]
        %2074 = vset.pattern.permute.xlu0 60
        %2075 = vperm.xlu0 %2074, %v330
        %v2076 = vpop.permute.xlu0 %2075
        %2077 = vset.pattern.permute.xlu0 60
        %2078 = vperm.xlu0 %2077, %v331
        %v2079 = vpop.permute.xlu0 %2078
        %2080 = vset.pattern.permute.xlu0 60
        %2081 = vperm.xlu0 %2080, %v332
        %v2082 = vpop.permute.xlu0 %2081
        %2083 = vset.pattern.permute.xlu0 60
        %2084 = vperm.xlu0 %2083, %v333
        %v2085 = vpop.permute.xlu0 %2084
        %vm2086 = vcmp.eq.s32.totalorder %v2076, 1
        %vm2087 = vcmp.eq.s32.totalorder %v2079, 1
        %vm2088 = vcmp.eq.s32.totalorder %v2082, 1
        %vm2089 = vcmp.eq.s32.totalorder %v2085, 1
        %v2090 = vlaneseq
        %v2091 = vshrl.u32 %v2090, 7
        %v2092 = vsub.s32 0, %v2091
        %v2093 = vrot.slane %v2073, %v2092
        %v2094 = vsel %vm2086, %v2093, -inf
        %v2095 = vsel %vm2087, %v2093, -inf
        %v2096 = vsel %vm2088, %v2093, -inf
        %v2097 = vsel %vm2089, %v2093, -inf
        %v2098 = vmax.f32 %v2069, %v2094
        %v2099 = vmax.f32 %v2070, %v2095
        %v2100 = vmax.f32 %v2071, %v2096
        %v2101 = vmax.f32 %v2072, %v2097
        %v2102 = vld [vmem:[#allocation3 + $0x3d] sm:$0x1]
        %2103 = vset.pattern.permute.xlu0 61
        %2104 = vperm.xlu0 %2103, %v330
        %v2105 = vpop.permute.xlu0 %2104
        %2106 = vset.pattern.permute.xlu0 61
        %2107 = vperm.xlu0 %2106, %v331
        %v2108 = vpop.permute.xlu0 %2107
        %2109 = vset.pattern.permute.xlu0 61
        %2110 = vperm.xlu0 %2109, %v332
        %v2111 = vpop.permute.xlu0 %2110
        %2112 = vset.pattern.permute.xlu0 61
        %2113 = vperm.xlu0 %2112, %v333
        %v2114 = vpop.permute.xlu0 %2113
        %vm2115 = vcmp.eq.s32.totalorder %v2105, 1
        %vm2116 = vcmp.eq.s32.totalorder %v2108, 1
        %vm2117 = vcmp.eq.s32.totalorder %v2111, 1
        %vm2118 = vcmp.eq.s32.totalorder %v2114, 1
        %v2119 = vlaneseq
        %v2120 = vshrl.u32 %v2119, 7
        %v2121 = vsub.s32 0, %v2120
        %v2122 = vrot.slane %v2102, %v2121
        %v2123 = vsel %vm2115, %v2122, -inf
        %v2124 = vsel %vm2116, %v2122, -inf
        %v2125 = vsel %vm2117, %v2122, -inf
        %v2126 = vsel %vm2118, %v2122, -inf
        %v2127 = vmax.f32 %v2098, %v2123
        %v2128 = vmax.f32 %v2099, %v2124
        %v2129 = vmax.f32 %v2100, %v2125
        %v2130 = vmax.f32 %v2101, %v2126
        %v2131 = vld [vmem:[#allocation3 + $0x3e] sm:$0x1]
        %2132 = vset.pattern.permute.xlu0 62
        %2133 = vperm.xlu0 %2132, %v330
        %v2134 = vpop.permute.xlu0 %2133
        %2135 = vset.pattern.permute.xlu0 62
        %2136 = vperm.xlu0 %2135, %v331
        %v2137 = vpop.permute.xlu0 %2136
        %2138 = vset.pattern.permute.xlu0 62
        %2139 = vperm.xlu0 %2138, %v332
        %v2140 = vpop.permute.xlu0 %2139
        %2141 = vset.pattern.permute.xlu0 62
        %2142 = vperm.xlu0 %2141, %v333
        %v2143 = vpop.permute.xlu0 %2142
        %vm2144 = vcmp.eq.s32.totalorder %v2134, 1
        %vm2145 = vcmp.eq.s32.totalorder %v2137, 1
        %vm2146 = vcmp.eq.s32.totalorder %v2140, 1
        %vm2147 = vcmp.eq.s32.totalorder %v2143, 1
        %v2148 = vlaneseq
        %v2149 = vshrl.u32 %v2148, 7
        %v2150 = vsub.s32 0, %v2149
        %v2151 = vrot.slane %v2131, %v2150
        %v2152 = vsel %vm2144, %v2151, -inf
        %v2153 = vsel %vm2145, %v2151, -inf
        %v2154 = vsel %vm2146, %v2151, -inf
        %v2155 = vsel %vm2147, %v2151, -inf
        %v2156 = vmax.f32 %v2127, %v2152
        %v2157 = vmax.f32 %v2128, %v2153
        %v2158 = vmax.f32 %v2129, %v2154
        %v2159 = vmax.f32 %v2130, %v2155
        %v2160 = vld [vmem:[#allocation3 + $0x3f] sm:$0x1]
        %2161 = vset.pattern.permute.xlu0 63
        %2162 = vperm.xlu0 %2161, %v330
        %v2163 = vpop.permute.xlu0 %2162
        %2164 = vset.pattern.permute.xlu0 63
        %2165 = vperm.xlu0 %2164, %v331
        %v2166 = vpop.permute.xlu0 %2165
        %2167 = vset.pattern.permute.xlu0 63
        %2168 = vperm.xlu0 %2167, %v332
        %v2169 = vpop.permute.xlu0 %2168
        %2170 = vset.pattern.permute.xlu0 63
        %2171 = vperm.xlu0 %2170, %v333
        %v2172 = vpop.permute.xlu0 %2171
        %vm2173 = vcmp.eq.s32.totalorder %v2163, 1
        %vm2174 = vcmp.eq.s32.totalorder %v2166, 1
        %vm2175 = vcmp.eq.s32.totalorder %v2169, 1
        %vm2176 = vcmp.eq.s32.totalorder %v2172, 1
        %v2177 = vlaneseq
        %v2178 = vshrl.u32 %v2177, 7
        %v2179 = vsub.s32 0, %v2178
        %v2180 = vrot.slane %v2160, %v2179
        %v2181 = vsel %vm2173, %v2180, -inf
        %v2182 = vsel %vm2174, %v2180, -inf
        %v2183 = vsel %vm2175, %v2180, -inf
        %v2184 = vsel %vm2176, %v2180, -inf
        %v2185 = vmax.f32 %v2156, %v2181
        %v2186 = vmax.f32 %v2157, %v2182
        %v2187 = vmax.f32 %v2158, %v2183
        %v2188 = vmax.f32 %v2159, %v2184
        %v2189 = vld [vmem:[#allocation3 + $0x40] sm:$0x1]
        %2190 = vset.pattern.permute.xlu0 64
        %2191 = vperm.xlu0 %2190, %v330
        %v2192 = vpop.permute.xlu0 %2191
        %2193 = vset.pattern.permute.xlu0 64
        %2194 = vperm.xlu0 %2193, %v331
        %v2195 = vpop.permute.xlu0 %2194
        %2196 = vset.pattern.permute.xlu0 64
        %2197 = vperm.xlu0 %2196, %v332
        %v2198 = vpop.permute.xlu0 %2197
        %2199 = vset.pattern.permute.xlu0 64
        %2200 = vperm.xlu0 %2199, %v333
        %v2201 = vpop.permute.xlu0 %2200
        %vm2202 = vcmp.eq.s32.totalorder %v2192, 1
        %vm2203 = vcmp.eq.s32.totalorder %v2195, 1
        %vm2204 = vcmp.eq.s32.totalorder %v2198, 1
        %vm2205 = vcmp.eq.s32.totalorder %v2201, 1
        %v2206 = vlaneseq
        %v2207 = vshrl.u32 %v2206, 7
        %v2208 = vsub.s32 0, %v2207
        %v2209 = vrot.slane %v2189, %v2208
        %v2210 = vsel %vm2202, %v2209, -inf
        %v2211 = vsel %vm2203, %v2209, -inf
        %v2212 = vsel %vm2204, %v2209, -inf
        %v2213 = vsel %vm2205, %v2209, -inf
        %v2214 = vmax.f32 %v2185, %v2210
        %v2215 = vmax.f32 %v2186, %v2211
        %v2216 = vmax.f32 %v2187, %v2212
        %v2217 = vmax.f32 %v2188, %v2213
        %v2218 = vld [vmem:[#allocation3 + $0x41] sm:$0x1]
        %2219 = vset.pattern.permute.xlu0 65
        %2220 = vperm.xlu0 %2219, %v330
        %v2221 = vpop.permute.xlu0 %2220
        %2222 = vset.pattern.permute.xlu0 65
        %2223 = vperm.xlu0 %2222, %v331
        %v2224 = vpop.permute.xlu0 %2223
        %2225 = vset.pattern.permute.xlu0 65
        %2226 = vperm.xlu0 %2225, %v332
        %v2227 = vpop.permute.xlu0 %2226
        %2228 = vset.pattern.permute.xlu0 65
        %2229 = vperm.xlu0 %2228, %v333
        %v2230 = vpop.permute.xlu0 %2229
        %vm2231 = vcmp.eq.s32.totalorder %v2221, 1
        %vm2232 = vcmp.eq.s32.totalorder %v2224, 1
        %vm2233 = vcmp.eq.s32.totalorder %v2227, 1
        %vm2234 = vcmp.eq.s32.totalorder %v2230, 1
        %v2235 = vlaneseq
        %v2236 = vshrl.u32 %v2235, 7
        %v2237 = vsub.s32 0, %v2236
        %v2238 = vrot.slane %v2218, %v2237
        %v2239 = vsel %vm2231, %v2238, -inf
        %v2240 = vsel %vm2232, %v2238, -inf
        %v2241 = vsel %vm2233, %v2238, -inf
        %v2242 = vsel %vm2234, %v2238, -inf
        %v2243 = vmax.f32 %v2214, %v2239
        %v2244 = vmax.f32 %v2215, %v2240
        %v2245 = vmax.f32 %v2216, %v2241
        %v2246 = vmax.f32 %v2217, %v2242
        %v2247 = vld [vmem:[#allocation3 + $0x42] sm:$0x1]
        %2248 = vset.pattern.permute.xlu0 66
        %2249 = vperm.xlu0 %2248, %v330
        %v2250 = vpop.permute.xlu0 %2249
        %2251 = vset.pattern.permute.xlu0 66
        %2252 = vperm.xlu0 %2251, %v331
        %v2253 = vpop.permute.xlu0 %2252
        %2254 = vset.pattern.permute.xlu0 66
        %2255 = vperm.xlu0 %2254, %v332
        %v2256 = vpop.permute.xlu0 %2255
        %2257 = vset.pattern.permute.xlu0 66
        %2258 = vperm.xlu0 %2257, %v333
        %v2259 = vpop.permute.xlu0 %2258
        %vm2260 = vcmp.eq.s32.totalorder %v2250, 1
        %vm2261 = vcmp.eq.s32.totalorder %v2253, 1
        %vm2262 = vcmp.eq.s32.totalorder %v2256, 1
        %vm2263 = vcmp.eq.s32.totalorder %v2259, 1
        %v2264 = vlaneseq
        %v2265 = vshrl.u32 %v2264, 7
        %v2266 = vsub.s32 0, %v2265
        %v2267 = vrot.slane %v2247, %v2266
        %v2268 = vsel %vm2260, %v2267, -inf
        %v2269 = vsel %vm2261, %v2267, -inf
        %v2270 = vsel %vm2262, %v2267, -inf
        %v2271 = vsel %vm2263, %v2267, -inf
        %v2272 = vmax.f32 %v2243, %v2268
        %v2273 = vmax.f32 %v2244, %v2269
        %v2274 = vmax.f32 %v2245, %v2270
        %v2275 = vmax.f32 %v2246, %v2271
        %v2276 = vld [vmem:[#allocation3 + $0x43] sm:$0x1]
        %2277 = vset.pattern.permute.xlu0 67
        %2278 = vperm.xlu0 %2277, %v330
        %v2279 = vpop.permute.xlu0 %2278
        %2280 = vset.pattern.permute.xlu0 67
        %2281 = vperm.xlu0 %2280, %v331
        %v2282 = vpop.permute.xlu0 %2281
        %2283 = vset.pattern.permute.xlu0 67
        %2284 = vperm.xlu0 %2283, %v332
        %v2285 = vpop.permute.xlu0 %2284
        %2286 = vset.pattern.permute.xlu0 67
        %2287 = vperm.xlu0 %2286, %v333
        %v2288 = vpop.permute.xlu0 %2287
        %vm2289 = vcmp.eq.s32.totalorder %v2279, 1
        %vm2290 = vcmp.eq.s32.totalorder %v2282, 1
        %vm2291 = vcmp.eq.s32.totalorder %v2285, 1
        %vm2292 = vcmp.eq.s32.totalorder %v2288, 1
        %v2293 = vlaneseq
        %v2294 = vshrl.u32 %v2293, 7
        %v2295 = vsub.s32 0, %v2294
        %v2296 = vrot.slane %v2276, %v2295
        %v2297 = vsel %vm2289, %v2296, -inf
        %v2298 = vsel %vm2290, %v2296, -inf
        %v2299 = vsel %vm2291, %v2296, -inf
        %v2300 = vsel %vm2292, %v2296, -inf
        %v2301 = vmax.f32 %v2272, %v2297
        %v2302 = vmax.f32 %v2273, %v2298
        %v2303 = vmax.f32 %v2274, %v2299
        %v2304 = vmax.f32 %v2275, %v2300
        %v2305 = vld [vmem:[#allocation3 + $0x44] sm:$0x1]
        %2306 = vset.pattern.permute.xlu0 68
        %2307 = vperm.xlu0 %2306, %v330
        %v2308 = vpop.permute.xlu0 %2307
        %2309 = vset.pattern.permute.xlu0 68
        %2310 = vperm.xlu0 %2309, %v331
        %v2311 = vpop.permute.xlu0 %2310
        %2312 = vset.pattern.permute.xlu0 68
        %2313 = vperm.xlu0 %2312, %v332
        %v2314 = vpop.permute.xlu0 %2313
        %2315 = vset.pattern.permute.xlu0 68
        %2316 = vperm.xlu0 %2315, %v333
        %v2317 = vpop.permute.xlu0 %2316
        %vm2318 = vcmp.eq.s32.totalorder %v2308, 1
        %vm2319 = vcmp.eq.s32.totalorder %v2311, 1
        %vm2320 = vcmp.eq.s32.totalorder %v2314, 1
        %vm2321 = vcmp.eq.s32.totalorder %v2317, 1
        %v2322 = vlaneseq
        %v2323 = vshrl.u32 %v2322, 7
        %v2324 = vsub.s32 0, %v2323
        %v2325 = vrot.slane %v2305, %v2324
        %v2326 = vsel %vm2318, %v2325, -inf
        %v2327 = vsel %vm2319, %v2325, -inf
        %v2328 = vsel %vm2320, %v2325, -inf
        %v2329 = vsel %vm2321, %v2325, -inf
        %v2330 = vmax.f32 %v2301, %v2326
        %v2331 = vmax.f32 %v2302, %v2327
        %v2332 = vmax.f32 %v2303, %v2328
        %v2333 = vmax.f32 %v2304, %v2329
        %v2334 = vld [vmem:[#allocation3 + $0x45] sm:$0x1]
        %2335 = vset.pattern.permute.xlu0 69
        %2336 = vperm.xlu0 %2335, %v330
        %v2337 = vpop.permute.xlu0 %2336
        %2338 = vset.pattern.permute.xlu0 69
        %2339 = vperm.xlu0 %2338, %v331
        %v2340 = vpop.permute.xlu0 %2339
        %2341 = vset.pattern.permute.xlu0 69
        %2342 = vperm.xlu0 %2341, %v332
        %v2343 = vpop.permute.xlu0 %2342
        %2344 = vset.pattern.permute.xlu0 69
        %2345 = vperm.xlu0 %2344, %v333
        %v2346 = vpop.permute.xlu0 %2345
        %vm2347 = vcmp.eq.s32.totalorder %v2337, 1
        %vm2348 = vcmp.eq.s32.totalorder %v2340, 1
        %vm2349 = vcmp.eq.s32.totalorder %v2343, 1
        %vm2350 = vcmp.eq.s32.totalorder %v2346, 1
        %v2351 = vlaneseq
        %v2352 = vshrl.u32 %v2351, 7
        %v2353 = vsub.s32 0, %v2352
        %v2354 = vrot.slane %v2334, %v2353
        %v2355 = vsel %vm2347, %v2354, -inf
        %v2356 = vsel %vm2348, %v2354, -inf
        %v2357 = vsel %vm2349, %v2354, -inf
        %v2358 = vsel %vm2350, %v2354, -inf
        %v2359 = vmax.f32 %v2330, %v2355
        %v2360 = vmax.f32 %v2331, %v2356
        %v2361 = vmax.f32 %v2332, %v2357
        %v2362 = vmax.f32 %v2333, %v2358
        %v2363 = vld [vmem:[#allocation3 + $0x46] sm:$0x1]
        %2364 = vset.pattern.permute.xlu0 70
        %2365 = vperm.xlu0 %2364, %v330
        %v2366 = vpop.permute.xlu0 %2365
        %2367 = vset.pattern.permute.xlu0 70
        %2368 = vperm.xlu0 %2367, %v331
        %v2369 = vpop.permute.xlu0 %2368
        %2370 = vset.pattern.permute.xlu0 70
        %2371 = vperm.xlu0 %2370, %v332
        %v2372 = vpop.permute.xlu0 %2371
        %2373 = vset.pattern.permute.xlu0 70
        %2374 = vperm.xlu0 %2373, %v333
        %v2375 = vpop.permute.xlu0 %2374
        %vm2376 = vcmp.eq.s32.totalorder %v2366, 1
        %vm2377 = vcmp.eq.s32.totalorder %v2369, 1
        %vm2378 = vcmp.eq.s32.totalorder %v2372, 1
        %vm2379 = vcmp.eq.s32.totalorder %v2375, 1
        %v2380 = vlaneseq
        %v2381 = vshrl.u32 %v2380, 7
        %v2382 = vsub.s32 0, %v2381
        %v2383 = vrot.slane %v2363, %v2382
        %v2384 = vsel %vm2376, %v2383, -inf
        %v2385 = vsel %vm2377, %v2383, -inf
        %v2386 = vsel %vm2378, %v2383, -inf
        %v2387 = vsel %vm2379, %v2383, -inf
        %v2388 = vmax.f32 %v2359, %v2384
        %v2389 = vmax.f32 %v2360, %v2385
        %v2390 = vmax.f32 %v2361, %v2386
        %v2391 = vmax.f32 %v2362, %v2387
        %v2392 = vld [vmem:[#allocation3 + $0x47] sm:$0x1]
        %2393 = vset.pattern.permute.xlu0 71
        %2394 = vperm.xlu0 %2393, %v330
        %v2395 = vpop.permute.xlu0 %2394
        %2396 = vset.pattern.permute.xlu0 71
        %2397 = vperm.xlu0 %2396, %v331
        %v2398 = vpop.permute.xlu0 %2397
        %2399 = vset.pattern.permute.xlu0 71
        %2400 = vperm.xlu0 %2399, %v332
        %v2401 = vpop.permute.xlu0 %2400
        %2402 = vset.pattern.permute.xlu0 71
        %2403 = vperm.xlu0 %2402, %v333
        %v2404 = vpop.permute.xlu0 %2403
        %vm2405 = vcmp.eq.s32.totalorder %v2395, 1
        %vm2406 = vcmp.eq.s32.totalorder %v2398, 1
        %vm2407 = vcmp.eq.s32.totalorder %v2401, 1
        %vm2408 = vcmp.eq.s32.totalorder %v2404, 1
        %v2409 = vlaneseq
        %v2410 = vshrl.u32 %v2409, 7
        %v2411 = vsub.s32 0, %v2410
        %v2412 = vrot.slane %v2392, %v2411
        %v2413 = vsel %vm2405, %v2412, -inf
        %v2414 = vsel %vm2406, %v2412, -inf
        %v2415 = vsel %vm2407, %v2412, -inf
        %v2416 = vsel %vm2408, %v2412, -inf
        %v2417 = vmax.f32 %v2388, %v2413
        %v2418 = vmax.f32 %v2389, %v2414
        %v2419 = vmax.f32 %v2390, %v2415
        %v2420 = vmax.f32 %v2391, %v2416
        %v2421 = vld [vmem:[#allocation3 + $0x48] sm:$0x1]
        %2422 = vset.pattern.permute.xlu0 72
        %2423 = vperm.xlu0 %2422, %v330
        %v2424 = vpop.permute.xlu0 %2423
        %2425 = vset.pattern.permute.xlu0 72
        %2426 = vperm.xlu0 %2425, %v331
        %v2427 = vpop.permute.xlu0 %2426
        %2428 = vset.pattern.permute.xlu0 72
        %2429 = vperm.xlu0 %2428, %v332
        %v2430 = vpop.permute.xlu0 %2429
        %2431 = vset.pattern.permute.xlu0 72
        %2432 = vperm.xlu0 %2431, %v333
        %v2433 = vpop.permute.xlu0 %2432
        %vm2434 = vcmp.eq.s32.totalorder %v2424, 1
        %vm2435 = vcmp.eq.s32.totalorder %v2427, 1
        %vm2436 = vcmp.eq.s32.totalorder %v2430, 1
        %vm2437 = vcmp.eq.s32.totalorder %v2433, 1
        %v2438 = vlaneseq
        %v2439 = vshrl.u32 %v2438, 7
        %v2440 = vsub.s32 0, %v2439
        %v2441 = vrot.slane %v2421, %v2440
        %v2442 = vsel %vm2434, %v2441, -inf
        %v2443 = vsel %vm2435, %v2441, -inf
        %v2444 = vsel %vm2436, %v2441, -inf
        %v2445 = vsel %vm2437, %v2441, -inf
        %v2446 = vmax.f32 %v2417, %v2442
        %v2447 = vmax.f32 %v2418, %v2443
        %v2448 = vmax.f32 %v2419, %v2444
        %v2449 = vmax.f32 %v2420, %v2445
        %v2450 = vld [vmem:[#allocation3 + $0x49] sm:$0x1]
        %2451 = vset.pattern.permute.xlu0 73
        %2452 = vperm.xlu0 %2451, %v330
        %v2453 = vpop.permute.xlu0 %2452
        %2454 = vset.pattern.permute.xlu0 73
        %2455 = vperm.xlu0 %2454, %v331
        %v2456 = vpop.permute.xlu0 %2455
        %2457 = vset.pattern.permute.xlu0 73
        %2458 = vperm.xlu0 %2457, %v332
        %v2459 = vpop.permute.xlu0 %2458
        %2460 = vset.pattern.permute.xlu0 73
        %2461 = vperm.xlu0 %2460, %v333
        %v2462 = vpop.permute.xlu0 %2461
        %vm2463 = vcmp.eq.s32.totalorder %v2453, 1
        %vm2464 = vcmp.eq.s32.totalorder %v2456, 1
        %vm2465 = vcmp.eq.s32.totalorder %v2459, 1
        %vm2466 = vcmp.eq.s32.totalorder %v2462, 1
        %v2467 = vlaneseq
        %v2468 = vshrl.u32 %v2467, 7
        %v2469 = vsub.s32 0, %v2468
        %v2470 = vrot.slane %v2450, %v2469
        %v2471 = vsel %vm2463, %v2470, -inf
        %v2472 = vsel %vm2464, %v2470, -inf
        %v2473 = vsel %vm2465, %v2470, -inf
        %v2474 = vsel %vm2466, %v2470, -inf
        %v2475 = vmax.f32 %v2446, %v2471
        %v2476 = vmax.f32 %v2447, %v2472
        %v2477 = vmax.f32 %v2448, %v2473
        %v2478 = vmax.f32 %v2449, %v2474
        %v2479 = vld [vmem:[#allocation3 + $0x4a] sm:$0x1]
        %2480 = vset.pattern.permute.xlu0 74
        %2481 = vperm.xlu0 %2480, %v330
        %v2482 = vpop.permute.xlu0 %2481
        %2483 = vset.pattern.permute.xlu0 74
        %2484 = vperm.xlu0 %2483, %v331
        %v2485 = vpop.permute.xlu0 %2484
        %2486 = vset.pattern.permute.xlu0 74
        %2487 = vperm.xlu0 %2486, %v332
        %v2488 = vpop.permute.xlu0 %2487
        %2489 = vset.pattern.permute.xlu0 74
        %2490 = vperm.xlu0 %2489, %v333
        %v2491 = vpop.permute.xlu0 %2490
        %vm2492 = vcmp.eq.s32.totalorder %v2482, 1
        %vm2493 = vcmp.eq.s32.totalorder %v2485, 1
        %vm2494 = vcmp.eq.s32.totalorder %v2488, 1
        %vm2495 = vcmp.eq.s32.totalorder %v2491, 1
        %v2496 = vlaneseq
        %v2497 = vshrl.u32 %v2496, 7
        %v2498 = vsub.s32 0, %v2497
        %v2499 = vrot.slane %v2479, %v2498
        %v2500 = vsel %vm2492, %v2499, -inf
        %v2501 = vsel %vm2493, %v2499, -inf
        %v2502 = vsel %vm2494, %v2499, -inf
        %v2503 = vsel %vm2495, %v2499, -inf
        %v2504 = vmax.f32 %v2475, %v2500
        %v2505 = vmax.f32 %v2476, %v2501
        %v2506 = vmax.f32 %v2477, %v2502
        %v2507 = vmax.f32 %v2478, %v2503
        %v2508 = vld [vmem:[#allocation3 + $0x4b] sm:$0x1]
        %2509 = vset.pattern.permute.xlu0 75
        %2510 = vperm.xlu0 %2509, %v330
        %v2511 = vpop.permute.xlu0 %2510
        %2512 = vset.pattern.permute.xlu0 75
        %2513 = vperm.xlu0 %2512, %v331
        %v2514 = vpop.permute.xlu0 %2513
        %2515 = vset.pattern.permute.xlu0 75
        %2516 = vperm.xlu0 %2515, %v332
        %v2517 = vpop.permute.xlu0 %2516
        %2518 = vset.pattern.permute.xlu0 75
        %2519 = vperm.xlu0 %2518, %v333
        %v2520 = vpop.permute.xlu0 %2519
        %vm2521 = vcmp.eq.s32.totalorder %v2511, 1
        %vm2522 = vcmp.eq.s32.totalorder %v2514, 1
        %vm2523 = vcmp.eq.s32.totalorder %v2517, 1
        %vm2524 = vcmp.eq.s32.totalorder %v2520, 1
        %v2525 = vlaneseq
        %v2526 = vshrl.u32 %v2525, 7
        %v2527 = vsub.s32 0, %v2526
        %v2528 = vrot.slane %v2508, %v2527
        %v2529 = vsel %vm2521, %v2528, -inf
        %v2530 = vsel %vm2522, %v2528, -inf
        %v2531 = vsel %vm2523, %v2528, -inf
        %v2532 = vsel %vm2524, %v2528, -inf
        %v2533 = vmax.f32 %v2504, %v2529
        %v2534 = vmax.f32 %v2505, %v2530
        %v2535 = vmax.f32 %v2506, %v2531
        %v2536 = vmax.f32 %v2507, %v2532
        %v2537 = vld [vmem:[#allocation3 + $0x4c] sm:$0x1]
        %2538 = vset.pattern.permute.xlu0 76
        %2539 = vperm.xlu0 %2538, %v330
        %v2540 = vpop.permute.xlu0 %2539
        %2541 = vset.pattern.permute.xlu0 76
        %2542 = vperm.xlu0 %2541, %v331
        %v2543 = vpop.permute.xlu0 %2542
        %2544 = vset.pattern.permute.xlu0 76
        %2545 = vperm.xlu0 %2544, %v332
        %v2546 = vpop.permute.xlu0 %2545
        %2547 = vset.pattern.permute.xlu0 76
        %2548 = vperm.xlu0 %2547, %v333
        %v2549 = vpop.permute.xlu0 %2548
        %vm2550 = vcmp.eq.s32.totalorder %v2540, 1
        %vm2551 = vcmp.eq.s32.totalorder %v2543, 1
        %vm2552 = vcmp.eq.s32.totalorder %v2546, 1
        %vm2553 = vcmp.eq.s32.totalorder %v2549, 1
        %v2554 = vlaneseq
        %v2555 = vshrl.u32 %v2554, 7
        %v2556 = vsub.s32 0, %v2555
        %v2557 = vrot.slane %v2537, %v2556
        %v2558 = vsel %vm2550, %v2557, -inf
        %v2559 = vsel %vm2551, %v2557, -inf
        %v2560 = vsel %vm2552, %v2557, -inf
        %v2561 = vsel %vm2553, %v2557, -inf
        %v2562 = vmax.f32 %v2533, %v2558
        %v2563 = vmax.f32 %v2534, %v2559
        %v2564 = vmax.f32 %v2535, %v2560
        %v2565 = vmax.f32 %v2536, %v2561
        %v2566 = vld [vmem:[#allocation3 + $0x4d] sm:$0x1]
        %2567 = vset.pattern.permute.xlu0 77
        %2568 = vperm.xlu0 %2567, %v330
        %v2569 = vpop.permute.xlu0 %2568
        %2570 = vset.pattern.permute.xlu0 77
        %2571 = vperm.xlu0 %2570, %v331
        %v2572 = vpop.permute.xlu0 %2571
        %2573 = vset.pattern.permute.xlu0 77
        %2574 = vperm.xlu0 %2573, %v332
        %v2575 = vpop.permute.xlu0 %2574
        %2576 = vset.pattern.permute.xlu0 77
        %2577 = vperm.xlu0 %2576, %v333
        %v2578 = vpop.permute.xlu0 %2577
        %vm2579 = vcmp.eq.s32.totalorder %v2569, 1
        %vm2580 = vcmp.eq.s32.totalorder %v2572, 1
        %vm2581 = vcmp.eq.s32.totalorder %v2575, 1
        %vm2582 = vcmp.eq.s32.totalorder %v2578, 1
        %v2583 = vlaneseq
        %v2584 = vshrl.u32 %v2583, 7
        %v2585 = vsub.s32 0, %v2584
        %v2586 = vrot.slane %v2566, %v2585
        %v2587 = vsel %vm2579, %v2586, -inf
        %v2588 = vsel %vm2580, %v2586, -inf
        %v2589 = vsel %vm2581, %v2586, -inf
        %v2590 = vsel %vm2582, %v2586, -inf
        %v2591 = vmax.f32 %v2562, %v2587
        %v2592 = vmax.f32 %v2563, %v2588
        %v2593 = vmax.f32 %v2564, %v2589
        %v2594 = vmax.f32 %v2565, %v2590
        %v2595 = vld [vmem:[#allocation3 + $0x4e] sm:$0x1]
        %2596 = vset.pattern.permute.xlu0 78
        %2597 = vperm.xlu0 %2596, %v330
        %v2598 = vpop.permute.xlu0 %2597
        %2599 = vset.pattern.permute.xlu0 78
        %2600 = vperm.xlu0 %2599, %v331
        %v2601 = vpop.permute.xlu0 %2600
        %2602 = vset.pattern.permute.xlu0 78
        %2603 = vperm.xlu0 %2602, %v332
        %v2604 = vpop.permute.xlu0 %2603
        %2605 = vset.pattern.permute.xlu0 78
        %2606 = vperm.xlu0 %2605, %v333
        %v2607 = vpop.permute.xlu0 %2606
        %vm2608 = vcmp.eq.s32.totalorder %v2598, 1
        %vm2609 = vcmp.eq.s32.totalorder %v2601, 1
        %vm2610 = vcmp.eq.s32.totalorder %v2604, 1
        %vm2611 = vcmp.eq.s32.totalorder %v2607, 1
        %v2612 = vlaneseq
        %v2613 = vshrl.u32 %v2612, 7
        %v2614 = vsub.s32 0, %v2613
        %v2615 = vrot.slane %v2595, %v2614
        %v2616 = vsel %vm2608, %v2615, -inf
        %v2617 = vsel %vm2609, %v2615, -inf
        %v2618 = vsel %vm2610, %v2615, -inf
        %v2619 = vsel %vm2611, %v2615, -inf
        %v2620 = vmax.f32 %v2591, %v2616
        %v2621 = vmax.f32 %v2592, %v2617
        %v2622 = vmax.f32 %v2593, %v2618
        %v2623 = vmax.f32 %v2594, %v2619
        %v2624 = vld [vmem:[#allocation3 + $0x4f] sm:$0x1]
        %2625 = vset.pattern.permute.xlu0 79
        %2626 = vperm.xlu0 %2625, %v330
        %v2627 = vpop.permute.xlu0 %2626
        %2628 = vset.pattern.permute.xlu0 79
        %2629 = vperm.xlu0 %2628, %v331
        %v2630 = vpop.permute.xlu0 %2629
        %2631 = vset.pattern.permute.xlu0 79
        %2632 = vperm.xlu0 %2631, %v332
        %v2633 = vpop.permute.xlu0 %2632
        %2634 = vset.pattern.permute.xlu0 79
        %2635 = vperm.xlu0 %2634, %v333
        %v2636 = vpop.permute.xlu0 %2635
        %vm2637 = vcmp.eq.s32.totalorder %v2627, 1
        %vm2638 = vcmp.eq.s32.totalorder %v2630, 1
        %vm2639 = vcmp.eq.s32.totalorder %v2633, 1
        %vm2640 = vcmp.eq.s32.totalorder %v2636, 1
        %v2641 = vlaneseq
        %v2642 = vshrl.u32 %v2641, 7
        %v2643 = vsub.s32 0, %v2642
        %v2644 = vrot.slane %v2624, %v2643
        %v2645 = vsel %vm2637, %v2644, -inf
        %v2646 = vsel %vm2638, %v2644, -inf
        %v2647 = vsel %vm2639, %v2644, -inf
        %v2648 = vsel %vm2640, %v2644, -inf
        %v2649 = vmax.f32 %v2620, %v2645
        %v2650 = vmax.f32 %v2621, %v2646
        %v2651 = vmax.f32 %v2622, %v2647
        %v2652 = vmax.f32 %v2623, %v2648
        %v2653 = vld [vmem:[#allocation3 + $0x50] sm:$0x1]
        %2654 = vset.pattern.permute.xlu0 80
        %2655 = vperm.xlu0 %2654, %v330
        %v2656 = vpop.permute.xlu0 %2655
        %2657 = vset.pattern.permute.xlu0 80
        %2658 = vperm.xlu0 %2657, %v331
        %v2659 = vpop.permute.xlu0 %2658
        %2660 = vset.pattern.permute.xlu0 80
        %2661 = vperm.xlu0 %2660, %v332
        %v2662 = vpop.permute.xlu0 %2661
        %2663 = vset.pattern.permute.xlu0 80
        %2664 = vperm.xlu0 %2663, %v333
        %v2665 = vpop.permute.xlu0 %2664
        %vm2666 = vcmp.eq.s32.totalorder %v2656, 1
        %vm2667 = vcmp.eq.s32.totalorder %v2659, 1
        %vm2668 = vcmp.eq.s32.totalorder %v2662, 1
        %vm2669 = vcmp.eq.s32.totalorder %v2665, 1
        %v2670 = vlaneseq
        %v2671 = vshrl.u32 %v2670, 7
        %v2672 = vsub.s32 0, %v2671
        %v2673 = vrot.slane %v2653, %v2672
        %v2674 = vsel %vm2666, %v2673, -inf
        %v2675 = vsel %vm2667, %v2673, -inf
        %v2676 = vsel %vm2668, %v2673, -inf
        %v2677 = vsel %vm2669, %v2673, -inf
        %v2678 = vmax.f32 %v2649, %v2674
        %v2679 = vmax.f32 %v2650, %v2675
        %v2680 = vmax.f32 %v2651, %v2676
        %v2681 = vmax.f32 %v2652, %v2677
        %v2682 = vld [vmem:[#allocation3 + $0x51] sm:$0x1]
        %2683 = vset.pattern.permute.xlu0 81
        %2684 = vperm.xlu0 %2683, %v330
        %v2685 = vpop.permute.xlu0 %2684
        %2686 = vset.pattern.permute.xlu0 81
        %2687 = vperm.xlu0 %2686, %v331
        %v2688 = vpop.permute.xlu0 %2687
        %2689 = vset.pattern.permute.xlu0 81
        %2690 = vperm.xlu0 %2689, %v332
        %v2691 = vpop.permute.xlu0 %2690
        %2692 = vset.pattern.permute.xlu0 81
        %2693 = vperm.xlu0 %2692, %v333
        %v2694 = vpop.permute.xlu0 %2693
        %vm2695 = vcmp.eq.s32.totalorder %v2685, 1
        %vm2696 = vcmp.eq.s32.totalorder %v2688, 1
        %vm2697 = vcmp.eq.s32.totalorder %v2691, 1
        %vm2698 = vcmp.eq.s32.totalorder %v2694, 1
        %v2699 = vlaneseq
        %v2700 = vshrl.u32 %v2699, 7
        %v2701 = vsub.s32 0, %v2700
        %v2702 = vrot.slane %v2682, %v2701
        %v2703 = vsel %vm2695, %v2702, -inf
        %v2704 = vsel %vm2696, %v2702, -inf
        %v2705 = vsel %vm2697, %v2702, -inf
        %v2706 = vsel %vm2698, %v2702, -inf
        %v2707 = vmax.f32 %v2678, %v2703
        %v2708 = vmax.f32 %v2679, %v2704
        %v2709 = vmax.f32 %v2680, %v2705
        %v2710 = vmax.f32 %v2681, %v2706
        %v2711 = vld [vmem:[#allocation3 + $0x52] sm:$0x1]
        %2712 = vset.pattern.permute.xlu0 82
        %2713 = vperm.xlu0 %2712, %v330
        %v2714 = vpop.permute.xlu0 %2713
        %2715 = vset.pattern.permute.xlu0 82
        %2716 = vperm.xlu0 %2715, %v331
        %v2717 = vpop.permute.xlu0 %2716
        %2718 = vset.pattern.permute.xlu0 82
        %2719 = vperm.xlu0 %2718, %v332
        %v2720 = vpop.permute.xlu0 %2719
        %2721 = vset.pattern.permute.xlu0 82
        %2722 = vperm.xlu0 %2721, %v333
        %v2723 = vpop.permute.xlu0 %2722
        %vm2724 = vcmp.eq.s32.totalorder %v2714, 1
        %vm2725 = vcmp.eq.s32.totalorder %v2717, 1
        %vm2726 = vcmp.eq.s32.totalorder %v2720, 1
        %vm2727 = vcmp.eq.s32.totalorder %v2723, 1
        %v2728 = vlaneseq
        %v2729 = vshrl.u32 %v2728, 7
        %v2730 = vsub.s32 0, %v2729
        %v2731 = vrot.slane %v2711, %v2730
        %v2732 = vsel %vm2724, %v2731, -inf
        %v2733 = vsel %vm2725, %v2731, -inf
        %v2734 = vsel %vm2726, %v2731, -inf
        %v2735 = vsel %vm2727, %v2731, -inf
        %v2736 = vmax.f32 %v2707, %v2732
        %v2737 = vmax.f32 %v2708, %v2733
        %v2738 = vmax.f32 %v2709, %v2734
        %v2739 = vmax.f32 %v2710, %v2735
        %v2740 = vld [vmem:[#allocation3 + $0x53] sm:$0x1]
        %2741 = vset.pattern.permute.xlu0 83
        %2742 = vperm.xlu0 %2741, %v330
        %v2743 = vpop.permute.xlu0 %2742
        %2744 = vset.pattern.permute.xlu0 83
        %2745 = vperm.xlu0 %2744, %v331
        %v2746 = vpop.permute.xlu0 %2745
        %2747 = vset.pattern.permute.xlu0 83
        %2748 = vperm.xlu0 %2747, %v332
        %v2749 = vpop.permute.xlu0 %2748
        %2750 = vset.pattern.permute.xlu0 83
        %2751 = vperm.xlu0 %2750, %v333
        %v2752 = vpop.permute.xlu0 %2751
        %vm2753 = vcmp.eq.s32.totalorder %v2743, 1
        %vm2754 = vcmp.eq.s32.totalorder %v2746, 1
        %vm2755 = vcmp.eq.s32.totalorder %v2749, 1
        %vm2756 = vcmp.eq.s32.totalorder %v2752, 1
        %v2757 = vlaneseq
        %v2758 = vshrl.u32 %v2757, 7
        %v2759 = vsub.s32 0, %v2758
        %v2760 = vrot.slane %v2740, %v2759
        %v2761 = vsel %vm2753, %v2760, -inf
        %v2762 = vsel %vm2754, %v2760, -inf
        %v2763 = vsel %vm2755, %v2760, -inf
        %v2764 = vsel %vm2756, %v2760, -inf
        %v2765 = vmax.f32 %v2736, %v2761
        %v2766 = vmax.f32 %v2737, %v2762
        %v2767 = vmax.f32 %v2738, %v2763
        %v2768 = vmax.f32 %v2739, %v2764
        %v2769 = vld [vmem:[#allocation3 + $0x54] sm:$0x1]
        %2770 = vset.pattern.permute.xlu0 84
        %2771 = vperm.xlu0 %2770, %v330
        %v2772 = vpop.permute.xlu0 %2771
        %2773 = vset.pattern.permute.xlu0 84
        %2774 = vperm.xlu0 %2773, %v331
        %v2775 = vpop.permute.xlu0 %2774
        %2776 = vset.pattern.permute.xlu0 84
        %2777 = vperm.xlu0 %2776, %v332
        %v2778 = vpop.permute.xlu0 %2777
        %2779 = vset.pattern.permute.xlu0 84
        %2780 = vperm.xlu0 %2779, %v333
        %v2781 = vpop.permute.xlu0 %2780
        %vm2782 = vcmp.eq.s32.totalorder %v2772, 1
        %vm2783 = vcmp.eq.s32.totalorder %v2775, 1
        %vm2784 = vcmp.eq.s32.totalorder %v2778, 1
        %vm2785 = vcmp.eq.s32.totalorder %v2781, 1
        %v2786 = vlaneseq
        %v2787 = vshrl.u32 %v2786, 7
        %v2788 = vsub.s32 0, %v2787
        %v2789 = vrot.slane %v2769, %v2788
        %v2790 = vsel %vm2782, %v2789, -inf
        %v2791 = vsel %vm2783, %v2789, -inf
        %v2792 = vsel %vm2784, %v2789, -inf
        %v2793 = vsel %vm2785, %v2789, -inf
        %v2794 = vmax.f32 %v2765, %v2790
        %v2795 = vmax.f32 %v2766, %v2791
        %v2796 = vmax.f32 %v2767, %v2792
        %v2797 = vmax.f32 %v2768, %v2793
        %v2798 = vld [vmem:[#allocation3 + $0x55] sm:$0x1]
        %2799 = vset.pattern.permute.xlu0 85
        %2800 = vperm.xlu0 %2799, %v330
        %v2801 = vpop.permute.xlu0 %2800
        %2802 = vset.pattern.permute.xlu0 85
        %2803 = vperm.xlu0 %2802, %v331
        %v2804 = vpop.permute.xlu0 %2803
        %2805 = vset.pattern.permute.xlu0 85
        %2806 = vperm.xlu0 %2805, %v332
        %v2807 = vpop.permute.xlu0 %2806
        %2808 = vset.pattern.permute.xlu0 85
        %2809 = vperm.xlu0 %2808, %v333
        %v2810 = vpop.permute.xlu0 %2809
        %vm2811 = vcmp.eq.s32.totalorder %v2801, 1
        %vm2812 = vcmp.eq.s32.totalorder %v2804, 1
        %vm2813 = vcmp.eq.s32.totalorder %v2807, 1
        %vm2814 = vcmp.eq.s32.totalorder %v2810, 1
        %v2815 = vlaneseq
        %v2816 = vshrl.u32 %v2815, 7
        %v2817 = vsub.s32 0, %v2816
        %v2818 = vrot.slane %v2798, %v2817
        %v2819 = vsel %vm2811, %v2818, -inf
        %v2820 = vsel %vm2812, %v2818, -inf
        %v2821 = vsel %vm2813, %v2818, -inf
        %v2822 = vsel %vm2814, %v2818, -inf
        %v2823 = vmax.f32 %v2794, %v2819
        %v2824 = vmax.f32 %v2795, %v2820
        %v2825 = vmax.f32 %v2796, %v2821
        %v2826 = vmax.f32 %v2797, %v2822
        %v2827 = vld [vmem:[#allocation3 + $0x56] sm:$0x1]
        %2828 = vset.pattern.permute.xlu0 86
        %2829 = vperm.xlu0 %2828, %v330
        %v2830 = vpop.permute.xlu0 %2829
        %2831 = vset.pattern.permute.xlu0 86
        %2832 = vperm.xlu0 %2831, %v331
        %v2833 = vpop.permute.xlu0 %2832
        %2834 = vset.pattern.permute.xlu0 86
        %2835 = vperm.xlu0 %2834, %v332
        %v2836 = vpop.permute.xlu0 %2835
        %2837 = vset.pattern.permute.xlu0 86
        %2838 = vperm.xlu0 %2837, %v333
        %v2839 = vpop.permute.xlu0 %2838
        %vm2840 = vcmp.eq.s32.totalorder %v2830, 1
        %vm2841 = vcmp.eq.s32.totalorder %v2833, 1
        %vm2842 = vcmp.eq.s32.totalorder %v2836, 1
        %vm2843 = vcmp.eq.s32.totalorder %v2839, 1
        %v2844 = vlaneseq
        %v2845 = vshrl.u32 %v2844, 7
        %v2846 = vsub.s32 0, %v2845
        %v2847 = vrot.slane %v2827, %v2846
        %v2848 = vsel %vm2840, %v2847, -inf
        %v2849 = vsel %vm2841, %v2847, -inf
        %v2850 = vsel %vm2842, %v2847, -inf
        %v2851 = vsel %vm2843, %v2847, -inf
        %v2852 = vmax.f32 %v2823, %v2848
        %v2853 = vmax.f32 %v2824, %v2849
        %v2854 = vmax.f32 %v2825, %v2850
        %v2855 = vmax.f32 %v2826, %v2851
        %v2856 = vld [vmem:[#allocation3 + $0x57] sm:$0x1]
        %2857 = vset.pattern.permute.xlu0 87
        %2858 = vperm.xlu0 %2857, %v330
        %v2859 = vpop.permute.xlu0 %2858
        %2860 = vset.pattern.permute.xlu0 87
        %2861 = vperm.xlu0 %2860, %v331
        %v2862 = vpop.permute.xlu0 %2861
        %2863 = vset.pattern.permute.xlu0 87
        %2864 = vperm.xlu0 %2863, %v332
        %v2865 = vpop.permute.xlu0 %2864
        %2866 = vset.pattern.permute.xlu0 87
        %2867 = vperm.xlu0 %2866, %v333
        %v2868 = vpop.permute.xlu0 %2867
        %vm2869 = vcmp.eq.s32.totalorder %v2859, 1
        %vm2870 = vcmp.eq.s32.totalorder %v2862, 1
        %vm2871 = vcmp.eq.s32.totalorder %v2865, 1
        %vm2872 = vcmp.eq.s32.totalorder %v2868, 1
        %v2873 = vlaneseq
        %v2874 = vshrl.u32 %v2873, 7
        %v2875 = vsub.s32 0, %v2874
        %v2876 = vrot.slane %v2856, %v2875
        %v2877 = vsel %vm2869, %v2876, -inf
        %v2878 = vsel %vm2870, %v2876, -inf
        %v2879 = vsel %vm2871, %v2876, -inf
        %v2880 = vsel %vm2872, %v2876, -inf
        %v2881 = vmax.f32 %v2852, %v2877
        %v2882 = vmax.f32 %v2853, %v2878
        %v2883 = vmax.f32 %v2854, %v2879
        %v2884 = vmax.f32 %v2855, %v2880
        %v2885 = vld [vmem:[#allocation3 + $0x58] sm:$0x1]
        %2886 = vset.pattern.permute.xlu0 88
        %2887 = vperm.xlu0 %2886, %v330
        %v2888 = vpop.permute.xlu0 %2887
        %2889 = vset.pattern.permute.xlu0 88
        %2890 = vperm.xlu0 %2889, %v331
        %v2891 = vpop.permute.xlu0 %2890
        %2892 = vset.pattern.permute.xlu0 88
        %2893 = vperm.xlu0 %2892, %v332
        %v2894 = vpop.permute.xlu0 %2893
        %2895 = vset.pattern.permute.xlu0 88
        %2896 = vperm.xlu0 %2895, %v333
        %v2897 = vpop.permute.xlu0 %2896
        %vm2898 = vcmp.eq.s32.totalorder %v2888, 1
        %vm2899 = vcmp.eq.s32.totalorder %v2891, 1
        %vm2900 = vcmp.eq.s32.totalorder %v2894, 1
        %vm2901 = vcmp.eq.s32.totalorder %v2897, 1
        %v2902 = vlaneseq
        %v2903 = vshrl.u32 %v2902, 7
        %v2904 = vsub.s32 0, %v2903
        %v2905 = vrot.slane %v2885, %v2904
        %v2906 = vsel %vm2898, %v2905, -inf
        %v2907 = vsel %vm2899, %v2905, -inf
        %v2908 = vsel %vm2900, %v2905, -inf
        %v2909 = vsel %vm2901, %v2905, -inf
        %v2910 = vmax.f32 %v2881, %v2906
        %v2911 = vmax.f32 %v2882, %v2907
        %v2912 = vmax.f32 %v2883, %v2908
        %v2913 = vmax.f32 %v2884, %v2909
        %v2914 = vld [vmem:[#allocation3 + $0x59] sm:$0x1]
        %2915 = vset.pattern.permute.xlu0 89
        %2916 = vperm.xlu0 %2915, %v330
        %v2917 = vpop.permute.xlu0 %2916
        %2918 = vset.pattern.permute.xlu0 89
        %2919 = vperm.xlu0 %2918, %v331
        %v2920 = vpop.permute.xlu0 %2919
        %2921 = vset.pattern.permute.xlu0 89
        %2922 = vperm.xlu0 %2921, %v332
        %v2923 = vpop.permute.xlu0 %2922
        %2924 = vset.pattern.permute.xlu0 89
        %2925 = vperm.xlu0 %2924, %v333
        %v2926 = vpop.permute.xlu0 %2925
        %vm2927 = vcmp.eq.s32.totalorder %v2917, 1
        %vm2928 = vcmp.eq.s32.totalorder %v2920, 1
        %vm2929 = vcmp.eq.s32.totalorder %v2923, 1
        %vm2930 = vcmp.eq.s32.totalorder %v2926, 1
        %v2931 = vlaneseq
        %v2932 = vshrl.u32 %v2931, 7
        %v2933 = vsub.s32 0, %v2932
        %v2934 = vrot.slane %v2914, %v2933
        %v2935 = vsel %vm2927, %v2934, -inf
        %v2936 = vsel %vm2928, %v2934, -inf
        %v2937 = vsel %vm2929, %v2934, -inf
        %v2938 = vsel %vm2930, %v2934, -inf
        %v2939 = vmax.f32 %v2910, %v2935
        %v2940 = vmax.f32 %v2911, %v2936
        %v2941 = vmax.f32 %v2912, %v2937
        %v2942 = vmax.f32 %v2913, %v2938
        %v2943 = vld [vmem:[#allocation3 + $0x5a] sm:$0x1]
        %2944 = vset.pattern.permute.xlu0 90
        %2945 = vperm.xlu0 %2944, %v330
        %v2946 = vpop.permute.xlu0 %2945
        %2947 = vset.pattern.permute.xlu0 90
        %2948 = vperm.xlu0 %2947, %v331
        %v2949 = vpop.permute.xlu0 %2948
        %2950 = vset.pattern.permute.xlu0 90
        %2951 = vperm.xlu0 %2950, %v332
        %v2952 = vpop.permute.xlu0 %2951
        %2953 = vset.pattern.permute.xlu0 90
        %2954 = vperm.xlu0 %2953, %v333
        %v2955 = vpop.permute.xlu0 %2954
        %vm2956 = vcmp.eq.s32.totalorder %v2946, 1
        %vm2957 = vcmp.eq.s32.totalorder %v2949, 1
        %vm2958 = vcmp.eq.s32.totalorder %v2952, 1
        %vm2959 = vcmp.eq.s32.totalorder %v2955, 1
        %v2960 = vlaneseq
        %v2961 = vshrl.u32 %v2960, 7
        %v2962 = vsub.s32 0, %v2961
        %v2963 = vrot.slane %v2943, %v2962
        %v2964 = vsel %vm2956, %v2963, -inf
        %v2965 = vsel %vm2957, %v2963, -inf
        %v2966 = vsel %vm2958, %v2963, -inf
        %v2967 = vsel %vm2959, %v2963, -inf
        %v2968 = vmax.f32 %v2939, %v2964
        %v2969 = vmax.f32 %v2940, %v2965
        %v2970 = vmax.f32 %v2941, %v2966
        %v2971 = vmax.f32 %v2942, %v2967
        %v2972 = vld [vmem:[#allocation3 + $0x5b] sm:$0x1]
        %2973 = vset.pattern.permute.xlu0 91
        %2974 = vperm.xlu0 %2973, %v330
        %v2975 = vpop.permute.xlu0 %2974
        %2976 = vset.pattern.permute.xlu0 91
        %2977 = vperm.xlu0 %2976, %v331
        %v2978 = vpop.permute.xlu0 %2977
        %2979 = vset.pattern.permute.xlu0 91
        %2980 = vperm.xlu0 %2979, %v332
        %v2981 = vpop.permute.xlu0 %2980
        %2982 = vset.pattern.permute.xlu0 91
        %2983 = vperm.xlu0 %2982, %v333
        %v2984 = vpop.permute.xlu0 %2983
        %vm2985 = vcmp.eq.s32.totalorder %v2975, 1
        %vm2986 = vcmp.eq.s32.totalorder %v2978, 1
        %vm2987 = vcmp.eq.s32.totalorder %v2981, 1
        %vm2988 = vcmp.eq.s32.totalorder %v2984, 1
        %v2989 = vlaneseq
        %v2990 = vshrl.u32 %v2989, 7
        %v2991 = vsub.s32 0, %v2990
        %v2992 = vrot.slane %v2972, %v2991
        %v2993 = vsel %vm2985, %v2992, -inf
        %v2994 = vsel %vm2986, %v2992, -inf
        %v2995 = vsel %vm2987, %v2992, -inf
        %v2996 = vsel %vm2988, %v2992, -inf
        %v2997 = vmax.f32 %v2968, %v2993
        %v2998 = vmax.f32 %v2969, %v2994
        %v2999 = vmax.f32 %v2970, %v2995
        %v3000 = vmax.f32 %v2971, %v2996
        %v3001 = vld [vmem:[#allocation3 + $0x5c] sm:$0x1]
        %3002 = vset.pattern.permute.xlu0 92
        %3003 = vperm.xlu0 %3002, %v330
        %v3004 = vpop.permute.xlu0 %3003
        %3005 = vset.pattern.permute.xlu0 92
        %3006 = vperm.xlu0 %3005, %v331
        %v3007 = vpop.permute.xlu0 %3006
        %3008 = vset.pattern.permute.xlu0 92
        %3009 = vperm.xlu0 %3008, %v332
        %v3010 = vpop.permute.xlu0 %3009
        %3011 = vset.pattern.permute.xlu0 92
        %3012 = vperm.xlu0 %3011, %v333
        %v3013 = vpop.permute.xlu0 %3012
        %vm3014 = vcmp.eq.s32.totalorder %v3004, 1
        %vm3015 = vcmp.eq.s32.totalorder %v3007, 1
        %vm3016 = vcmp.eq.s32.totalorder %v3010, 1
        %vm3017 = vcmp.eq.s32.totalorder %v3013, 1
        %v3018 = vlaneseq
        %v3019 = vshrl.u32 %v3018, 7
        %v3020 = vsub.s32 0, %v3019
        %v3021 = vrot.slane %v3001, %v3020
        %v3022 = vsel %vm3014, %v3021, -inf
        %v3023 = vsel %vm3015, %v3021, -inf
        %v3024 = vsel %vm3016, %v3021, -inf
        %v3025 = vsel %vm3017, %v3021, -inf
        %v3026 = vmax.f32 %v2997, %v3022
        %v3027 = vmax.f32 %v2998, %v3023
        %v3028 = vmax.f32 %v2999, %v3024
        %v3029 = vmax.f32 %v3000, %v3025
        %v3030 = vld [vmem:[#allocation3 + $0x5d] sm:$0x1]
        %3031 = vset.pattern.permute.xlu0 93
        %3032 = vperm.xlu0 %3031, %v330
        %v3033 = vpop.permute.xlu0 %3032
        %3034 = vset.pattern.permute.xlu0 93
        %3035 = vperm.xlu0 %3034, %v331
        %v3036 = vpop.permute.xlu0 %3035
        %3037 = vset.pattern.permute.xlu0 93
        %3038 = vperm.xlu0 %3037, %v332
        %v3039 = vpop.permute.xlu0 %3038
        %3040 = vset.pattern.permute.xlu0 93
        %3041 = vperm.xlu0 %3040, %v333
        %v3042 = vpop.permute.xlu0 %3041
        %vm3043 = vcmp.eq.s32.totalorder %v3033, 1
        %vm3044 = vcmp.eq.s32.totalorder %v3036, 1
        %vm3045 = vcmp.eq.s32.totalorder %v3039, 1
        %vm3046 = vcmp.eq.s32.totalorder %v3042, 1
        %v3047 = vlaneseq
        %v3048 = vshrl.u32 %v3047, 7
        %v3049 = vsub.s32 0, %v3048
        %v3050 = vrot.slane %v3030, %v3049
        %v3051 = vsel %vm3043, %v3050, -inf
        %v3052 = vsel %vm3044, %v3050, -inf
        %v3053 = vsel %vm3045, %v3050, -inf
        %v3054 = vsel %vm3046, %v3050, -inf
        %v3055 = vmax.f32 %v3026, %v3051
        %v3056 = vmax.f32 %v3027, %v3052
        %v3057 = vmax.f32 %v3028, %v3053
        %v3058 = vmax.f32 %v3029, %v3054
        %v3059 = vld [vmem:[#allocation3 + $0x5e] sm:$0x1]
        %3060 = vset.pattern.permute.xlu0 94
        %3061 = vperm.xlu0 %3060, %v330
        %v3062 = vpop.permute.xlu0 %3061
        %3063 = vset.pattern.permute.xlu0 94
        %3064 = vperm.xlu0 %3063, %v331
        %v3065 = vpop.permute.xlu0 %3064
        %3066 = vset.pattern.permute.xlu0 94
        %3067 = vperm.xlu0 %3066, %v332
        %v3068 = vpop.permute.xlu0 %3067
        %3069 = vset.pattern.permute.xlu0 94
        %3070 = vperm.xlu0 %3069, %v333
        %v3071 = vpop.permute.xlu0 %3070
        %vm3072 = vcmp.eq.s32.totalorder %v3062, 1
        %vm3073 = vcmp.eq.s32.totalorder %v3065, 1
        %vm3074 = vcmp.eq.s32.totalorder %v3068, 1
        %vm3075 = vcmp.eq.s32.totalorder %v3071, 1
        %v3076 = vlaneseq
        %v3077 = vshrl.u32 %v3076, 7
        %v3078 = vsub.s32 0, %v3077
        %v3079 = vrot.slane %v3059, %v3078
        %v3080 = vsel %vm3072, %v3079, -inf
        %v3081 = vsel %vm3073, %v3079, -inf
        %v3082 = vsel %vm3074, %v3079, -inf
        %v3083 = vsel %vm3075, %v3079, -inf
        %v3084 = vmax.f32 %v3055, %v3080
        %v3085 = vmax.f32 %v3056, %v3081
        %v3086 = vmax.f32 %v3057, %v3082
        %v3087 = vmax.f32 %v3058, %v3083
        %v3088 = vld [vmem:[#allocation3 + $0x5f] sm:$0x1]
        %3089 = vset.pattern.permute.xlu0 95
        %3090 = vperm.xlu0 %3089, %v330
        %v3091 = vpop.permute.xlu0 %3090
        %3092 = vset.pattern.permute.xlu0 95
        %3093 = vperm.xlu0 %3092, %v331
        %v3094 = vpop.permute.xlu0 %3093
        %3095 = vset.pattern.permute.xlu0 95
        %3096 = vperm.xlu0 %3095, %v332
        %v3097 = vpop.permute.xlu0 %3096
        %3098 = vset.pattern.permute.xlu0 95
        %3099 = vperm.xlu0 %3098, %v333
        %v3100 = vpop.permute.xlu0 %3099
        %vm3101 = vcmp.eq.s32.totalorder %v3091, 1
        %vm3102 = vcmp.eq.s32.totalorder %v3094, 1
        %vm3103 = vcmp.eq.s32.totalorder %v3097, 1
        %vm3104 = vcmp.eq.s32.totalorder %v3100, 1
        %v3105 = vlaneseq
        %v3106 = vshrl.u32 %v3105, 7
        %v3107 = vsub.s32 0, %v3106
        %v3108 = vrot.slane %v3088, %v3107
        %v3109 = vsel %vm3101, %v3108, -inf
        %v3110 = vsel %vm3102, %v3108, -inf
        %v3111 = vsel %vm3103, %v3108, -inf
        %v3112 = vsel %vm3104, %v3108, -inf
        %v3113 = vmax.f32 %v3084, %v3109
        %v3114 = vmax.f32 %v3085, %v3110
        %v3115 = vmax.f32 %v3086, %v3111
        %v3116 = vmax.f32 %v3087, %v3112
        %v3117 = vld [vmem:[#allocation3 + $0x60] sm:$0x1]
        %3118 = vset.pattern.permute.xlu0 96
        %3119 = vperm.xlu0 %3118, %v330
        %v3120 = vpop.permute.xlu0 %3119
        %3121 = vset.pattern.permute.xlu0 96
        %3122 = vperm.xlu0 %3121, %v331
        %v3123 = vpop.permute.xlu0 %3122
        %3124 = vset.pattern.permute.xlu0 96
        %3125 = vperm.xlu0 %3124, %v332
        %v3126 = vpop.permute.xlu0 %3125
        %3127 = vset.pattern.permute.xlu0 96
        %3128 = vperm.xlu0 %3127, %v333
        %v3129 = vpop.permute.xlu0 %3128
        %vm3130 = vcmp.eq.s32.totalorder %v3120, 1
        %vm3131 = vcmp.eq.s32.totalorder %v3123, 1
        %vm3132 = vcmp.eq.s32.totalorder %v3126, 1
        %vm3133 = vcmp.eq.s32.totalorder %v3129, 1
        %v3134 = vlaneseq
        %v3135 = vshrl.u32 %v3134, 7
        %v3136 = vsub.s32 0, %v3135
        %v3137 = vrot.slane %v3117, %v3136
        %v3138 = vsel %vm3130, %v3137, -inf
        %v3139 = vsel %vm3131, %v3137, -inf
        %v3140 = vsel %vm3132, %v3137, -inf
        %v3141 = vsel %vm3133, %v3137, -inf
        %v3142 = vmax.f32 %v3113, %v3138
        %v3143 = vmax.f32 %v3114, %v3139
        %v3144 = vmax.f32 %v3115, %v3140
        %v3145 = vmax.f32 %v3116, %v3141
        %v3146 = vld [vmem:[#allocation3 + $0x61] sm:$0x1]
        %3147 = vset.pattern.permute.xlu0 97
        %3148 = vperm.xlu0 %3147, %v330
        %v3149 = vpop.permute.xlu0 %3148
        %3150 = vset.pattern.permute.xlu0 97
        %3151 = vperm.xlu0 %3150, %v331
        %v3152 = vpop.permute.xlu0 %3151
        %3153 = vset.pattern.permute.xlu0 97
        %3154 = vperm.xlu0 %3153, %v332
        %v3155 = vpop.permute.xlu0 %3154
        %3156 = vset.pattern.permute.xlu0 97
        %3157 = vperm.xlu0 %3156, %v333
        %v3158 = vpop.permute.xlu0 %3157
        %vm3159 = vcmp.eq.s32.totalorder %v3149, 1
        %vm3160 = vcmp.eq.s32.totalorder %v3152, 1
        %vm3161 = vcmp.eq.s32.totalorder %v3155, 1
        %vm3162 = vcmp.eq.s32.totalorder %v3158, 1
        %v3163 = vlaneseq
        %v3164 = vshrl.u32 %v3163, 7
        %v3165 = vsub.s32 0, %v3164
        %v3166 = vrot.slane %v3146, %v3165
        %v3167 = vsel %vm3159, %v3166, -inf
        %v3168 = vsel %vm3160, %v3166, -inf
        %v3169 = vsel %vm3161, %v3166, -inf
        %v3170 = vsel %vm3162, %v3166, -inf
        %v3171 = vmax.f32 %v3142, %v3167
        %v3172 = vmax.f32 %v3143, %v3168
        %v3173 = vmax.f32 %v3144, %v3169
        %v3174 = vmax.f32 %v3145, %v3170
        %v3175 = vld [vmem:[#allocation3 + $0x62] sm:$0x1]
        %3176 = vset.pattern.permute.xlu0 98
        %3177 = vperm.xlu0 %3176, %v330
        %v3178 = vpop.permute.xlu0 %3177
        %3179 = vset.pattern.permute.xlu0 98
        %3180 = vperm.xlu0 %3179, %v331
        %v3181 = vpop.permute.xlu0 %3180
        %3182 = vset.pattern.permute.xlu0 98
        %3183 = vperm.xlu0 %3182, %v332
        %v3184 = vpop.permute.xlu0 %3183
        %3185 = vset.pattern.permute.xlu0 98
        %3186 = vperm.xlu0 %3185, %v333
        %v3187 = vpop.permute.xlu0 %3186
        %vm3188 = vcmp.eq.s32.totalorder %v3178, 1
        %vm3189 = vcmp.eq.s32.totalorder %v3181, 1
        %vm3190 = vcmp.eq.s32.totalorder %v3184, 1
        %vm3191 = vcmp.eq.s32.totalorder %v3187, 1
        %v3192 = vlaneseq
        %v3193 = vshrl.u32 %v3192, 7
        %v3194 = vsub.s32 0, %v3193
        %v3195 = vrot.slane %v3175, %v3194
        %v3196 = vsel %vm3188, %v3195, -inf
        %v3197 = vsel %vm3189, %v3195, -inf
        %v3198 = vsel %vm3190, %v3195, -inf
        %v3199 = vsel %vm3191, %v3195, -inf
        %v3200 = vmax.f32 %v3171, %v3196
        %v3201 = vmax.f32 %v3172, %v3197
        %v3202 = vmax.f32 %v3173, %v3198
        %v3203 = vmax.f32 %v3174, %v3199
        %v3204 = vld [vmem:[#allocation3 + $0x63] sm:$0x1]
        %3205 = vset.pattern.permute.xlu0 99
        %3206 = vperm.xlu0 %3205, %v330
        %v3207 = vpop.permute.xlu0 %3206
        %3208 = vset.pattern.permute.xlu0 99
        %3209 = vperm.xlu0 %3208, %v331
        %v3210 = vpop.permute.xlu0 %3209
        %3211 = vset.pattern.permute.xlu0 99
        %3212 = vperm.xlu0 %3211, %v332
        %v3213 = vpop.permute.xlu0 %3212
        %3214 = vset.pattern.permute.xlu0 99
        %3215 = vperm.xlu0 %3214, %v333
        %v3216 = vpop.permute.xlu0 %3215
        %vm3217 = vcmp.eq.s32.totalorder %v3207, 1
        %vm3218 = vcmp.eq.s32.totalorder %v3210, 1
        %vm3219 = vcmp.eq.s32.totalorder %v3213, 1
        %vm3220 = vcmp.eq.s32.totalorder %v3216, 1
        %v3221 = vlaneseq
        %v3222 = vshrl.u32 %v3221, 7
        %v3223 = vsub.s32 0, %v3222
        %v3224 = vrot.slane %v3204, %v3223
        %v3225 = vsel %vm3217, %v3224, -inf
        %v3226 = vsel %vm3218, %v3224, -inf
        %v3227 = vsel %vm3219, %v3224, -inf
        %v3228 = vsel %vm3220, %v3224, -inf
        %v3229 = vmax.f32 %v3200, %v3225
        %v3230 = vmax.f32 %v3201, %v3226
        %v3231 = vmax.f32 %v3202, %v3227
        %v3232 = vmax.f32 %v3203, %v3228
        %v3233 = vld [vmem:[#allocation3 + $0x64] sm:$0x1]
        %3234 = vset.pattern.permute.xlu0 100
        %3235 = vperm.xlu0 %3234, %v330
        %v3236 = vpop.permute.xlu0 %3235
        %3237 = vset.pattern.permute.xlu0 100
        %3238 = vperm.xlu0 %3237, %v331
        %v3239 = vpop.permute.xlu0 %3238
        %3240 = vset.pattern.permute.xlu0 100
        %3241 = vperm.xlu0 %3240, %v332
        %v3242 = vpop.permute.xlu0 %3241
        %3243 = vset.pattern.permute.xlu0 100
        %3244 = vperm.xlu0 %3243, %v333
        %v3245 = vpop.permute.xlu0 %3244
        %vm3246 = vcmp.eq.s32.totalorder %v3236, 1
        %vm3247 = vcmp.eq.s32.totalorder %v3239, 1
        %vm3248 = vcmp.eq.s32.totalorder %v3242, 1
        %vm3249 = vcmp.eq.s32.totalorder %v3245, 1
        %v3250 = vlaneseq
        %v3251 = vshrl.u32 %v3250, 7
        %v3252 = vsub.s32 0, %v3251
        %v3253 = vrot.slane %v3233, %v3252
        %v3254 = vsel %vm3246, %v3253, -inf
        %v3255 = vsel %vm3247, %v3253, -inf
        %v3256 = vsel %vm3248, %v3253, -inf
        %v3257 = vsel %vm3249, %v3253, -inf
        %v3258 = vmax.f32 %v3229, %v3254
        %v3259 = vmax.f32 %v3230, %v3255
        %v3260 = vmax.f32 %v3231, %v3256
        %v3261 = vmax.f32 %v3232, %v3257
        %v3262 = vld [vmem:[#allocation3 + $0x65] sm:$0x1]
        %3263 = vset.pattern.permute.xlu0 101
        %3264 = vperm.xlu0 %3263, %v330
        %v3265 = vpop.permute.xlu0 %3264
        %3266 = vset.pattern.permute.xlu0 101
        %3267 = vperm.xlu0 %3266, %v331
        %v3268 = vpop.permute.xlu0 %3267
        %3269 = vset.pattern.permute.xlu0 101
        %3270 = vperm.xlu0 %3269, %v332
        %v3271 = vpop.permute.xlu0 %3270
        %3272 = vset.pattern.permute.xlu0 101
        %3273 = vperm.xlu0 %3272, %v333
        %v3274 = vpop.permute.xlu0 %3273
        %vm3275 = vcmp.eq.s32.totalorder %v3265, 1
        %vm3276 = vcmp.eq.s32.totalorder %v3268, 1
        %vm3277 = vcmp.eq.s32.totalorder %v3271, 1
        %vm3278 = vcmp.eq.s32.totalorder %v3274, 1
        %v3279 = vlaneseq
        %v3280 = vshrl.u32 %v3279, 7
        %v3281 = vsub.s32 0, %v3280
        %v3282 = vrot.slane %v3262, %v3281
        %v3283 = vsel %vm3275, %v3282, -inf
        %v3284 = vsel %vm3276, %v3282, -inf
        %v3285 = vsel %vm3277, %v3282, -inf
        %v3286 = vsel %vm3278, %v3282, -inf
        %v3287 = vmax.f32 %v3258, %v3283
        %v3288 = vmax.f32 %v3259, %v3284
        %v3289 = vmax.f32 %v3260, %v3285
        %v3290 = vmax.f32 %v3261, %v3286
        %v3291 = vld [vmem:[#allocation3 + $0x66] sm:$0x1]
        %3292 = vset.pattern.permute.xlu0 102
        %3293 = vperm.xlu0 %3292, %v330
        %v3294 = vpop.permute.xlu0 %3293
        %3295 = vset.pattern.permute.xlu0 102
        %3296 = vperm.xlu0 %3295, %v331
        %v3297 = vpop.permute.xlu0 %3296
        %3298 = vset.pattern.permute.xlu0 102
        %3299 = vperm.xlu0 %3298, %v332
        %v3300 = vpop.permute.xlu0 %3299
        %3301 = vset.pattern.permute.xlu0 102
        %3302 = vperm.xlu0 %3301, %v333
        %v3303 = vpop.permute.xlu0 %3302
        %vm3304 = vcmp.eq.s32.totalorder %v3294, 1
        %vm3305 = vcmp.eq.s32.totalorder %v3297, 1
        %vm3306 = vcmp.eq.s32.totalorder %v3300, 1
        %vm3307 = vcmp.eq.s32.totalorder %v3303, 1
        %v3308 = vlaneseq
        %v3309 = vshrl.u32 %v3308, 7
        %v3310 = vsub.s32 0, %v3309
        %v3311 = vrot.slane %v3291, %v3310
        %v3312 = vsel %vm3304, %v3311, -inf
        %v3313 = vsel %vm3305, %v3311, -inf
        %v3314 = vsel %vm3306, %v3311, -inf
        %v3315 = vsel %vm3307, %v3311, -inf
        %v3316 = vmax.f32 %v3287, %v3312
        %v3317 = vmax.f32 %v3288, %v3313
        %v3318 = vmax.f32 %v3289, %v3314
        %v3319 = vmax.f32 %v3290, %v3315
        %v3320 = vld [vmem:[#allocation3 + $0x67] sm:$0x1]
        %3321 = vset.pattern.permute.xlu0 103
        %3322 = vperm.xlu0 %3321, %v330
        %v3323 = vpop.permute.xlu0 %3322
        %3324 = vset.pattern.permute.xlu0 103
        %3325 = vperm.xlu0 %3324, %v331
        %v3326 = vpop.permute.xlu0 %3325
        %3327 = vset.pattern.permute.xlu0 103
        %3328 = vperm.xlu0 %3327, %v332
        %v3329 = vpop.permute.xlu0 %3328
        %3330 = vset.pattern.permute.xlu0 103
        %3331 = vperm.xlu0 %3330, %v333
        %v3332 = vpop.permute.xlu0 %3331
        %vm3333 = vcmp.eq.s32.totalorder %v3323, 1
        %vm3334 = vcmp.eq.s32.totalorder %v3326, 1
        %vm3335 = vcmp.eq.s32.totalorder %v3329, 1
        %vm3336 = vcmp.eq.s32.totalorder %v3332, 1
        %v3337 = vlaneseq
        %v3338 = vshrl.u32 %v3337, 7
        %v3339 = vsub.s32 0, %v3338
        %v3340 = vrot.slane %v3320, %v3339
        %v3341 = vsel %vm3333, %v3340, -inf
        %v3342 = vsel %vm3334, %v3340, -inf
        %v3343 = vsel %vm3335, %v3340, -inf
        %v3344 = vsel %vm3336, %v3340, -inf
        %v3345 = vmax.f32 %v3316, %v3341
        %v3346 = vmax.f32 %v3317, %v3342
        %v3347 = vmax.f32 %v3318, %v3343
        %v3348 = vmax.f32 %v3319, %v3344
        %v3349 = vld [vmem:[#allocation3 + $0x68] sm:$0x1]
        %3350 = vset.pattern.permute.xlu0 104
        %3351 = vperm.xlu0 %3350, %v330
        %v3352 = vpop.permute.xlu0 %3351
        %3353 = vset.pattern.permute.xlu0 104
        %3354 = vperm.xlu0 %3353, %v331
        %v3355 = vpop.permute.xlu0 %3354
        %3356 = vset.pattern.permute.xlu0 104
        %3357 = vperm.xlu0 %3356, %v332
        %v3358 = vpop.permute.xlu0 %3357
        %3359 = vset.pattern.permute.xlu0 104
        %3360 = vperm.xlu0 %3359, %v333
        %v3361 = vpop.permute.xlu0 %3360
        %vm3362 = vcmp.eq.s32.totalorder %v3352, 1
        %vm3363 = vcmp.eq.s32.totalorder %v3355, 1
        %vm3364 = vcmp.eq.s32.totalorder %v3358, 1
        %vm3365 = vcmp.eq.s32.totalorder %v3361, 1
        %v3366 = vlaneseq
        %v3367 = vshrl.u32 %v3366, 7
        %v3368 = vsub.s32 0, %v3367
        %v3369 = vrot.slane %v3349, %v3368
        %v3370 = vsel %vm3362, %v3369, -inf
        %v3371 = vsel %vm3363, %v3369, -inf
        %v3372 = vsel %vm3364, %v3369, -inf
        %v3373 = vsel %vm3365, %v3369, -inf
        %v3374 = vmax.f32 %v3345, %v3370
        %v3375 = vmax.f32 %v3346, %v3371
        %v3376 = vmax.f32 %v3347, %v3372
        %v3377 = vmax.f32 %v3348, %v3373
        %v3378 = vld [vmem:[#allocation3 + $0x69] sm:$0x1]
        %3379 = vset.pattern.permute.xlu0 105
        %3380 = vperm.xlu0 %3379, %v330
        %v3381 = vpop.permute.xlu0 %3380
        %3382 = vset.pattern.permute.xlu0 105
        %3383 = vperm.xlu0 %3382, %v331
        %v3384 = vpop.permute.xlu0 %3383
        %3385 = vset.pattern.permute.xlu0 105
        %3386 = vperm.xlu0 %3385, %v332
        %v3387 = vpop.permute.xlu0 %3386
        %3388 = vset.pattern.permute.xlu0 105
        %3389 = vperm.xlu0 %3388, %v333
        %v3390 = vpop.permute.xlu0 %3389
        %vm3391 = vcmp.eq.s32.totalorder %v3381, 1
        %vm3392 = vcmp.eq.s32.totalorder %v3384, 1
        %vm3393 = vcmp.eq.s32.totalorder %v3387, 1
        %vm3394 = vcmp.eq.s32.totalorder %v3390, 1
        %v3395 = vlaneseq
        %v3396 = vshrl.u32 %v3395, 7
        %v3397 = vsub.s32 0, %v3396
        %v3398 = vrot.slane %v3378, %v3397
        %v3399 = vsel %vm3391, %v3398, -inf
        %v3400 = vsel %vm3392, %v3398, -inf
        %v3401 = vsel %vm3393, %v3398, -inf
        %v3402 = vsel %vm3394, %v3398, -inf
        %v3403 = vmax.f32 %v3374, %v3399
        %v3404 = vmax.f32 %v3375, %v3400
        %v3405 = vmax.f32 %v3376, %v3401
        %v3406 = vmax.f32 %v3377, %v3402
        %v3407 = vld [vmem:[#allocation3 + $0x6a] sm:$0x1]
        %3408 = vset.pattern.permute.xlu0 106
        %3409 = vperm.xlu0 %3408, %v330
        %v3410 = vpop.permute.xlu0 %3409
        %3411 = vset.pattern.permute.xlu0 106
        %3412 = vperm.xlu0 %3411, %v331
        %v3413 = vpop.permute.xlu0 %3412
        %3414 = vset.pattern.permute.xlu0 106
        %3415 = vperm.xlu0 %3414, %v332
        %v3416 = vpop.permute.xlu0 %3415
        %3417 = vset.pattern.permute.xlu0 106
        %3418 = vperm.xlu0 %3417, %v333
        %v3419 = vpop.permute.xlu0 %3418
        %vm3420 = vcmp.eq.s32.totalorder %v3410, 1
        %vm3421 = vcmp.eq.s32.totalorder %v3413, 1
        %vm3422 = vcmp.eq.s32.totalorder %v3416, 1
        %vm3423 = vcmp.eq.s32.totalorder %v3419, 1
        %v3424 = vlaneseq
        %v3425 = vshrl.u32 %v3424, 7
        %v3426 = vsub.s32 0, %v3425
        %v3427 = vrot.slane %v3407, %v3426
        %v3428 = vsel %vm3420, %v3427, -inf
        %v3429 = vsel %vm3421, %v3427, -inf
        %v3430 = vsel %vm3422, %v3427, -inf
        %v3431 = vsel %vm3423, %v3427, -inf
        %v3432 = vmax.f32 %v3403, %v3428
        %v3433 = vmax.f32 %v3404, %v3429
        %v3434 = vmax.f32 %v3405, %v3430
        %v3435 = vmax.f32 %v3406, %v3431
        %v3436 = vld [vmem:[#allocation3 + $0x6b] sm:$0x1]
        %3437 = vset.pattern.permute.xlu0 107
        %3438 = vperm.xlu0 %3437, %v330
        %v3439 = vpop.permute.xlu0 %3438
        %3440 = vset.pattern.permute.xlu0 107
        %3441 = vperm.xlu0 %3440, %v331
        %v3442 = vpop.permute.xlu0 %3441
        %3443 = vset.pattern.permute.xlu0 107
        %3444 = vperm.xlu0 %3443, %v332
        %v3445 = vpop.permute.xlu0 %3444
        %3446 = vset.pattern.permute.xlu0 107
        %3447 = vperm.xlu0 %3446, %v333
        %v3448 = vpop.permute.xlu0 %3447
        %vm3449 = vcmp.eq.s32.totalorder %v3439, 1
        %vm3450 = vcmp.eq.s32.totalorder %v3442, 1
        %vm3451 = vcmp.eq.s32.totalorder %v3445, 1
        %vm3452 = vcmp.eq.s32.totalorder %v3448, 1
        %v3453 = vlaneseq
        %v3454 = vshrl.u32 %v3453, 7
        %v3455 = vsub.s32 0, %v3454
        %v3456 = vrot.slane %v3436, %v3455
        %v3457 = vsel %vm3449, %v3456, -inf
        %v3458 = vsel %vm3450, %v3456, -inf
        %v3459 = vsel %vm3451, %v3456, -inf
        %v3460 = vsel %vm3452, %v3456, -inf
        %v3461 = vmax.f32 %v3432, %v3457
        %v3462 = vmax.f32 %v3433, %v3458
        %v3463 = vmax.f32 %v3434, %v3459
        %v3464 = vmax.f32 %v3435, %v3460
        %v3465 = vld [vmem:[#allocation3 + $0x6c] sm:$0x1]
        %3466 = vset.pattern.permute.xlu0 108
        %3467 = vperm.xlu0 %3466, %v330
        %v3468 = vpop.permute.xlu0 %3467
        %3469 = vset.pattern.permute.xlu0 108
        %3470 = vperm.xlu0 %3469, %v331
        %v3471 = vpop.permute.xlu0 %3470
        %3472 = vset.pattern.permute.xlu0 108
        %3473 = vperm.xlu0 %3472, %v332
        %v3474 = vpop.permute.xlu0 %3473
        %3475 = vset.pattern.permute.xlu0 108
        %3476 = vperm.xlu0 %3475, %v333
        %v3477 = vpop.permute.xlu0 %3476
        %vm3478 = vcmp.eq.s32.totalorder %v3468, 1
        %vm3479 = vcmp.eq.s32.totalorder %v3471, 1
        %vm3480 = vcmp.eq.s32.totalorder %v3474, 1
        %vm3481 = vcmp.eq.s32.totalorder %v3477, 1
        %v3482 = vlaneseq
        %v3483 = vshrl.u32 %v3482, 7
        %v3484 = vsub.s32 0, %v3483
        %v3485 = vrot.slane %v3465, %v3484
        %v3486 = vsel %vm3478, %v3485, -inf
        %v3487 = vsel %vm3479, %v3485, -inf
        %v3488 = vsel %vm3480, %v3485, -inf
        %v3489 = vsel %vm3481, %v3485, -inf
        %v3490 = vmax.f32 %v3461, %v3486
        %v3491 = vmax.f32 %v3462, %v3487
        %v3492 = vmax.f32 %v3463, %v3488
        %v3493 = vmax.f32 %v3464, %v3489
        %v3494 = vld [vmem:[#allocation3 + $0x6d] sm:$0x1]
        %3495 = vset.pattern.permute.xlu0 109
        %3496 = vperm.xlu0 %3495, %v330
        %v3497 = vpop.permute.xlu0 %3496
        %3498 = vset.pattern.permute.xlu0 109
        %3499 = vperm.xlu0 %3498, %v331
        %v3500 = vpop.permute.xlu0 %3499
        %3501 = vset.pattern.permute.xlu0 109
        %3502 = vperm.xlu0 %3501, %v332
        %v3503 = vpop.permute.xlu0 %3502
        %3504 = vset.pattern.permute.xlu0 109
        %3505 = vperm.xlu0 %3504, %v333
        %v3506 = vpop.permute.xlu0 %3505
        %vm3507 = vcmp.eq.s32.totalorder %v3497, 1
        %vm3508 = vcmp.eq.s32.totalorder %v3500, 1
        %vm3509 = vcmp.eq.s32.totalorder %v3503, 1
        %vm3510 = vcmp.eq.s32.totalorder %v3506, 1
        %v3511 = vlaneseq
        %v3512 = vshrl.u32 %v3511, 7
        %v3513 = vsub.s32 0, %v3512
        %v3514 = vrot.slane %v3494, %v3513
        %v3515 = vsel %vm3507, %v3514, -inf
        %v3516 = vsel %vm3508, %v3514, -inf
        %v3517 = vsel %vm3509, %v3514, -inf
        %v3518 = vsel %vm3510, %v3514, -inf
        %v3519 = vmax.f32 %v3490, %v3515
        %v3520 = vmax.f32 %v3491, %v3516
        %v3521 = vmax.f32 %v3492, %v3517
        %v3522 = vmax.f32 %v3493, %v3518
        %v3523 = vld [vmem:[#allocation3 + $0x6e] sm:$0x1]
        %3524 = vset.pattern.permute.xlu0 110
        %3525 = vperm.xlu0 %3524, %v330
        %v3526 = vpop.permute.xlu0 %3525
        %3527 = vset.pattern.permute.xlu0 110
        %3528 = vperm.xlu0 %3527, %v331
        %v3529 = vpop.permute.xlu0 %3528
        %3530 = vset.pattern.permute.xlu0 110
        %3531 = vperm.xlu0 %3530, %v332
        %v3532 = vpop.permute.xlu0 %3531
        %3533 = vset.pattern.permute.xlu0 110
        %3534 = vperm.xlu0 %3533, %v333
        %v3535 = vpop.permute.xlu0 %3534
        %vm3536 = vcmp.eq.s32.totalorder %v3526, 1
        %vm3537 = vcmp.eq.s32.totalorder %v3529, 1
        %vm3538 = vcmp.eq.s32.totalorder %v3532, 1
        %vm3539 = vcmp.eq.s32.totalorder %v3535, 1
        %v3540 = vlaneseq
        %v3541 = vshrl.u32 %v3540, 7
        %v3542 = vsub.s32 0, %v3541
        %v3543 = vrot.slane %v3523, %v3542
        %v3544 = vsel %vm3536, %v3543, -inf
        %v3545 = vsel %vm3537, %v3543, -inf
        %v3546 = vsel %vm3538, %v3543, -inf
        %v3547 = vsel %vm3539, %v3543, -inf
        %v3548 = vmax.f32 %v3519, %v3544
        %v3549 = vmax.f32 %v3520, %v3545
        %v3550 = vmax.f32 %v3521, %v3546
        %v3551 = vmax.f32 %v3522, %v3547
        %v3552 = vld [vmem:[#allocation3 + $0x6f] sm:$0x1]
        %3553 = vset.pattern.permute.xlu0 111
        %3554 = vperm.xlu0 %3553, %v330
        %v3555 = vpop.permute.xlu0 %3554
        %3556 = vset.pattern.permute.xlu0 111
        %3557 = vperm.xlu0 %3556, %v331
        %v3558 = vpop.permute.xlu0 %3557
        %3559 = vset.pattern.permute.xlu0 111
        %3560 = vperm.xlu0 %3559, %v332
        %v3561 = vpop.permute.xlu0 %3560
        %3562 = vset.pattern.permute.xlu0 111
        %3563 = vperm.xlu0 %3562, %v333
        %v3564 = vpop.permute.xlu0 %3563
        %vm3565 = vcmp.eq.s32.totalorder %v3555, 1
        %vm3566 = vcmp.eq.s32.totalorder %v3558, 1
        %vm3567 = vcmp.eq.s32.totalorder %v3561, 1
        %vm3568 = vcmp.eq.s32.totalorder %v3564, 1
        %v3569 = vlaneseq
        %v3570 = vshrl.u32 %v3569, 7
        %v3571 = vsub.s32 0, %v3570
        %v3572 = vrot.slane %v3552, %v3571
        %v3573 = vsel %vm3565, %v3572, -inf
        %v3574 = vsel %vm3566, %v3572, -inf
        %v3575 = vsel %vm3567, %v3572, -inf
        %v3576 = vsel %vm3568, %v3572, -inf
        %v3577 = vmax.f32 %v3548, %v3573
        %v3578 = vmax.f32 %v3549, %v3574
        %v3579 = vmax.f32 %v3550, %v3575
        %v3580 = vmax.f32 %v3551, %v3576
        %v3581 = vld [vmem:[#allocation3 + $0x70] sm:$0x1]
        %3582 = vset.pattern.permute.xlu0 112
        %3583 = vperm.xlu0 %3582, %v330
        %v3584 = vpop.permute.xlu0 %3583
        %3585 = vset.pattern.permute.xlu0 112
        %3586 = vperm.xlu0 %3585, %v331
        %v3587 = vpop.permute.xlu0 %3586
        %3588 = vset.pattern.permute.xlu0 112
        %3589 = vperm.xlu0 %3588, %v332
        %v3590 = vpop.permute.xlu0 %3589
        %3591 = vset.pattern.permute.xlu0 112
        %3592 = vperm.xlu0 %3591, %v333
        %v3593 = vpop.permute.xlu0 %3592
        %vm3594 = vcmp.eq.s32.totalorder %v3584, 1
        %vm3595 = vcmp.eq.s32.totalorder %v3587, 1
        %vm3596 = vcmp.eq.s32.totalorder %v3590, 1
        %vm3597 = vcmp.eq.s32.totalorder %v3593, 1
        %v3598 = vlaneseq
        %v3599 = vshrl.u32 %v3598, 7
        %v3600 = vsub.s32 0, %v3599
        %v3601 = vrot.slane %v3581, %v3600
        %v3602 = vsel %vm3594, %v3601, -inf
        %v3603 = vsel %vm3595, %v3601, -inf
        %v3604 = vsel %vm3596, %v3601, -inf
        %v3605 = vsel %vm3597, %v3601, -inf
        %v3606 = vmax.f32 %v3577, %v3602
        %v3607 = vmax.f32 %v3578, %v3603
        %v3608 = vmax.f32 %v3579, %v3604
        %v3609 = vmax.f32 %v3580, %v3605
        %v3610 = vld [vmem:[#allocation3 + $0x71] sm:$0x1]
        %3611 = vset.pattern.permute.xlu0 113
        %3612 = vperm.xlu0 %3611, %v330
        %v3613 = vpop.permute.xlu0 %3612
        %3614 = vset.pattern.permute.xlu0 113
        %3615 = vperm.xlu0 %3614, %v331
        %v3616 = vpop.permute.xlu0 %3615
        %3617 = vset.pattern.permute.xlu0 113
        %3618 = vperm.xlu0 %3617, %v332
        %v3619 = vpop.permute.xlu0 %3618
        %3620 = vset.pattern.permute.xlu0 113
        %3621 = vperm.xlu0 %3620, %v333
        %v3622 = vpop.permute.xlu0 %3621
        %vm3623 = vcmp.eq.s32.totalorder %v3613, 1
        %vm3624 = vcmp.eq.s32.totalorder %v3616, 1
        %vm3625 = vcmp.eq.s32.totalorder %v3619, 1
        %vm3626 = vcmp.eq.s32.totalorder %v3622, 1
        %v3627 = vlaneseq
        %v3628 = vshrl.u32 %v3627, 7
        %v3629 = vsub.s32 0, %v3628
        %v3630 = vrot.slane %v3610, %v3629
        %v3631 = vsel %vm3623, %v3630, -inf
        %v3632 = vsel %vm3624, %v3630, -inf
        %v3633 = vsel %vm3625, %v3630, -inf
        %v3634 = vsel %vm3626, %v3630, -inf
        %v3635 = vmax.f32 %v3606, %v3631
        %v3636 = vmax.f32 %v3607, %v3632
        %v3637 = vmax.f32 %v3608, %v3633
        %v3638 = vmax.f32 %v3609, %v3634
        %v3639 = vld [vmem:[#allocation3 + $0x72] sm:$0x1]
        %3640 = vset.pattern.permute.xlu0 114
        %3641 = vperm.xlu0 %3640, %v330
        %v3642 = vpop.permute.xlu0 %3641
        %3643 = vset.pattern.permute.xlu0 114
        %3644 = vperm.xlu0 %3643, %v331
        %v3645 = vpop.permute.xlu0 %3644
        %3646 = vset.pattern.permute.xlu0 114
        %3647 = vperm.xlu0 %3646, %v332
        %v3648 = vpop.permute.xlu0 %3647
        %3649 = vset.pattern.permute.xlu0 114
        %3650 = vperm.xlu0 %3649, %v333
        %v3651 = vpop.permute.xlu0 %3650
        %vm3652 = vcmp.eq.s32.totalorder %v3642, 1
        %vm3653 = vcmp.eq.s32.totalorder %v3645, 1
        %vm3654 = vcmp.eq.s32.totalorder %v3648, 1
        %vm3655 = vcmp.eq.s32.totalorder %v3651, 1
        %v3656 = vlaneseq
        %v3657 = vshrl.u32 %v3656, 7
        %v3658 = vsub.s32 0, %v3657
        %v3659 = vrot.slane %v3639, %v3658
        %v3660 = vsel %vm3652, %v3659, -inf
        %v3661 = vsel %vm3653, %v3659, -inf
        %v3662 = vsel %vm3654, %v3659, -inf
        %v3663 = vsel %vm3655, %v3659, -inf
        %v3664 = vmax.f32 %v3635, %v3660
        %v3665 = vmax.f32 %v3636, %v3661
        %v3666 = vmax.f32 %v3637, %v3662
        %v3667 = vmax.f32 %v3638, %v3663
        %v3668 = vld [vmem:[#allocation3 + $0x73] sm:$0x1]
        %3669 = vset.pattern.permute.xlu0 115
        %3670 = vperm.xlu0 %3669, %v330
        %v3671 = vpop.permute.xlu0 %3670
        %3672 = vset.pattern.permute.xlu0 115
        %3673 = vperm.xlu0 %3672, %v331
        %v3674 = vpop.permute.xlu0 %3673
        %3675 = vset.pattern.permute.xlu0 115
        %3676 = vperm.xlu0 %3675, %v332
        %v3677 = vpop.permute.xlu0 %3676
        %3678 = vset.pattern.permute.xlu0 115
        %3679 = vperm.xlu0 %3678, %v333
        %v3680 = vpop.permute.xlu0 %3679
        %vm3681 = vcmp.eq.s32.totalorder %v3671, 1
        %vm3682 = vcmp.eq.s32.totalorder %v3674, 1
        %vm3683 = vcmp.eq.s32.totalorder %v3677, 1
        %vm3684 = vcmp.eq.s32.totalorder %v3680, 1
        %v3685 = vlaneseq
        %v3686 = vshrl.u32 %v3685, 7
        %v3687 = vsub.s32 0, %v3686
        %v3688 = vrot.slane %v3668, %v3687
        %v3689 = vsel %vm3681, %v3688, -inf
        %v3690 = vsel %vm3682, %v3688, -inf
        %v3691 = vsel %vm3683, %v3688, -inf
        %v3692 = vsel %vm3684, %v3688, -inf
        %v3693 = vmax.f32 %v3664, %v3689
        %v3694 = vmax.f32 %v3665, %v3690
        %v3695 = vmax.f32 %v3666, %v3691
        %v3696 = vmax.f32 %v3667, %v3692
        %v3697 = vld [vmem:[#allocation3 + $0x74] sm:$0x1]
        %3698 = vset.pattern.permute.xlu0 116
        %3699 = vperm.xlu0 %3698, %v330
        %v3700 = vpop.permute.xlu0 %3699
        %3701 = vset.pattern.permute.xlu0 116
        %3702 = vperm.xlu0 %3701, %v331
        %v3703 = vpop.permute.xlu0 %3702
        %3704 = vset.pattern.permute.xlu0 116
        %3705 = vperm.xlu0 %3704, %v332
        %v3706 = vpop.permute.xlu0 %3705
        %3707 = vset.pattern.permute.xlu0 116
        %3708 = vperm.xlu0 %3707, %v333
        %v3709 = vpop.permute.xlu0 %3708
        %vm3710 = vcmp.eq.s32.totalorder %v3700, 1
        %vm3711 = vcmp.eq.s32.totalorder %v3703, 1
        %vm3712 = vcmp.eq.s32.totalorder %v3706, 1
        %vm3713 = vcmp.eq.s32.totalorder %v3709, 1
        %v3714 = vlaneseq
        %v3715 = vshrl.u32 %v3714, 7
        %v3716 = vsub.s32 0, %v3715
        %v3717 = vrot.slane %v3697, %v3716
        %v3718 = vsel %vm3710, %v3717, -inf
        %v3719 = vsel %vm3711, %v3717, -inf
        %v3720 = vsel %vm3712, %v3717, -inf
        %v3721 = vsel %vm3713, %v3717, -inf
        %v3722 = vmax.f32 %v3693, %v3718
        %v3723 = vmax.f32 %v3694, %v3719
        %v3724 = vmax.f32 %v3695, %v3720
        %v3725 = vmax.f32 %v3696, %v3721
        %v3726 = vld [vmem:[#allocation3 + $0x75] sm:$0x1]
        %3727 = vset.pattern.permute.xlu0 117
        %3728 = vperm.xlu0 %3727, %v330
        %v3729 = vpop.permute.xlu0 %3728
        %3730 = vset.pattern.permute.xlu0 117
        %3731 = vperm.xlu0 %3730, %v331
        %v3732 = vpop.permute.xlu0 %3731
        %3733 = vset.pattern.permute.xlu0 117
        %3734 = vperm.xlu0 %3733, %v332
        %v3735 = vpop.permute.xlu0 %3734
        %3736 = vset.pattern.permute.xlu0 117
        %3737 = vperm.xlu0 %3736, %v333
        %v3738 = vpop.permute.xlu0 %3737
        %vm3739 = vcmp.eq.s32.totalorder %v3729, 1
        %vm3740 = vcmp.eq.s32.totalorder %v3732, 1
        %vm3741 = vcmp.eq.s32.totalorder %v3735, 1
        %vm3742 = vcmp.eq.s32.totalorder %v3738, 1
        %v3743 = vlaneseq
        %v3744 = vshrl.u32 %v3743, 7
        %v3745 = vsub.s32 0, %v3744
        %v3746 = vrot.slane %v3726, %v3745
        %v3747 = vsel %vm3739, %v3746, -inf
        %v3748 = vsel %vm3740, %v3746, -inf
        %v3749 = vsel %vm3741, %v3746, -inf
        %v3750 = vsel %vm3742, %v3746, -inf
        %v3751 = vmax.f32 %v3722, %v3747
        %v3752 = vmax.f32 %v3723, %v3748
        %v3753 = vmax.f32 %v3724, %v3749
        %v3754 = vmax.f32 %v3725, %v3750
        %v3755 = vld [vmem:[#allocation3 + $0x76] sm:$0x1]
        %3756 = vset.pattern.permute.xlu0 118
        %3757 = vperm.xlu0 %3756, %v330
        %v3758 = vpop.permute.xlu0 %3757
        %3759 = vset.pattern.permute.xlu0 118
        %3760 = vperm.xlu0 %3759, %v331
        %v3761 = vpop.permute.xlu0 %3760
        %3762 = vset.pattern.permute.xlu0 118
        %3763 = vperm.xlu0 %3762, %v332
        %v3764 = vpop.permute.xlu0 %3763
        %3765 = vset.pattern.permute.xlu0 118
        %3766 = vperm.xlu0 %3765, %v333
        %v3767 = vpop.permute.xlu0 %3766
        %vm3768 = vcmp.eq.s32.totalorder %v3758, 1
        %vm3769 = vcmp.eq.s32.totalorder %v3761, 1
        %vm3770 = vcmp.eq.s32.totalorder %v3764, 1
        %vm3771 = vcmp.eq.s32.totalorder %v3767, 1
        %v3772 = vlaneseq
        %v3773 = vshrl.u32 %v3772, 7
        %v3774 = vsub.s32 0, %v3773
        %v3775 = vrot.slane %v3755, %v3774
        %v3776 = vsel %vm3768, %v3775, -inf
        %v3777 = vsel %vm3769, %v3775, -inf
        %v3778 = vsel %vm3770, %v3775, -inf
        %v3779 = vsel %vm3771, %v3775, -inf
        %v3780 = vmax.f32 %v3751, %v3776
        %v3781 = vmax.f32 %v3752, %v3777
        %v3782 = vmax.f32 %v3753, %v3778
        %v3783 = vmax.f32 %v3754, %v3779
        %v3784 = vld [vmem:[#allocation3 + $0x77] sm:$0x1]
        %3785 = vset.pattern.permute.xlu0 119
        %3786 = vperm.xlu0 %3785, %v330
        %v3787 = vpop.permute.xlu0 %3786
        %3788 = vset.pattern.permute.xlu0 119
        %3789 = vperm.xlu0 %3788, %v331
        %v3790 = vpop.permute.xlu0 %3789
        %3791 = vset.pattern.permute.xlu0 119
        %3792 = vperm.xlu0 %3791, %v332
        %v3793 = vpop.permute.xlu0 %3792
        %3794 = vset.pattern.permute.xlu0 119
        %3795 = vperm.xlu0 %3794, %v333
        %v3796 = vpop.permute.xlu0 %3795
        %vm3797 = vcmp.eq.s32.totalorder %v3787, 1
        %vm3798 = vcmp.eq.s32.totalorder %v3790, 1
        %vm3799 = vcmp.eq.s32.totalorder %v3793, 1
        %vm3800 = vcmp.eq.s32.totalorder %v3796, 1
        %v3801 = vlaneseq
        %v3802 = vshrl.u32 %v3801, 7
        %v3803 = vsub.s32 0, %v3802
        %v3804 = vrot.slane %v3784, %v3803
        %v3805 = vsel %vm3797, %v3804, -inf
        %v3806 = vsel %vm3798, %v3804, -inf
        %v3807 = vsel %vm3799, %v3804, -inf
        %v3808 = vsel %vm3800, %v3804, -inf
        %v3809 = vmax.f32 %v3780, %v3805
        %v3810 = vmax.f32 %v3781, %v3806
        %v3811 = vmax.f32 %v3782, %v3807
        %v3812 = vmax.f32 %v3783, %v3808
        %v3813 = vld [vmem:[#allocation3 + $0x78] sm:$0x1]
        %3814 = vset.pattern.permute.xlu0 120
        %3815 = vperm.xlu0 %3814, %v330
        %v3816 = vpop.permute.xlu0 %3815
        %3817 = vset.pattern.permute.xlu0 120
        %3818 = vperm.xlu0 %3817, %v331
        %v3819 = vpop.permute.xlu0 %3818
        %3820 = vset.pattern.permute.xlu0 120
        %3821 = vperm.xlu0 %3820, %v332
        %v3822 = vpop.permute.xlu0 %3821
        %3823 = vset.pattern.permute.xlu0 120
        %3824 = vperm.xlu0 %3823, %v333
        %v3825 = vpop.permute.xlu0 %3824
        %vm3826 = vcmp.eq.s32.totalorder %v3816, 1
        %vm3827 = vcmp.eq.s32.totalorder %v3819, 1
        %vm3828 = vcmp.eq.s32.totalorder %v3822, 1
        %vm3829 = vcmp.eq.s32.totalorder %v3825, 1
        %v3830 = vlaneseq
        %v3831 = vshrl.u32 %v3830, 7
        %v3832 = vsub.s32 0, %v3831
        %v3833 = vrot.slane %v3813, %v3832
        %v3834 = vsel %vm3826, %v3833, -inf
        %v3835 = vsel %vm3827, %v3833, -inf
        %v3836 = vsel %vm3828, %v3833, -inf
        %v3837 = vsel %vm3829, %v3833, -inf
        %v3838 = vmax.f32 %v3809, %v3834
        %v3839 = vmax.f32 %v3810, %v3835
        %v3840 = vmax.f32 %v3811, %v3836
        %v3841 = vmax.f32 %v3812, %v3837
        %v3842 = vld [vmem:[#allocation3 + $0x79] sm:$0x1]
        %3843 = vset.pattern.permute.xlu0 121
        %3844 = vperm.xlu0 %3843, %v330
        %v3845 = vpop.permute.xlu0 %3844
        %3846 = vset.pattern.permute.xlu0 121
        %3847 = vperm.xlu0 %3846, %v331
        %v3848 = vpop.permute.xlu0 %3847
        %3849 = vset.pattern.permute.xlu0 121
        %3850 = vperm.xlu0 %3849, %v332
        %v3851 = vpop.permute.xlu0 %3850
        %3852 = vset.pattern.permute.xlu0 121
        %3853 = vperm.xlu0 %3852, %v333
        %v3854 = vpop.permute.xlu0 %3853
        %vm3855 = vcmp.eq.s32.totalorder %v3845, 1
        %vm3856 = vcmp.eq.s32.totalorder %v3848, 1
        %vm3857 = vcmp.eq.s32.totalorder %v3851, 1
        %vm3858 = vcmp.eq.s32.totalorder %v3854, 1
        %v3859 = vlaneseq
        %v3860 = vshrl.u32 %v3859, 7
        %v3861 = vsub.s32 0, %v3860
        %v3862 = vrot.slane %v3842, %v3861
        %v3863 = vsel %vm3855, %v3862, -inf
        %v3864 = vsel %vm3856, %v3862, -inf
        %v3865 = vsel %vm3857, %v3862, -inf
        %v3866 = vsel %vm3858, %v3862, -inf
        %v3867 = vmax.f32 %v3838, %v3863
        %v3868 = vmax.f32 %v3839, %v3864
        %v3869 = vmax.f32 %v3840, %v3865
        %v3870 = vmax.f32 %v3841, %v3866
        %v3871 = vld [vmem:[#allocation3 + $0x7a] sm:$0x1]
        %3872 = vset.pattern.permute.xlu0 122
        %3873 = vperm.xlu0 %3872, %v330
        %v3874 = vpop.permute.xlu0 %3873
        %3875 = vset.pattern.permute.xlu0 122
        %3876 = vperm.xlu0 %3875, %v331
        %v3877 = vpop.permute.xlu0 %3876
        %3878 = vset.pattern.permute.xlu0 122
        %3879 = vperm.xlu0 %3878, %v332
        %v3880 = vpop.permute.xlu0 %3879
        %3881 = vset.pattern.permute.xlu0 122
        %3882 = vperm.xlu0 %3881, %v333
        %v3883 = vpop.permute.xlu0 %3882
        %vm3884 = vcmp.eq.s32.totalorder %v3874, 1
        %vm3885 = vcmp.eq.s32.totalorder %v3877, 1
        %vm3886 = vcmp.eq.s32.totalorder %v3880, 1
        %vm3887 = vcmp.eq.s32.totalorder %v3883, 1
        %v3888 = vlaneseq
        %v3889 = vshrl.u32 %v3888, 7
        %v3890 = vsub.s32 0, %v3889
        %v3891 = vrot.slane %v3871, %v3890
        %v3892 = vsel %vm3884, %v3891, -inf
        %v3893 = vsel %vm3885, %v3891, -inf
        %v3894 = vsel %vm3886, %v3891, -inf
        %v3895 = vsel %vm3887, %v3891, -inf
        %v3896 = vmax.f32 %v3867, %v3892
        %v3897 = vmax.f32 %v3868, %v3893
        %v3898 = vmax.f32 %v3869, %v3894
        %v3899 = vmax.f32 %v3870, %v3895
        %v3900 = vld [vmem:[#allocation3 + $0x7b] sm:$0x1]
        %3901 = vset.pattern.permute.xlu0 123
        %3902 = vperm.xlu0 %3901, %v330
        %v3903 = vpop.permute.xlu0 %3902
        %3904 = vset.pattern.permute.xlu0 123
        %3905 = vperm.xlu0 %3904, %v331
        %v3906 = vpop.permute.xlu0 %3905
        %3907 = vset.pattern.permute.xlu0 123
        %3908 = vperm.xlu0 %3907, %v332
        %v3909 = vpop.permute.xlu0 %3908
        %3910 = vset.pattern.permute.xlu0 123
        %3911 = vperm.xlu0 %3910, %v333
        %v3912 = vpop.permute.xlu0 %3911
        %vm3913 = vcmp.eq.s32.totalorder %v3903, 1
        %vm3914 = vcmp.eq.s32.totalorder %v3906, 1
        %vm3915 = vcmp.eq.s32.totalorder %v3909, 1
        %vm3916 = vcmp.eq.s32.totalorder %v3912, 1
        %v3917 = vlaneseq
        %v3918 = vshrl.u32 %v3917, 7
        %v3919 = vsub.s32 0, %v3918
        %v3920 = vrot.slane %v3900, %v3919
        %v3921 = vsel %vm3913, %v3920, -inf
        %v3922 = vsel %vm3914, %v3920, -inf
        %v3923 = vsel %vm3915, %v3920, -inf
        %v3924 = vsel %vm3916, %v3920, -inf
        %v3925 = vmax.f32 %v3896, %v3921
        %v3926 = vmax.f32 %v3897, %v3922
        %v3927 = vmax.f32 %v3898, %v3923
        %v3928 = vmax.f32 %v3899, %v3924
        %v3929 = vld [vmem:[#allocation3 + $0x7c] sm:$0x1]
        %3930 = vset.pattern.permute.xlu0 124
        %3931 = vperm.xlu0 %3930, %v330
        %v3932 = vpop.permute.xlu0 %3931
        %3933 = vset.pattern.permute.xlu0 124
        %3934 = vperm.xlu0 %3933, %v331
        %v3935 = vpop.permute.xlu0 %3934
        %3936 = vset.pattern.permute.xlu0 124
        %3937 = vperm.xlu0 %3936, %v332
        %v3938 = vpop.permute.xlu0 %3937
        %3939 = vset.pattern.permute.xlu0 124
        %3940 = vperm.xlu0 %3939, %v333
        %v3941 = vpop.permute.xlu0 %3940
        %vm3942 = vcmp.eq.s32.totalorder %v3932, 1
        %vm3943 = vcmp.eq.s32.totalorder %v3935, 1
        %vm3944 = vcmp.eq.s32.totalorder %v3938, 1
        %vm3945 = vcmp.eq.s32.totalorder %v3941, 1
        %v3946 = vlaneseq
        %v3947 = vshrl.u32 %v3946, 7
        %v3948 = vsub.s32 0, %v3947
        %v3949 = vrot.slane %v3929, %v3948
        %v3950 = vsel %vm3942, %v3949, -inf
        %v3951 = vsel %vm3943, %v3949, -inf
        %v3952 = vsel %vm3944, %v3949, -inf
        %v3953 = vsel %vm3945, %v3949, -inf
        %v3954 = vmax.f32 %v3925, %v3950
        %v3955 = vmax.f32 %v3926, %v3951
        %v3956 = vmax.f32 %v3927, %v3952
        %v3957 = vmax.f32 %v3928, %v3953
        %v3958 = vld [vmem:[#allocation3 + $0x7d] sm:$0x1]
        %3959 = vset.pattern.permute.xlu0 125
        %3960 = vperm.xlu0 %3959, %v330
        %v3961 = vpop.permute.xlu0 %3960
        %3962 = vset.pattern.permute.xlu0 125
        %3963 = vperm.xlu0 %3962, %v331
        %v3964 = vpop.permute.xlu0 %3963
        %3965 = vset.pattern.permute.xlu0 125
        %3966 = vperm.xlu0 %3965, %v332
        %v3967 = vpop.permute.xlu0 %3966
        %3968 = vset.pattern.permute.xlu0 125
        %3969 = vperm.xlu0 %3968, %v333
        %v3970 = vpop.permute.xlu0 %3969
        %vm3971 = vcmp.eq.s32.totalorder %v3961, 1
        %vm3972 = vcmp.eq.s32.totalorder %v3964, 1
        %vm3973 = vcmp.eq.s32.totalorder %v3967, 1
        %vm3974 = vcmp.eq.s32.totalorder %v3970, 1
        %v3975 = vlaneseq
        %v3976 = vshrl.u32 %v3975, 7
        %v3977 = vsub.s32 0, %v3976
        %v3978 = vrot.slane %v3958, %v3977
        %v3979 = vsel %vm3971, %v3978, -inf
        %v3980 = vsel %vm3972, %v3978, -inf
        %v3981 = vsel %vm3973, %v3978, -inf
        %v3982 = vsel %vm3974, %v3978, -inf
        %v3983 = vmax.f32 %v3954, %v3979
        %v3984 = vmax.f32 %v3955, %v3980
        %v3985 = vmax.f32 %v3956, %v3981
        %v3986 = vmax.f32 %v3957, %v3982
        %v3987 = vld [vmem:[#allocation3 + $0x7e] sm:$0x1]
        %3988 = vset.pattern.permute.xlu0 126
        %3989 = vperm.xlu0 %3988, %v330
        %v3990 = vpop.permute.xlu0 %3989
        %3991 = vset.pattern.permute.xlu0 126
        %3992 = vperm.xlu0 %3991, %v331
        %v3993 = vpop.permute.xlu0 %3992
        %3994 = vset.pattern.permute.xlu0 126
        %3995 = vperm.xlu0 %3994, %v332
        %v3996 = vpop.permute.xlu0 %3995
        %3997 = vset.pattern.permute.xlu0 126
        %3998 = vperm.xlu0 %3997, %v333
        %v3999 = vpop.permute.xlu0 %3998
        %vm4000 = vcmp.eq.s32.totalorder %v3990, 1
        %vm4001 = vcmp.eq.s32.totalorder %v3993, 1
        %vm4002 = vcmp.eq.s32.totalorder %v3996, 1
        %vm4003 = vcmp.eq.s32.totalorder %v3999, 1
        %v4004 = vlaneseq
        %v4005 = vshrl.u32 %v4004, 7
        %v4006 = vsub.s32 0, %v4005
        %v4007 = vrot.slane %v3987, %v4006
        %v4008 = vsel %vm4000, %v4007, -inf
        %v4009 = vsel %vm4001, %v4007, -inf
        %v4010 = vsel %vm4002, %v4007, -inf
        %v4011 = vsel %vm4003, %v4007, -inf
        %v4012 = vmax.f32 %v3983, %v4008
        %v4013 = vmax.f32 %v3984, %v4009
        %v4014 = vmax.f32 %v3985, %v4010
        %v4015 = vmax.f32 %v3986, %v4011
        %v4016 = vld [vmem:[#allocation3 + $0x7f] sm:$0x1]
        %4017 = vset.pattern.permute.xlu0 127
        %4018 = vperm.xlu0 %4017, %v330
        %v4019 = vpop.permute.xlu0 %4018
        %4020 = vset.pattern.permute.xlu0 127
        %4021 = vperm.xlu0 %4020, %v331
        %v4022 = vpop.permute.xlu0 %4021
        %4023 = vset.pattern.permute.xlu0 127
        %4024 = vperm.xlu0 %4023, %v332
        %v4025 = vpop.permute.xlu0 %4024
        %4026 = vset.pattern.permute.xlu0 127
        %4027 = vperm.xlu0 %4026, %v333
        %v4028 = vpop.permute.xlu0 %4027
        %vm4029 = vcmp.eq.s32.totalorder %v4019, 1
        %vm4030 = vcmp.eq.s32.totalorder %v4022, 1
        %vm4031 = vcmp.eq.s32.totalorder %v4025, 1
        %vm4032 = vcmp.eq.s32.totalorder %v4028, 1
        %v4033 = vlaneseq
        %v4034 = vshrl.u32 %v4033, 7
        %v4035 = vsub.s32 0, %v4034
        %v4036 = vrot.slane %v4016, %v4035
        %v4037 = vsel %vm4029, %v4036, -inf
        %v4038 = vsel %vm4030, %v4036, -inf
        %v4039 = vsel %vm4031, %v4036, -inf
        %v4040 = vsel %vm4032, %v4036, -inf
        %v4041 = vmax.f32 %v4012, %v4037
        %v4042 = vmax.f32 %v4013, %v4038
        %v4043 = vmax.f32 %v4014, %v4039
        %v4044 = vmax.f32 %v4015, %v4040
        %4045 = vst [vmem:[#allocation2] sm:$0xff] %v4041
        %4046 = vst [vmem:[#allocation2 + $0x8] sm:$0xff] %v4042
        %4047 = vst [vmem:[#allocation2 + $0x10] sm:$0xff] %v4043
        %4048 = vst [vmem:[#allocation2 + $0x18] sm:$0xff] %v4044
        // Predicated region
        $region49: #{tpu_custom_call.1} parent=35 // pred_check
          %p4049 = pneg %p309
        $region50: #{tpu_custom_call.1} parent=35 // pred_check_branch
          %4051 = sbr.rel (%p4049) target = $region52
        $region51: #{tpu_custom_call.1} parent=35 // pred_region
          %v4052 = vld [vmem:[%s295] sm:$0xff]
          %v4053 = vld [vmem:[%s295 + $0x8] sm:$0xff]
          %v4054 = vld [vmem:[%s295 + $0x10] sm:$0xff]
          %v4055 = vld [vmem:[%s295 + $0x18] sm:$0xff]
          %vm4056 = vcmp.ne.f32.partialorder %v4052, 0.0
          %vm4057 = vcmp.ne.f32.partialorder %v4053, 0.0
          %vm4058 = vcmp.ne.f32.partialorder %v4054, 0.0
          %vm4059 = vcmp.ne.f32.partialorder %v4055, 0.0
          %v4060 = vld [vmem:[%s253] sm:$0xff]
          %v4061 = vld [vmem:[%s253 + $0x8] sm:$0xff]
          %v4062 = vld [vmem:[%s253 + $0x10] sm:$0xff]
          %v4063 = vld [vmem:[%s253 + $0x18] sm:$0xff]
          %v4064 = vsel %vm4056, 1, 0
          %v4065 = vsel %vm4057, 1, 0
          %v4066 = vsel %vm4058, 1, 0
          %v4067 = vsel %vm4059, 1, 0
          %4068 = vset.pattern.permute.xlu0 0
          %4069 = vperm.xlu0 %4068, %v4064
          %v4070 = vpop.permute.xlu0 %4069
          %4071 = vset.pattern.permute.xlu0 0
          %4072 = vperm.xlu0 %4071, %v4065
          %v4073 = vpop.permute.xlu0 %4072
          %4074 = vset.pattern.permute.xlu0 0
          %4075 = vperm.xlu0 %4074, %v4066
          %v4076 = vpop.permute.xlu0 %4075
          %4077 = vset.pattern.permute.xlu0 0
          %4078 = vperm.xlu0 %4077, %v4067
          %v4079 = vpop.permute.xlu0 %4078
          %vm4080 = vcmp.eq.s32.totalorder %v4070, 1
          %vm4081 = vcmp.eq.s32.totalorder %v4073, 1
          %vm4082 = vcmp.eq.s32.totalorder %v4076, 1
          %vm4083 = vcmp.eq.s32.totalorder %v4079, 1
          %v4084 = vsel %vm4080, %v4041, %v4060
          %v4085 = vsel %vm4081, %v4042, %v4061
          %v4086 = vsel %vm4082, %v4043, %v4062
          %v4087 = vsel %vm4083, %v4044, %v4063
          %4088 = vst [vmem:[%s290] sm:$0xff] %v4084
          %4089 = vst [vmem:[%s290 + $0x8] sm:$0xff] %v4085
          %4090 = vst [vmem:[%s290 + $0x10] sm:$0xff] %v4086
          %4091 = vst [vmem:[%s290 + $0x18] sm:$0xff] %v4087
        $region52: #{tpu_custom_call.1} parent=35 // pred_fallthru
          _
        %s4092 = sand.u32 %s148, 1
        %s4093 = scalar_lea.sflag [#allocation5], %s4092
        %s4094 = sand.u32 %s148, 1
        %s4095 = smul.addr %s4094, 32
        %s4096 = scalar_lea.vmem [#allocation8], %s4095
        // Predicated region
        $region53: #{tpu_custom_call.1} parent=35 // pred_check
          %p4097 = pneg %p158
        $region54: #{tpu_custom_call.1} parent=35 // pred_check_branch
          %4099 = sbr.rel (%p4097) target = $region56
        $region55: #{tpu_custom_call.1} parent=35 // pred_region
          %s4100 = smul.u32 4, %s26
          %s4102 = ssub.s32 512, 512
          %4103 = vsyncadd %s4093, %s4102
          %s4104 = smul.addr %s4100, 128
          %s4105 = scalar_lea.hbm %s4, %s4104
          %s4106 = sshll.u32 %s4096, 4
          %s4107 = int_to_ptr.vmem [resolvable:$true] %s4106
          %4112 = dma.vmem_to_hbm [thread:$0]  %s4107, 512, %s4105, %s4093, 128, 128, 8
        $region56: #{tpu_custom_call.1} parent=35 // pred_fallthru
          _
      $region36: #{tpu_custom_call.1} parent=5 // pred_fallthru
        _
      %p4113 = scmp.le.s32.totalorder 2, %s17
      // Predicated region
      $region57: #{tpu_custom_call.1} parent=5 // pred_check
        %p4114 = pneg %p4113
      $region58: #{tpu_custom_call.1} parent=5 // pred_check_branch
        %4116 = sbr.rel (%p4114) target = $region60
      $region59: #{tpu_custom_call.1} parent=5 // pred_region
        %s4117 = ssub.s32 %s17, 2
        // Predicated region
        $region61: #{tpu_custom_call.1} parent=59 // pred_check
          %p4118 = pneg %p164
        $region62: #{tpu_custom_call.1} parent=59 // pred_check_branch
          %4120 = sbr.rel (%p4118) target = $region64
        $region63: #{tpu_custom_call.1} parent=59 // pred_region
          %s4121 = sand.u32 %s149, 1
          %s4122 = scalar_lea.sflag [#allocation5], %s4121
          %s4123 = sand.u32 %s149, 1
          %s4124 = smul.addr %s4123, 32
          %s4125 = scalar_lea.vmem [#allocation8], %s4124
          %4126 = dma.done %s4122, 512
        $region64: #{tpu_custom_call.1} parent=59 // pred_fallthru
          _
      $region60: #{tpu_custom_call.1} parent=5 // pred_fallthru
        _
    $region6: #{tpu_custom_call.1} parent=1 // loop_footer
      %s21 = sadd.s32 1, %s17
    $region7: #{tpu_custom_call.1} parent=1 // loop_footer_branch
      %16 = sbr.rel target = $region3
    $region8: #{tpu_custom_call.1} parent=1 // loop_exit
      _
    %4127 = vsyncpa [#allocation4], 1
    %s4128 = scalar_lea.sflag [#allocation4], 1
    %4129 = vsyncpa %s4128, 1
    %4130 = vsyncpa [#allocation7], 1
    %s4131 = scalar_lea.sflag [#allocation7], 1
    %4132 = vsyncpa %s4131, 1
    %4133 = vsyncpa [#allocation5], 1
    %s4134 = scalar_lea.sflag [#allocation5], 1
    %4135 = vsyncpa %s4134, 1

</llo_original>
